<compile_context>
chip_gen: v5e
topology: v5e:2x2
jax: 0.10.0
libtpu: 0.0.40
codegen_flags: <defaults>
</compile_context>

<pallas_src>
import jax
import jax.numpy as jnp
from jax import lax
from jax.experimental import pallas as pl
from jax.experimental.pallas import tpu as pltpu


# ----------------------------------------------------------------------------
# In-kernel helpers (traced inline; operate on flat (G*T*N, C) slabs where the
# G batches handled by one kernel step are stacked along the row dimension).
# ----------------------------------------------------------------------------
def _shift_down_per_batch(x, d_rows, G, TN):
    """Shift every batch's (TN, C) row block down by d_rows rows, zero-filling
    the top (== causal left padding of d_rows / n_vertex time steps)."""
    if d_rows == 0:
        return x
    zeros = jnp.zeros((d_rows, x.shape[1]), x.dtype)
    pieces = []
    for g in range(G):
        pieces.append(zeros)
        pieces.append(x[g * TN:g * TN + TN - d_rows])
    return jnp.concatenate(pieces, axis=0)


def _causal_glu_conv(x, w_cat, b, G, TN, N, Kt):
    """Causal temporal conv (kernel (Kt, 1)) + GLU on a flat (G*TN, Cin) slab.

    All Kt taps are fused into ONE MXU matmul: the Kt causally shifted slabs are
    concatenated along lanes and multiplied by the (Kt*Cin, 2*Co) stacked weight.
    Matches the reference glu branch: x_p * sigmoid(x_q).
    """
    f32 = jnp.float32
    taps = [_shift_down_per_batch(x, (Kt - 1 - k) * N, G, TN) for k in range(Kt)]
    xcat = taps[0] if Kt == 1 else jnp.concatenate(taps, axis=1)
    acc = jnp.dot(xcat, w_cat, preferred_element_type=f32) + b
    co = w_cat.shape[1] // 2
    return acc[:, :co] * jax.nn.sigmoid(acc[:, co:])


# ----------------------------------------------------------------------------
# Fused kernel: one grid step processes G batches stacked into a (G*T*N, C) slab.
# ----------------------------------------------------------------------------
def _st_block_kernel(x_ref, gso_ref,
                     tc1w_ref, tc1b_ref, gcw_ref, gcb_ref, tc2w_ref, tc2b_ref,
                     wih1_ref, bih1_ref, wrec_ref, brec_ref, lnw_ref, lnb_ref,
                     out_ref, gi1_ref):
    f32 = jnp.float32
    G, TN, C2 = out_ref.shape                 # (batches this step, T*N, channels[2])
    Cin = x_ref.shape[2]
    N = lnw_ref.shape[0]                      # n_vertex
    T = TN // N
    H = wrec_ref.shape[0] // 2                # GRU hidden (== C2)
    GN = G * N
    R = G * TN
    Kt = tc1w_ref.shape[0] // Cin
    Ks = gcw_ref.shape[0] // gcw_ref.shape[1]

    # ---- tmp_conv1: causal GLU conv, (R, Cin) -> (R, C0) ----------------------
    x_in = x_ref[...].reshape(R, Cin).astype(f32)
    h1 = _causal_glu_conv(x_in, tc1w_ref[...], tc1b_ref[...], G, TN, N, Kt)

    # ---- graph_conv: Chebyshev graph conv (+bias) + residual; then ELU --------
    gso_bd = gso_ref[...]                     # (TN, TN) = kron(I_T, gso)

    def apply_s(v):                           # one (TN,TN)x(TN,C) matmul per batch
        outs = [jnp.dot(gso_bd, v[g * TN:(g + 1) * TN], preferred_element_type=f32)
                for g in range(G)]
        return outs[0] if G == 1 else jnp.concatenate(outs, axis=0)

    xs = [h1]
    if Ks >= 2:
        xs.append(apply_s(h1))
        for _ in range(2, Ks):
            xs.append(2.0 * apply_s(xs[-1]) - xs[-2])
    xcat = xs[0] if Ks == 1 else jnp.concatenate(xs, axis=1)       # (R, Ks*C1)
    gc = jnp.dot(xcat, gcw_ref[...], preferred_element_type=f32) + gcb_ref[...]
    gc = gc + h1                              # GraphConvLayer residual (align == id)
    h2 = jnp.where(gc > 0, gc, jnp.exp(jnp.minimum(gc, 0.0)) - 1.0)  # ELU(alpha=1)

    # ---- tmp_conv2: causal GLU conv, (R, C1) -> (R, C2) -----------------------
    y2 = _causal_glu_conv(h2, tc2w_ref[...], tc2b_ref[...], G, TN, N, Kt)

    # ---- GRU layer-1 input projections -> VMEM scratch (natural row order). ---
    # GRU sequence j, step s reads flat row j*T + s; each round below loads that
    # row set with one strided pl.ds slice (stride T == one sublane per 8).
    gi1_ref[...] = (jnp.dot(y2, wih1_ref[...], preferred_element_type=f32)
                    + bih1_ref[...])

    # ---- 2-layer GRU, software-pipelined (layer 2 one step behind layer 1). ---
    # Per round, ONE fused matmul  [h1 | h2] @ W_rec  produces
    #   [ h1@whh1+bhh1 | h2@whh2+bhh2 | h1@wih2+bih2 ]  =  [gh1 | gh2 | gi2].
    # LayerNorm([n_vertex, C2], eps=1e-12) is fused onto each layer-2 step.
    w_rec = wrec_ref[...]                     # (2H, 9H)
    b_rec = brec_ref[...]                     # (1, 9H)
    lnw = lnw_ref[...]
    lnb = lnb_ref[...]

    def gru_gates(gi, io, gh, go, h):         # PyTorch gate order r|z|n; b_hn in r*()
        r = jax.nn.sigmoid(gi[:, io:io + H] + gh[:, go:go + H])
        z = jax.nn.sigmoid(gi[:, io + H:io + 2 * H] + gh[:, go + H:go + 2 * H])
        n = jnp.tanh(gi[:, io + 2 * H:io + 3 * H] + r * gh[:, go + 2 * H:go + 3 * H])
        return (1.0 - z) * n + z * h

    h1s = jnp.zeros((GN, H), f32)
    h2s = jnp.zeros((GN, H), f32)
    for s in range(T + 1):                    # unrolled: T+1 pipelined rounds, not 2T
        if s == 0:
            m = b_rec                         # h == 0  =>  h @ W_rec == 0
        else:
            m = jnp.dot(jnp.concatenate([h1s, h2s], axis=1), w_rec,
                        preferred_element_type=f32) + b_rec        # (GN, 9H)
        if s >= 1:
            # layer-2 step s-1 (+ fused LayerNorm over each batch's (N, C2) slab)
            h2s = gru_gates(m, 6 * H, m, 3 * H, h2s)
            for g in range(G):
                hb = h2s[g * N:(g + 1) * N, :]
                mu = jnp.mean(hb)
                var = jnp.mean((hb - mu) * (hb - mu))
                y = (hb - mu) * lax.rsqrt(var + 1e-12) * lnw + lnb
                # TODO(synk): dropout (p=droprate) treated as identity (inference).
                out_ref[g, (s - 1) * N:s * N, :] = y.astype(out_ref.dtype)
        if s < T:
            # layer-1 step s
            gi1_s = gi1_ref[pl.ds(s, GN, stride=T), :]             # rows j*T + s
            h1s = gru_gates(gi1_s, 0, m, 0, h1s)


# ----------------------------------------------------------------------------
# Wrapper: layout glue, weight packing, one fused pallas_call.
# ----------------------------------------------------------------------------
def _default_batches_per_step(B):
    """Single-TC parts (v5e/v6e) fold the whole batch into one kernel step (one
    GRU recurrence over B*N sequences); parts with 2 TensorCores per device
    (v7x, v4/v5p megacore) take one batch per core via a 'parallel' grid."""
    try:
        kind = jax.devices()[0].device_kind.lower()
    except Exception:
        kind = ""
    multi_tc = any(t in kind for t in ("v7", "v5p", "v4"))
    return 1 if (multi_tc and B > 1) else B


def _pack_params(p):
    """Pack parameters into the fused-matmul layouts the kernel expects."""
    Kt, cin1, two_c0 = p['tc1_w'].shape
    Ks, c1, _ = p['gc_w'].shape
    _, c1b, two_c2 = p['tc2_w'].shape
    H = p['gru_whh1'].shape[0]
    tc1w = p['tc1_w'].reshape(Kt * cin1, two_c0)
    gcw = p['gc_w'].reshape(Ks * c1, c1)
    tc2w = p['tc2_w'].reshape(Kt * c1b, two_c2)
    # Fused recurrence weight: [h1 | h2] @ w_rec -> [gh1 | gh2 | gi2]
    w_rec = jnp.zeros((2 * H, 9 * H), jnp.float32)
    w_rec = w_rec.at[:H, :3 * H].set(p['gru_whh1'])
    w_rec = w_rec.at[H:, 3 * H:6 * H].set(p['gru_whh2'])
    w_rec = w_rec.at[:H, 6 * H:].set(p['gru_wih2'])
    b_rec = jnp.concatenate([p['gru_bhh1'], p['gru_bhh2'], p['gru_bih2']], axis=1)
    return (tc1w, p['tc1_b'], gcw, p['gc_b'], tc2w, p['tc2_b'],
            p['gru_wih1'], p['gru_bih1'], w_rec, b_rec, p['ln_w'], p['ln_b'])


def st_conv_block_gru(x_nchw, gso, params, *, batches_per_step=None):
    """Forward pass of STConvBlockGRU.  x_nchw: (B, C_in, T, N) -> (B, C2, T, N)."""
    B, Cin, T, N = x_nchw.shape
    C0 = params['tc1_w'].shape[2] // 2
    C1 = params['gc_w'].shape[2]
    C2 = params['tc2_w'].shape[2] // 2
    H = params['gru_whh1'].shape[0]
    assert C0 == C1 and H == C2, \
        "kernel assumes channels[0] == channels[1] and GRU hidden == channels[2]"
    TN = T * N

    G = _default_batches_per_step(B) if batches_per_step is None else batches_per_step
    assert B % G == 0
    steps = B // G

    # (B, C, T, N) -> (B, T, N, C) -> flat (B, T*N, C)
    x = jnp.transpose(x_nchw, (0, 2, 3, 1)).reshape(B, TN, Cin)

    # kron(I_T, gso): the (N,N) graph shift applied to a whole (T*N, C) time slab
    # becomes one well-shaped MXU matmul inside the kernel.
    gso_bd = jnp.kron(jnp.eye(T, dtype=jnp.float32), gso.astype(jnp.float32))

    args = (x, gso_bd) + _pack_params(params)

    def _full_spec(a):
        return pl.BlockSpec(a.shape, lambda i, _nd=a.ndim: (0,) * _nd)

    in_specs = [pl.BlockSpec((G, TN, Cin), lambda i: (i, 0, 0))]
    in_specs += [_full_spec(a) for a in args[1:]]

    out = pl.pallas_call(
        _st_block_kernel,
        out_shape=jax.ShapeDtypeStruct((B, TN, C2), x_nchw.dtype),
        grid=(steps,),
        in_specs=in_specs,
        out_specs=pl.BlockSpec((G, TN, C2), lambda i: (i, 0, 0)),
        scratch_shapes=[pltpu.VMEM((G * TN, 3 * H), jnp.float32)],
        compiler_params=pltpu.CompilerParams(dimension_semantics=("parallel",)),
    )(*args)

    # (B, T*N, C2) -> (B, T, N, C2) -> PyTorch NCHW (B, C2, T, N)
    return jnp.transpose(out.reshape(B, T, N, C2), (0, 3, 1, 2))


# ----------------------------------------------------------------------------
# Deterministic parameter init (PyTorch-like uniform bounds).
# ----------------------------------------------------------------------------
def init_params(key, *, Kt, Ks, n_vertex, last_block_channel, channels):
    C0, C1, C2 = channels
    H = C2                      # GRU hidden == channels[2]
    keys = iter(jax.random.split(key, 32))

    def u(shape, fan_in):
        bound = 1.0 / jnp.sqrt(jnp.float32(fan_in))
        return jax.random.uniform(next(keys), shape, jnp.float32, -bound, bound)

    p = {}
    # tmp_conv1: CausalConv2d(last_block_channel -> 2*C0, (Kt,1)); packed (Kt,Cin,2*C0)
    p['tc1_w'] = u((Kt, last_block_channel, 2 * C0), last_block_channel * Kt)
    p['tc1_b'] = u((1, 2 * C0), last_block_channel * Kt)
    # ChebGraphConv(C1 -> C1): weight (Ks, C1, C1), bias (C1,)
    p['gc_w'] = u((Ks, C1, C1), C1 * Ks)
    p['gc_b'] = u((1, C1), C1 * Ks)
    # tmp_conv2: CausalConv2d(C1 -> 2*C2, (Kt,1))
    p['tc2_w'] = u((Kt, C1, 2 * C2), C1 * Kt)
    p['tc2_b'] = u((1, 2 * C2), C1 * Kt)
    # GRU(input=C2, hidden=C2, num_layers=2); weights stored transposed (in, 3H),
    # gate order [r | z | n] as in PyTorch.
    for layer, in_dim in ((1, C2), (2, H)):
        p[f'gru_wih{layer}'] = u((in_dim, 3 * H), H)
        p[f'gru_whh{layer}'] = u((H, 3 * H), H)
        p[f'gru_bih{layer}'] = u((1, 3 * H), H)
        p[f'gru_bhh{layer}'] = u((1, 3 * H), H)
    # tc2_ln: LayerNorm([n_vertex, C2], eps=1e-12)
    p['ln_w'] = jnp.ones((n_vertex, C2), jnp.float32)
    p['ln_b'] = jnp.zeros((n_vertex, C2), jnp.float32)
    return p


if __name__ == "__main__":
    B, T, N = 2, 8, 16
    Kt, Ks = 3, 3
    last_block_channel = 4
    channels = (32, 32, 32)

    key = jax.random.PRNGKey(0)
    kx, kg, kp = jax.random.split(key, 3)
    x = jax.random.normal(kx, (B, last_block_channel, T, N), jnp.float32)
    gso = jax.random.normal(kg, (N, N), jnp.float32) / jnp.sqrt(jnp.float32(N))
    params = init_params(kp, Kt=Kt, Ks=Ks, n_vertex=N,
                         last_block_channel=last_block_channel, channels=channels)

    fwd = jax.jit(st_conv_block_gru)
    y = fwd(x, gso, params)
    jax.block_until_ready(y)
    assert y.shape == (B, channels[2], T, N), y.shape
    assert bool(jnp.all(jnp.isfinite(y)))
    print("KERNEL_OK")
</pallas_src>

<mosaic_0001>
module attributes {stable_mosaic.version = 11 : i64} {
  func.func @_st_block_kernel(%arg0: i32, %arg1: memref<2x128x4xf32, #tpu.memory_space<vmem>>, %arg2: memref<128x128xf32, #tpu.memory_space<vmem>>, %arg3: memref<12x64xf32, #tpu.memory_space<vmem>>, %arg4: memref<1x64xf32, #tpu.memory_space<vmem>>, %arg5: memref<96x32xf32, #tpu.memory_space<vmem>>, %arg6: memref<1x32xf32, #tpu.memory_space<vmem>>, %arg7: memref<96x64xf32, #tpu.memory_space<vmem>>, %arg8: memref<1x64xf32, #tpu.memory_space<vmem>>, %arg9: memref<32x96xf32, #tpu.memory_space<vmem>>, %arg10: memref<1x96xf32, #tpu.memory_space<vmem>>, %arg11: memref<64x288xf32, #tpu.memory_space<vmem>>, %arg12: memref<1x288xf32, #tpu.memory_space<vmem>>, %arg13: memref<16x32xf32, #tpu.memory_space<vmem>>, %arg14: memref<16x32xf32, #tpu.memory_space<vmem>>, %arg15: memref<2x128x32xf32, #tpu.memory_space<vmem>>, %arg16: memref<256x96xf32, #tpu.memory_space<vmem>>) attributes {dimension_semantics = [#tpu.dimension_semantics<parallel>], iteration_bounds = array<i64: 1>, scalar_prefetch = 0 : i64, scratch_operands = 1 : i64, tpu.core_type = #tpu.core_type<tc>, window_params = [{transform_indices = @transform_0, window_bounds = array<i64: 2, 128, 4>}, {pipeline_mode = #tpu.pipeline_mode<synchronous>, transform_indices = @transform_1, window_bounds = array<i64: 128, 128>}, {pipeline_mode = #tpu.pipeline_mode<synchronous>, transform_indices = @transform_2, window_bounds = array<i64: 12, 64>}, {pipeline_mode = #tpu.pipeline_mode<synchronous>, transform_indices = @transform_3, window_bounds = array<i64: 1, 64>}, {pipeline_mode = #tpu.pipeline_mode<synchronous>, transform_indices = @transform_4, window_bounds = array<i64: 96, 32>}, {pipeline_mode = #tpu.pipeline_mode<synchronous>, transform_indices = @transform_5, window_bounds = array<i64: 1, 32>}, {pipeline_mode = #tpu.pipeline_mode<synchronous>, transform_indices = @transform_6, window_bounds = array<i64: 96, 64>}, {pipeline_mode = #tpu.pipeline_mode<synchronous>, transform_indices = @transform_7, window_bounds = array<i64: 1, 64>}, {pipeline_mode = #tpu.pipeline_mode<synchronous>, transform_indices = @transform_8, window_bounds = array<i64: 32, 96>}, {pipeline_mode = #tpu.pipeline_mode<synchronous>, transform_indices = @transform_9, window_bounds = array<i64: 1, 96>}, {pipeline_mode = #tpu.pipeline_mode<synchronous>, transform_indices = @transform_10, window_bounds = array<i64: 64, 288>}, {pipeline_mode = #tpu.pipeline_mode<synchronous>, transform_indices = @transform_11, window_bounds = array<i64: 1, 288>}, {pipeline_mode = #tpu.pipeline_mode<synchronous>, transform_indices = @transform_12, window_bounds = array<i64: 16, 32>}, {pipeline_mode = #tpu.pipeline_mode<synchronous>, transform_indices = @transform_13, window_bounds = array<i64: 16, 32>}, {transform_indices = @transform_14, window_bounds = array<i64: 2, 128, 32>}]} {
    %c0 = arith.constant 0 : index
    %c0_0 = arith.constant 0 : index
    %c0_1 = arith.constant 0 : index
    %0 = vector.load %arg1[%c0, %c0_0, %c0_1] : memref<2x128x4xf32, #tpu.memory_space<vmem>>, vector<2x128x4xf32>
    %1 = vector.shape_cast %0 : vector<2x128x4xf32> to vector<256x4xf32>
    %c0_2 = arith.constant 0 : index
    %c0_3 = arith.constant 0 : index
    %2 = vector.load %arg3[%c0_2, %c0_3] : memref<12x64xf32, #tpu.memory_space<vmem>>, vector<12x64xf32>
    %c0_4 = arith.constant 0 : index
    %c0_5 = arith.constant 0 : index
    %3 = vector.load %arg4[%c0_4, %c0_5] : memref<1x64xf32, #tpu.memory_space<vmem>>, vector<1x64xf32>
    %cst = arith.constant 0.000000e+00 : f32
    %4 = vector.broadcast %cst : f32 to vector<32x4xf32>
    %5 = vector.extract_strided_slice %1 {offsets = [0, 0], sizes = [96, 4], strides = [1, 1]} : vector<256x4xf32> to vector<96x4xf32>
    %6 = vector.extract_strided_slice %1 {offsets = [128, 0], sizes = [96, 4], strides = [1, 1]} : vector<256x4xf32> to vector<96x4xf32>
    %7 = tpu.concatenate %4, %5, %4, %6 in 0 : vector<32x4xf32>, vector<96x4xf32>, vector<32x4xf32>, vector<96x4xf32> -> vector<256x4xf32>
    %cst_6 = arith.constant 0.000000e+00 : f32
    %8 = vector.broadcast %cst_6 : f32 to vector<16x4xf32>
    %9 = vector.extract_strided_slice %1 {offsets = [0, 0], sizes = [112, 4], strides = [1, 1]} : vector<256x4xf32> to vector<112x4xf32>
    %10 = vector.extract_strided_slice %1 {offsets = [128, 0], sizes = [112, 4], strides = [1, 1]} : vector<256x4xf32> to vector<112x4xf32>
    %11 = tpu.concatenate %8, %9, %8, %10 in 0 : vector<16x4xf32>, vector<112x4xf32>, vector<16x4xf32>, vector<112x4xf32> -> vector<256x4xf32>
    %12 = tpu.concatenate %7, %11, %1 in 1 : vector<256x4xf32>, vector<256x4xf32>, vector<256x4xf32> -> vector<256x12xf32>
    %cst_7 = arith.constant dense<0.000000e+00> : vector<256x64xf32>
    %13 = tpu.matmul %12, %2, %cst_7 {dimension_numbers = #tpu.dot_dimension_numbers<[1], [0], [0], [1], [0, 0, 1, 1], [], []>} : vector<256x12xf32>, vector<12x64xf32>, vector<256x64xf32> -> vector<256x64xf32>
    %14 = vector.broadcast %3 : vector<1x64xf32> to vector<256x64xf32>
    %15 = arith.addf %13, %14 : vector<256x64xf32>
    %16 = vector.extract_strided_slice %15 {offsets = [0, 0], sizes = [256, 32], strides = [1, 1]} : vector<256x64xf32> to vector<256x32xf32>
    %17 = vector.extract_strided_slice %15 {offsets = [0, 32], sizes = [256, 32], strides = [1, 1]} : vector<256x64xf32> to vector<256x32xf32>
    %18 = arith.negf %17 : vector<256x32xf32>
    %19 = math.exp %18 : vector<256x32xf32>
    %cst_8 = arith.constant 1.000000e+00 : f32
    %20 = vector.broadcast %cst_8 : f32 to vector<256x32xf32>
    %21 = arith.addf %20, %19 : vector<256x32xf32>
    %22 = arith.divf %20, %21 : vector<256x32xf32>
    %23 = arith.mulf %16, %22 : vector<256x32xf32>
    %c0_9 = arith.constant 0 : index
    %c0_10 = arith.constant 0 : index
    %24 = vector.load %arg2[%c0_9, %c0_10] : memref<128x128xf32, #tpu.memory_space<vmem>>, vector<128x128xf32>
    %25 = vector.extract_strided_slice %23 {offsets = [0, 0], sizes = [128, 32], strides = [1, 1]} : vector<256x32xf32> to vector<128x32xf32>
    %cst_11 = arith.constant dense<0.000000e+00> : vector<128x32xf32>
    %26 = tpu.matmul %24, %25, %cst_11 {dimension_numbers = #tpu.dot_dimension_numbers<[1], [0], [0], [1], [0, 0, 1, 1], [], []>} : vector<128x128xf32>, vector<128x32xf32>, vector<128x32xf32> -> vector<128x32xf32>
    %27 = vector.extract_strided_slice %23 {offsets = [128, 0], sizes = [128, 32], strides = [1, 1]} : vector<256x32xf32> to vector<128x32xf32>
    %cst_12 = arith.constant dense<0.000000e+00> : vector<128x32xf32>
    %28 = tpu.matmul %24, %27, %cst_12 {dimension_numbers = #tpu.dot_dimension_numbers<[1], [0], [0], [1], [0, 0, 1, 1], [], []>} : vector<128x128xf32>, vector<128x32xf32>, vector<128x32xf32> -> vector<128x32xf32>
    %29 = tpu.concatenate %26, %28 in 0 : vector<128x32xf32>, vector<128x32xf32> -> vector<256x32xf32>
    %30 = vector.extract_strided_slice %29 {offsets = [0, 0], sizes = [128, 32], strides = [1, 1]} : vector<256x32xf32> to vector<128x32xf32>
    %cst_13 = arith.constant dense<0.000000e+00> : vector<128x32xf32>
    %31 = tpu.matmul %24, %30, %cst_13 {dimension_numbers = #tpu.dot_dimension_numbers<[1], [0], [0], [1], [0, 0, 1, 1], [], []>} : vector<128x128xf32>, vector<128x32xf32>, vector<128x32xf32> -> vector<128x32xf32>
    %32 = vector.extract_strided_slice %29 {offsets = [128, 0], sizes = [128, 32], strides = [1, 1]} : vector<256x32xf32> to vector<128x32xf32>
    %cst_14 = arith.constant dense<0.000000e+00> : vector<128x32xf32>
    %33 = tpu.matmul %24, %32, %cst_14 {dimension_numbers = #tpu.dot_dimension_numbers<[1], [0], [0], [1], [0, 0, 1, 1], [], []>} : vector<128x128xf32>, vector<128x32xf32>, vector<128x32xf32> -> vector<128x32xf32>
    %34 = tpu.concatenate %31, %33 in 0 : vector<128x32xf32>, vector<128x32xf32> -> vector<256x32xf32>
    %cst_15 = arith.constant 2.000000e+00 : f32
    %35 = vector.broadcast %cst_15 : f32 to vector<256x32xf32>
    %36 = arith.mulf %35, %34 : vector<256x32xf32>
    %37 = arith.subf %36, %23 : vector<256x32xf32>
    %38 = tpu.concatenate %23, %29, %37 in 1 : vector<256x32xf32>, vector<256x32xf32>, vector<256x32xf32> -> vector<256x96xf32>
    %c0_16 = arith.constant 0 : index
    %c0_17 = arith.constant 0 : index
    %39 = vector.load %arg5[%c0_16, %c0_17] : memref<96x32xf32, #tpu.memory_space<vmem>>, vector<96x32xf32>
    %cst_18 = arith.constant dense<0.000000e+00> : vector<256x32xf32>
    %40 = tpu.matmul %38, %39, %cst_18 {dimension_numbers = #tpu.dot_dimension_numbers<[1], [0], [0], [1], [0, 0, 1, 1], [], []>} : vector<256x96xf32>, vector<96x32xf32>, vector<256x32xf32> -> vector<256x32xf32>
    %c0_19 = arith.constant 0 : index
    %c0_20 = arith.constant 0 : index
    %41 = vector.load %arg6[%c0_19, %c0_20] : memref<1x32xf32, #tpu.memory_space<vmem>>, vector<1x32xf32>
    %42 = vector.broadcast %41 : vector<1x32xf32> to vector<256x32xf32>
    %43 = arith.addf %40, %42 : vector<256x32xf32>
    %44 = arith.addf %43, %23 : vector<256x32xf32>
    %cst_21 = arith.constant 0.000000e+00 : f32
    %45 = vector.broadcast %cst_21 : f32 to vector<256x32xf32>
    %46 = arith.cmpf ogt, %44, %45 : vector<256x32xf32>
    %cst_22 = arith.constant 0.000000e+00 : f32
    %47 = vector.broadcast %cst_22 : f32 to vector<256x32xf32>
    %48 = arith.minimumf %44, %47 : vector<256x32xf32>
    %49 = math.exp %48 : vector<256x32xf32>
    %cst_23 = arith.constant 1.000000e+00 : f32
    %50 = vector.broadcast %cst_23 : f32 to vector<256x32xf32>
    %51 = arith.subf %49, %50 : vector<256x32xf32>
    %52 = arith.select %46, %44, %51 : vector<256x32xi1>, vector<256x32xf32>
    %c0_24 = arith.constant 0 : index
    %c0_25 = arith.constant 0 : index
    %53 = vector.load %arg7[%c0_24, %c0_25] : memref<96x64xf32, #tpu.memory_space<vmem>>, vector<96x64xf32>
    %c0_26 = arith.constant 0 : index
    %c0_27 = arith.constant 0 : index
    %54 = vector.load %arg8[%c0_26, %c0_27] : memref<1x64xf32, #tpu.memory_space<vmem>>, vector<1x64xf32>
    %cst_28 = arith.constant 0.000000e+00 : f32
    %55 = vector.broadcast %cst_28 : f32 to vector<32x32xf32>
    %56 = vector.extract_strided_slice %52 {offsets = [0, 0], sizes = [96, 32], strides = [1, 1]} : vector<256x32xf32> to vector<96x32xf32>
    %57 = vector.extract_strided_slice %52 {offsets = [128, 0], sizes = [96, 32], strides = [1, 1]} : vector<256x32xf32> to vector<96x32xf32>
    %58 = tpu.concatenate %55, %56, %55, %57 in 0 : vector<32x32xf32>, vector<96x32xf32>, vector<32x32xf32>, vector<96x32xf32> -> vector<256x32xf32>
    %cst_29 = arith.constant 0.000000e+00 : f32
    %59 = vector.broadcast %cst_29 : f32 to vector<16x32xf32>
    %60 = vector.extract_strided_slice %52 {offsets = [0, 0], sizes = [112, 32], strides = [1, 1]} : vector<256x32xf32> to vector<112x32xf32>
    %61 = vector.extract_strided_slice %52 {offsets = [128, 0], sizes = [112, 32], strides = [1, 1]} : vector<256x32xf32> to vector<112x32xf32>
    %62 = tpu.concatenate %59, %60, %59, %61 in 0 : vector<16x32xf32>, vector<112x32xf32>, vector<16x32xf32>, vector<112x32xf32> -> vector<256x32xf32>
    %63 = tpu.concatenate %58, %62, %52 in 1 : vector<256x32xf32>, vector<256x32xf32>, vector<256x32xf32> -> vector<256x96xf32>
    %cst_30 = arith.constant dense<0.000000e+00> : vector<256x64xf32>
    %64 = tpu.matmul %63, %53, %cst_30 {dimension_numbers = #tpu.dot_dimension_numbers<[1], [0], [0], [1], [0, 0, 1, 1], [], []>} : vector<256x96xf32>, vector<96x64xf32>, vector<256x64xf32> -> vector<256x64xf32>
    %65 = vector.broadcast %54 : vector<1x64xf32> to vector<256x64xf32>
    %66 = arith.addf %64, %65 : vector<256x64xf32>
    %67 = vector.extract_strided_slice %66 {offsets = [0, 0], sizes = [256, 32], strides = [1, 1]} : vector<256x64xf32> to vector<256x32xf32>
    %68 = vector.extract_strided_slice %66 {offsets = [0, 32], sizes = [256, 32], strides = [1, 1]} : vector<256x64xf32> to vector<256x32xf32>
    %69 = arith.negf %68 : vector<256x32xf32>
    %70 = math.exp %69 : vector<256x32xf32>
    %cst_31 = arith.constant 1.000000e+00 : f32
    %71 = vector.broadcast %cst_31 : f32 to vector<256x32xf32>
    %72 = arith.addf %71, %70 : vector<256x32xf32>
    %73 = arith.divf %71, %72 : vector<256x32xf32>
    %74 = arith.mulf %67, %73 : vector<256x32xf32>
    %c0_32 = arith.constant 0 : index
    %c0_33 = arith.constant 0 : index
    %75 = vector.load %arg9[%c0_32, %c0_33] : memref<32x96xf32, #tpu.memory_space<vmem>>, vector<32x96xf32>
    %cst_34 = arith.constant dense<0.000000e+00> : vector<256x96xf32>
    %76 = tpu.matmul %74, %75, %cst_34 {dimension_numbers = #tpu.dot_dimension_numbers<[1], [0], [0], [1], [0, 0, 1, 1], [], []>} : vector<256x32xf32>, vector<32x96xf32>, vector<256x96xf32> -> vector<256x96xf32>
    %c0_35 = arith.constant 0 : index
    %c0_36 = arith.constant 0 : index
    %77 = vector.load %arg10[%c0_35, %c0_36] : memref<1x96xf32, #tpu.memory_space<vmem>>, vector<1x96xf32>
    %78 = vector.broadcast %77 : vector<1x96xf32> to vector<256x96xf32>
    %79 = arith.addf %76, %78 : vector<256x96xf32>
    %c0_37 = arith.constant 0 : index
    %c0_38 = arith.constant 0 : index
    %80 = vector.load %arg16[%c0_37, %c0_38] : memref<256x96xf32, #tpu.memory_space<vmem>>, vector<256x96xf32>
    tpu.vector_store %arg16[%c0_37, %c0_38], %79 {strides = array<i32>} : memref<256x96xf32, #tpu.memory_space<vmem>>, vector<256x96xf32>,
    %c0_39 = arith.constant 0 : index
    %c0_40 = arith.constant 0 : index
    %81 = vector.load %arg11[%c0_39, %c0_40] : memref<64x288xf32, #tpu.memory_space<vmem>>, vector<64x288xf32>
    %c0_41 = arith.constant 0 : index
    %c0_42 = arith.constant 0 : index
    %82 = vector.load %arg12[%c0_41, %c0_42] : memref<1x288xf32, #tpu.memory_space<vmem>>, vector<1x288xf32>
    %c0_43 = arith.constant 0 : index
    %c0_44 = arith.constant 0 : index
    %83 = vector.load %arg13[%c0_43, %c0_44] : memref<16x32xf32, #tpu.memory_space<vmem>>, vector<16x32xf32>
    %c0_45 = arith.constant 0 : index
    %c0_46 = arith.constant 0 : index
    %84 = vector.load %arg14[%c0_45, %c0_46] : memref<16x32xf32, #tpu.memory_space<vmem>>, vector<16x32xf32>
    %cst_47 = arith.constant 0.000000e+00 : f32
    %85 = vector.broadcast %cst_47 : f32 to vector<32x32xf32>
    %cst_48 = arith.constant 0.000000e+00 : f32
    %86 = vector.broadcast %cst_48 : f32 to vector<32x32xf32>
    %c0_49 = arith.constant 0 : index
    %c0_50 = arith.constant 0 : index
    %87 = tpu.strided_load %arg16[%c0_49, %c0_50] {strides = array<i32: 8, 1>} : memref<256x96xf32, #tpu.memory_space<vmem>>, vector<32x96xf32>
    %88 = vector.extract_strided_slice %87 {offsets = [0, 0], sizes = [32, 32], strides = [1, 1]} : vector<32x96xf32> to vector<32x32xf32>
    %89 = vector.extract_strided_slice %82 {offsets = [0, 0], sizes = [1, 32], strides = [1, 1]} : vector<1x288xf32> to vector<1x32xf32>
    %90 = vector.broadcast %89 : vector<1x32xf32> to vector<32x32xf32>
    %91 = arith.addf %88, %90 : vector<32x32xf32>
    %92 = arith.negf %91 : vector<32x32xf32>
    %93 = math.exp %92 : vector<32x32xf32>
    %cst_51 = arith.constant 1.000000e+00 : f32
    %94 = vector.broadcast %cst_51 : f32 to vector<32x32xf32>
    %95 = arith.addf %94, %93 : vector<32x32xf32>
    %96 = arith.divf %94, %95 : vector<32x32xf32>
    %97 = vector.extract_strided_slice %87 {offsets = [0, 32], sizes = [32, 32], strides = [1, 1]} : vector<32x96xf32> to vector<32x32xf32>
    %98 = vector.extract_strided_slice %82 {offsets = [0, 32], sizes = [1, 32], strides = [1, 1]} : vector<1x288xf32> to vector<1x32xf32>
    %99 = vector.broadcast %98 : vector<1x32xf32> to vector<32x32xf32>
    %100 = arith.addf %97, %99 : vector<32x32xf32>
    %101 = arith.negf %100 : vector<32x32xf32>
    %102 = math.exp %101 : vector<32x32xf32>
    %cst_52 = arith.constant 1.000000e+00 : f32
    %103 = vector.broadcast %cst_52 : f32 to vector<32x32xf32>
    %104 = arith.addf %103, %102 : vector<32x32xf32>
    %105 = arith.divf %103, %104 : vector<32x32xf32>
    %106 = vector.extract_strided_slice %87 {offsets = [0, 64], sizes = [32, 32], strides = [1, 1]} : vector<32x96xf32> to vector<32x32xf32>
    %107 = vector.extract_strided_slice %82 {offsets = [0, 64], sizes = [1, 32], strides = [1, 1]} : vector<1x288xf32> to vector<1x32xf32>
    %108 = vector.broadcast %107 : vector<1x32xf32> to vector<32x32xf32>
    %109 = arith.mulf %96, %108 : vector<32x32xf32>
    %110 = arith.addf %106, %109 : vector<32x32xf32>
    %111 = math.tanh %110 : vector<32x32xf32>
    %cst_53 = arith.constant 1.000000e+00 : f32
    %112 = vector.broadcast %cst_53 : f32 to vector<32x32xf32>
    %113 = arith.subf %112, %105 : vector<32x32xf32>
    %114 = arith.mulf %113, %111 : vector<32x32xf32>
    %115 = arith.mulf %105, %85 : vector<32x32xf32>
    %116 = arith.addf %114, %115 : vector<32x32xf32>
    %117 = tpu.concatenate %116, %86 in 1 : vector<32x32xf32>, vector<32x32xf32> -> vector<32x64xf32>
    %cst_54 = arith.constant dense<0.000000e+00> : vector<32x288xf32>
    %118 = tpu.matmul %117, %81, %cst_54 {dimension_numbers = #tpu.dot_dimension_numbers<[1], [0], [0], [1], [0, 0, 1, 1], [], []>} : vector<32x64xf32>, vector<64x288xf32>, vector<32x288xf32> -> vector<32x288xf32>
    %119 = vector.broadcast %82 : vector<1x288xf32> to vector<32x288xf32>
    %120 = arith.addf %118, %119 : vector<32x288xf32>
    %121 = vector.extract_strided_slice %120 {offsets = [0, 192], sizes = [32, 32], strides = [1, 1]} : vector<32x288xf32> to vector<32x32xf32>
    %122 = vector.extract_strided_slice %120 {offsets = [0, 96], sizes = [32, 32], strides = [1, 1]} : vector<32x288xf32> to vector<32x32xf32>
    %123 = arith.addf %121, %122 : vector<32x32xf32>
    %124 = arith.negf %123 : vector<32x32xf32>
    %125 = math.exp %124 : vector<32x32xf32>
    %cst_55 = arith.constant 1.000000e+00 : f32
    %126 = vector.broadcast %cst_55 : f32 to vector<32x32xf32>
    %127 = arith.addf %126, %125 : vector<32x32xf32>
    %128 = arith.divf %126, %127 : vector<32x32xf32>
    %129 = vector.extract_strided_slice %120 {offsets = [0, 224], sizes = [32, 32], strides = [1, 1]} : vector<32x288xf32> to vector<32x32xf32>
    %130 = vector.extract_strided_slice %120 {offsets = [0, 128], sizes = [32, 32], strides = [1, 1]} : vector<32x288xf32> to vector<32x32xf32>
    %131 = arith.addf %129, %130 : vector<32x32xf32>
    %132 = arith.negf %131 : vector<32x32xf32>
    %133 = math.exp %132 : vector<32x32xf32>
    %cst_56 = arith.constant 1.000000e+00 : f32
    %134 = vector.broadcast %cst_56 : f32 to vector<32x32xf32>
    %135 = arith.addf %134, %133 : vector<32x32xf32>
    %136 = arith.divf %134, %135 : vector<32x32xf32>
    %137 = vector.extract_strided_slice %120 {offsets = [0, 256], sizes = [32, 32], strides = [1, 1]} : vector<32x288xf32> to vector<32x32xf32>
    %138 = vector.extract_strided_slice %120 {offsets = [0, 160], sizes = [32, 32], strides = [1, 1]} : vector<32x288xf32> to vector<32x32xf32>
    %139 = arith.mulf %128, %138 : vector<32x32xf32>
    %140 = arith.addf %137, %139 : vector<32x32xf32>
    %141 = math.tanh %140 : vector<32x32xf32>
    %cst_57 = arith.constant 1.000000e+00 : f32
    %142 = vector.broadcast %cst_57 : f32 to vector<32x32xf32>
    %143 = arith.subf %142, %136 : vector<32x32xf32>
    %144 = arith.mulf %143, %141 : vector<32x32xf32>
    %145 = arith.mulf %136, %86 : vector<32x32xf32>
    %146 = arith.addf %144, %145 : vector<32x32xf32>
    %147 = vector.extract_strided_slice %146 {offsets = [0, 0], sizes = [16, 32], strides = [1, 1]} : vector<32x32xf32> to vector<16x32xf32>
    %148 = vector.shape_cast %147 : vector<16x32xf32> to vector<1x16x32xf32>
    %cst_58 = arith.constant dense<0.000000e+00> : vector<1xf32>
    %149 = vector.multi_reduction <add>, %148, %cst_58 [1, 2] : vector<1x16x32xf32> to vector<1xf32>
    %150 = vector.shape_cast %149 : vector<1xf32> to vector<1x1x1xf32>
    %151 = vector.extract %150[0, 0, 0] : f32 from vector<1x1x1xf32>
    %cst_59 = arith.constant 5.120000e+02 : f32
    %152 = arith.divf %151, %cst_59 : f32
    %153 = vector.broadcast %152 : f32 to vector<16x32xf32>
    %154 = arith.subf %147, %153 : vector<16x32xf32>
    %155 = vector.broadcast %152 : f32 to vector<16x32xf32>
    %156 = arith.subf %147, %155 : vector<16x32xf32>
    %157 = arith.mulf %154, %156 : vector<16x32xf32>
    %158 = vector.shape_cast %157 : vector<16x32xf32> to vector<1x16x32xf32>
    %cst_60 = arith.constant dense<0.000000e+00> : vector<1xf32>
    %159 = vector.multi_reduction <add>, %158, %cst_60 [1, 2] : vector<1x16x32xf32> to vector<1xf32>
    %160 = vector.shape_cast %159 : vector<1xf32> to vector<1x1x1xf32>
    %161 = vector.extract %160[0, 0, 0] : f32 from vector<1x1x1xf32>
    %cst_61 = arith.constant 5.120000e+02 : f32
    %162 = arith.divf %161, %cst_61 : f32
    %163 = vector.broadcast %152 : f32 to vector<16x32xf32>
    %164 = arith.subf %147, %163 : vector<16x32xf32>
    %cst_62 = arith.constant 9.99999996E-13 : f32
    %165 = arith.addf %162, %cst_62 : f32
    %166 = math.rsqrt %165 : f32
    %167 = vector.broadcast %166 : f32 to vector<16x32xf32>
    %168 = arith.mulf %164, %167 : vector<16x32xf32>
    %169 = arith.mulf %168, %83 : vector<16x32xf32>
    %170 = arith.addf %169, %84 : vector<16x32xf32>
    %c0_63 = arith.constant 0 : index
    %c0_64 = arith.constant 0 : index
    %c0_65 = arith.constant 0 : index
    %171 = vector.load %arg15[%c0_63, %c0_64, %c0_65] : memref<2x128x32xf32, #tpu.memory_space<vmem>>, vector<1x16x32xf32>
    %172 = vector.shape_cast %171 : vector<1x16x32xf32> to vector<16x32xf32>
    %173 = vector.shape_cast %170 : vector<16x32xf32> to vector<1x16x32xf32>
    tpu.vector_store %arg15[%c0_63, %c0_64, %c0_65], %173 {strides = array<i32>} : memref<2x128x32xf32, #tpu.memory_space<vmem>>, vector<1x16x32xf32>,
    %174 = vector.extract_strided_slice %146 {offsets = [16, 0], sizes = [16, 32], strides = [1, 1]} : vector<32x32xf32> to vector<16x32xf32>
    %175 = vector.shape_cast %174 : vector<16x32xf32> to vector<1x16x32xf32>
    %cst_66 = arith.constant dense<0.000000e+00> : vector<1xf32>
    %176 = vector.multi_reduction <add>, %175, %cst_66 [1, 2] : vector<1x16x32xf32> to vector<1xf32>
    %177 = vector.shape_cast %176 : vector<1xf32> to vector<1x1x1xf32>
    %178 = vector.extract %177[0, 0, 0] : f32 from vector<1x1x1xf32>
    %cst_67 = arith.constant 5.120000e+02 : f32
    %179 = arith.divf %178, %cst_67 : f32
    %180 = vector.broadcast %179 : f32 to vector<16x32xf32>
    %181 = arith.subf %174, %180 : vector<16x32xf32>
    %182 = vector.broadcast %179 : f32 to vector<16x32xf32>
    %183 = arith.subf %174, %182 : vector<16x32xf32>
    %184 = arith.mulf %181, %183 : vector<16x32xf32>
    %185 = vector.shape_cast %184 : vector<16x32xf32> to vector<1x16x32xf32>
    %cst_68 = arith.constant dense<0.000000e+00> : vector<1xf32>
    %186 = vector.multi_reduction <add>, %185, %cst_68 [1, 2] : vector<1x16x32xf32> to vector<1xf32>
    %187 = vector.shape_cast %186 : vector<1xf32> to vector<1x1x1xf32>
    %188 = vector.extract %187[0, 0, 0] : f32 from vector<1x1x1xf32>
    %cst_69 = arith.constant 5.120000e+02 : f32
    %189 = arith.divf %188, %cst_69 : f32
    %190 = vector.broadcast %179 : f32 to vector<16x32xf32>
    %191 = arith.subf %174, %190 : vector<16x32xf32>
    %cst_70 = arith.constant 9.99999996E-13 : f32
    %192 = arith.addf %189, %cst_70 : f32
    %193 = math.rsqrt %192 : f32
    %194 = vector.broadcast %193 : f32 to vector<16x32xf32>
    %195 = arith.mulf %191, %194 : vector<16x32xf32>
    %196 = arith.mulf %195, %83 : vector<16x32xf32>
    %197 = arith.addf %196, %84 : vector<16x32xf32>
    %c1 = arith.constant 1 : index
    %c0_71 = arith.constant 0 : index
    %c0_72 = arith.constant 0 : index
    %198 = vector.load %arg15[%c1, %c0_71, %c0_72] : memref<2x128x32xf32, #tpu.memory_space<vmem>>, vector<1x16x32xf32>
    %199 = vector.shape_cast %198 : vector<1x16x32xf32> to vector<16x32xf32>
    %200 = vector.shape_cast %197 : vector<16x32xf32> to vector<1x16x32xf32>
    tpu.vector_store %arg15[%c1, %c0_71, %c0_72], %200 {strides = array<i32>} : memref<2x128x32xf32, #tpu.memory_space<vmem>>, vector<1x16x32xf32>,
    %c1_73 = arith.constant 1 : index
    %c0_74 = arith.constant 0 : index
    %201 = tpu.strided_load %arg16[%c1_73, %c0_74] {strides = array<i32: 8, 1>} : memref<256x96xf32, #tpu.memory_space<vmem>>, vector<32x96xf32>
    %202 = vector.extract_strided_slice %201 {offsets = [0, 0], sizes = [32, 32], strides = [1, 1]} : vector<32x96xf32> to vector<32x32xf32>
    %203 = vector.extract_strided_slice %120 {offsets = [0, 0], sizes = [32, 32], strides = [1, 1]} : vector<32x288xf32> to vector<32x32xf32>
    %204 = arith.addf %202, %203 : vector<32x32xf32>
    %205 = arith.negf %204 : vector<32x32xf32>
    %206 = math.exp %205 : vector<32x32xf32>
    %cst_75 = arith.constant 1.000000e+00 : f32
    %207 = vector.broadcast %cst_75 : f32 to vector<32x32xf32>
    %208 = arith.addf %207, %206 : vector<32x32xf32>
    %209 = arith.divf %207, %208 : vector<32x32xf32>
    %210 = vector.extract_strided_slice %201 {offsets = [0, 32], sizes = [32, 32], strides = [1, 1]} : vector<32x96xf32> to vector<32x32xf32>
    %211 = vector.extract_strided_slice %120 {offsets = [0, 32], sizes = [32, 32], strides = [1, 1]} : vector<32x288xf32> to vector<32x32xf32>
    %212 = arith.addf %210, %211 : vector<32x32xf32>
    %213 = arith.negf %212 : vector<32x32xf32>
    %214 = math.exp %213 : vector<32x32xf32>
    %cst_76 = arith.constant 1.000000e+00 : f32
    %215 = vector.broadcast %cst_76 : f32 to vector<32x32xf32>
    %216 = arith.addf %215, %214 : vector<32x32xf32>
    %217 = arith.divf %215, %216 : vector<32x32xf32>
    %218 = vector.extract_strided_slice %201 {offsets = [0, 64], sizes = [32, 32], strides = [1, 1]} : vector<32x96xf32> to vector<32x32xf32>
    %219 = vector.extract_strided_slice %120 {offsets = [0, 64], sizes = [32, 32], strides = [1, 1]} : vector<32x288xf32> to vector<32x32xf32>
    %220 = arith.mulf %209, %219 : vector<32x32xf32>
    %221 = arith.addf %218, %220 : vector<32x32xf32>
    %222 = math.tanh %221 : vector<32x32xf32>
    %cst_77 = arith.constant 1.000000e+00 : f32
    %223 = vector.broadcast %cst_77 : f32 to vector<32x32xf32>
    %224 = arith.subf %223, %217 : vector<32x32xf32>
    %225 = arith.mulf %224, %222 : vector<32x32xf32>
    %226 = arith.mulf %217, %116 : vector<32x32xf32>
    %227 = arith.addf %225, %226 : vector<32x32xf32>
    %228 = tpu.concatenate %227, %146 in 1 : vector<32x32xf32>, vector<32x32xf32> -> vector<32x64xf32>
    %cst_78 = arith.constant dense<0.000000e+00> : vector<32x288xf32>
    %229 = tpu.matmul %228, %81, %cst_78 {dimension_numbers = #tpu.dot_dimension_numbers<[1], [0], [0], [1], [0, 0, 1, 1], [], []>} : vector<32x64xf32>, vector<64x288xf32>, vector<32x288xf32> -> vector<32x288xf32>
    %230 = vector.broadcast %82 : vector<1x288xf32> to vector<32x288xf32>
    %231 = arith.addf %229, %230 : vector<32x288xf32>
    %232 = vector.extract_strided_slice %231 {offsets = [0, 192], sizes = [32, 32], strides = [1, 1]} : vector<32x288xf32> to vector<32x32xf32>
    %233 = vector.extract_strided_slice %231 {offsets = [0, 96], sizes = [32, 32], strides = [1, 1]} : vector<32x288xf32> to vector<32x32xf32>
    %234 = arith.addf %232, %233 : vector<32x32xf32>
    %235 = arith.negf %234 : vector<32x32xf32>
    %236 = math.exp %235 : vector<32x32xf32>
    %cst_79 = arith.constant 1.000000e+00 : f32
    %237 = vector.broadcast %cst_79 : f32 to vector<32x32xf32>
    %238 = arith.addf %237, %236 : vector<32x32xf32>
    %239 = arith.divf %237, %238 : vector<32x32xf32>
    %240 = vector.extract_strided_slice %231 {offsets = [0, 224], sizes = [32, 32], strides = [1, 1]} : vector<32x288xf32> to vector<32x32xf32>
    %241 = vector.extract_strided_slice %231 {offsets = [0, 128], sizes = [32, 32], strides = [1, 1]} : vector<32x288xf32> to vector<32x32xf32>
    %242 = arith.addf %240, %241 : vector<32x32xf32>
    %243 = arith.negf %242 : vector<32x32xf32>
    %244 = math.exp %243 : vector<32x32xf32>
    %cst_80 = arith.constant 1.000000e+00 : f32
    %245 = vector.broadcast %cst_80 : f32 to vector<32x32xf32>
    %246 = arith.addf %245, %244 : vector<32x32xf32>
    %247 = arith.divf %245, %246 : vector<32x32xf32>
    %248 = vector.extract_strided_slice %231 {offsets = [0, 256], sizes = [32, 32], strides = [1, 1]} : vector<32x288xf32> to vector<32x32xf32>
    %249 = vector.extract_strided_slice %231 {offsets = [0, 160], sizes = [32, 32], strides = [1, 1]} : vector<32x288xf32> to vector<32x32xf32>
    %250 = arith.mulf %239, %249 : vector<32x32xf32>
    %251 = arith.addf %248, %250 : vector<32x32xf32>
    %252 = math.tanh %251 : vector<32x32xf32>
    %cst_81 = arith.constant 1.000000e+00 : f32
    %253 = vector.broadcast %cst_81 : f32 to vector<32x32xf32>
    %254 = arith.subf %253, %247 : vector<32x32xf32>
    %255 = arith.mulf %254, %252 : vector<32x32xf32>
    %256 = arith.mulf %247, %146 : vector<32x32xf32>
    %257 = arith.addf %255, %256 : vector<32x32xf32>
    %258 = vector.extract_strided_slice %257 {offsets = [0, 0], sizes = [16, 32], strides = [1, 1]} : vector<32x32xf32> to vector<16x32xf32>
    %259 = vector.shape_cast %258 : vector<16x32xf32> to vector<1x16x32xf32>
    %cst_82 = arith.constant dense<0.000000e+00> : vector<1xf32>
    %260 = vector.multi_reduction <add>, %259, %cst_82 [1, 2] : vector<1x16x32xf32> to vector<1xf32>
    %261 = vector.shape_cast %260 : vector<1xf32> to vector<1x1x1xf32>
    %262 = vector.extract %261[0, 0, 0] : f32 from vector<1x1x1xf32>
    %cst_83 = arith.constant 5.120000e+02 : f32
    %263 = arith.divf %262, %cst_83 : f32
    %264 = vector.broadcast %263 : f32 to vector<16x32xf32>
    %265 = arith.subf %258, %264 : vector<16x32xf32>
    %266 = vector.broadcast %263 : f32 to vector<16x32xf32>
    %267 = arith.subf %258, %266 : vector<16x32xf32>
    %268 = arith.mulf %265, %267 : vector<16x32xf32>
    %269 = vector.shape_cast %268 : vector<16x32xf32> to vector<1x16x32xf32>
    %cst_84 = arith.constant dense<0.000000e+00> : vector<1xf32>
    %270 = vector.multi_reduction <add>, %269, %cst_84 [1, 2] : vector<1x16x32xf32> to vector<1xf32>
    %271 = vector.shape_cast %270 : vector<1xf32> to vector<1x1x1xf32>
    %272 = vector.extract %271[0, 0, 0] : f32 from vector<1x1x1xf32>
    %cst_85 = arith.constant 5.120000e+02 : f32
    %273 = arith.divf %272, %cst_85 : f32
    %274 = vector.broadcast %263 : f32 to vector<16x32xf32>
    %275 = arith.subf %258, %274 : vector<16x32xf32>
    %cst_86 = arith.constant 9.99999996E-13 : f32
    %276 = arith.addf %273, %cst_86 : f32
    %277 = math.rsqrt %276 : f32
    %278 = vector.broadcast %277 : f32 to vector<16x32xf32>
    %279 = arith.mulf %275, %278 : vector<16x32xf32>
    %280 = arith.mulf %279, %83 : vector<16x32xf32>
    %281 = arith.addf %280, %84 : vector<16x32xf32>
    %c0_87 = arith.constant 0 : index
    %c16 = arith.constant 16 : index
    %c0_88 = arith.constant 0 : index
    %282 = vector.load %arg15[%c0_87, %c16, %c0_88] : memref<2x128x32xf32, #tpu.memory_space<vmem>>, vector<1x16x32xf32>
    %283 = vector.shape_cast %282 : vector<1x16x32xf32> to vector<16x32xf32>
    %284 = vector.shape_cast %281 : vector<16x32xf32> to vector<1x16x32xf32>
    tpu.vector_store %arg15[%c0_87, %c16, %c0_88], %284 {strides = array<i32>} : memref<2x128x32xf32, #tpu.memory_space<vmem>>, vector<1x16x32xf32>,
    %285 = vector.extract_strided_slice %257 {offsets = [16, 0], sizes = [16, 32], strides = [1, 1]} : vector<32x32xf32> to vector<16x32xf32>
    %286 = vector.shape_cast %285 : vector<16x32xf32> to vector<1x16x32xf32>
    %cst_89 = arith.constant dense<0.000000e+00> : vector<1xf32>
    %287 = vector.multi_reduction <add>, %286, %cst_89 [1, 2] : vector<1x16x32xf32> to vector<1xf32>
    %288 = vector.shape_cast %287 : vector<1xf32> to vector<1x1x1xf32>
    %289 = vector.extract %288[0, 0, 0] : f32 from vector<1x1x1xf32>
    %cst_90 = arith.constant 5.120000e+02 : f32
    %290 = arith.divf %289, %cst_90 : f32
    %291 = vector.broadcast %290 : f32 to vector<16x32xf32>
    %292 = arith.subf %285, %291 : vector<16x32xf32>
    %293 = vector.broadcast %290 : f32 to vector<16x32xf32>
    %294 = arith.subf %285, %293 : vector<16x32xf32>
    %295 = arith.mulf %292, %294 : vector<16x32xf32>
    %296 = vector.shape_cast %295 : vector<16x32xf32> to vector<1x16x32xf32>
    %cst_91 = arith.constant dense<0.000000e+00> : vector<1xf32>
    %297 = vector.multi_reduction <add>, %296, %cst_91 [1, 2] : vector<1x16x32xf32> to vector<1xf32>
    %298 = vector.shape_cast %297 : vector<1xf32> to vector<1x1x1xf32>
    %299 = vector.extract %298[0, 0, 0] : f32 from vector<1x1x1xf32>
    %cst_92 = arith.constant 5.120000e+02 : f32
    %300 = arith.divf %299, %cst_92 : f32
    %301 = vector.broadcast %290 : f32 to vector<16x32xf32>
    %302 = arith.subf %285, %301 : vector<16x32xf32>
    %cst_93 = arith.constant 9.99999996E-13 : f32
    %303 = arith.addf %300, %cst_93 : f32
    %304 = math.rsqrt %303 : f32
    %305 = vector.broadcast %304 : f32 to vector<16x32xf32>
    %306 = arith.mulf %302, %305 : vector<16x32xf32>
    %307 = arith.mulf %306, %83 : vector<16x32xf32>
    %308 = arith.addf %307, %84 : vector<16x32xf32>
    %c1_94 = arith.constant 1 : index
    %c16_95 = arith.constant 16 : index
    %c0_96 = arith.constant 0 : index
    %309 = vector.load %arg15[%c1_94, %c16_95, %c0_96] : memref<2x128x32xf32, #tpu.memory_space<vmem>>, vector<1x16x32xf32>
    %310 = vector.shape_cast %309 : vector<1x16x32xf32> to vector<16x32xf32>
    %311 = vector.shape_cast %308 : vector<16x32xf32> to vector<1x16x32xf32>
    tpu.vector_store %arg15[%c1_94, %c16_95, %c0_96], %311 {strides = array<i32>} : memref<2x128x32xf32, #tpu.memory_space<vmem>>, vector<1x16x32xf32>,
    %c2 = arith.constant 2 : index
    %c0_97 = arith.constant 0 : index
    %312 = tpu.strided_load %arg16[%c2, %c0_97] {strides = array<i32: 8, 1>} : memref<256x96xf32, #tpu.memory_space<vmem>>, vector<32x96xf32>
    %313 = vector.extract_strided_slice %312 {offsets = [0, 0], sizes = [32, 32], strides = [1, 1]} : vector<32x96xf32> to vector<32x32xf32>
    %314 = vector.extract_strided_slice %231 {offsets = [0, 0], sizes = [32, 32], strides = [1, 1]} : vector<32x288xf32> to vector<32x32xf32>
    %315 = arith.addf %313, %314 : vector<32x32xf32>
    %316 = arith.negf %315 : vector<32x32xf32>
    %317 = math.exp %316 : vector<32x32xf32>
    %cst_98 = arith.constant 1.000000e+00 : f32
    %318 = vector.broadcast %cst_98 : f32 to vector<32x32xf32>
    %319 = arith.addf %318, %317 : vector<32x32xf32>
    %320 = arith.divf %318, %319 : vector<32x32xf32>
    %321 = vector.extract_strided_slice %312 {offsets = [0, 32], sizes = [32, 32], strides = [1, 1]} : vector<32x96xf32> to vector<32x32xf32>
    %322 = vector.extract_strided_slice %231 {offsets = [0, 32], sizes = [32, 32], strides = [1, 1]} : vector<32x288xf32> to vector<32x32xf32>
    %323 = arith.addf %321, %322 : vector<32x32xf32>
    %324 = arith.negf %323 : vector<32x32xf32>
    %325 = math.exp %324 : vector<32x32xf32>
    %cst_99 = arith.constant 1.000000e+00 : f32
    %326 = vector.broadcast %cst_99 : f32 to vector<32x32xf32>
    %327 = arith.addf %326, %325 : vector<32x32xf32>
    %328 = arith.divf %326, %327 : vector<32x32xf32>
    %329 = vector.extract_strided_slice %312 {offsets = [0, 64], sizes = [32, 32], strides = [1, 1]} : vector<32x96xf32> to vector<32x32xf32>
    %330 = vector.extract_strided_slice %231 {offsets = [0, 64], sizes = [32, 32], strides = [1, 1]} : vector<32x288xf32> to vector<32x32xf32>
    %331 = arith.mulf %320, %330 : vector<32x32xf32>
    %332 = arith.addf %329, %331 : vector<32x32xf32>
    %333 = math.tanh %332 : vector<32x32xf32>
    %cst_100 = arith.constant 1.000000e+00 : f32
    %334 = vector.broadcast %cst_100 : f32 to vector<32x32xf32>
    %335 = arith.subf %334, %328 : vector<32x32xf32>
    %336 = arith.mulf %335, %333 : vector<32x32xf32>
    %337 = arith.mulf %328, %227 : vector<32x32xf32>
    %338 = arith.addf %336, %337 : vector<32x32xf32>
    %339 = tpu.concatenate %338, %257 in 1 : vector<32x32xf32>, vector<32x32xf32> -> vector<32x64xf32>
    %cst_101 = arith.constant dense<0.000000e+00> : vector<32x288xf32>
    %340 = tpu.matmul %339, %81, %cst_101 {dimension_numbers = #tpu.dot_dimension_numbers<[1], [0], [0], [1], [0, 0, 1, 1], [], []>} : vector<32x64xf32>, vector<64x288xf32>, vector<32x288xf32> -> vector<32x288xf32>
    %341 = vector.broadcast %82 : vector<1x288xf32> to vector<32x288xf32>
    %342 = arith.addf %340, %341 : vector<32x288xf32>
    %343 = vector.extract_strided_slice %342 {offsets = [0, 192], sizes = [32, 32], strides = [1, 1]} : vector<32x288xf32> to vector<32x32xf32>
    %344 = vector.extract_strided_slice %342 {offsets = [0, 96], sizes = [32, 32], strides = [1, 1]} : vector<32x288xf32> to vector<32x32xf32>
    %345 = arith.addf %343, %344 : vector<32x32xf32>
    %346 = arith.negf %345 : vector<32x32xf32>
    %347 = math.exp %346 : vector<32x32xf32>
    %cst_102 = arith.constant 1.000000e+00 : f32
    %348 = vector.broadcast %cst_102 : f32 to vector<32x32xf32>
    %349 = arith.addf %348, %347 : vector<32x32xf32>
    %350 = arith.divf %348, %349 : vector<32x32xf32>
    %351 = vector.extract_strided_slice %342 {offsets = [0, 224], sizes = [32, 32], strides = [1, 1]} : vector<32x288xf32> to vector<32x32xf32>
    %352 = vector.extract_strided_slice %342 {offsets = [0, 128], sizes = [32, 32], strides = [1, 1]} : vector<32x288xf32> to vector<32x32xf32>
    %353 = arith.addf %351, %352 : vector<32x32xf32>
    %354 = arith.negf %353 : vector<32x32xf32>
    %355 = math.exp %354 : vector<32x32xf32>
    %cst_103 = arith.constant 1.000000e+00 : f32
    %356 = vector.broadcast %cst_103 : f32 to vector<32x32xf32>
    %357 = arith.addf %356, %355 : vector<32x32xf32>
    %358 = arith.divf %356, %357 : vector<32x32xf32>
    %359 = vector.extract_strided_slice %342 {offsets = [0, 256], sizes = [32, 32], strides = [1, 1]} : vector<32x288xf32> to vector<32x32xf32>
    %360 = vector.extract_strided_slice %342 {offsets = [0, 160], sizes = [32, 32], strides = [1, 1]} : vector<32x288xf32> to vector<32x32xf32>
    %361 = arith.mulf %350, %360 : vector<32x32xf32>
    %362 = arith.addf %359, %361 : vector<32x32xf32>
    %363 = math.tanh %362 : vector<32x32xf32>
    %cst_104 = arith.constant 1.000000e+00 : f32
    %364 = vector.broadcast %cst_104 : f32 to vector<32x32xf32>
    %365 = arith.subf %364, %358 : vector<32x32xf32>
    %366 = arith.mulf %365, %363 : vector<32x32xf32>
    %367 = arith.mulf %358, %257 : vector<32x32xf32>
    %368 = arith.addf %366, %367 : vector<32x32xf32>
    %369 = vector.extract_strided_slice %368 {offsets = [0, 0], sizes = [16, 32], strides = [1, 1]} : vector<32x32xf32> to vector<16x32xf32>
    %370 = vector.shape_cast %369 : vector<16x32xf32> to vector<1x16x32xf32>
    %cst_105 = arith.constant dense<0.000000e+00> : vector<1xf32>
    %371 = vector.multi_reduction <add>, %370, %cst_105 [1, 2] : vector<1x16x32xf32> to vector<1xf32>
    %372 = vector.shape_cast %371 : vector<1xf32> to vector<1x1x1xf32>
    %373 = vector.extract %372[0, 0, 0] : f32 from vector<1x1x1xf32>
    %cst_106 = arith.constant 5.120000e+02 : f32
    %374 = arith.divf %373, %cst_106 : f32
    %375 = vector.broadcast %374 : f32 to vector<16x32xf32>
    %376 = arith.subf %369, %375 : vector<16x32xf32>
    %377 = vector.broadcast %374 : f32 to vector<16x32xf32>
    %378 = arith.subf %369, %377 : vector<16x32xf32>
    %379 = arith.mulf %376, %378 : vector<16x32xf32>
    %380 = vector.shape_cast %379 : vector<16x32xf32> to vector<1x16x32xf32>
    %cst_107 = arith.constant dense<0.000000e+00> : vector<1xf32>
    %381 = vector.multi_reduction <add>, %380, %cst_107 [1, 2] : vector<1x16x32xf32> to vector<1xf32>
    %382 = vector.shape_cast %381 : vector<1xf32> to vector<1x1x1xf32>
    %383 = vector.extract %382[0, 0, 0] : f32 from vector<1x1x1xf32>
    %cst_108 = arith.constant 5.120000e+02 : f32
    %384 = arith.divf %383, %cst_108 : f32
    %385 = vector.broadcast %374 : f32 to vector<16x32xf32>
    %386 = arith.subf %369, %385 : vector<16x32xf32>
    %cst_109 = arith.constant 9.99999996E-13 : f32
    %387 = arith.addf %384, %cst_109 : f32
    %388 = math.rsqrt %387 : f32
    %389 = vector.broadcast %388 : f32 to vector<16x32xf32>
    %390 = arith.mulf %386, %389 : vector<16x32xf32>
    %391 = arith.mulf %390, %83 : vector<16x32xf32>
    %392 = arith.addf %391, %84 : vector<16x32xf32>
    %c0_110 = arith.constant 0 : index
    %c32 = arith.constant 32 : index
    %c0_111 = arith.constant 0 : index
    %393 = vector.load %arg15[%c0_110, %c32, %c0_111] : memref<2x128x32xf32, #tpu.memory_space<vmem>>, vector<1x16x32xf32>
    %394 = vector.shape_cast %393 : vector<1x16x32xf32> to vector<16x32xf32>
    %395 = vector.shape_cast %392 : vector<16x32xf32> to vector<1x16x32xf32>
    tpu.vector_store %arg15[%c0_110, %c32, %c0_111], %395 {strides = array<i32>} : memref<2x128x32xf32, #tpu.memory_space<vmem>>, vector<1x16x32xf32>,
    %396 = vector.extract_strided_slice %368 {offsets = [16, 0], sizes = [16, 32], strides = [1, 1]} : vector<32x32xf32> to vector<16x32xf32>
    %397 = vector.shape_cast %396 : vector<16x32xf32> to vector<1x16x32xf32>
    %cst_112 = arith.constant dense<0.000000e+00> : vector<1xf32>
    %398 = vector.multi_reduction <add>, %397, %cst_112 [1, 2] : vector<1x16x32xf32> to vector<1xf32>
    %399 = vector.shape_cast %398 : vector<1xf32> to vector<1x1x1xf32>
    %400 = vector.extract %399[0, 0, 0] : f32 from vector<1x1x1xf32>
    %cst_113 = arith.constant 5.120000e+02 : f32
    %401 = arith.divf %400, %cst_113 : f32
    %402 = vector.broadcast %401 : f32 to vector<16x32xf32>
    %403 = arith.subf %396, %402 : vector<16x32xf32>
    %404 = vector.broadcast %401 : f32 to vector<16x32xf32>
    %405 = arith.subf %396, %404 : vector<16x32xf32>
    %406 = arith.mulf %403, %405 : vector<16x32xf32>
    %407 = vector.shape_cast %406 : vector<16x32xf32> to vector<1x16x32xf32>
    %cst_114 = arith.constant dense<0.000000e+00> : vector<1xf32>
    %408 = vector.multi_reduction <add>, %407, %cst_114 [1, 2] : vector<1x16x32xf32> to vector<1xf32>
    %409 = vector.shape_cast %408 : vector<1xf32> to vector<1x1x1xf32>
    %410 = vector.extract %409[0, 0, 0] : f32 from vector<1x1x1xf32>
    %cst_115 = arith.constant 5.120000e+02 : f32
    %411 = arith.divf %410, %cst_115 : f32
    %412 = vector.broadcast %401 : f32 to vector<16x32xf32>
    %413 = arith.subf %396, %412 : vector<16x32xf32>
    %cst_116 = arith.constant 9.99999996E-13 : f32
    %414 = arith.addf %411, %cst_116 : f32
    %415 = math.rsqrt %414 : f32
    %416 = vector.broadcast %415 : f32 to vector<16x32xf32>
    %417 = arith.mulf %413, %416 : vector<16x32xf32>
    %418 = arith.mulf %417, %83 : vector<16x32xf32>
    %419 = arith.addf %418, %84 : vector<16x32xf32>
    %c1_117 = arith.constant 1 : index
    %c32_118 = arith.constant 32 : index
    %c0_119 = arith.constant 0 : index
    %420 = vector.load %arg15[%c1_117, %c32_118, %c0_119] : memref<2x128x32xf32, #tpu.memory_space<vmem>>, vector<1x16x32xf32>
    %421 = vector.shape_cast %420 : vector<1x16x32xf32> to vector<16x32xf32>
    %422 = vector.shape_cast %419 : vector<16x32xf32> to vector<1x16x32xf32>
    tpu.vector_store %arg15[%c1_117, %c32_118, %c0_119], %422 {strides = array<i32>} : memref<2x128x32xf32, #tpu.memory_space<vmem>>, vector<1x16x32xf32>,
    %c3 = arith.constant 3 : index
    %c0_120 = arith.constant 0 : index
    %423 = tpu.strided_load %arg16[%c3, %c0_120] {strides = array<i32: 8, 1>} : memref<256x96xf32, #tpu.memory_space<vmem>>, vector<32x96xf32>
    %424 = vector.extract_strided_slice %423 {offsets = [0, 0], sizes = [32, 32], strides = [1, 1]} : vector<32x96xf32> to vector<32x32xf32>
    %425 = vector.extract_strided_slice %342 {offsets = [0, 0], sizes = [32, 32], strides = [1, 1]} : vector<32x288xf32> to vector<32x32xf32>
    %426 = arith.addf %424, %425 : vector<32x32xf32>
    %427 = arith.negf %426 : vector<32x32xf32>
    %428 = math.exp %427 : vector<32x32xf32>
    %cst_121 = arith.constant 1.000000e+00 : f32
    %429 = vector.broadcast %cst_121 : f32 to vector<32x32xf32>
    %430 = arith.addf %429, %428 : vector<32x32xf32>
    %431 = arith.divf %429, %430 : vector<32x32xf32>
    %432 = vector.extract_strided_slice %423 {offsets = [0, 32], sizes = [32, 32], strides = [1, 1]} : vector<32x96xf32> to vector<32x32xf32>
    %433 = vector.extract_strided_slice %342 {offsets = [0, 32], sizes = [32, 32], strides = [1, 1]} : vector<32x288xf32> to vector<32x32xf32>
    %434 = arith.addf %432, %433 : vector<32x32xf32>
    %435 = arith.negf %434 : vector<32x32xf32>
    %436 = math.exp %435 : vector<32x32xf32>
    %cst_122 = arith.constant 1.000000e+00 : f32
    %437 = vector.broadcast %cst_122 : f32 to vector<32x32xf32>
    %438 = arith.addf %437, %436 : vector<32x32xf32>
    %439 = arith.divf %437, %438 : vector<32x32xf32>
    %440 = vector.extract_strided_slice %423 {offsets = [0, 64], sizes = [32, 32], strides = [1, 1]} : vector<32x96xf32> to vector<32x32xf32>
    %441 = vector.extract_strided_slice %342 {offsets = [0, 64], sizes = [32, 32], strides = [1, 1]} : vector<32x288xf32> to vector<32x32xf32>
    %442 = arith.mulf %431, %441 : vector<32x32xf32>
    %443 = arith.addf %440, %442 : vector<32x32xf32>
    %444 = math.tanh %443 : vector<32x32xf32>
    %cst_123 = arith.constant 1.000000e+00 : f32
    %445 = vector.broadcast %cst_123 : f32 to vector<32x32xf32>
    %446 = arith.subf %445, %439 : vector<32x32xf32>
    %447 = arith.mulf %446, %444 : vector<32x32xf32>
    %448 = arith.mulf %439, %338 : vector<32x32xf32>
    %449 = arith.addf %447, %448 : vector<32x32xf32>
    %450 = tpu.concatenate %449, %368 in 1 : vector<32x32xf32>, vector<32x32xf32> -> vector<32x64xf32>
    %cst_124 = arith.constant dense<0.000000e+00> : vector<32x288xf32>
    %451 = tpu.matmul %450, %81, %cst_124 {dimension_numbers = #tpu.dot_dimension_numbers<[1], [0], [0], [1], [0, 0, 1, 1], [], []>} : vector<32x64xf32>, vector<64x288xf32>, vector<32x288xf32> -> vector<32x288xf32>
    %452 = vector.broadcast %82 : vector<1x288xf32> to vector<32x288xf32>
    %453 = arith.addf %451, %452 : vector<32x288xf32>
    %454 = vector.extract_strided_slice %453 {offsets = [0, 192], sizes = [32, 32], strides = [1, 1]} : vector<32x288xf32> to vector<32x32xf32>
    %455 = vector.extract_strided_slice %453 {offsets = [0, 96], sizes = [32, 32], strides = [1, 1]} : vector<32x288xf32> to vector<32x32xf32>
    %456 = arith.addf %454, %455 : vector<32x32xf32>
    %457 = arith.negf %456 : vector<32x32xf32>
    %458 = math.exp %457 : vector<32x32xf32>
    %cst_125 = arith.constant 1.000000e+00 : f32
    %459 = vector.broadcast %cst_125 : f32 to vector<32x32xf32>
    %460 = arith.addf %459, %458 : vector<32x32xf32>
    %461 = arith.divf %459, %460 : vector<32x32xf32>
    %462 = vector.extract_strided_slice %453 {offsets = [0, 224], sizes = [32, 32], strides = [1, 1]} : vector<32x288xf32> to vector<32x32xf32>
    %463 = vector.extract_strided_slice %453 {offsets = [0, 128], sizes = [32, 32], strides = [1, 1]} : vector<32x288xf32> to vector<32x32xf32>
    %464 = arith.addf %462, %463 : vector<32x32xf32>
    %465 = arith.negf %464 : vector<32x32xf32>
    %466 = math.exp %465 : vector<32x32xf32>
    %cst_126 = arith.constant 1.000000e+00 : f32
    %467 = vector.broadcast %cst_126 : f32 to vector<32x32xf32>
    %468 = arith.addf %467, %466 : vector<32x32xf32>
    %469 = arith.divf %467, %468 : vector<32x32xf32>
    %470 = vector.extract_strided_slice %453 {offsets = [0, 256], sizes = [32, 32], strides = [1, 1]} : vector<32x288xf32> to vector<32x32xf32>
    %471 = vector.extract_strided_slice %453 {offsets = [0, 160], sizes = [32, 32], strides = [1, 1]} : vector<32x288xf32> to vector<32x32xf32>
    %472 = arith.mulf %461, %471 : vector<32x32xf32>
    %473 = arith.addf %470, %472 : vector<32x32xf32>
    %474 = math.tanh %473 : vector<32x32xf32>
    %cst_127 = arith.constant 1.000000e+00 : f32
    %475 = vector.broadcast %cst_127 : f32 to vector<32x32xf32>
    %476 = arith.subf %475, %469 : vector<32x32xf32>
    %477 = arith.mulf %476, %474 : vector<32x32xf32>
    %478 = arith.mulf %469, %368 : vector<32x32xf32>
    %479 = arith.addf %477, %478 : vector<32x32xf32>
    %480 = vector.extract_strided_slice %479 {offsets = [0, 0], sizes = [16, 32], strides = [1, 1]} : vector<32x32xf32> to vector<16x32xf32>
    %481 = vector.shape_cast %480 : vector<16x32xf32> to vector<1x16x32xf32>
    %cst_128 = arith.constant dense<0.000000e+00> : vector<1xf32>
    %482 = vector.multi_reduction <add>, %481, %cst_128 [1, 2] : vector<1x16x32xf32> to vector<1xf32>
    %483 = vector.shape_cast %482 : vector<1xf32> to vector<1x1x1xf32>
    %484 = vector.extract %483[0, 0, 0] : f32 from vector<1x1x1xf32>
    %cst_129 = arith.constant 5.120000e+02 : f32
    %485 = arith.divf %484, %cst_129 : f32
    %486 = vector.broadcast %485 : f32 to vector<16x32xf32>
    %487 = arith.subf %480, %486 : vector<16x32xf32>
    %488 = vector.broadcast %485 : f32 to vector<16x32xf32>
    %489 = arith.subf %480, %488 : vector<16x32xf32>
    %490 = arith.mulf %487, %489 : vector<16x32xf32>
    %491 = vector.shape_cast %490 : vector<16x32xf32> to vector<1x16x32xf32>
    %cst_130 = arith.constant dense<0.000000e+00> : vector<1xf32>
    %492 = vector.multi_reduction <add>, %491, %cst_130 [1, 2] : vector<1x16x32xf32> to vector<1xf32>
    %493 = vector.shape_cast %492 : vector<1xf32> to vector<1x1x1xf32>
    %494 = vector.extract %493[0, 0, 0] : f32 from vector<1x1x1xf32>
    %cst_131 = arith.constant 5.120000e+02 : f32
    %495 = arith.divf %494, %cst_131 : f32
    %496 = vector.broadcast %485 : f32 to vector<16x32xf32>
    %497 = arith.subf %480, %496 : vector<16x32xf32>
    %cst_132 = arith.constant 9.99999996E-13 : f32
    %498 = arith.addf %495, %cst_132 : f32
    %499 = math.rsqrt %498 : f32
    %500 = vector.broadcast %499 : f32 to vector<16x32xf32>
    %501 = arith.mulf %497, %500 : vector<16x32xf32>
    %502 = arith.mulf %501, %83 : vector<16x32xf32>
    %503 = arith.addf %502, %84 : vector<16x32xf32>
    %c0_133 = arith.constant 0 : index
    %c48 = arith.constant 48 : index
    %c0_134 = arith.constant 0 : index
    %504 = vector.load %arg15[%c0_133, %c48, %c0_134] : memref<2x128x32xf32, #tpu.memory_space<vmem>>, vector<1x16x32xf32>
    %505 = vector.shape_cast %504 : vector<1x16x32xf32> to vector<16x32xf32>
    %506 = vector.shape_cast %503 : vector<16x32xf32> to vector<1x16x32xf32>
    tpu.vector_store %arg15[%c0_133, %c48, %c0_134], %506 {strides = array<i32>} : memref<2x128x32xf32, #tpu.memory_space<vmem>>, vector<1x16x32xf32>,
    %507 = vector.extract_strided_slice %479 {offsets = [16, 0], sizes = [16, 32], strides = [1, 1]} : vector<32x32xf32> to vector<16x32xf32>
    %508 = vector.shape_cast %507 : vector<16x32xf32> to vector<1x16x32xf32>
    %cst_135 = arith.constant dense<0.000000e+00> : vector<1xf32>
    %509 = vector.multi_reduction <add>, %508, %cst_135 [1, 2] : vector<1x16x32xf32> to vector<1xf32>
    %510 = vector.shape_cast %509 : vector<1xf32> to vector<1x1x1xf32>
    %511 = vector.extract %510[0, 0, 0] : f32 from vector<1x1x1xf32>
    %cst_136 = arith.constant 5.120000e+02 : f32
    %512 = arith.divf %511, %cst_136 : f32
    %513 = vector.broadcast %512 : f32 to vector<16x32xf32>
    %514 = arith.subf %507, %513 : vector<16x32xf32>
    %515 = vector.broadcast %512 : f32 to vector<16x32xf32>
    %516 = arith.subf %507, %515 : vector<16x32xf32>
    %517 = arith.mulf %514, %516 : vector<16x32xf32>
    %518 = vector.shape_cast %517 : vector<16x32xf32> to vector<1x16x32xf32>
    %cst_137 = arith.constant dense<0.000000e+00> : vector<1xf32>
    %519 = vector.multi_reduction <add>, %518, %cst_137 [1, 2] : vector<1x16x32xf32> to vector<1xf32>
    %520 = vector.shape_cast %519 : vector<1xf32> to vector<1x1x1xf32>
    %521 = vector.extract %520[0, 0, 0] : f32 from vector<1x1x1xf32>
    %cst_138 = arith.constant 5.120000e+02 : f32
    %522 = arith.divf %521, %cst_138 : f32
    %523 = vector.broadcast %512 : f32 to vector<16x32xf32>
    %524 = arith.subf %507, %523 : vector<16x32xf32>
    %cst_139 = arith.constant 9.99999996E-13 : f32
    %525 = arith.addf %522, %cst_139 : f32
    %526 = math.rsqrt %525 : f32
    %527 = vector.broadcast %526 : f32 to vector<16x32xf32>
    %528 = arith.mulf %524, %527 : vector<16x32xf32>
    %529 = arith.mulf %528, %83 : vector<16x32xf32>
    %530 = arith.addf %529, %84 : vector<16x32xf32>
    %c1_140 = arith.constant 1 : index
    %c48_141 = arith.constant 48 : index
    %c0_142 = arith.constant 0 : index
    %531 = vector.load %arg15[%c1_140, %c48_141, %c0_142] : memref<2x128x32xf32, #tpu.memory_space<vmem>>, vector<1x16x32xf32>
    %532 = vector.shape_cast %531 : vector<1x16x32xf32> to vector<16x32xf32>
    %533 = vector.shape_cast %530 : vector<16x32xf32> to vector<1x16x32xf32>
    tpu.vector_store %arg15[%c1_140, %c48_141, %c0_142], %533 {strides = array<i32>} : memref<2x128x32xf32, #tpu.memory_space<vmem>>, vector<1x16x32xf32>,
    %c4 = arith.constant 4 : index
    %c0_143 = arith.constant 0 : index
    %534 = tpu.strided_load %arg16[%c4, %c0_143] {strides = array<i32: 8, 1>} : memref<256x96xf32, #tpu.memory_space<vmem>>, vector<32x96xf32>
    %535 = vector.extract_strided_slice %534 {offsets = [0, 0], sizes = [32, 32], strides = [1, 1]} : vector<32x96xf32> to vector<32x32xf32>
    %536 = vector.extract_strided_slice %453 {offsets = [0, 0], sizes = [32, 32], strides = [1, 1]} : vector<32x288xf32> to vector<32x32xf32>
    %537 = arith.addf %535, %536 : vector<32x32xf32>
    %538 = arith.negf %537 : vector<32x32xf32>
    %539 = math.exp %538 : vector<32x32xf32>
    %cst_144 = arith.constant 1.000000e+00 : f32
    %540 = vector.broadcast %cst_144 : f32 to vector<32x32xf32>
    %541 = arith.addf %540, %539 : vector<32x32xf32>
    %542 = arith.divf %540, %541 : vector<32x32xf32>
    %543 = vector.extract_strided_slice %534 {offsets = [0, 32], sizes = [32, 32], strides = [1, 1]} : vector<32x96xf32> to vector<32x32xf32>
    %544 = vector.extract_strided_slice %453 {offsets = [0, 32], sizes = [32, 32], strides = [1, 1]} : vector<32x288xf32> to vector<32x32xf32>
    %545 = arith.addf %543, %544 : vector<32x32xf32>
    %546 = arith.negf %545 : vector<32x32xf32>
    %547 = math.exp %546 : vector<32x32xf32>
    %cst_145 = arith.constant 1.000000e+00 : f32
    %548 = vector.broadcast %cst_145 : f32 to vector<32x32xf32>
    %549 = arith.addf %548, %547 : vector<32x32xf32>
    %550 = arith.divf %548, %549 : vector<32x32xf32>
    %551 = vector.extract_strided_slice %534 {offsets = [0, 64], sizes = [32, 32], strides = [1, 1]} : vector<32x96xf32> to vector<32x32xf32>
    %552 = vector.extract_strided_slice %453 {offsets = [0, 64], sizes = [32, 32], strides = [1, 1]} : vector<32x288xf32> to vector<32x32xf32>
    %553 = arith.mulf %542, %552 : vector<32x32xf32>
    %554 = arith.addf %551, %553 : vector<32x32xf32>
    %555 = math.tanh %554 : vector<32x32xf32>
    %cst_146 = arith.constant 1.000000e+00 : f32
    %556 = vector.broadcast %cst_146 : f32 to vector<32x32xf32>
    %557 = arith.subf %556, %550 : vector<32x32xf32>
    %558 = arith.mulf %557, %555 : vector<32x32xf32>
    %559 = arith.mulf %550, %449 : vector<32x32xf32>
    %560 = arith.addf %558, %559 : vector<32x32xf32>
    %561 = tpu.concatenate %560, %479 in 1 : vector<32x32xf32>, vector<32x32xf32> -> vector<32x64xf32>
    %cst_147 = arith.constant dense<0.000000e+00> : vector<32x288xf32>
    %562 = tpu.matmul %561, %81, %cst_147 {dimension_numbers = #tpu.dot_dimension_numbers<[1], [0], [0], [1], [0, 0, 1, 1], [], []>} : vector<32x64xf32>, vector<64x288xf32>, vector<32x288xf32> -> vector<32x288xf32>
    %563 = vector.broadcast %82 : vector<1x288xf32> to vector<32x288xf32>
    %564 = arith.addf %562, %563 : vector<32x288xf32>
    %565 = vector.extract_strided_slice %564 {offsets = [0, 192], sizes = [32, 32], strides = [1, 1]} : vector<32x288xf32> to vector<32x32xf32>
    %566 = vector.extract_strided_slice %564 {offsets = [0, 96], sizes = [32, 32], strides = [1, 1]} : vector<32x288xf32> to vector<32x32xf32>
    %567 = arith.addf %565, %566 : vector<32x32xf32>
    %568 = arith.negf %567 : vector<32x32xf32>
    %569 = math.exp %568 : vector<32x32xf32>
    %cst_148 = arith.constant 1.000000e+00 : f32
    %570 = vector.broadcast %cst_148 : f32 to vector<32x32xf32>
    %571 = arith.addf %570, %569 : vector<32x32xf32>
    %572 = arith.divf %570, %571 : vector<32x32xf32>
    %573 = vector.extract_strided_slice %564 {offsets = [0, 224], sizes = [32, 32], strides = [1, 1]} : vector<32x288xf32> to vector<32x32xf32>
    %574 = vector.extract_strided_slice %564 {offsets = [0, 128], sizes = [32, 32], strides = [1, 1]} : vector<32x288xf32> to vector<32x32xf32>
    %575 = arith.addf %573, %574 : vector<32x32xf32>
    %576 = arith.negf %575 : vector<32x32xf32>
    %577 = math.exp %576 : vector<32x32xf32>
    %cst_149 = arith.constant 1.000000e+00 : f32
    %578 = vector.broadcast %cst_149 : f32 to vector<32x32xf32>
    %579 = arith.addf %578, %577 : vector<32x32xf32>
    %580 = arith.divf %578, %579 : vector<32x32xf32>
    %581 = vector.extract_strided_slice %564 {offsets = [0, 256], sizes = [32, 32], strides = [1, 1]} : vector<32x288xf32> to vector<32x32xf32>
    %582 = vector.extract_strided_slice %564 {offsets = [0, 160], sizes = [32, 32], strides = [1, 1]} : vector<32x288xf32> to vector<32x32xf32>
    %583 = arith.mulf %572, %582 : vector<32x32xf32>
    %584 = arith.addf %581, %583 : vector<32x32xf32>
    %585 = math.tanh %584 : vector<32x32xf32>
    %cst_150 = arith.constant 1.000000e+00 : f32
    %586 = vector.broadcast %cst_150 : f32 to vector<32x32xf32>
    %587 = arith.subf %586, %580 : vector<32x32xf32>
    %588 = arith.mulf %587, %585 : vector<32x32xf32>
    %589 = arith.mulf %580, %479 : vector<32x32xf32>
    %590 = arith.addf %588, %589 : vector<32x32xf32>
    %591 = vector.extract_strided_slice %590 {offsets = [0, 0], sizes = [16, 32], strides = [1, 1]} : vector<32x32xf32> to vector<16x32xf32>
    %592 = vector.shape_cast %591 : vector<16x32xf32> to vector<1x16x32xf32>
    %cst_151 = arith.constant dense<0.000000e+00> : vector<1xf32>
    %593 = vector.multi_reduction <add>, %592, %cst_151 [1, 2] : vector<1x16x32xf32> to vector<1xf32>
    %594 = vector.shape_cast %593 : vector<1xf32> to vector<1x1x1xf32>
    %595 = vector.extract %594[0, 0, 0] : f32 from vector<1x1x1xf32>
    %cst_152 = arith.constant 5.120000e+02 : f32
    %596 = arith.divf %595, %cst_152 : f32
    %597 = vector.broadcast %596 : f32 to vector<16x32xf32>
    %598 = arith.subf %591, %597 : vector<16x32xf32>
    %599 = vector.broadcast %596 : f32 to vector<16x32xf32>
    %600 = arith.subf %591, %599 : vector<16x32xf32>
    %601 = arith.mulf %598, %600 : vector<16x32xf32>
    %602 = vector.shape_cast %601 : vector<16x32xf32> to vector<1x16x32xf32>
    %cst_153 = arith.constant dense<0.000000e+00> : vector<1xf32>
    %603 = vector.multi_reduction <add>, %602, %cst_153 [1, 2] : vector<1x16x32xf32> to vector<1xf32>
    %604 = vector.shape_cast %603 : vector<1xf32> to vector<1x1x1xf32>
    %605 = vector.extract %604[0, 0, 0] : f32 from vector<1x1x1xf32>
    %cst_154 = arith.constant 5.120000e+02 : f32
    %606 = arith.divf %605, %cst_154 : f32
    %607 = vector.broadcast %596 : f32 to vector<16x32xf32>
    %608 = arith.subf %591, %607 : vector<16x32xf32>
    %cst_155 = arith.constant 9.99999996E-13 : f32
    %609 = arith.addf %606, %cst_155 : f32
    %610 = math.rsqrt %609 : f32
    %611 = vector.broadcast %610 : f32 to vector<16x32xf32>
    %612 = arith.mulf %608, %611 : vector<16x32xf32>
    %613 = arith.mulf %612, %83 : vector<16x32xf32>
    %614 = arith.addf %613, %84 : vector<16x32xf32>
    %c0_156 = arith.constant 0 : index
    %c64 = arith.constant 64 : index
    %c0_157 = arith.constant 0 : index
    %615 = vector.load %arg15[%c0_156, %c64, %c0_157] : memref<2x128x32xf32, #tpu.memory_space<vmem>>, vector<1x16x32xf32>
    %616 = vector.shape_cast %615 : vector<1x16x32xf32> to vector<16x32xf32>
    %617 = vector.shape_cast %614 : vector<16x32xf32> to vector<1x16x32xf32>
    tpu.vector_store %arg15[%c0_156, %c64, %c0_157], %617 {strides = array<i32>} : memref<2x128x32xf32, #tpu.memory_space<vmem>>, vector<1x16x32xf32>,
    %618 = vector.extract_strided_slice %590 {offsets = [16, 0], sizes = [16, 32], strides = [1, 1]} : vector<32x32xf32> to vector<16x32xf32>
    %619 = vector.shape_cast %618 : vector<16x32xf32> to vector<1x16x32xf32>
    %cst_158 = arith.constant dense<0.000000e+00> : vector<1xf32>
    %620 = vector.multi_reduction <add>, %619, %cst_158 [1, 2] : vector<1x16x32xf32> to vector<1xf32>
    %621 = vector.shape_cast %620 : vector<1xf32> to vector<1x1x1xf32>
    %622 = vector.extract %621[0, 0, 0] : f32 from vector<1x1x1xf32>
    %cst_159 = arith.constant 5.120000e+02 : f32
    %623 = arith.divf %622, %cst_159 : f32
    %624 = vector.broadcast %623 : f32 to vector<16x32xf32>
    %625 = arith.subf %618, %624 : vector<16x32xf32>
    %626 = vector.broadcast %623 : f32 to vector<16x32xf32>
    %627 = arith.subf %618, %626 : vector<16x32xf32>
    %628 = arith.mulf %625, %627 : vector<16x32xf32>
    %629 = vector.shape_cast %628 : vector<16x32xf32> to vector<1x16x32xf32>
    %cst_160 = arith.constant dense<0.000000e+00> : vector<1xf32>
    %630 = vector.multi_reduction <add>, %629, %cst_160 [1, 2] : vector<1x16x32xf32> to vector<1xf32>
    %631 = vector.shape_cast %630 : vector<1xf32> to vector<1x1x1xf32>
    %632 = vector.extract %631[0, 0, 0] : f32 from vector<1x1x1xf32>
    %cst_161 = arith.constant 5.120000e+02 : f32
    %633 = arith.divf %632, %cst_161 : f32
    %634 = vector.broadcast %623 : f32 to vector<16x32xf32>
    %635 = arith.subf %618, %634 : vector<16x32xf32>
    %cst_162 = arith.constant 9.99999996E-13 : f32
    %636 = arith.addf %633, %cst_162 : f32
    %637 = math.rsqrt %636 : f32
    %638 = vector.broadcast %637 : f32 to vector<16x32xf32>
    %639 = arith.mulf %635, %638 : vector<16x32xf32>
    %640 = arith.mulf %639, %83 : vector<16x32xf32>
    %641 = arith.addf %640, %84 : vector<16x32xf32>
    %c1_163 = arith.constant 1 : index
    %c64_164 = arith.constant 64 : index
    %c0_165 = arith.constant 0 : index
    %642 = vector.load %arg15[%c1_163, %c64_164, %c0_165] : memref<2x128x32xf32, #tpu.memory_space<vmem>>, vector<1x16x32xf32>
    %643 = vector.shape_cast %642 : vector<1x16x32xf32> to vector<16x32xf32>
    %644 = vector.shape_cast %641 : vector<16x32xf32> to vector<1x16x32xf32>
    tpu.vector_store %arg15[%c1_163, %c64_164, %c0_165], %644 {strides = array<i32>} : memref<2x128x32xf32, #tpu.memory_space<vmem>>, vector<1x16x32xf32>,
    %c5 = arith.constant 5 : index
    %c0_166 = arith.constant 0 : index
    %645 = tpu.strided_load %arg16[%c5, %c0_166] {strides = array<i32: 8, 1>} : memref<256x96xf32, #tpu.memory_space<vmem>>, vector<32x96xf32>
    %646 = vector.extract_strided_slice %645 {offsets = [0, 0], sizes = [32, 32], strides = [1, 1]} : vector<32x96xf32> to vector<32x32xf32>
    %647 = vector.extract_strided_slice %564 {offsets = [0, 0], sizes = [32, 32], strides = [1, 1]} : vector<32x288xf32> to vector<32x32xf32>
    %648 = arith.addf %646, %647 : vector<32x32xf32>
    %649 = arith.negf %648 : vector<32x32xf32>
    %650 = math.exp %649 : vector<32x32xf32>
    %cst_167 = arith.constant 1.000000e+00 : f32
    %651 = vector.broadcast %cst_167 : f32 to vector<32x32xf32>
    %652 = arith.addf %651, %650 : vector<32x32xf32>
    %653 = arith.divf %651, %652 : vector<32x32xf32>
    %654 = vector.extract_strided_slice %645 {offsets = [0, 32], sizes = [32, 32], strides = [1, 1]} : vector<32x96xf32> to vector<32x32xf32>
    %655 = vector.extract_strided_slice %564 {offsets = [0, 32], sizes = [32, 32], strides = [1, 1]} : vector<32x288xf32> to vector<32x32xf32>
    %656 = arith.addf %654, %655 : vector<32x32xf32>
    %657 = arith.negf %656 : vector<32x32xf32>
    %658 = math.exp %657 : vector<32x32xf32>
    %cst_168 = arith.constant 1.000000e+00 : f32
    %659 = vector.broadcast %cst_168 : f32 to vector<32x32xf32>
    %660 = arith.addf %659, %658 : vector<32x32xf32>
    %661 = arith.divf %659, %660 : vector<32x32xf32>
    %662 = vector.extract_strided_slice %645 {offsets = [0, 64], sizes = [32, 32], strides = [1, 1]} : vector<32x96xf32> to vector<32x32xf32>
    %663 = vector.extract_strided_slice %564 {offsets = [0, 64], sizes = [32, 32], strides = [1, 1]} : vector<32x288xf32> to vector<32x32xf32>
    %664 = arith.mulf %653, %663 : vector<32x32xf32>
    %665 = arith.addf %662, %664 : vector<32x32xf32>
    %666 = math.tanh %665 : vector<32x32xf32>
    %cst_169 = arith.constant 1.000000e+00 : f32
    %667 = vector.broadcast %cst_169 : f32 to vector<32x32xf32>
    %668 = arith.subf %667, %661 : vector<32x32xf32>
    %669 = arith.mulf %668, %666 : vector<32x32xf32>
    %670 = arith.mulf %661, %560 : vector<32x32xf32>
    %671 = arith.addf %669, %670 : vector<32x32xf32>
    %672 = tpu.concatenate %671, %590 in 1 : vector<32x32xf32>, vector<32x32xf32> -> vector<32x64xf32>
    %cst_170 = arith.constant dense<0.000000e+00> : vector<32x288xf32>
    %673 = tpu.matmul %672, %81, %cst_170 {dimension_numbers = #tpu.dot_dimension_numbers<[1], [0], [0], [1], [0, 0, 1, 1], [], []>} : vector<32x64xf32>, vector<64x288xf32>, vector<32x288xf32> -> vector<32x288xf32>
    %674 = vector.broadcast %82 : vector<1x288xf32> to vector<32x288xf32>
    %675 = arith.addf %673, %674 : vector<32x288xf32>
    %676 = vector.extract_strided_slice %675 {offsets = [0, 192], sizes = [32, 32], strides = [1, 1]} : vector<32x288xf32> to vector<32x32xf32>
    %677 = vector.extract_strided_slice %675 {offsets = [0, 96], sizes = [32, 32], strides = [1, 1]} : vector<32x288xf32> to vector<32x32xf32>
    %678 = arith.addf %676, %677 : vector<32x32xf32>
    %679 = arith.negf %678 : vector<32x32xf32>
    %680 = math.exp %679 : vector<32x32xf32>
    %cst_171 = arith.constant 1.000000e+00 : f32
    %681 = vector.broadcast %cst_171 : f32 to vector<32x32xf32>
    %682 = arith.addf %681, %680 : vector<32x32xf32>
    %683 = arith.divf %681, %682 : vector<32x32xf32>
    %684 = vector.extract_strided_slice %675 {offsets = [0, 224], sizes = [32, 32], strides = [1, 1]} : vector<32x288xf32> to vector<32x32xf32>
    %685 = vector.extract_strided_slice %675 {offsets = [0, 128], sizes = [32, 32], strides = [1, 1]} : vector<32x288xf32> to vector<32x32xf32>
    %686 = arith.addf %684, %685 : vector<32x32xf32>
    %687 = arith.negf %686 : vector<32x32xf32>
    %688 = math.exp %687 : vector<32x32xf32>
    %cst_172 = arith.constant 1.000000e+00 : f32
    %689 = vector.broadcast %cst_172 : f32 to vector<32x32xf32>
    %690 = arith.addf %689, %688 : vector<32x32xf32>
    %691 = arith.divf %689, %690 : vector<32x32xf32>
    %692 = vector.extract_strided_slice %675 {offsets = [0, 256], sizes = [32, 32], strides = [1, 1]} : vector<32x288xf32> to vector<32x32xf32>
    %693 = vector.extract_strided_slice %675 {offsets = [0, 160], sizes = [32, 32], strides = [1, 1]} : vector<32x288xf32> to vector<32x32xf32>
    %694 = arith.mulf %683, %693 : vector<32x32xf32>
    %695 = arith.addf %692, %694 : vector<32x32xf32>
    %696 = math.tanh %695 : vector<32x32xf32>
    %cst_173 = arith.constant 1.000000e+00 : f32
    %697 = vector.broadcast %cst_173 : f32 to vector<32x32xf32>
    %698 = arith.subf %697, %691 : vector<32x32xf32>
    %699 = arith.mulf %698, %696 : vector<32x32xf32>
    %700 = arith.mulf %691, %590 : vector<32x32xf32>
    %701 = arith.addf %699, %700 : vector<32x32xf32>
    %702 = vector.extract_strided_slice %701 {offsets = [0, 0], sizes = [16, 32], strides = [1, 1]} : vector<32x32xf32> to vector<16x32xf32>
    %703 = vector.shape_cast %702 : vector<16x32xf32> to vector<1x16x32xf32>
    %cst_174 = arith.constant dense<0.000000e+00> : vector<1xf32>
    %704 = vector.multi_reduction <add>, %703, %cst_174 [1, 2] : vector<1x16x32xf32> to vector<1xf32>
    %705 = vector.shape_cast %704 : vector<1xf32> to vector<1x1x1xf32>
    %706 = vector.extract %705[0, 0, 0] : f32 from vector<1x1x1xf32>
    %cst_175 = arith.constant 5.120000e+02 : f32
    %707 = arith.divf %706, %cst_175 : f32
    %708 = vector.broadcast %707 : f32 to vector<16x32xf32>
    %709 = arith.subf %702, %708 : vector<16x32xf32>
    %710 = vector.broadcast %707 : f32 to vector<16x32xf32>
    %711 = arith.subf %702, %710 : vector<16x32xf32>
    %712 = arith.mulf %709, %711 : vector<16x32xf32>
    %713 = vector.shape_cast %712 : vector<16x32xf32> to vector<1x16x32xf32>
    %cst_176 = arith.constant dense<0.000000e+00> : vector<1xf32>
    %714 = vector.multi_reduction <add>, %713, %cst_176 [1, 2] : vector<1x16x32xf32> to vector<1xf32>
    %715 = vector.shape_cast %714 : vector<1xf32> to vector<1x1x1xf32>
    %716 = vector.extract %715[0, 0, 0] : f32 from vector<1x1x1xf32>
    %cst_177 = arith.constant 5.120000e+02 : f32
    %717 = arith.divf %716, %cst_177 : f32
    %718 = vector.broadcast %707 : f32 to vector<16x32xf32>
    %719 = arith.subf %702, %718 : vector<16x32xf32>
    %cst_178 = arith.constant 9.99999996E-13 : f32
    %720 = arith.addf %717, %cst_178 : f32
    %721 = math.rsqrt %720 : f32
    %722 = vector.broadcast %721 : f32 to vector<16x32xf32>
    %723 = arith.mulf %719, %722 : vector<16x32xf32>
    %724 = arith.mulf %723, %83 : vector<16x32xf32>
    %725 = arith.addf %724, %84 : vector<16x32xf32>
    %c0_179 = arith.constant 0 : index
    %c80 = arith.constant 80 : index
    %c0_180 = arith.constant 0 : index
    %726 = vector.load %arg15[%c0_179, %c80, %c0_180] : memref<2x128x32xf32, #tpu.memory_space<vmem>>, vector<1x16x32xf32>
    %727 = vector.shape_cast %726 : vector<1x16x32xf32> to vector<16x32xf32>
    %728 = vector.shape_cast %725 : vector<16x32xf32> to vector<1x16x32xf32>
    tpu.vector_store %arg15[%c0_179, %c80, %c0_180], %728 {strides = array<i32>} : memref<2x128x32xf32, #tpu.memory_space<vmem>>, vector<1x16x32xf32>,
    %729 = vector.extract_strided_slice %701 {offsets = [16, 0], sizes = [16, 32], strides = [1, 1]} : vector<32x32xf32> to vector<16x32xf32>
    %730 = vector.shape_cast %729 : vector<16x32xf32> to vector<1x16x32xf32>
    %cst_181 = arith.constant dense<0.000000e+00> : vector<1xf32>
    %731 = vector.multi_reduction <add>, %730, %cst_181 [1, 2] : vector<1x16x32xf32> to vector<1xf32>
    %732 = vector.shape_cast %731 : vector<1xf32> to vector<1x1x1xf32>
    %733 = vector.extract %732[0, 0, 0] : f32 from vector<1x1x1xf32>
    %cst_182 = arith.constant 5.120000e+02 : f32
    %734 = arith.divf %733, %cst_182 : f32
    %735 = vector.broadcast %734 : f32 to vector<16x32xf32>
    %736 = arith.subf %729, %735 : vector<16x32xf32>
    %737 = vector.broadcast %734 : f32 to vector<16x32xf32>
    %738 = arith.subf %729, %737 : vector<16x32xf32>
    %739 = arith.mulf %736, %738 : vector<16x32xf32>
    %740 = vector.shape_cast %739 : vector<16x32xf32> to vector<1x16x32xf32>
    %cst_183 = arith.constant dense<0.000000e+00> : vector<1xf32>
    %741 = vector.multi_reduction <add>, %740, %cst_183 [1, 2] : vector<1x16x32xf32> to vector<1xf32>
    %742 = vector.shape_cast %741 : vector<1xf32> to vector<1x1x1xf32>
    %743 = vector.extract %742[0, 0, 0] : f32 from vector<1x1x1xf32>
    %cst_184 = arith.constant 5.120000e+02 : f32
    %744 = arith.divf %743, %cst_184 : f32
    %745 = vector.broadcast %734 : f32 to vector<16x32xf32>
    %746 = arith.subf %729, %745 : vector<16x32xf32>
    %cst_185 = arith.constant 9.99999996E-13 : f32
    %747 = arith.addf %744, %cst_185 : f32
    %748 = math.rsqrt %747 : f32
    %749 = vector.broadcast %748 : f32 to vector<16x32xf32>
    %750 = arith.mulf %746, %749 : vector<16x32xf32>
    %751 = arith.mulf %750, %83 : vector<16x32xf32>
    %752 = arith.addf %751, %84 : vector<16x32xf32>
    %c1_186 = arith.constant 1 : index
    %c80_187 = arith.constant 80 : index
    %c0_188 = arith.constant 0 : index
    %753 = vector.load %arg15[%c1_186, %c80_187, %c0_188] : memref<2x128x32xf32, #tpu.memory_space<vmem>>, vector<1x16x32xf32>
    %754 = vector.shape_cast %753 : vector<1x16x32xf32> to vector<16x32xf32>
    %755 = vector.shape_cast %752 : vector<16x32xf32> to vector<1x16x32xf32>
    tpu.vector_store %arg15[%c1_186, %c80_187, %c0_188], %755 {strides = array<i32>} : memref<2x128x32xf32, #tpu.memory_space<vmem>>, vector<1x16x32xf32>,
    %c6 = arith.constant 6 : index
    %c0_189 = arith.constant 0 : index
    %756 = tpu.strided_load %arg16[%c6, %c0_189] {strides = array<i32: 8, 1>} : memref<256x96xf32, #tpu.memory_space<vmem>>, vector<32x96xf32>
    %757 = vector.extract_strided_slice %756 {offsets = [0, 0], sizes = [32, 32], strides = [1, 1]} : vector<32x96xf32> to vector<32x32xf32>
    %758 = vector.extract_strided_slice %675 {offsets = [0, 0], sizes = [32, 32], strides = [1, 1]} : vector<32x288xf32> to vector<32x32xf32>
    %759 = arith.addf %757, %758 : vector<32x32xf32>
    %760 = arith.negf %759 : vector<32x32xf32>
    %761 = math.exp %760 : vector<32x32xf32>
    %cst_190 = arith.constant 1.000000e+00 : f32
    %762 = vector.broadcast %cst_190 : f32 to vector<32x32xf32>
    %763 = arith.addf %762, %761 : vector<32x32xf32>
    %764 = arith.divf %762, %763 : vector<32x32xf32>
    %765 = vector.extract_strided_slice %756 {offsets = [0, 32], sizes = [32, 32], strides = [1, 1]} : vector<32x96xf32> to vector<32x32xf32>
    %766 = vector.extract_strided_slice %675 {offsets = [0, 32], sizes = [32, 32], strides = [1, 1]} : vector<32x288xf32> to vector<32x32xf32>
    %767 = arith.addf %765, %766 : vector<32x32xf32>
    %768 = arith.negf %767 : vector<32x32xf32>
    %769 = math.exp %768 : vector<32x32xf32>
    %cst_191 = arith.constant 1.000000e+00 : f32
    %770 = vector.broadcast %cst_191 : f32 to vector<32x32xf32>
    %771 = arith.addf %770, %769 : vector<32x32xf32>
    %772 = arith.divf %770, %771 : vector<32x32xf32>
    %773 = vector.extract_strided_slice %756 {offsets = [0, 64], sizes = [32, 32], strides = [1, 1]} : vector<32x96xf32> to vector<32x32xf32>
    %774 = vector.extract_strided_slice %675 {offsets = [0, 64], sizes = [32, 32], strides = [1, 1]} : vector<32x288xf32> to vector<32x32xf32>
    %775 = arith.mulf %764, %774 : vector<32x32xf32>
    %776 = arith.addf %773, %775 : vector<32x32xf32>
    %777 = math.tanh %776 : vector<32x32xf32>
    %cst_192 = arith.constant 1.000000e+00 : f32
    %778 = vector.broadcast %cst_192 : f32 to vector<32x32xf32>
    %779 = arith.subf %778, %772 : vector<32x32xf32>
    %780 = arith.mulf %779, %777 : vector<32x32xf32>
    %781 = arith.mulf %772, %671 : vector<32x32xf32>
    %782 = arith.addf %780, %781 : vector<32x32xf32>
    %783 = tpu.concatenate %782, %701 in 1 : vector<32x32xf32>, vector<32x32xf32> -> vector<32x64xf32>
    %cst_193 = arith.constant dense<0.000000e+00> : vector<32x288xf32>
    %784 = tpu.matmul %783, %81, %cst_193 {dimension_numbers = #tpu.dot_dimension_numbers<[1], [0], [0], [1], [0, 0, 1, 1], [], []>} : vector<32x64xf32>, vector<64x288xf32>, vector<32x288xf32> -> vector<32x288xf32>
    %785 = vector.broadcast %82 : vector<1x288xf32> to vector<32x288xf32>
    %786 = arith.addf %784, %785 : vector<32x288xf32>
    %787 = vector.extract_strided_slice %786 {offsets = [0, 192], sizes = [32, 32], strides = [1, 1]} : vector<32x288xf32> to vector<32x32xf32>
    %788 = vector.extract_strided_slice %786 {offsets = [0, 96], sizes = [32, 32], strides = [1, 1]} : vector<32x288xf32> to vector<32x32xf32>
    %789 = arith.addf %787, %788 : vector<32x32xf32>
    %790 = arith.negf %789 : vector<32x32xf32>
    %791 = math.exp %790 : vector<32x32xf32>
    %cst_194 = arith.constant 1.000000e+00 : f32
    %792 = vector.broadcast %cst_194 : f32 to vector<32x32xf32>
    %793 = arith.addf %792, %791 : vector<32x32xf32>
    %794 = arith.divf %792, %793 : vector<32x32xf32>
    %795 = vector.extract_strided_slice %786 {offsets = [0, 224], sizes = [32, 32], strides = [1, 1]} : vector<32x288xf32> to vector<32x32xf32>
    %796 = vector.extract_strided_slice %786 {offsets = [0, 128], sizes = [32, 32], strides = [1, 1]} : vector<32x288xf32> to vector<32x32xf32>
    %797 = arith.addf %795, %796 : vector<32x32xf32>
    %798 = arith.negf %797 : vector<32x32xf32>
    %799 = math.exp %798 : vector<32x32xf32>
    %cst_195 = arith.constant 1.000000e+00 : f32
    %800 = vector.broadcast %cst_195 : f32 to vector<32x32xf32>
    %801 = arith.addf %800, %799 : vector<32x32xf32>
    %802 = arith.divf %800, %801 : vector<32x32xf32>
    %803 = vector.extract_strided_slice %786 {offsets = [0, 256], sizes = [32, 32], strides = [1, 1]} : vector<32x288xf32> to vector<32x32xf32>
    %804 = vector.extract_strided_slice %786 {offsets = [0, 160], sizes = [32, 32], strides = [1, 1]} : vector<32x288xf32> to vector<32x32xf32>
    %805 = arith.mulf %794, %804 : vector<32x32xf32>
    %806 = arith.addf %803, %805 : vector<32x32xf32>
    %807 = math.tanh %806 : vector<32x32xf32>
    %cst_196 = arith.constant 1.000000e+00 : f32
    %808 = vector.broadcast %cst_196 : f32 to vector<32x32xf32>
    %809 = arith.subf %808, %802 : vector<32x32xf32>
    %810 = arith.mulf %809, %807 : vector<32x32xf32>
    %811 = arith.mulf %802, %701 : vector<32x32xf32>
    %812 = arith.addf %810, %811 : vector<32x32xf32>
    %813 = vector.extract_strided_slice %812 {offsets = [0, 0], sizes = [16, 32], strides = [1, 1]} : vector<32x32xf32> to vector<16x32xf32>
    %814 = vector.shape_cast %813 : vector<16x32xf32> to vector<1x16x32xf32>
    %cst_197 = arith.constant dense<0.000000e+00> : vector<1xf32>
    %815 = vector.multi_reduction <add>, %814, %cst_197 [1, 2] : vector<1x16x32xf32> to vector<1xf32>
    %816 = vector.shape_cast %815 : vector<1xf32> to vector<1x1x1xf32>
    %817 = vector.extract %816[0, 0, 0] : f32 from vector<1x1x1xf32>
    %cst_198 = arith.constant 5.120000e+02 : f32
    %818 = arith.divf %817, %cst_198 : f32
    %819 = vector.broadcast %818 : f32 to vector<16x32xf32>
    %820 = arith.subf %813, %819 : vector<16x32xf32>
    %821 = vector.broadcast %818 : f32 to vector<16x32xf32>
    %822 = arith.subf %813, %821 : vector<16x32xf32>
    %823 = arith.mulf %820, %822 : vector<16x32xf32>
    %824 = vector.shape_cast %823 : vector<16x32xf32> to vector<1x16x32xf32>
    %cst_199 = arith.constant dense<0.000000e+00> : vector<1xf32>
    %825 = vector.multi_reduction <add>, %824, %cst_199 [1, 2] : vector<1x16x32xf32> to vector<1xf32>
    %826 = vector.shape_cast %825 : vector<1xf32> to vector<1x1x1xf32>
    %827 = vector.extract %826[0, 0, 0] : f32 from vector<1x1x1xf32>
    %cst_200 = arith.constant 5.120000e+02 : f32
    %828 = arith.divf %827, %cst_200 : f32
    %829 = vector.broadcast %818 : f32 to vector<16x32xf32>
    %830 = arith.subf %813, %829 : vector<16x32xf32>
    %cst_201 = arith.constant 9.99999996E-13 : f32
    %831 = arith.addf %828, %cst_201 : f32
    %832 = math.rsqrt %831 : f32
    %833 = vector.broadcast %832 : f32 to vector<16x32xf32>
    %834 = arith.mulf %830, %833 : vector<16x32xf32>
    %835 = arith.mulf %834, %83 : vector<16x32xf32>
    %836 = arith.addf %835, %84 : vector<16x32xf32>
    %c0_202 = arith.constant 0 : index
    %c96 = arith.constant 96 : index
    %c0_203 = arith.constant 0 : index
    %837 = vector.load %arg15[%c0_202, %c96, %c0_203] : memref<2x128x32xf32, #tpu.memory_space<vmem>>, vector<1x16x32xf32>
    %838 = vector.shape_cast %837 : vector<1x16x32xf32> to vector<16x32xf32>
    %839 = vector.shape_cast %836 : vector<16x32xf32> to vector<1x16x32xf32>
    tpu.vector_store %arg15[%c0_202, %c96, %c0_203], %839 {strides = array<i32>} : memref<2x128x32xf32, #tpu.memory_space<vmem>>, vector<1x16x32xf32>,
    %840 = vector.extract_strided_slice %812 {offsets = [16, 0], sizes = [16, 32], strides = [1, 1]} : vector<32x32xf32> to vector<16x32xf32>
    %841 = vector.shape_cast %840 : vector<16x32xf32> to vector<1x16x32xf32>
    %cst_204 = arith.constant dense<0.000000e+00> : vector<1xf32>
    %842 = vector.multi_reduction <add>, %841, %cst_204 [1, 2] : vector<1x16x32xf32> to vector<1xf32>
    %843 = vector.shape_cast %842 : vector<1xf32> to vector<1x1x1xf32>
    %844 = vector.extract %843[0, 0, 0] : f32 from vector<1x1x1xf32>
    %cst_205 = arith.constant 5.120000e+02 : f32
    %845 = arith.divf %844, %cst_205 : f32
    %846 = vector.broadcast %845 : f32 to vector<16x32xf32>
    %847 = arith.subf %840, %846 : vector<16x32xf32>
    %848 = vector.broadcast %845 : f32 to vector<16x32xf32>
    %849 = arith.subf %840, %848 : vector<16x32xf32>
    %850 = arith.mulf %847, %849 : vector<16x32xf32>
    %851 = vector.shape_cast %850 : vector<16x32xf32> to vector<1x16x32xf32>
    %cst_206 = arith.constant dense<0.000000e+00> : vector<1xf32>
    %852 = vector.multi_reduction <add>, %851, %cst_206 [1, 2] : vector<1x16x32xf32> to vector<1xf32>
    %853 = vector.shape_cast %852 : vector<1xf32> to vector<1x1x1xf32>
    %854 = vector.extract %853[0, 0, 0] : f32 from vector<1x1x1xf32>
    %cst_207 = arith.constant 5.120000e+02 : f32
    %855 = arith.divf %854, %cst_207 : f32
    %856 = vector.broadcast %845 : f32 to vector<16x32xf32>
    %857 = arith.subf %840, %856 : vector<16x32xf32>
    %cst_208 = arith.constant 9.99999996E-13 : f32
    %858 = arith.addf %855, %cst_208 : f32
    %859 = math.rsqrt %858 : f32
    %860 = vector.broadcast %859 : f32 to vector<16x32xf32>
    %861 = arith.mulf %857, %860 : vector<16x32xf32>
    %862 = arith.mulf %861, %83 : vector<16x32xf32>
    %863 = arith.addf %862, %84 : vector<16x32xf32>
    %c1_209 = arith.constant 1 : index
    %c96_210 = arith.constant 96 : index
    %c0_211 = arith.constant 0 : index
    %864 = vector.load %arg15[%c1_209, %c96_210, %c0_211] : memref<2x128x32xf32, #tpu.memory_space<vmem>>, vector<1x16x32xf32>
    %865 = vector.shape_cast %864 : vector<1x16x32xf32> to vector<16x32xf32>
    %866 = vector.shape_cast %863 : vector<16x32xf32> to vector<1x16x32xf32>
    tpu.vector_store %arg15[%c1_209, %c96_210, %c0_211], %866 {strides = array<i32>} : memref<2x128x32xf32, #tpu.memory_space<vmem>>, vector<1x16x32xf32>,
    %c7 = arith.constant 7 : index
    %c0_212 = arith.constant 0 : index
    %867 = tpu.strided_load %arg16[%c7, %c0_212] {strides = array<i32: 8, 1>} : memref<256x96xf32, #tpu.memory_space<vmem>>, vector<32x96xf32>
    %868 = vector.extract_strided_slice %867 {offsets = [0, 0], sizes = [32, 32], strides = [1, 1]} : vector<32x96xf32> to vector<32x32xf32>
    %869 = vector.extract_strided_slice %786 {offsets = [0, 0], sizes = [32, 32], strides = [1, 1]} : vector<32x288xf32> to vector<32x32xf32>
    %870 = arith.addf %868, %869 : vector<32x32xf32>
    %871 = arith.negf %870 : vector<32x32xf32>
    %872 = math.exp %871 : vector<32x32xf32>
    %cst_213 = arith.constant 1.000000e+00 : f32
    %873 = vector.broadcast %cst_213 : f32 to vector<32x32xf32>
    %874 = arith.addf %873, %872 : vector<32x32xf32>
    %875 = arith.divf %873, %874 : vector<32x32xf32>
    %876 = vector.extract_strided_slice %867 {offsets = [0, 32], sizes = [32, 32], strides = [1, 1]} : vector<32x96xf32> to vector<32x32xf32>
    %877 = vector.extract_strided_slice %786 {offsets = [0, 32], sizes = [32, 32], strides = [1, 1]} : vector<32x288xf32> to vector<32x32xf32>
    %878 = arith.addf %876, %877 : vector<32x32xf32>
    %879 = arith.negf %878 : vector<32x32xf32>
    %880 = math.exp %879 : vector<32x32xf32>
    %cst_214 = arith.constant 1.000000e+00 : f32
    %881 = vector.broadcast %cst_214 : f32 to vector<32x32xf32>
    %882 = arith.addf %881, %880 : vector<32x32xf32>
    %883 = arith.divf %881, %882 : vector<32x32xf32>
    %884 = vector.extract_strided_slice %867 {offsets = [0, 64], sizes = [32, 32], strides = [1, 1]} : vector<32x96xf32> to vector<32x32xf32>
    %885 = vector.extract_strided_slice %786 {offsets = [0, 64], sizes = [32, 32], strides = [1, 1]} : vector<32x288xf32> to vector<32x32xf32>
    %886 = arith.mulf %875, %885 : vector<32x32xf32>
    %887 = arith.addf %884, %886 : vector<32x32xf32>
    %888 = math.tanh %887 : vector<32x32xf32>
    %cst_215 = arith.constant 1.000000e+00 : f32
    %889 = vector.broadcast %cst_215 : f32 to vector<32x32xf32>
    %890 = arith.subf %889, %883 : vector<32x32xf32>
    %891 = arith.mulf %890, %888 : vector<32x32xf32>
    %892 = arith.mulf %883, %782 : vector<32x32xf32>
    %893 = arith.addf %891, %892 : vector<32x32xf32>
    %894 = tpu.concatenate %893, %812 in 1 : vector<32x32xf32>, vector<32x32xf32> -> vector<32x64xf32>
    %cst_216 = arith.constant dense<0.000000e+00> : vector<32x288xf32>
    %895 = tpu.matmul %894, %81, %cst_216 {dimension_numbers = #tpu.dot_dimension_numbers<[1], [0], [0], [1], [0, 0, 1, 1], [], []>} : vector<32x64xf32>, vector<64x288xf32>, vector<32x288xf32> -> vector<32x288xf32>
    %896 = vector.broadcast %82 : vector<1x288xf32> to vector<32x288xf32>
    %897 = arith.addf %895, %896 : vector<32x288xf32>
    %898 = vector.extract_strided_slice %897 {offsets = [0, 192], sizes = [32, 32], strides = [1, 1]} : vector<32x288xf32> to vector<32x32xf32>
    %899 = vector.extract_strided_slice %897 {offsets = [0, 96], sizes = [32, 32], strides = [1, 1]} : vector<32x288xf32> to vector<32x32xf32>
    %900 = arith.addf %898, %899 : vector<32x32xf32>
    %901 = arith.negf %900 : vector<32x32xf32>
    %902 = math.exp %901 : vector<32x32xf32>
    %cst_217 = arith.constant 1.000000e+00 : f32
    %903 = vector.broadcast %cst_217 : f32 to vector<32x32xf32>
    %904 = arith.addf %903, %902 : vector<32x32xf32>
    %905 = arith.divf %903, %904 : vector<32x32xf32>
    %906 = vector.extract_strided_slice %897 {offsets = [0, 224], sizes = [32, 32], strides = [1, 1]} : vector<32x288xf32> to vector<32x32xf32>
    %907 = vector.extract_strided_slice %897 {offsets = [0, 128], sizes = [32, 32], strides = [1, 1]} : vector<32x288xf32> to vector<32x32xf32>
    %908 = arith.addf %906, %907 : vector<32x32xf32>
    %909 = arith.negf %908 : vector<32x32xf32>
    %910 = math.exp %909 : vector<32x32xf32>
    %cst_218 = arith.constant 1.000000e+00 : f32
    %911 = vector.broadcast %cst_218 : f32 to vector<32x32xf32>
    %912 = arith.addf %911, %910 : vector<32x32xf32>
    %913 = arith.divf %911, %912 : vector<32x32xf32>
    %914 = vector.extract_strided_slice %897 {offsets = [0, 256], sizes = [32, 32], strides = [1, 1]} : vector<32x288xf32> to vector<32x32xf32>
    %915 = vector.extract_strided_slice %897 {offsets = [0, 160], sizes = [32, 32], strides = [1, 1]} : vector<32x288xf32> to vector<32x32xf32>
    %916 = arith.mulf %905, %915 : vector<32x32xf32>
    %917 = arith.addf %914, %916 : vector<32x32xf32>
    %918 = math.tanh %917 : vector<32x32xf32>
    %cst_219 = arith.constant 1.000000e+00 : f32
    %919 = vector.broadcast %cst_219 : f32 to vector<32x32xf32>
    %920 = arith.subf %919, %913 : vector<32x32xf32>
    %921 = arith.mulf %920, %918 : vector<32x32xf32>
    %922 = arith.mulf %913, %812 : vector<32x32xf32>
    %923 = arith.addf %921, %922 : vector<32x32xf32>
    %924 = vector.extract_strided_slice %923 {offsets = [0, 0], sizes = [16, 32], strides = [1, 1]} : vector<32x32xf32> to vector<16x32xf32>
    %925 = vector.shape_cast %924 : vector<16x32xf32> to vector<1x16x32xf32>
    %cst_220 = arith.constant dense<0.000000e+00> : vector<1xf32>
    %926 = vector.multi_reduction <add>, %925, %cst_220 [1, 2] : vector<1x16x32xf32> to vector<1xf32>
    %927 = vector.shape_cast %926 : vector<1xf32> to vector<1x1x1xf32>
    %928 = vector.extract %927[0, 0, 0] : f32 from vector<1x1x1xf32>
    %cst_221 = arith.constant 5.120000e+02 : f32
    %929 = arith.divf %928, %cst_221 : f32
    %930 = vector.broadcast %929 : f32 to vector<16x32xf32>
    %931 = arith.subf %924, %930 : vector<16x32xf32>
    %932 = vector.broadcast %929 : f32 to vector<16x32xf32>
    %933 = arith.subf %924, %932 : vector<16x32xf32>
    %934 = arith.mulf %931, %933 : vector<16x32xf32>
    %935 = vector.shape_cast %934 : vector<16x32xf32> to vector<1x16x32xf32>
    %cst_222 = arith.constant dense<0.000000e+00> : vector<1xf32>
    %936 = vector.multi_reduction <add>, %935, %cst_222 [1, 2] : vector<1x16x32xf32> to vector<1xf32>
    %937 = vector.shape_cast %936 : vector<1xf32> to vector<1x1x1xf32>
    %938 = vector.extract %937[0, 0, 0] : f32 from vector<1x1x1xf32>
    %cst_223 = arith.constant 5.120000e+02 : f32
    %939 = arith.divf %938, %cst_223 : f32
    %940 = vector.broadcast %929 : f32 to vector<16x32xf32>
    %941 = arith.subf %924, %940 : vector<16x32xf32>
    %cst_224 = arith.constant 9.99999996E-13 : f32
    %942 = arith.addf %939, %cst_224 : f32
    %943 = math.rsqrt %942 : f32
    %944 = vector.broadcast %943 : f32 to vector<16x32xf32>
    %945 = arith.mulf %941, %944 : vector<16x32xf32>
    %946 = arith.mulf %945, %83 : vector<16x32xf32>
    %947 = arith.addf %946, %84 : vector<16x32xf32>
    %c0_225 = arith.constant 0 : index
    %c112 = arith.constant 112 : index
    %c0_226 = arith.constant 0 : index
    %948 = vector.load %arg15[%c0_225, %c112, %c0_226] : memref<2x128x32xf32, #tpu.memory_space<vmem>>, vector<1x16x32xf32>
    %949 = vector.shape_cast %948 : vector<1x16x32xf32> to vector<16x32xf32>
    %950 = vector.shape_cast %947 : vector<16x32xf32> to vector<1x16x32xf32>
    tpu.vector_store %arg15[%c0_225, %c112, %c0_226], %950 {strides = array<i32>} : memref<2x128x32xf32, #tpu.memory_space<vmem>>, vector<1x16x32xf32>,
    %951 = vector.extract_strided_slice %923 {offsets = [16, 0], sizes = [16, 32], strides = [1, 1]} : vector<32x32xf32> to vector<16x32xf32>
    %952 = vector.shape_cast %951 : vector<16x32xf32> to vector<1x16x32xf32>
    %cst_227 = arith.constant dense<0.000000e+00> : vector<1xf32>
    %953 = vector.multi_reduction <add>, %952, %cst_227 [1, 2] : vector<1x16x32xf32> to vector<1xf32>
    %954 = vector.shape_cast %953 : vector<1xf32> to vector<1x1x1xf32>
    %955 = vector.extract %954[0, 0, 0] : f32 from vector<1x1x1xf32>
    %cst_228 = arith.constant 5.120000e+02 : f32
    %956 = arith.divf %955, %cst_228 : f32
    %957 = vector.broadcast %956 : f32 to vector<16x32xf32>
    %958 = arith.subf %951, %957 : vector<16x32xf32>
    %959 = vector.broadcast %956 : f32 to vector<16x32xf32>
    %960 = arith.subf %951, %959 : vector<16x32xf32>
    %961 = arith.mulf %958, %960 : vector<16x32xf32>
    %962 = vector.shape_cast %961 : vector<16x32xf32> to vector<1x16x32xf32>
    %cst_229 = arith.constant dense<0.000000e+00> : vector<1xf32>
    %963 = vector.multi_reduction <add>, %962, %cst_229 [1, 2] : vector<1x16x32xf32> to vector<1xf32>
    %964 = vector.shape_cast %963 : vector<1xf32> to vector<1x1x1xf32>
    %965 = vector.extract %964[0, 0, 0] : f32 from vector<1x1x1xf32>
    %cst_230 = arith.constant 5.120000e+02 : f32
    %966 = arith.divf %965, %cst_230 : f32
    %967 = vector.broadcast %956 : f32 to vector<16x32xf32>
    %968 = arith.subf %951, %967 : vector<16x32xf32>
    %cst_231 = arith.constant 9.99999996E-13 : f32
    %969 = arith.addf %966, %cst_231 : f32
    %970 = math.rsqrt %969 : f32
    %971 = vector.broadcast %970 : f32 to vector<16x32xf32>
    %972 = arith.mulf %968, %971 : vector<16x32xf32>
    %973 = arith.mulf %972, %83 : vector<16x32xf32>
    %974 = arith.addf %973, %84 : vector<16x32xf32>
    %c1_232 = arith.constant 1 : index
    %c112_233 = arith.constant 112 : index
    %c0_234 = arith.constant 0 : index
    %975 = vector.load %arg15[%c1_232, %c112_233, %c0_234] : memref<2x128x32xf32, #tpu.memory_space<vmem>>, vector<1x16x32xf32>
    %976 = vector.shape_cast %975 : vector<1x16x32xf32> to vector<16x32xf32>
    %977 = vector.shape_cast %974 : vector<16x32xf32> to vector<1x16x32xf32>
    tpu.vector_store %arg15[%c1_232, %c112_233, %c0_234], %977 {strides = array<i32>} : memref<2x128x32xf32, #tpu.memory_space<vmem>>, vector<1x16x32xf32>,
    return
  }
  func.func @transform_0(%arg0: i32) -> (i32, i32, i32) {
    %c0_i32 = arith.constant 0 : i32
    %c0_i32_0 = arith.constant 0 : i32
    %c0_i32_1 = arith.constant 0 : i32
    return %arg0, %c0_i32, %c0_i32_0 : i32, i32, i32
  }
  func.func @transform_1(%arg0: i32) -> (i32, i32) {
    %c0_i32 = arith.constant 0 : i32
    %c0_i32_0 = arith.constant 0 : i32
    %c0_i32_1 = arith.constant 0 : i32
    return %c0_i32, %c0_i32_0 : i32, i32
  }
  func.func @transform_2(%arg0: i32) -> (i32, i32) {
    %c0_i32 = arith.constant 0 : i32
    %c0_i32_0 = arith.constant 0 : i32
    %c0_i32_1 = arith.constant 0 : i32
    return %c0_i32, %c0_i32_0 : i32, i32
  }
  func.func @transform_3(%arg0: i32) -> (i32, i32) {
    %c0_i32 = arith.constant 0 : i32
    %c0_i32_0 = arith.constant 0 : i32
    %c0_i32_1 = arith.constant 0 : i32
    return %c0_i32, %c0_i32_0 : i32, i32
  }
  func.func @transform_4(%arg0: i32) -> (i32, i32) {
    %c0_i32 = arith.constant 0 : i32
    %c0_i32_0 = arith.constant 0 : i32
    %c0_i32_1 = arith.constant 0 : i32
    return %c0_i32, %c0_i32_0 : i32, i32
  }
  func.func @transform_5(%arg0: i32) -> (i32, i32) {
    %c0_i32 = arith.constant 0 : i32
    %c0_i32_0 = arith.constant 0 : i32
    %c0_i32_1 = arith.constant 0 : i32
    return %c0_i32, %c0_i32_0 : i32, i32
  }
  func.func @transform_6(%arg0: i32) -> (i32, i32) {
    %c0_i32 = arith.constant 0 : i32
    %c0_i32_0 = arith.constant 0 : i32
    %c0_i32_1 = arith.constant 0 : i32
    return %c0_i32, %c0_i32_0 : i32, i32
  }
  func.func @transform_7(%arg0: i32) -> (i32, i32) {
    %c0_i32 = arith.constant 0 : i32
    %c0_i32_0 = arith.constant 0 : i32
    %c0_i32_1 = arith.constant 0 : i32
    return %c0_i32, %c0_i32_0 : i32, i32
  }
  func.func @transform_8(%arg0: i32) -> (i32, i32) {
    %c0_i32 = arith.constant 0 : i32
    %c0_i32_0 = arith.constant 0 : i32
    %c0_i32_1 = arith.constant 0 : i32
    return %c0_i32, %c0_i32_0 : i32, i32
  }
  func.func @transform_9(%arg0: i32) -> (i32, i32) {
    %c0_i32 = arith.constant 0 : i32
    %c0_i32_0 = arith.constant 0 : i32
    %c0_i32_1 = arith.constant 0 : i32
    return %c0_i32, %c0_i32_0 : i32, i32
  }
  func.func @transform_10(%arg0: i32) -> (i32, i32) {
    %c0_i32 = arith.constant 0 : i32
    %c0_i32_0 = arith.constant 0 : i32
    %c0_i32_1 = arith.constant 0 : i32
    return %c0_i32, %c0_i32_0 : i32, i32
  }
  func.func @transform_11(%arg0: i32) -> (i32, i32) {
    %c0_i32 = arith.constant 0 : i32
    %c0_i32_0 = arith.constant 0 : i32
    %c0_i32_1 = arith.constant 0 : i32
    return %c0_i32, %c0_i32_0 : i32, i32
  }
  func.func @transform_12(%arg0: i32) -> (i32, i32) {
    %c0_i32 = arith.constant 0 : i32
    %c0_i32_0 = arith.constant 0 : i32
    %c0_i32_1 = arith.constant 0 : i32
    return %c0_i32, %c0_i32_0 : i32, i32
  }
  func.func @transform_13(%arg0: i32) -> (i32, i32) {
    %c0_i32 = arith.constant 0 : i32
    %c0_i32_0 = arith.constant 0 : i32
    %c0_i32_1 = arith.constant 0 : i32
    return %c0_i32, %c0_i32_0 : i32, i32
  }
  func.func @transform_14(%arg0: i32) -> (i32, i32, i32) {
    %c0_i32 = arith.constant 0 : i32
    %c0_i32_0 = arith.constant 0 : i32
    %c0_i32_1 = arith.constant 0 : i32
    return %arg0, %c0_i32, %c0_i32_0 : i32, i32, i32
  }
}

</mosaic_0001>

<llo_original>
// kernel: st_conv_block_gru.1
$region0: #{st_conv_block_gru.1}
  #allocation0 [shape = 'u32[]', space=smem, size = 0x4, offset = 0x4, fixed_abs, tag = 'smem constant byte address 0x4 - core index']
  #allocation1 [shape = 'u32[72,128]{1,0:T(1,128)}', space=vmem, size = 0x9000, scoped, tag = 'internal scratch']
  #allocation2 [shape = 'f32[256,96]{1,0:T(8,128)}', space=vmem, size = 0x20000, scoped, tag = 'scratch operand']
  %s0 = inlined_call_operand.vmem [shape: f32[2,128,4], index: 0, kind: input, shape index: {}]
  %s1 = inlined_call_operand.vmem [shape: f32[128,128], index: 1, kind: input, shape index: {}]
  %s2 = inlined_call_operand.vmem [shape: f32[12,64], index: 2, kind: input, shape index: {}]
  %s3 = inlined_call_operand.vmem [shape: f32[1,64], index: 3, kind: input, shape index: {}]
  %s4 = inlined_call_operand.vmem [shape: f32[96,32], index: 4, kind: input, shape index: {}]
  %s5 = inlined_call_operand.vmem [shape: f32[1,32], index: 5, kind: input, shape index: {}]
  %s6 = inlined_call_operand.vmem [shape: f32[96,64], index: 6, kind: input, shape index: {}]
  %s7 = inlined_call_operand.vmem [shape: f32[1,64], index: 7, kind: input, shape index: {}]
  %s8 = inlined_call_operand.vmem [shape: f32[32,96], index: 8, kind: input, shape index: {}]
  %s9 = inlined_call_operand.vmem [shape: f32[1,96], index: 9, kind: input, shape index: {}]
  %s10 = inlined_call_operand.vmem [shape: f32[64,288], index: 10, kind: input, shape index: {}]
  %s11 = inlined_call_operand.vmem [shape: f32[1,288], index: 11, kind: input, shape index: {}]
  %s12 = inlined_call_operand.vmem [shape: f32[16,32], index: 12, kind: input, shape index: {}]
  %s13 = inlined_call_operand.vmem [shape: f32[16,32], index: 13, kind: input, shape index: {}]
  %s14 = inlined_call_operand.hbm [shape: f32[2,128,32], index: 14, kind: output, shape index: {}]
  %s15 = sld [smem:[#allocation0]]
  $region66: #{st_conv_block_gru.1} parent=0
    _
  %s17 = ssub.s32 1, %s15
  %s18 = scalar_select 0, %s17, %s15
  $region1: #{st_conv_block_gru.1} parent=0
    #allocation3 [shape = 'u8[131072]{0}', space=vmem, size = 0x20000, scoped, tag = 'output window, operand 0, single buffered']
    #allocation4 [shape = 's32[1]{0}', space=sflag, size = 0x4, scoped, tag = 'scoped memory for st_conv_block_gru.1']
    %19 = vsyncpa [#allocation4], 0
    // Predicated region
    $region2: #{st_conv_block_gru.1} parent=1 // pred_check
      _
    $region3: #{st_conv_block_gru.1} parent=1 // pred_check_branch
      %21 = sbr.rel (0) target = $region5
    $region4: #{st_conv_block_gru.1} parent=1 // pred_region
      _
    $region5: #{st_conv_block_gru.1} parent=1 // pred_fallthru
      _
    // Predicated region
    $region6: #{st_conv_block_gru.1} parent=1 // pred_check
      _
    $region7: #{st_conv_block_gru.1} parent=1 // pred_check_branch
      %23 = sbr.rel (0) target = $region9
    $region8: #{st_conv_block_gru.1} parent=1 // pred_region
      _
    $region9: #{st_conv_block_gru.1} parent=1 // pred_fallthru
      _
    // Predicated region
    $region10: #{st_conv_block_gru.1} parent=1 // pred_check
      _
    $region11: #{st_conv_block_gru.1} parent=1 // pred_check_branch
      %25 = sbr.rel (0) target = $region13
    $region12: #{st_conv_block_gru.1} parent=1 // pred_region
      _
    $region13: #{st_conv_block_gru.1} parent=1 // pred_fallthru
      _
    // Predicated region
    $region14: #{st_conv_block_gru.1} parent=1 // pred_check
      _
    $region15: #{st_conv_block_gru.1} parent=1 // pred_check_branch
      %27 = sbr.rel (0) target = $region17
    $region16: #{st_conv_block_gru.1} parent=1 // pred_region
      _
    $region17: #{st_conv_block_gru.1} parent=1 // pred_fallthru
      _
    // Predicated region
    $region18: #{st_conv_block_gru.1} parent=1 // pred_check
      _
    $region19: #{st_conv_block_gru.1} parent=1 // pred_check_branch
      %29 = sbr.rel (0) target = $region21
    $region20: #{st_conv_block_gru.1} parent=1 // pred_region
      _
    $region21: #{st_conv_block_gru.1} parent=1 // pred_fallthru
      _
    // Predicated region
    $region22: #{st_conv_block_gru.1} parent=1 // pred_check
      _
    $region23: #{st_conv_block_gru.1} parent=1 // pred_check_branch
      %31 = sbr.rel (0) target = $region25
    $region24: #{st_conv_block_gru.1} parent=1 // pred_region
      _
    $region25: #{st_conv_block_gru.1} parent=1 // pred_fallthru
      _
    // Predicated region
    $region26: #{st_conv_block_gru.1} parent=1 // pred_check
      _
    $region27: #{st_conv_block_gru.1} parent=1 // pred_check_branch
      %33 = sbr.rel (0) target = $region29
    $region28: #{st_conv_block_gru.1} parent=1 // pred_region
      _
    $region29: #{st_conv_block_gru.1} parent=1 // pred_fallthru
      _
    // Predicated region
    $region30: #{st_conv_block_gru.1} parent=1 // pred_check
      _
    $region31: #{st_conv_block_gru.1} parent=1 // pred_check_branch
      %35 = sbr.rel (0) target = $region33
    $region32: #{st_conv_block_gru.1} parent=1 // pred_region
      _
    $region33: #{st_conv_block_gru.1} parent=1 // pred_fallthru
      _
    // Predicated region
    $region34: #{st_conv_block_gru.1} parent=1 // pred_check
      _
    $region35: #{st_conv_block_gru.1} parent=1 // pred_check_branch
      %37 = sbr.rel (0) target = $region37
    $region36: #{st_conv_block_gru.1} parent=1 // pred_region
      _
    $region37: #{st_conv_block_gru.1} parent=1 // pred_fallthru
      _
    // Predicated region
    $region38: #{st_conv_block_gru.1} parent=1 // pred_check
      _
    $region39: #{st_conv_block_gru.1} parent=1 // pred_check_branch
      %39 = sbr.rel (0) target = $region41
    $region40: #{st_conv_block_gru.1} parent=1 // pred_region
      _
    $region41: #{st_conv_block_gru.1} parent=1 // pred_fallthru
      _
    // Predicated region
    $region42: #{st_conv_block_gru.1} parent=1 // pred_check
      _
    $region43: #{st_conv_block_gru.1} parent=1 // pred_check_branch
      %41 = sbr.rel (0) target = $region45
    $region44: #{st_conv_block_gru.1} parent=1 // pred_region
      _
    $region45: #{st_conv_block_gru.1} parent=1 // pred_fallthru
      _
    // Predicated region
    $region46: #{st_conv_block_gru.1} parent=1 // pred_check
      _
    $region47: #{st_conv_block_gru.1} parent=1 // pred_check_branch
      %43 = sbr.rel (0) target = $region49
    $region48: #{st_conv_block_gru.1} parent=1 // pred_region
      _
    $region49: #{st_conv_block_gru.1} parent=1 // pred_fallthru
      _
    // Predicated region
    $region50: #{st_conv_block_gru.1} parent=1 // pred_check
      _
    $region51: #{st_conv_block_gru.1} parent=1 // pred_check_branch
      %45 = sbr.rel (0) target = $region53
    $region52: #{st_conv_block_gru.1} parent=1 // pred_region
      _
    $region53: #{st_conv_block_gru.1} parent=1 // pred_fallthru
      _
    // Predicated region
    $region54: #{st_conv_block_gru.1} parent=1 // pred_check
      _
    $region55: #{st_conv_block_gru.1} parent=1 // pred_check_branch
      %47 = sbr.rel (0) target = $region57
    $region56: #{st_conv_block_gru.1} parent=1 // pred_region
      _
    $region57: #{st_conv_block_gru.1} parent=1 // pred_fallthru
      _
    %v48 = vld [vmem:[%s0] sm:$0xff]
    %v49 = vld [vmem:[%s0 + $0x8] sm:$0xff]
    %v50 = vld [vmem:[%s0 + $0x10] sm:$0xff]
    %v51 = vld [vmem:[%s0 + $0x18] sm:$0xff]
    %v52 = vld [vmem:[%s0 + $0x20] sm:$0xff]
    %v53 = vld [vmem:[%s0 + $0x28] sm:$0xff]
    %v54 = vld [vmem:[%s0 + $0x30] sm:$0xff]
    %v55 = vld [vmem:[%s0 + $0x38] sm:$0xff]
    %v56 = vld [vmem:[%s0 + $0x40] sm:$0xff]
    %v57 = vld [vmem:[%s0 + $0x48] sm:$0xff]
    %v58 = vld [vmem:[%s0 + $0x50] sm:$0xff]
    %v59 = vld [vmem:[%s0 + $0x58] sm:$0xff]
    %v60 = vld [vmem:[%s0 + $0x60] sm:$0xff]
    %v61 = vld [vmem:[%s0 + $0x68] sm:$0xff]
    %v62 = vld [vmem:[%s0 + $0x70] sm:$0xff]
    %v63 = vld [vmem:[%s0 + $0x78] sm:$0xff]
    %v64 = vld [vmem:[%s0 + $0x80] sm:$0xff]
    %v65 = vld [vmem:[%s0 + $0x88] sm:$0xff]
    %v66 = vld [vmem:[%s0 + $0x90] sm:$0xff]
    %v67 = vld [vmem:[%s0 + $0x98] sm:$0xff]
    %v68 = vld [vmem:[%s0 + $0xa0] sm:$0xff]
    %v69 = vld [vmem:[%s0 + $0xa8] sm:$0xff]
    %v70 = vld [vmem:[%s0 + $0xb0] sm:$0xff]
    %v71 = vld [vmem:[%s0 + $0xb8] sm:$0xff]
    %v72 = vld [vmem:[%s0 + $0xc0] sm:$0xff]
    %v73 = vld [vmem:[%s0 + $0xc8] sm:$0xff]
    %v74 = vld [vmem:[%s0 + $0xd0] sm:$0xff]
    %v75 = vld [vmem:[%s0 + $0xd8] sm:$0xff]
    %v76 = vld [vmem:[%s0 + $0xe0] sm:$0xff]
    %v77 = vld [vmem:[%s0 + $0xe8] sm:$0xff]
    %v78 = vld [vmem:[%s0 + $0xf0] sm:$0xff]
    %v79 = vld [vmem:[%s0 + $0xf8] sm:$0xff]
    %v80 = vld [vmem:[%s2] sm:$0xff]
    %v81 = vld [vmem:[%s2 + $0x8] sm:$0xf]
    %v82 = vld [vmem:[%s3] sm:$0x1]
    %112 = vrot.lane.b32.xlu0 0.0, 4
    %v113 = vpop.permute.xlu0 %112
    %114 = vrot.lane.b32.xlu0 %v48, 4
    %v115 = vpop.permute.xlu0 %114
    %116 = vrot.lane.b32.xlu0 %v49, 4
    %v117 = vpop.permute.xlu0 %116
    %118 = vrot.lane.b32.xlu0 %v50, 4
    %v119 = vpop.permute.xlu0 %118
    %120 = vrot.lane.b32.xlu0 %v51, 4
    %v121 = vpop.permute.xlu0 %120
    %122 = vrot.lane.b32.xlu0 %v52, 4
    %v123 = vpop.permute.xlu0 %122
    %124 = vrot.lane.b32.xlu0 %v53, 4
    %v125 = vpop.permute.xlu0 %124
    %126 = vrot.lane.b32.xlu0 %v54, 4
    %v127 = vpop.permute.xlu0 %126
    %128 = vrot.lane.b32.xlu0 %v55, 4
    %v129 = vpop.permute.xlu0 %128
    %130 = vrot.lane.b32.xlu0 %v56, 4
    %v131 = vpop.permute.xlu0 %130
    %132 = vrot.lane.b32.xlu0 %v57, 4
    %v133 = vpop.permute.xlu0 %132
    %134 = vrot.lane.b32.xlu0 %v58, 4
    %v135 = vpop.permute.xlu0 %134
    %136 = vrot.lane.b32.xlu0 %v59, 4
    %v137 = vpop.permute.xlu0 %136
    %138 = vrot.lane.b32.xlu0 %v60, 4
    %v139 = vpop.permute.xlu0 %138
    %140 = vrot.lane.b32.xlu0 %v61, 4
    %v141 = vpop.permute.xlu0 %140
    %142 = vrot.lane.b32.xlu0 %v64, 4
    %v143 = vpop.permute.xlu0 %142
    %144 = vrot.lane.b32.xlu0 %v65, 4
    %v145 = vpop.permute.xlu0 %144
    %146 = vrot.lane.b32.xlu0 %v66, 4
    %v147 = vpop.permute.xlu0 %146
    %148 = vrot.lane.b32.xlu0 %v67, 4
    %v149 = vpop.permute.xlu0 %148
    %150 = vrot.lane.b32.xlu0 %v68, 4
    %v151 = vpop.permute.xlu0 %150
    %152 = vrot.lane.b32.xlu0 %v69, 4
    %v153 = vpop.permute.xlu0 %152
    %154 = vrot.lane.b32.xlu0 %v70, 4
    %v155 = vpop.permute.xlu0 %154
    %156 = vrot.lane.b32.xlu0 %v71, 4
    %v157 = vpop.permute.xlu0 %156
    %158 = vrot.lane.b32.xlu0 %v72, 4
    %v159 = vpop.permute.xlu0 %158
    %160 = vrot.lane.b32.xlu0 %v73, 4
    %v161 = vpop.permute.xlu0 %160
    %162 = vrot.lane.b32.xlu0 %v74, 4
    %v163 = vpop.permute.xlu0 %162
    %164 = vrot.lane.b32.xlu0 %v75, 4
    %v165 = vpop.permute.xlu0 %164
    %166 = vrot.lane.b32.xlu0 %v76, 4
    %v167 = vpop.permute.xlu0 %166
    %168 = vrot.lane.b32.xlu0 %v77, 4
    %v169 = vpop.permute.xlu0 %168
    %203 = vrot.lane.b32.xlu0 %v48, 8
    %v204 = vpop.permute.xlu0 %203
    %205 = vrot.lane.b32.xlu0 %v49, 8
    %v206 = vpop.permute.xlu0 %205
    %207 = vrot.lane.b32.xlu0 %v50, 8
    %v208 = vpop.permute.xlu0 %207
    %209 = vrot.lane.b32.xlu0 %v51, 8
    %v210 = vpop.permute.xlu0 %209
    %211 = vrot.lane.b32.xlu0 %v52, 8
    %v212 = vpop.permute.xlu0 %211
    %213 = vrot.lane.b32.xlu0 %v53, 8
    %v214 = vpop.permute.xlu0 %213
    %215 = vrot.lane.b32.xlu0 %v54, 8
    %v216 = vpop.permute.xlu0 %215
    %217 = vrot.lane.b32.xlu0 %v55, 8
    %v218 = vpop.permute.xlu0 %217
    %219 = vrot.lane.b32.xlu0 %v56, 8
    %v220 = vpop.permute.xlu0 %219
    %221 = vrot.lane.b32.xlu0 %v57, 8
    %v222 = vpop.permute.xlu0 %221
    %223 = vrot.lane.b32.xlu0 %v58, 8
    %v224 = vpop.permute.xlu0 %223
    %225 = vrot.lane.b32.xlu0 %v59, 8
    %v226 = vpop.permute.xlu0 %225
    %227 = vrot.lane.b32.xlu0 %v60, 8
    %v228 = vpop.permute.xlu0 %227
    %229 = vrot.lane.b32.xlu0 %v61, 8
    %v230 = vpop.permute.xlu0 %229
    %231 = vrot.lane.b32.xlu0 %v62, 8
    %v232 = vpop.permute.xlu0 %231
    %233 = vrot.lane.b32.xlu0 %v63, 8
    %v234 = vpop.permute.xlu0 %233
    %235 = vrot.lane.b32.xlu0 %v64, 8
    %v236 = vpop.permute.xlu0 %235
    %237 = vrot.lane.b32.xlu0 %v65, 8
    %v238 = vpop.permute.xlu0 %237
    %239 = vrot.lane.b32.xlu0 %v66, 8
    %v240 = vpop.permute.xlu0 %239
    %241 = vrot.lane.b32.xlu0 %v67, 8
    %v242 = vpop.permute.xlu0 %241
    %243 = vrot.lane.b32.xlu0 %v68, 8
    %v244 = vpop.permute.xlu0 %243
    %245 = vrot.lane.b32.xlu0 %v69, 8
    %v246 = vpop.permute.xlu0 %245
    %247 = vrot.lane.b32.xlu0 %v70, 8
    %v248 = vpop.permute.xlu0 %247
    %249 = vrot.lane.b32.xlu0 %v71, 8
    %v250 = vpop.permute.xlu0 %249
    %251 = vrot.lane.b32.xlu0 %v72, 8
    %v252 = vpop.permute.xlu0 %251
    %253 = vrot.lane.b32.xlu0 %v73, 8
    %v254 = vpop.permute.xlu0 %253
    %255 = vrot.lane.b32.xlu0 %v74, 8
    %v256 = vpop.permute.xlu0 %255
    %257 = vrot.lane.b32.xlu0 %v75, 8
    %v258 = vpop.permute.xlu0 %257
    %259 = vrot.lane.b32.xlu0 %v76, 8
    %v260 = vpop.permute.xlu0 %259
    %261 = vrot.lane.b32.xlu0 %v77, 8
    %v262 = vpop.permute.xlu0 %261
    %263 = vrot.lane.b32.xlu0 %v78, 8
    %v264 = vpop.permute.xlu0 %263
    %265 = vrot.lane.b32.xlu0 %v79, 8
    %v266 = vpop.permute.xlu0 %265
    %vm299 = vcmask 31744
    %v300 = vsel %vm299, 0.0, %v113
    %v301 = vsel %vm299, 0.0, %v115
    %v302 = vsel %vm299, 0.0, %v117
    %v303 = vsel %vm299, %v48, %v119
    %v304 = vsel %vm299, %v49, %v121
    %v305 = vsel %vm299, %v50, %v123
    %v306 = vsel %vm299, %v51, %v125
    %v307 = vsel %vm299, %v52, %v127
    %v308 = vsel %vm299, %v53, %v129
    %v309 = vsel %vm299, %v54, %v131
    %v310 = vsel %vm299, %v55, %v133
    %v311 = vsel %vm299, %v56, %v135
    %v312 = vsel %vm299, %v57, %v137
    %v313 = vsel %vm299, %v58, %v139
    %v314 = vsel %vm299, %v59, %v141
    %v315 = vsel %vm299, 0.0, %v143
    %v316 = vsel %vm299, 0.0, %v145
    %v317 = vsel %vm299, %v64, %v147
    %v318 = vsel %vm299, %v65, %v149
    %v319 = vsel %vm299, %v66, %v151
    %v320 = vsel %vm299, %v67, %v153
    %v321 = vsel %vm299, %v68, %v155
    %v322 = vsel %vm299, %v69, %v157
    %v323 = vsel %vm299, %v70, %v159
    %v324 = vsel %vm299, %v71, %v161
    %v325 = vsel %vm299, %v72, %v163
    %v326 = vsel %vm299, %v73, %v165
    %v327 = vsel %vm299, %v74, %v167
    %v328 = vsel %vm299, %v75, %v169
    %vm329 = vcmask 64512
    %v330 = vsel %vm329, %v300, %v204
    %v331 = vsel %vm329, %v300, %v206
    %v332 = vsel %vm329, %v301, %v208
    %v333 = vsel %vm329, %v302, %v210
    %v334 = vsel %vm329, %v303, %v212
    %v335 = vsel %vm329, %v304, %v214
    %v336 = vsel %vm329, %v305, %v216
    %v337 = vsel %vm329, %v306, %v218
    %v338 = vsel %vm329, %v307, %v220
    %v339 = vsel %vm329, %v308, %v222
    %v340 = vsel %vm329, %v309, %v224
    %v341 = vsel %vm329, %v310, %v226
    %v342 = vsel %vm329, %v311, %v228
    %v343 = vsel %vm329, %v312, %v230
    %v344 = vsel %vm329, %v313, %v232
    %v345 = vsel %vm329, %v314, %v234
    %v346 = vsel %vm329, %v300, %v236
    %v347 = vsel %vm329, %v300, %v238
    %v348 = vsel %vm329, %v315, %v240
    %v349 = vsel %vm329, %v316, %v242
    %v350 = vsel %vm329, %v317, %v244
    %v351 = vsel %vm329, %v318, %v246
    %v352 = vsel %vm329, %v319, %v248
    %v353 = vsel %vm329, %v320, %v250
    %v354 = vsel %vm329, %v321, %v252
    %v355 = vsel %vm329, %v322, %v254
    %v356 = vsel %vm329, %v323, %v256
    %v357 = vsel %vm329, %v324, %v258
    %v358 = vsel %vm329, %v325, %v260
    %v359 = vsel %vm329, %v326, %v262
    %v360 = vsel %vm329, %v327, %v264
    %v361 = vsel %vm329, %v328, %v266
    %v363 = vperm.slane %v82, 0
    %vm365 = vcmask 97280
    %v367 = vsel %vm365, %v330, 0
    %v370 = vsel %vm365, %v331, 0
    %v373 = vsel %vm365, %v332, 0
    %v376 = vsel %vm365, %v333, 0
    %v379 = vsel %vm365, %v334, 0
    %v382 = vsel %vm365, %v335, 0
    %v385 = vsel %vm365, %v336, 0
    %v388 = vsel %vm365, %v337, 0
    %v391 = vsel %vm365, %v338, 0
    %v394 = vsel %vm365, %v339, 0
    %v397 = vsel %vm365, %v340, 0
    %v400 = vsel %vm365, %v341, 0
    %v403 = vsel %vm365, %v342, 0
    %v406 = vsel %vm365, %v343, 0
    %v409 = vsel %vm365, %v344, 0
    %v412 = vsel %vm365, %v345, 0
    %v415 = vsel %vm365, %v346, 0
    %v418 = vsel %vm365, %v347, 0
    %v421 = vsel %vm365, %v348, 0
    %v424 = vsel %vm365, %v349, 0
    %v427 = vsel %vm365, %v350, 0
    %v430 = vsel %vm365, %v351, 0
    %v433 = vsel %vm365, %v352, 0
    %v436 = vsel %vm365, %v353, 0
    %v439 = vsel %vm365, %v354, 0
    %v442 = vsel %vm365, %v355, 0
    %v445 = vsel %vm365, %v356, 0
    %v448 = vsel %vm365, %v357, 0
    %v451 = vsel %vm365, %v358, 0
    %v454 = vsel %vm365, %v359, 0
    %v457 = vsel %vm365, %v360, 0
    %v460 = vsel %vm365, %v361, 0
    %vm462 = vcmask 1043456
    %v464 = vsel %vm462, %v81, 0
    %466 = vmatpush.msra.mxu0 0.0
    %467 = vmatpush.msra.mxu0 0.0
    %468 = vmatpush.msra.mxu0 0.0
    %469 = vmatpush.msra.mxu0 0.0
    %470 = vmatpush.msra.mxu0 0.0
    %471 = vmatpush.msra.mxu0 0.0
    %472 = vmatpush.msra.mxu0 0.0
    %473 = vmatpush.msra.mxu0 0.0
    %474 = vmatpush.msra.mxu0 0.0
    %475 = vmatpush.msra.mxu0 0.0
    %476 = vmatpush.msra.mxu0 0.0
    %477 = vmatpush.msra.mxu0 0.0
    %478 = vmatpush.msra.mxu0 0.0
    %479 = vmatpush.msra.mxu0 0.0
    %480 = vmatpush.msra.mxu0 %v464
    %481 = vmatpush.msra.mxu0 %v80
    %482 = vmatmul.f32.gmra.mxu0 %v367
    %v483 = vpop.f32.mrf.mxu0
    %v484 = vadd.f32 %v363, %v483
    %485 = vmatmul.f32.gmra.mxu0 %v370
    %v486 = vpop.f32.mrf.mxu0
    %v487 = vadd.f32 %v363, %v486
    %488 = vmatmul.f32.gmra.mxu0 %v373
    %v489 = vpop.f32.mrf.mxu0
    %v490 = vadd.f32 %v363, %v489
    %491 = vmatmul.f32.gmra.mxu0 %v376
    %v492 = vpop.f32.mrf.mxu0
    %v493 = vadd.f32 %v363, %v492
    %494 = vmatmul.f32.gmra.mxu0 %v379
    %v495 = vpop.f32.mrf.mxu0
    %v496 = vadd.f32 %v363, %v495
    %497 = vmatmul.f32.gmra.mxu0 %v382
    %v498 = vpop.f32.mrf.mxu0
    %v499 = vadd.f32 %v363, %v498
    %500 = vmatmul.f32.gmra.mxu0 %v385
    %v501 = vpop.f32.mrf.mxu0
    %v502 = vadd.f32 %v363, %v501
    %503 = vmatmul.f32.gmra.mxu0 %v388
    %v504 = vpop.f32.mrf.mxu0
    %v505 = vadd.f32 %v363, %v504
    %506 = vmatmul.f32.gmra.mxu0 %v391
    %v507 = vpop.f32.mrf.mxu0
    %v508 = vadd.f32 %v363, %v507
    %509 = vmatmul.f32.gmra.mxu0 %v394
    %v510 = vpop.f32.mrf.mxu0
    %v511 = vadd.f32 %v363, %v510
    %512 = vmatmul.f32.gmra.mxu0 %v397
    %v513 = vpop.f32.mrf.mxu0
    %v514 = vadd.f32 %v363, %v513
    %515 = vmatmul.f32.gmra.mxu0 %v400
    %v516 = vpop.f32.mrf.mxu0
    %v517 = vadd.f32 %v363, %v516
    %518 = vmatmul.f32.gmra.mxu0 %v403
    %v519 = vpop.f32.mrf.mxu0
    %v520 = vadd.f32 %v363, %v519
    %521 = vmatmul.f32.gmra.mxu0 %v406
    %v522 = vpop.f32.mrf.mxu0
    %v523 = vadd.f32 %v363, %v522
    %524 = vmatmul.f32.gmra.mxu0 %v409
    %v525 = vpop.f32.mrf.mxu0
    %v526 = vadd.f32 %v363, %v525
    %527 = vmatmul.f32.gmra.mxu0 %v412
    %v528 = vpop.f32.mrf.mxu0
    %v529 = vadd.f32 %v363, %v528
    %530 = vmatmul.f32.gmra.mxu0 %v415
    %v531 = vpop.f32.mrf.mxu0
    %v532 = vadd.f32 %v363, %v531
    %533 = vmatmul.f32.gmra.mxu0 %v418
    %v534 = vpop.f32.mrf.mxu0
    %v535 = vadd.f32 %v363, %v534
    %536 = vmatmul.f32.gmra.mxu0 %v421
    %v537 = vpop.f32.mrf.mxu0
    %v538 = vadd.f32 %v363, %v537
    %539 = vmatmul.f32.gmra.mxu0 %v424
    %v540 = vpop.f32.mrf.mxu0
    %v541 = vadd.f32 %v363, %v540
    %542 = vmatmul.f32.gmra.mxu0 %v427
    %v543 = vpop.f32.mrf.mxu0
    %v544 = vadd.f32 %v363, %v543
    %545 = vmatmul.f32.gmra.mxu0 %v430
    %v546 = vpop.f32.mrf.mxu0
    %v547 = vadd.f32 %v363, %v546
    %548 = vmatmul.f32.gmra.mxu0 %v433
    %v549 = vpop.f32.mrf.mxu0
    %v550 = vadd.f32 %v363, %v549
    %551 = vmatmul.f32.gmra.mxu0 %v436
    %v552 = vpop.f32.mrf.mxu0
    %v553 = vadd.f32 %v363, %v552
    %554 = vmatmul.f32.gmra.mxu0 %v439
    %v555 = vpop.f32.mrf.mxu0
    %v556 = vadd.f32 %v363, %v555
    %557 = vmatmul.f32.gmra.mxu0 %v442
    %v558 = vpop.f32.mrf.mxu0
    %v559 = vadd.f32 %v363, %v558
    %560 = vmatmul.f32.gmra.mxu0 %v445
    %v561 = vpop.f32.mrf.mxu0
    %v562 = vadd.f32 %v363, %v561
    %563 = vmatmul.f32.gmra.mxu0 %v448
    %v564 = vpop.f32.mrf.mxu0
    %v565 = vadd.f32 %v363, %v564
    %566 = vmatmul.f32.gmra.mxu0 %v451
    %v567 = vpop.f32.mrf.mxu0
    %v568 = vadd.f32 %v363, %v567
    %569 = vmatmul.f32.gmra.mxu0 %v454
    %v570 = vpop.f32.mrf.mxu0
    %v571 = vadd.f32 %v363, %v570
    %572 = vmatmul.f32.gmra.mxu0 %v457
    %v573 = vpop.f32.mrf.mxu0
    %v574 = vadd.f32 %v363, %v573
    %575 = vmatmul.f32.gmra.mxu0 %v460
    %v576 = vpop.f32.mrf.mxu0
    %v577 = vadd.f32 %v363, %v576
    %578 = vdwg.mxu0
    %v579 = vxor.u32 %v484, 2147483648
    %v580 = vxor.u32 %v487, 2147483648
    %v581 = vxor.u32 %v490, 2147483648
    %v582 = vxor.u32 %v493, 2147483648
    %v583 = vxor.u32 %v496, 2147483648
    %v584 = vxor.u32 %v499, 2147483648
    %v585 = vxor.u32 %v502, 2147483648
    %v586 = vxor.u32 %v505, 2147483648
    %v587 = vxor.u32 %v508, 2147483648
    %v588 = vxor.u32 %v511, 2147483648
    %v589 = vxor.u32 %v514, 2147483648
    %v590 = vxor.u32 %v517, 2147483648
    %v591 = vxor.u32 %v520, 2147483648
    %v592 = vxor.u32 %v523, 2147483648
    %v593 = vxor.u32 %v526, 2147483648
    %v594 = vxor.u32 %v529, 2147483648
    %v595 = vxor.u32 %v532, 2147483648
    %v596 = vxor.u32 %v535, 2147483648
    %v597 = vxor.u32 %v538, 2147483648
    %v598 = vxor.u32 %v541, 2147483648
    %v599 = vxor.u32 %v544, 2147483648
    %v600 = vxor.u32 %v547, 2147483648
    %v601 = vxor.u32 %v550, 2147483648
    %v602 = vxor.u32 %v553, 2147483648
    %v603 = vxor.u32 %v556, 2147483648
    %v604 = vxor.u32 %v559, 2147483648
    %v605 = vxor.u32 %v562, 2147483648
    %v606 = vxor.u32 %v565, 2147483648
    %v607 = vxor.u32 %v568, 2147483648
    %v608 = vxor.u32 %v571, 2147483648
    %v609 = vxor.u32 %v574, 2147483648
    %v610 = vxor.u32 %v577, 2147483648
    %v611 = vmul.f32 %v579, 1.442695
    %v612 = vpow.pop %v611
    %v613 = vmul.f32 %v580, 1.442695
    %v614 = vpow.pop %v613
    %v615 = vmul.f32 %v581, 1.442695
    %v616 = vpow.pop %v615
    %v617 = vmul.f32 %v582, 1.442695
    %v618 = vpow.pop %v617
    %v619 = vmul.f32 %v583, 1.442695
    %v620 = vpow.pop %v619
    %v621 = vmul.f32 %v584, 1.442695
    %v622 = vpow.pop %v621
    %v623 = vmul.f32 %v585, 1.442695
    %v624 = vpow.pop %v623
    %v625 = vmul.f32 %v586, 1.442695
    %v626 = vpow.pop %v625
    %v627 = vmul.f32 %v587, 1.442695
    %v628 = vpow.pop %v627
    %v629 = vmul.f32 %v588, 1.442695
    %v630 = vpow.pop %v629
    %v631 = vmul.f32 %v589, 1.442695
    %v632 = vpow.pop %v631
    %v633 = vmul.f32 %v590, 1.442695
    %v634 = vpow.pop %v633
    %v635 = vmul.f32 %v591, 1.442695
    %v636 = vpow.pop %v635
    %v637 = vmul.f32 %v592, 1.442695
    %v638 = vpow.pop %v637
    %v639 = vmul.f32 %v593, 1.442695
    %v640 = vpow.pop %v639
    %v641 = vmul.f32 %v594, 1.442695
    %v642 = vpow.pop %v641
    %v643 = vmul.f32 %v595, 1.442695
    %v644 = vpow.pop %v643
    %v645 = vmul.f32 %v596, 1.442695
    %v646 = vpow.pop %v645
    %v647 = vmul.f32 %v597, 1.442695
    %v648 = vpow.pop %v647
    %v649 = vmul.f32 %v598, 1.442695
    %v650 = vpow.pop %v649
    %v651 = vmul.f32 %v599, 1.442695
    %v652 = vpow.pop %v651
    %v653 = vmul.f32 %v600, 1.442695
    %v654 = vpow.pop %v653
    %v655 = vmul.f32 %v601, 1.442695
    %v656 = vpow.pop %v655
    %v657 = vmul.f32 %v602, 1.442695
    %v658 = vpow.pop %v657
    %v659 = vmul.f32 %v603, 1.442695
    %v660 = vpow.pop %v659
    %v661 = vmul.f32 %v604, 1.442695
    %v662 = vpow.pop %v661
    %v663 = vmul.f32 %v605, 1.442695
    %v664 = vpow.pop %v663
    %v665 = vmul.f32 %v606, 1.442695
    %v666 = vpow.pop %v665
    %v667 = vmul.f32 %v607, 1.442695
    %v668 = vpow.pop %v667
    %v669 = vmul.f32 %v608, 1.442695
    %v670 = vpow.pop %v669
    %v671 = vmul.f32 %v609, 1.442695
    %v672 = vpow.pop %v671
    %v673 = vmul.f32 %v610, 1.442695
    %v674 = vpow.pop %v673
    %v675 = vadd.f32 %v612, 1.0
    %v676 = vadd.f32 %v614, 1.0
    %v677 = vadd.f32 %v616, 1.0
    %v678 = vadd.f32 %v618, 1.0
    %v679 = vadd.f32 %v620, 1.0
    %v680 = vadd.f32 %v622, 1.0
    %v681 = vadd.f32 %v624, 1.0
    %v682 = vadd.f32 %v626, 1.0
    %v683 = vadd.f32 %v628, 1.0
    %v684 = vadd.f32 %v630, 1.0
    %v685 = vadd.f32 %v632, 1.0
    %v686 = vadd.f32 %v634, 1.0
    %v687 = vadd.f32 %v636, 1.0
    %v688 = vadd.f32 %v638, 1.0
    %v689 = vadd.f32 %v640, 1.0
    %v690 = vadd.f32 %v642, 1.0
    %v691 = vadd.f32 %v644, 1.0
    %v692 = vadd.f32 %v646, 1.0
    %v693 = vadd.f32 %v648, 1.0
    %v694 = vadd.f32 %v650, 1.0
    %v695 = vadd.f32 %v652, 1.0
    %v696 = vadd.f32 %v654, 1.0
    %v697 = vadd.f32 %v656, 1.0
    %v698 = vadd.f32 %v658, 1.0
    %v699 = vadd.f32 %v660, 1.0
    %v700 = vadd.f32 %v662, 1.0
    %v701 = vadd.f32 %v664, 1.0
    %v702 = vadd.f32 %v666, 1.0
    %v703 = vadd.f32 %v668, 1.0
    %v704 = vadd.f32 %v670, 1.0
    %v705 = vadd.f32 %v672, 1.0
    %v706 = vadd.f32 %v674, 1.0
    %v707 = vrcp.pop %v675
    %v708 = vmul.f32 %v675, %v707
    %v709 = vsub.f32 1.0, %v708
    %v710 = vmul.f32 %v707, %v709
    %v711 = vadd.f32 %v707, %v710
    %vm712 = vweird.f32 %v675
    %vm713 = vweird.f32 %v707
    %vm714 = vmor %vm712, %vm713
    %v715 = vsel %vm714, %v707, %v711
    %v716 = vand.u32 2147483647, %v675
    %vm717 = vcmp.eq.f32.partialorder %v716, 8.507059e+37
    %v718 = vand.u32 %v675, 2147483648
    %v719 = vor.u32 1.1754944e-38, %v718
    %v720 = vsel %vm717, %v719, %v715
    %v721 = vmul.f32 1.0, %v720
    %v722 = vrcp.pop %v676
    %v723 = vmul.f32 %v676, %v722
    %v724 = vsub.f32 1.0, %v723
    %v725 = vmul.f32 %v722, %v724
    %v726 = vadd.f32 %v722, %v725
    %vm727 = vweird.f32 %v676
    %vm728 = vweird.f32 %v722
    %vm729 = vmor %vm727, %vm728
    %v730 = vsel %vm729, %v722, %v726
    %v731 = vand.u32 2147483647, %v676
    %vm732 = vcmp.eq.f32.partialorder %v731, 8.507059e+37
    %v733 = vand.u32 %v676, 2147483648
    %v734 = vor.u32 1.1754944e-38, %v733
    %v735 = vsel %vm732, %v734, %v730
    %v736 = vmul.f32 1.0, %v735
    %v737 = vrcp.pop %v677
    %v738 = vmul.f32 %v677, %v737
    %v739 = vsub.f32 1.0, %v738
    %v740 = vmul.f32 %v737, %v739
    %v741 = vadd.f32 %v737, %v740
    %vm742 = vweird.f32 %v677
    %vm743 = vweird.f32 %v737
    %vm744 = vmor %vm742, %vm743
    %v745 = vsel %vm744, %v737, %v741
    %v746 = vand.u32 2147483647, %v677
    %vm747 = vcmp.eq.f32.partialorder %v746, 8.507059e+37
    %v748 = vand.u32 %v677, 2147483648
    %v749 = vor.u32 1.1754944e-38, %v748
    %v750 = vsel %vm747, %v749, %v745
    %v751 = vmul.f32 1.0, %v750
    %v752 = vrcp.pop %v678
    %v753 = vmul.f32 %v678, %v752
    %v754 = vsub.f32 1.0, %v753
    %v755 = vmul.f32 %v752, %v754
    %v756 = vadd.f32 %v752, %v755
    %vm757 = vweird.f32 %v678
    %vm758 = vweird.f32 %v752
    %vm759 = vmor %vm757, %vm758
    %v760 = vsel %vm759, %v752, %v756
    %v761 = vand.u32 2147483647, %v678
    %vm762 = vcmp.eq.f32.partialorder %v761, 8.507059e+37
    %v763 = vand.u32 %v678, 2147483648
    %v764 = vor.u32 1.1754944e-38, %v763
    %v765 = vsel %vm762, %v764, %v760
    %v766 = vmul.f32 1.0, %v765
    %v767 = vrcp.pop %v679
    %v768 = vmul.f32 %v679, %v767
    %v769 = vsub.f32 1.0, %v768
    %v770 = vmul.f32 %v767, %v769
    %v771 = vadd.f32 %v767, %v770
    %vm772 = vweird.f32 %v679
    %vm773 = vweird.f32 %v767
    %vm774 = vmor %vm772, %vm773
    %v775 = vsel %vm774, %v767, %v771
    %v776 = vand.u32 2147483647, %v679
    %vm777 = vcmp.eq.f32.partialorder %v776, 8.507059e+37
    %v778 = vand.u32 %v679, 2147483648
    %v779 = vor.u32 1.1754944e-38, %v778
    %v780 = vsel %vm777, %v779, %v775
    %v781 = vmul.f32 1.0, %v780
    %v782 = vrcp.pop %v680
    %v783 = vmul.f32 %v680, %v782
    %v784 = vsub.f32 1.0, %v783
    %v785 = vmul.f32 %v782, %v784
    %v786 = vadd.f32 %v782, %v785
    %vm787 = vweird.f32 %v680
    %vm788 = vweird.f32 %v782
    %vm789 = vmor %vm787, %vm788
    %v790 = vsel %vm789, %v782, %v786
    %v791 = vand.u32 2147483647, %v680
    %vm792 = vcmp.eq.f32.partialorder %v791, 8.507059e+37
    %v793 = vand.u32 %v680, 2147483648
    %v794 = vor.u32 1.1754944e-38, %v793
    %v795 = vsel %vm792, %v794, %v790
    %v796 = vmul.f32 1.0, %v795
    %v797 = vrcp.pop %v681
    %v798 = vmul.f32 %v681, %v797
    %v799 = vsub.f32 1.0, %v798
    %v800 = vmul.f32 %v797, %v799
    %v801 = vadd.f32 %v797, %v800
    %vm802 = vweird.f32 %v681
    %vm803 = vweird.f32 %v797
    %vm804 = vmor %vm802, %vm803
    %v805 = vsel %vm804, %v797, %v801
    %v806 = vand.u32 2147483647, %v681
    %vm807 = vcmp.eq.f32.partialorder %v806, 8.507059e+37
    %v808 = vand.u32 %v681, 2147483648
    %v809 = vor.u32 1.1754944e-38, %v808
    %v810 = vsel %vm807, %v809, %v805
    %v811 = vmul.f32 1.0, %v810
    %v812 = vrcp.pop %v682
    %v813 = vmul.f32 %v682, %v812
    %v814 = vsub.f32 1.0, %v813
    %v815 = vmul.f32 %v812, %v814
    %v816 = vadd.f32 %v812, %v815
    %vm817 = vweird.f32 %v682
    %vm818 = vweird.f32 %v812
    %vm819 = vmor %vm817, %vm818
    %v820 = vsel %vm819, %v812, %v816
    %v821 = vand.u32 2147483647, %v682
    %vm822 = vcmp.eq.f32.partialorder %v821, 8.507059e+37
    %v823 = vand.u32 %v682, 2147483648
    %v824 = vor.u32 1.1754944e-38, %v823
    %v825 = vsel %vm822, %v824, %v820
    %v826 = vmul.f32 1.0, %v825
    %v827 = vrcp.pop %v683
    %v828 = vmul.f32 %v683, %v827
    %v829 = vsub.f32 1.0, %v828
    %v830 = vmul.f32 %v827, %v829
    %v831 = vadd.f32 %v827, %v830
    %vm832 = vweird.f32 %v683
    %vm833 = vweird.f32 %v827
    %vm834 = vmor %vm832, %vm833
    %v835 = vsel %vm834, %v827, %v831
    %v836 = vand.u32 2147483647, %v683
    %vm837 = vcmp.eq.f32.partialorder %v836, 8.507059e+37
    %v838 = vand.u32 %v683, 2147483648
    %v839 = vor.u32 1.1754944e-38, %v838
    %v840 = vsel %vm837, %v839, %v835
    %v841 = vmul.f32 1.0, %v840
    %v842 = vrcp.pop %v684
    %v843 = vmul.f32 %v684, %v842
    %v844 = vsub.f32 1.0, %v843
    %v845 = vmul.f32 %v842, %v844
    %v846 = vadd.f32 %v842, %v845
    %vm847 = vweird.f32 %v684
    %vm848 = vweird.f32 %v842
    %vm849 = vmor %vm847, %vm848
    %v850 = vsel %vm849, %v842, %v846
    %v851 = vand.u32 2147483647, %v684
    %vm852 = vcmp.eq.f32.partialorder %v851, 8.507059e+37
    %v853 = vand.u32 %v684, 2147483648
    %v854 = vor.u32 1.1754944e-38, %v853
    %v855 = vsel %vm852, %v854, %v850
    %v856 = vmul.f32 1.0, %v855
    %v857 = vrcp.pop %v685
    %v858 = vmul.f32 %v685, %v857
    %v859 = vsub.f32 1.0, %v858
    %v860 = vmul.f32 %v857, %v859
    %v861 = vadd.f32 %v857, %v860
    %vm862 = vweird.f32 %v685
    %vm863 = vweird.f32 %v857
    %vm864 = vmor %vm862, %vm863
    %v865 = vsel %vm864, %v857, %v861
    %v866 = vand.u32 2147483647, %v685
    %vm867 = vcmp.eq.f32.partialorder %v866, 8.507059e+37
    %v868 = vand.u32 %v685, 2147483648
    %v869 = vor.u32 1.1754944e-38, %v868
    %v870 = vsel %vm867, %v869, %v865
    %v871 = vmul.f32 1.0, %v870
    %v872 = vrcp.pop %v686
    %v873 = vmul.f32 %v686, %v872
    %v874 = vsub.f32 1.0, %v873
    %v875 = vmul.f32 %v872, %v874
    %v876 = vadd.f32 %v872, %v875
    %vm877 = vweird.f32 %v686
    %vm878 = vweird.f32 %v872
    %vm879 = vmor %vm877, %vm878
    %v880 = vsel %vm879, %v872, %v876
    %v881 = vand.u32 2147483647, %v686
    %vm882 = vcmp.eq.f32.partialorder %v881, 8.507059e+37
    %v883 = vand.u32 %v686, 2147483648
    %v884 = vor.u32 1.1754944e-38, %v883
    %v885 = vsel %vm882, %v884, %v880
    %v886 = vmul.f32 1.0, %v885
    %v887 = vrcp.pop %v687
    %v888 = vmul.f32 %v687, %v887
    %v889 = vsub.f32 1.0, %v888
    %v890 = vmul.f32 %v887, %v889
    %v891 = vadd.f32 %v887, %v890
    %vm892 = vweird.f32 %v687
    %vm893 = vweird.f32 %v887
    %vm894 = vmor %vm892, %vm893
    %v895 = vsel %vm894, %v887, %v891
    %v896 = vand.u32 2147483647, %v687
    %vm897 = vcmp.eq.f32.partialorder %v896, 8.507059e+37
    %v898 = vand.u32 %v687, 2147483648
    %v899 = vor.u32 1.1754944e-38, %v898
    %v900 = vsel %vm897, %v899, %v895
    %v901 = vmul.f32 1.0, %v900
    %v902 = vrcp.pop %v688
    %v903 = vmul.f32 %v688, %v902
    %v904 = vsub.f32 1.0, %v903
    %v905 = vmul.f32 %v902, %v904
    %v906 = vadd.f32 %v902, %v905
    %vm907 = vweird.f32 %v688
    %vm908 = vweird.f32 %v902
    %vm909 = vmor %vm907, %vm908
    %v910 = vsel %vm909, %v902, %v906
    %v911 = vand.u32 2147483647, %v688
    %vm912 = vcmp.eq.f32.partialorder %v911, 8.507059e+37
    %v913 = vand.u32 %v688, 2147483648
    %v914 = vor.u32 1.1754944e-38, %v913
    %v915 = vsel %vm912, %v914, %v910
    %v916 = vmul.f32 1.0, %v915
    %v917 = vrcp.pop %v689
    %v918 = vmul.f32 %v689, %v917
    %v919 = vsub.f32 1.0, %v918
    %v920 = vmul.f32 %v917, %v919
    %v921 = vadd.f32 %v917, %v920
    %vm922 = vweird.f32 %v689
    %vm923 = vweird.f32 %v917
    %vm924 = vmor %vm922, %vm923
    %v925 = vsel %vm924, %v917, %v921
    %v926 = vand.u32 2147483647, %v689
    %vm927 = vcmp.eq.f32.partialorder %v926, 8.507059e+37
    %v928 = vand.u32 %v689, 2147483648
    %v929 = vor.u32 1.1754944e-38, %v928
    %v930 = vsel %vm927, %v929, %v925
    %v931 = vmul.f32 1.0, %v930
    %v932 = vrcp.pop %v690
    %v933 = vmul.f32 %v690, %v932
    %v934 = vsub.f32 1.0, %v933
    %v935 = vmul.f32 %v932, %v934
    %v936 = vadd.f32 %v932, %v935
    %vm937 = vweird.f32 %v690
    %vm938 = vweird.f32 %v932
    %vm939 = vmor %vm937, %vm938
    %v940 = vsel %vm939, %v932, %v936
    %v941 = vand.u32 2147483647, %v690
    %vm942 = vcmp.eq.f32.partialorder %v941, 8.507059e+37
    %v943 = vand.u32 %v690, 2147483648
    %v944 = vor.u32 1.1754944e-38, %v943
    %v945 = vsel %vm942, %v944, %v940
    %v946 = vmul.f32 1.0, %v945
    %v947 = vrcp.pop %v691
    %v948 = vmul.f32 %v691, %v947
    %v949 = vsub.f32 1.0, %v948
    %v950 = vmul.f32 %v947, %v949
    %v951 = vadd.f32 %v947, %v950
    %vm952 = vweird.f32 %v691
    %vm953 = vweird.f32 %v947
    %vm954 = vmor %vm952, %vm953
    %v955 = vsel %vm954, %v947, %v951
    %v956 = vand.u32 2147483647, %v691
    %vm957 = vcmp.eq.f32.partialorder %v956, 8.507059e+37
    %v958 = vand.u32 %v691, 2147483648
    %v959 = vor.u32 1.1754944e-38, %v958
    %v960 = vsel %vm957, %v959, %v955
    %v961 = vmul.f32 1.0, %v960
    %v962 = vrcp.pop %v692
    %v963 = vmul.f32 %v692, %v962
    %v964 = vsub.f32 1.0, %v963
    %v965 = vmul.f32 %v962, %v964
    %v966 = vadd.f32 %v962, %v965
    %vm967 = vweird.f32 %v692
    %vm968 = vweird.f32 %v962
    %vm969 = vmor %vm967, %vm968
    %v970 = vsel %vm969, %v962, %v966
    %v971 = vand.u32 2147483647, %v692
    %vm972 = vcmp.eq.f32.partialorder %v971, 8.507059e+37
    %v973 = vand.u32 %v692, 2147483648
    %v974 = vor.u32 1.1754944e-38, %v973
    %v975 = vsel %vm972, %v974, %v970
    %v976 = vmul.f32 1.0, %v975
    %v977 = vrcp.pop %v693
    %v978 = vmul.f32 %v693, %v977
    %v979 = vsub.f32 1.0, %v978
    %v980 = vmul.f32 %v977, %v979
    %v981 = vadd.f32 %v977, %v980
    %vm982 = vweird.f32 %v693
    %vm983 = vweird.f32 %v977
    %vm984 = vmor %vm982, %vm983
    %v985 = vsel %vm984, %v977, %v981
    %v986 = vand.u32 2147483647, %v693
    %vm987 = vcmp.eq.f32.partialorder %v986, 8.507059e+37
    %v988 = vand.u32 %v693, 2147483648
    %v989 = vor.u32 1.1754944e-38, %v988
    %v990 = vsel %vm987, %v989, %v985
    %v991 = vmul.f32 1.0, %v990
    %v992 = vrcp.pop %v694
    %v993 = vmul.f32 %v694, %v992
    %v994 = vsub.f32 1.0, %v993
    %v995 = vmul.f32 %v992, %v994
    %v996 = vadd.f32 %v992, %v995
    %vm997 = vweird.f32 %v694
    %vm998 = vweird.f32 %v992
    %vm999 = vmor %vm997, %vm998
    %v1000 = vsel %vm999, %v992, %v996
    %v1001 = vand.u32 2147483647, %v694
    %vm1002 = vcmp.eq.f32.partialorder %v1001, 8.507059e+37
    %v1003 = vand.u32 %v694, 2147483648
    %v1004 = vor.u32 1.1754944e-38, %v1003
    %v1005 = vsel %vm1002, %v1004, %v1000
    %v1006 = vmul.f32 1.0, %v1005
    %v1007 = vrcp.pop %v695
    %v1008 = vmul.f32 %v695, %v1007
    %v1009 = vsub.f32 1.0, %v1008
    %v1010 = vmul.f32 %v1007, %v1009
    %v1011 = vadd.f32 %v1007, %v1010
    %vm1012 = vweird.f32 %v695
    %vm1013 = vweird.f32 %v1007
    %vm1014 = vmor %vm1012, %vm1013
    %v1015 = vsel %vm1014, %v1007, %v1011
    %v1016 = vand.u32 2147483647, %v695
    %vm1017 = vcmp.eq.f32.partialorder %v1016, 8.507059e+37
    %v1018 = vand.u32 %v695, 2147483648
    %v1019 = vor.u32 1.1754944e-38, %v1018
    %v1020 = vsel %vm1017, %v1019, %v1015
    %v1021 = vmul.f32 1.0, %v1020
    %v1022 = vrcp.pop %v696
    %v1023 = vmul.f32 %v696, %v1022
    %v1024 = vsub.f32 1.0, %v1023
    %v1025 = vmul.f32 %v1022, %v1024
    %v1026 = vadd.f32 %v1022, %v1025
    %vm1027 = vweird.f32 %v696
    %vm1028 = vweird.f32 %v1022
    %vm1029 = vmor %vm1027, %vm1028
    %v1030 = vsel %vm1029, %v1022, %v1026
    %v1031 = vand.u32 2147483647, %v696
    %vm1032 = vcmp.eq.f32.partialorder %v1031, 8.507059e+37
    %v1033 = vand.u32 %v696, 2147483648
    %v1034 = vor.u32 1.1754944e-38, %v1033
    %v1035 = vsel %vm1032, %v1034, %v1030
    %v1036 = vmul.f32 1.0, %v1035
    %v1037 = vrcp.pop %v697
    %v1038 = vmul.f32 %v697, %v1037
    %v1039 = vsub.f32 1.0, %v1038
    %v1040 = vmul.f32 %v1037, %v1039
    %v1041 = vadd.f32 %v1037, %v1040
    %vm1042 = vweird.f32 %v697
    %vm1043 = vweird.f32 %v1037
    %vm1044 = vmor %vm1042, %vm1043
    %v1045 = vsel %vm1044, %v1037, %v1041
    %v1046 = vand.u32 2147483647, %v697
    %vm1047 = vcmp.eq.f32.partialorder %v1046, 8.507059e+37
    %v1048 = vand.u32 %v697, 2147483648
    %v1049 = vor.u32 1.1754944e-38, %v1048
    %v1050 = vsel %vm1047, %v1049, %v1045
    %v1051 = vmul.f32 1.0, %v1050
    %v1052 = vrcp.pop %v698
    %v1053 = vmul.f32 %v698, %v1052
    %v1054 = vsub.f32 1.0, %v1053
    %v1055 = vmul.f32 %v1052, %v1054
    %v1056 = vadd.f32 %v1052, %v1055
    %vm1057 = vweird.f32 %v698
    %vm1058 = vweird.f32 %v1052
    %vm1059 = vmor %vm1057, %vm1058
    %v1060 = vsel %vm1059, %v1052, %v1056
    %v1061 = vand.u32 2147483647, %v698
    %vm1062 = vcmp.eq.f32.partialorder %v1061, 8.507059e+37
    %v1063 = vand.u32 %v698, 2147483648
    %v1064 = vor.u32 1.1754944e-38, %v1063
    %v1065 = vsel %vm1062, %v1064, %v1060
    %v1066 = vmul.f32 1.0, %v1065
    %v1067 = vrcp.pop %v699
    %v1068 = vmul.f32 %v699, %v1067
    %v1069 = vsub.f32 1.0, %v1068
    %v1070 = vmul.f32 %v1067, %v1069
    %v1071 = vadd.f32 %v1067, %v1070
    %vm1072 = vweird.f32 %v699
    %vm1073 = vweird.f32 %v1067
    %vm1074 = vmor %vm1072, %vm1073
    %v1075 = vsel %vm1074, %v1067, %v1071
    %v1076 = vand.u32 2147483647, %v699
    %vm1077 = vcmp.eq.f32.partialorder %v1076, 8.507059e+37
    %v1078 = vand.u32 %v699, 2147483648
    %v1079 = vor.u32 1.1754944e-38, %v1078
    %v1080 = vsel %vm1077, %v1079, %v1075
    %v1081 = vmul.f32 1.0, %v1080
    %v1082 = vrcp.pop %v700
    %v1083 = vmul.f32 %v700, %v1082
    %v1084 = vsub.f32 1.0, %v1083
    %v1085 = vmul.f32 %v1082, %v1084
    %v1086 = vadd.f32 %v1082, %v1085
    %vm1087 = vweird.f32 %v700
    %vm1088 = vweird.f32 %v1082
    %vm1089 = vmor %vm1087, %vm1088
    %v1090 = vsel %vm1089, %v1082, %v1086
    %v1091 = vand.u32 2147483647, %v700
    %vm1092 = vcmp.eq.f32.partialorder %v1091, 8.507059e+37
    %v1093 = vand.u32 %v700, 2147483648
    %v1094 = vor.u32 1.1754944e-38, %v1093
    %v1095 = vsel %vm1092, %v1094, %v1090
    %v1096 = vmul.f32 1.0, %v1095
    %v1097 = vrcp.pop %v701
    %v1098 = vmul.f32 %v701, %v1097
    %v1099 = vsub.f32 1.0, %v1098
    %v1100 = vmul.f32 %v1097, %v1099
    %v1101 = vadd.f32 %v1097, %v1100
    %vm1102 = vweird.f32 %v701
    %vm1103 = vweird.f32 %v1097
    %vm1104 = vmor %vm1102, %vm1103
    %v1105 = vsel %vm1104, %v1097, %v1101
    %v1106 = vand.u32 2147483647, %v701
    %vm1107 = vcmp.eq.f32.partialorder %v1106, 8.507059e+37
    %v1108 = vand.u32 %v701, 2147483648
    %v1109 = vor.u32 1.1754944e-38, %v1108
    %v1110 = vsel %vm1107, %v1109, %v1105
    %v1111 = vmul.f32 1.0, %v1110
    %v1112 = vrcp.pop %v702
    %v1113 = vmul.f32 %v702, %v1112
    %v1114 = vsub.f32 1.0, %v1113
    %v1115 = vmul.f32 %v1112, %v1114
    %v1116 = vadd.f32 %v1112, %v1115
    %vm1117 = vweird.f32 %v702
    %vm1118 = vweird.f32 %v1112
    %vm1119 = vmor %vm1117, %vm1118
    %v1120 = vsel %vm1119, %v1112, %v1116
    %v1121 = vand.u32 2147483647, %v702
    %vm1122 = vcmp.eq.f32.partialorder %v1121, 8.507059e+37
    %v1123 = vand.u32 %v702, 2147483648
    %v1124 = vor.u32 1.1754944e-38, %v1123
    %v1125 = vsel %vm1122, %v1124, %v1120
    %v1126 = vmul.f32 1.0, %v1125
    %v1127 = vrcp.pop %v703
    %v1128 = vmul.f32 %v703, %v1127
    %v1129 = vsub.f32 1.0, %v1128
    %v1130 = vmul.f32 %v1127, %v1129
    %v1131 = vadd.f32 %v1127, %v1130
    %vm1132 = vweird.f32 %v703
    %vm1133 = vweird.f32 %v1127
    %vm1134 = vmor %vm1132, %vm1133
    %v1135 = vsel %vm1134, %v1127, %v1131
    %v1136 = vand.u32 2147483647, %v703
    %vm1137 = vcmp.eq.f32.partialorder %v1136, 8.507059e+37
    %v1138 = vand.u32 %v703, 2147483648
    %v1139 = vor.u32 1.1754944e-38, %v1138
    %v1140 = vsel %vm1137, %v1139, %v1135
    %v1141 = vmul.f32 1.0, %v1140
    %v1142 = vrcp.pop %v704
    %v1143 = vmul.f32 %v704, %v1142
    %v1144 = vsub.f32 1.0, %v1143
    %v1145 = vmul.f32 %v1142, %v1144
    %v1146 = vadd.f32 %v1142, %v1145
    %vm1147 = vweird.f32 %v704
    %vm1148 = vweird.f32 %v1142
    %vm1149 = vmor %vm1147, %vm1148
    %v1150 = vsel %vm1149, %v1142, %v1146
    %v1151 = vand.u32 2147483647, %v704
    %vm1152 = vcmp.eq.f32.partialorder %v1151, 8.507059e+37
    %v1153 = vand.u32 %v704, 2147483648
    %v1154 = vor.u32 1.1754944e-38, %v1153
    %v1155 = vsel %vm1152, %v1154, %v1150
    %v1156 = vmul.f32 1.0, %v1155
    %v1157 = vrcp.pop %v705
    %v1158 = vmul.f32 %v705, %v1157
    %v1159 = vsub.f32 1.0, %v1158
    %v1160 = vmul.f32 %v1157, %v1159
    %v1161 = vadd.f32 %v1157, %v1160
    %vm1162 = vweird.f32 %v705
    %vm1163 = vweird.f32 %v1157
    %vm1164 = vmor %vm1162, %vm1163
    %v1165 = vsel %vm1164, %v1157, %v1161
    %v1166 = vand.u32 2147483647, %v705
    %vm1167 = vcmp.eq.f32.partialorder %v1166, 8.507059e+37
    %v1168 = vand.u32 %v705, 2147483648
    %v1169 = vor.u32 1.1754944e-38, %v1168
    %v1170 = vsel %vm1167, %v1169, %v1165
    %v1171 = vmul.f32 1.0, %v1170
    %v1172 = vrcp.pop %v706
    %v1173 = vmul.f32 %v706, %v1172
    %v1174 = vsub.f32 1.0, %v1173
    %v1175 = vmul.f32 %v1172, %v1174
    %v1176 = vadd.f32 %v1172, %v1175
    %vm1177 = vweird.f32 %v706
    %vm1178 = vweird.f32 %v1172
    %vm1179 = vmor %vm1177, %vm1178
    %v1180 = vsel %vm1179, %v1172, %v1176
    %v1181 = vand.u32 2147483647, %v706
    %vm1182 = vcmp.eq.f32.partialorder %v1181, 8.507059e+37
    %v1183 = vand.u32 %v706, 2147483648
    %v1184 = vor.u32 1.1754944e-38, %v1183
    %v1185 = vsel %vm1182, %v1184, %v1180
    %v1186 = vmul.f32 1.0, %v1185
    %1219 = vrot.lane.b32.xlu0 %v721, 96
    %v1220 = vpop.permute.xlu0 %1219
    %1221 = vrot.lane.b32.xlu0 %v736, 96
    %v1222 = vpop.permute.xlu0 %1221
    %1223 = vrot.lane.b32.xlu0 %v751, 96
    %v1224 = vpop.permute.xlu0 %1223
    %1225 = vrot.lane.b32.xlu0 %v766, 96
    %v1226 = vpop.permute.xlu0 %1225
    %1227 = vrot.lane.b32.xlu0 %v781, 96
    %v1228 = vpop.permute.xlu0 %1227
    %1229 = vrot.lane.b32.xlu0 %v796, 96
    %v1230 = vpop.permute.xlu0 %1229
    %1231 = vrot.lane.b32.xlu0 %v811, 96
    %v1232 = vpop.permute.xlu0 %1231
    %1233 = vrot.lane.b32.xlu0 %v826, 96
    %v1234 = vpop.permute.xlu0 %1233
    %1235 = vrot.lane.b32.xlu0 %v841, 96
    %v1236 = vpop.permute.xlu0 %1235
    %1237 = vrot.lane.b32.xlu0 %v856, 96
    %v1238 = vpop.permute.xlu0 %1237
    %1239 = vrot.lane.b32.xlu0 %v871, 96
    %v1240 = vpop.permute.xlu0 %1239
    %1241 = vrot.lane.b32.xlu0 %v886, 96
    %v1242 = vpop.permute.xlu0 %1241
    %1243 = vrot.lane.b32.xlu0 %v901, 96
    %v1244 = vpop.permute.xlu0 %1243
    %1245 = vrot.lane.b32.xlu0 %v916, 96
    %v1246 = vpop.permute.xlu0 %1245
    %1247 = vrot.lane.b32.xlu0 %v931, 96
    %v1248 = vpop.permute.xlu0 %1247
    %1249 = vrot.lane.b32.xlu0 %v946, 96
    %v1250 = vpop.permute.xlu0 %1249
    %1251 = vrot.lane.b32.xlu0 %v961, 96
    %v1252 = vpop.permute.xlu0 %1251
    %1253 = vrot.lane.b32.xlu0 %v976, 96
    %v1254 = vpop.permute.xlu0 %1253
    %1255 = vrot.lane.b32.xlu0 %v991, 96
    %v1256 = vpop.permute.xlu0 %1255
    %1257 = vrot.lane.b32.xlu0 %v1006, 96
    %v1258 = vpop.permute.xlu0 %1257
    %1259 = vrot.lane.b32.xlu0 %v1021, 96
    %v1260 = vpop.permute.xlu0 %1259
    %1261 = vrot.lane.b32.xlu0 %v1036, 96
    %v1262 = vpop.permute.xlu0 %1261
    %1263 = vrot.lane.b32.xlu0 %v1051, 96
    %v1264 = vpop.permute.xlu0 %1263
    %1265 = vrot.lane.b32.xlu0 %v1066, 96
    %v1266 = vpop.permute.xlu0 %1265
    %1267 = vrot.lane.b32.xlu0 %v1081, 96
    %v1268 = vpop.permute.xlu0 %1267
    %1269 = vrot.lane.b32.xlu0 %v1096, 96
    %v1270 = vpop.permute.xlu0 %1269
    %1271 = vrot.lane.b32.xlu0 %v1111, 96
    %v1272 = vpop.permute.xlu0 %1271
    %1273 = vrot.lane.b32.xlu0 %v1126, 96
    %v1274 = vpop.permute.xlu0 %1273
    %1275 = vrot.lane.b32.xlu0 %v1141, 96
    %v1276 = vpop.permute.xlu0 %1275
    %1277 = vrot.lane.b32.xlu0 %v1156, 96
    %v1278 = vpop.permute.xlu0 %1277
    %1279 = vrot.lane.b32.xlu0 %v1171, 96
    %v1280 = vpop.permute.xlu0 %1279
    %1281 = vrot.lane.b32.xlu0 %v1186, 96
    %v1282 = vpop.permute.xlu0 %1281
    %v1315 = vmul.f32 %v484, %v1220
    %v1316 = vmul.f32 %v487, %v1222
    %v1317 = vmul.f32 %v490, %v1224
    %v1318 = vmul.f32 %v493, %v1226
    %v1319 = vmul.f32 %v496, %v1228
    %v1320 = vmul.f32 %v499, %v1230
    %v1321 = vmul.f32 %v502, %v1232
    %v1322 = vmul.f32 %v505, %v1234
    %v1323 = vmul.f32 %v508, %v1236
    %v1324 = vmul.f32 %v511, %v1238
    %v1325 = vmul.f32 %v514, %v1240
    %v1326 = vmul.f32 %v517, %v1242
    %v1327 = vmul.f32 %v520, %v1244
    %v1328 = vmul.f32 %v523, %v1246
    %v1329 = vmul.f32 %v526, %v1248
    %v1330 = vmul.f32 %v529, %v1250
    %v1331 = vmul.f32 %v532, %v1252
    %v1332 = vmul.f32 %v535, %v1254
    %v1333 = vmul.f32 %v538, %v1256
    %v1334 = vmul.f32 %v541, %v1258
    %v1335 = vmul.f32 %v544, %v1260
    %v1336 = vmul.f32 %v547, %v1262
    %v1337 = vmul.f32 %v550, %v1264
    %v1338 = vmul.f32 %v553, %v1266
    %v1339 = vmul.f32 %v556, %v1268
    %v1340 = vmul.f32 %v559, %v1270
    %v1341 = vmul.f32 %v562, %v1272
    %v1342 = vmul.f32 %v565, %v1274
    %v1343 = vmul.f32 %v568, %v1276
    %v1344 = vmul.f32 %v571, %v1278
    %v1345 = vmul.f32 %v574, %v1280
    %v1346 = vmul.f32 %v577, %v1282
    %v1347 = vld [vmem:[%s1] sm:$0xff]
    %v1348 = vld [vmem:[%s1 + $0x8] sm:$0xff]
    %v1349 = vld [vmem:[%s1 + $0x10] sm:$0xff]
    %v1350 = vld [vmem:[%s1 + $0x18] sm:$0xff]
    %v1351 = vld [vmem:[%s1 + $0x20] sm:$0xff]
    %v1352 = vld [vmem:[%s1 + $0x28] sm:$0xff]
    %v1353 = vld [vmem:[%s1 + $0x30] sm:$0xff]
    %v1354 = vld [vmem:[%s1 + $0x38] sm:$0xff]
    %v1355 = vld [vmem:[%s1 + $0x40] sm:$0xff]
    %v1356 = vld [vmem:[%s1 + $0x48] sm:$0xff]
    %v1357 = vld [vmem:[%s1 + $0x50] sm:$0xff]
    %v1358 = vld [vmem:[%s1 + $0x58] sm:$0xff]
    %v1359 = vld [vmem:[%s1 + $0x60] sm:$0xff]
    %v1360 = vld [vmem:[%s1 + $0x68] sm:$0xff]
    %v1361 = vld [vmem:[%s1 + $0x70] sm:$0xff]
    %v1362 = vld [vmem:[%s1 + $0x78] sm:$0xff]
    %1363 = vmatpush.msra.mxu0 %v1330
    %1364 = vmatpush.msra.mxu0 %v1329
    %1365 = vmatpush.msra.mxu0 %v1328
    %1366 = vmatpush.msra.mxu0 %v1327
    %1367 = vmatpush.msra.mxu0 %v1326
    %1368 = vmatpush.msra.mxu0 %v1325
    %1369 = vmatpush.msra.mxu0 %v1324
    %1370 = vmatpush.msra.mxu0 %v1323
    %1371 = vmatpush.msra.mxu0 %v1322
    %1372 = vmatpush.msra.mxu0 %v1321
    %1373 = vmatpush.msra.mxu0 %v1320
    %1374 = vmatpush.msra.mxu0 %v1319
    %1375 = vmatpush.msra.mxu0 %v1318
    %1376 = vmatpush.msra.mxu0 %v1317
    %1377 = vmatpush.msra.mxu0 %v1316
    %1378 = vmatpush.msra.mxu0 %v1315
    %1379 = vmatmul.f32.gmra.mxu0 %v1347
    %v1380 = vpop.f32.mrf.mxu0
    %v1381 = vadd.f32 0.0, %v1380
    %1382 = vmatmul.f32.gmra.mxu0 %v1348
    %v1383 = vpop.f32.mrf.mxu0
    %v1384 = vadd.f32 0.0, %v1383
    %1385 = vmatmul.f32.gmra.mxu0 %v1349
    %v1386 = vpop.f32.mrf.mxu0
    %v1387 = vadd.f32 0.0, %v1386
    %1388 = vmatmul.f32.gmra.mxu0 %v1350
    %v1389 = vpop.f32.mrf.mxu0
    %v1390 = vadd.f32 0.0, %v1389
    %1391 = vmatmul.f32.gmra.mxu0 %v1351
    %v1392 = vpop.f32.mrf.mxu0
    %v1393 = vadd.f32 0.0, %v1392
    %1394 = vmatmul.f32.gmra.mxu0 %v1352
    %v1395 = vpop.f32.mrf.mxu0
    %v1396 = vadd.f32 0.0, %v1395
    %1397 = vmatmul.f32.gmra.mxu0 %v1353
    %v1398 = vpop.f32.mrf.mxu0
    %v1399 = vadd.f32 0.0, %v1398
    %1400 = vmatmul.f32.gmra.mxu0 %v1354
    %v1401 = vpop.f32.mrf.mxu0
    %v1402 = vadd.f32 0.0, %v1401
    %1403 = vmatmul.f32.gmra.mxu0 %v1355
    %v1404 = vpop.f32.mrf.mxu0
    %v1405 = vadd.f32 0.0, %v1404
    %1406 = vmatmul.f32.gmra.mxu0 %v1356
    %v1407 = vpop.f32.mrf.mxu0
    %v1408 = vadd.f32 0.0, %v1407
    %1409 = vmatmul.f32.gmra.mxu0 %v1357
    %v1410 = vpop.f32.mrf.mxu0
    %v1411 = vadd.f32 0.0, %v1410
    %1412 = vmatmul.f32.gmra.mxu0 %v1358
    %v1413 = vpop.f32.mrf.mxu0
    %v1414 = vadd.f32 0.0, %v1413
    %1415 = vmatmul.f32.gmra.mxu0 %v1359
    %v1416 = vpop.f32.mrf.mxu0
    %v1417 = vadd.f32 0.0, %v1416
    %1418 = vmatmul.f32.gmra.mxu0 %v1360
    %v1419 = vpop.f32.mrf.mxu0
    %v1420 = vadd.f32 0.0, %v1419
    %1421 = vmatmul.f32.gmra.mxu0 %v1361
    %v1422 = vpop.f32.mrf.mxu0
    %v1423 = vadd.f32 0.0, %v1422
    %1424 = vmatmul.f32.gmra.mxu0 %v1362
    %v1425 = vpop.f32.mrf.mxu0
    %v1426 = vadd.f32 0.0, %v1425
    %1427 = vdwg.mxu0
    %1428 = vmatpush.msra.mxu0 %v1346
    %1429 = vmatpush.msra.mxu0 %v1345
    %1430 = vmatpush.msra.mxu0 %v1344
    %1431 = vmatpush.msra.mxu0 %v1343
    %1432 = vmatpush.msra.mxu0 %v1342
    %1433 = vmatpush.msra.mxu0 %v1341
    %1434 = vmatpush.msra.mxu0 %v1340
    %1435 = vmatpush.msra.mxu0 %v1339
    %1436 = vmatpush.msra.mxu0 %v1338
    %1437 = vmatpush.msra.mxu0 %v1337
    %1438 = vmatpush.msra.mxu0 %v1336
    %1439 = vmatpush.msra.mxu0 %v1335
    %1440 = vmatpush.msra.mxu0 %v1334
    %1441 = vmatpush.msra.mxu0 %v1333
    %1442 = vmatpush.msra.mxu0 %v1332
    %1443 = vmatpush.msra.mxu0 %v1331
    %1444 = vmatmul.f32.gmra.mxu0 %v1347
    %v1445 = vpop.f32.mrf.mxu0
    %v1446 = vadd.f32 0.0, %v1445
    %1447 = vmatmul.f32.gmra.mxu0 %v1348
    %v1448 = vpop.f32.mrf.mxu0
    %v1449 = vadd.f32 0.0, %v1448
    %1450 = vmatmul.f32.gmra.mxu0 %v1349
    %v1451 = vpop.f32.mrf.mxu0
    %v1452 = vadd.f32 0.0, %v1451
    %1453 = vmatmul.f32.gmra.mxu0 %v1350
    %v1454 = vpop.f32.mrf.mxu0
    %v1455 = vadd.f32 0.0, %v1454
    %1456 = vmatmul.f32.gmra.mxu0 %v1351
    %v1457 = vpop.f32.mrf.mxu0
    %v1458 = vadd.f32 0.0, %v1457
    %1459 = vmatmul.f32.gmra.mxu0 %v1352
    %v1460 = vpop.f32.mrf.mxu0
    %v1461 = vadd.f32 0.0, %v1460
    %1462 = vmatmul.f32.gmra.mxu0 %v1353
    %v1463 = vpop.f32.mrf.mxu0
    %v1464 = vadd.f32 0.0, %v1463
    %1465 = vmatmul.f32.gmra.mxu0 %v1354
    %v1466 = vpop.f32.mrf.mxu0
    %v1467 = vadd.f32 0.0, %v1466
    %1468 = vmatmul.f32.gmra.mxu0 %v1355
    %v1469 = vpop.f32.mrf.mxu0
    %v1470 = vadd.f32 0.0, %v1469
    %1471 = vmatmul.f32.gmra.mxu0 %v1356
    %v1472 = vpop.f32.mrf.mxu0
    %v1473 = vadd.f32 0.0, %v1472
    %1474 = vmatmul.f32.gmra.mxu0 %v1357
    %v1475 = vpop.f32.mrf.mxu0
    %v1476 = vadd.f32 0.0, %v1475
    %1477 = vmatmul.f32.gmra.mxu0 %v1358
    %v1478 = vpop.f32.mrf.mxu0
    %v1479 = vadd.f32 0.0, %v1478
    %1480 = vmatmul.f32.gmra.mxu0 %v1359
    %v1481 = vpop.f32.mrf.mxu0
    %v1482 = vadd.f32 0.0, %v1481
    %1483 = vmatmul.f32.gmra.mxu0 %v1360
    %v1484 = vpop.f32.mrf.mxu0
    %v1485 = vadd.f32 0.0, %v1484
    %1486 = vmatmul.f32.gmra.mxu0 %v1361
    %v1487 = vpop.f32.mrf.mxu0
    %v1488 = vadd.f32 0.0, %v1487
    %1489 = vmatmul.f32.gmra.mxu0 %v1362
    %v1490 = vpop.f32.mrf.mxu0
    %v1491 = vadd.f32 0.0, %v1490
    %1492 = vdwg.mxu0
    %1493 = vmatpush.msra.mxu0 %v1426
    %1494 = vmatpush.msra.mxu0 %v1423
    %1495 = vmatpush.msra.mxu0 %v1420
    %1496 = vmatpush.msra.mxu0 %v1417
    %1497 = vmatpush.msra.mxu0 %v1414
    %1498 = vmatpush.msra.mxu0 %v1411
    %1499 = vmatpush.msra.mxu0 %v1408
    %1500 = vmatpush.msra.mxu0 %v1405
    %1501 = vmatpush.msra.mxu0 %v1402
    %1502 = vmatpush.msra.mxu0 %v1399
    %1503 = vmatpush.msra.mxu0 %v1396
    %1504 = vmatpush.msra.mxu0 %v1393
    %1505 = vmatpush.msra.mxu0 %v1390
    %1506 = vmatpush.msra.mxu0 %v1387
    %1507 = vmatpush.msra.mxu0 %v1384
    %1508 = vmatpush.msra.mxu0 %v1381
    %1509 = vmatmul.f32.gmra.mxu0 %v1347
    %v1510 = vpop.f32.mrf.mxu0
    %v1511 = vadd.f32 0.0, %v1510
    %1512 = vmatmul.f32.gmra.mxu0 %v1348
    %v1513 = vpop.f32.mrf.mxu0
    %v1514 = vadd.f32 0.0, %v1513
    %1515 = vmatmul.f32.gmra.mxu0 %v1349
    %v1516 = vpop.f32.mrf.mxu0
    %v1517 = vadd.f32 0.0, %v1516
    %1518 = vmatmul.f32.gmra.mxu0 %v1350
    %v1519 = vpop.f32.mrf.mxu0
    %v1520 = vadd.f32 0.0, %v1519
    %1521 = vmatmul.f32.gmra.mxu0 %v1351
    %v1522 = vpop.f32.mrf.mxu0
    %v1523 = vadd.f32 0.0, %v1522
    %1524 = vmatmul.f32.gmra.mxu0 %v1352
    %v1525 = vpop.f32.mrf.mxu0
    %v1526 = vadd.f32 0.0, %v1525
    %1527 = vmatmul.f32.gmra.mxu0 %v1353
    %v1528 = vpop.f32.mrf.mxu0
    %v1529 = vadd.f32 0.0, %v1528
    %1530 = vmatmul.f32.gmra.mxu0 %v1354
    %v1531 = vpop.f32.mrf.mxu0
    %v1532 = vadd.f32 0.0, %v1531
    %1533 = vmatmul.f32.gmra.mxu0 %v1355
    %v1534 = vpop.f32.mrf.mxu0
    %v1535 = vadd.f32 0.0, %v1534
    %1536 = vmatmul.f32.gmra.mxu0 %v1356
    %v1537 = vpop.f32.mrf.mxu0
    %v1538 = vadd.f32 0.0, %v1537
    %1539 = vmatmul.f32.gmra.mxu0 %v1357
    %v1540 = vpop.f32.mrf.mxu0
    %v1541 = vadd.f32 0.0, %v1540
    %1542 = vmatmul.f32.gmra.mxu0 %v1358
    %v1543 = vpop.f32.mrf.mxu0
    %v1544 = vadd.f32 0.0, %v1543
    %1545 = vmatmul.f32.gmra.mxu0 %v1359
    %v1546 = vpop.f32.mrf.mxu0
    %v1547 = vadd.f32 0.0, %v1546
    %1548 = vmatmul.f32.gmra.mxu0 %v1360
    %v1549 = vpop.f32.mrf.mxu0
    %v1550 = vadd.f32 0.0, %v1549
    %1551 = vmatmul.f32.gmra.mxu0 %v1361
    %v1552 = vpop.f32.mrf.mxu0
    %v1553 = vadd.f32 0.0, %v1552
    %1554 = vmatmul.f32.gmra.mxu0 %v1362
    %v1555 = vpop.f32.mrf.mxu0
    %v1556 = vadd.f32 0.0, %v1555
    %1557 = vdwg.mxu0
    %1558 = vmatpush.msra.mxu0 %v1491
    %1559 = vmatpush.msra.mxu0 %v1488
    %1560 = vmatpush.msra.mxu0 %v1485
    %1561 = vmatpush.msra.mxu0 %v1482
    %1562 = vmatpush.msra.mxu0 %v1479
    %1563 = vmatpush.msra.mxu0 %v1476
    %1564 = vmatpush.msra.mxu0 %v1473
    %1565 = vmatpush.msra.mxu0 %v1470
    %1566 = vmatpush.msra.mxu0 %v1467
    %1567 = vmatpush.msra.mxu0 %v1464
    %1568 = vmatpush.msra.mxu0 %v1461
    %1569 = vmatpush.msra.mxu0 %v1458
    %1570 = vmatpush.msra.mxu0 %v1455
    %1571 = vmatpush.msra.mxu0 %v1452
    %1572 = vmatpush.msra.mxu0 %v1449
    %1573 = vmatpush.msra.mxu0 %v1446
    %1574 = vmatmul.f32.gmra.mxu0 %v1347
    %v1575 = vpop.f32.mrf.mxu0
    %v1576 = vadd.f32 0.0, %v1575
    %1577 = vmatmul.f32.gmra.mxu0 %v1348
    %v1578 = vpop.f32.mrf.mxu0
    %v1579 = vadd.f32 0.0, %v1578
    %1580 = vmatmul.f32.gmra.mxu0 %v1349
    %v1581 = vpop.f32.mrf.mxu0
    %v1582 = vadd.f32 0.0, %v1581
    %1583 = vmatmul.f32.gmra.mxu0 %v1350
    %v1584 = vpop.f32.mrf.mxu0
    %v1585 = vadd.f32 0.0, %v1584
    %1586 = vmatmul.f32.gmra.mxu0 %v1351
    %v1587 = vpop.f32.mrf.mxu0
    %v1588 = vadd.f32 0.0, %v1587
    %1589 = vmatmul.f32.gmra.mxu0 %v1352
    %v1590 = vpop.f32.mrf.mxu0
    %v1591 = vadd.f32 0.0, %v1590
    %1592 = vmatmul.f32.gmra.mxu0 %v1353
    %v1593 = vpop.f32.mrf.mxu0
    %v1594 = vadd.f32 0.0, %v1593
    %1595 = vmatmul.f32.gmra.mxu0 %v1354
    %v1596 = vpop.f32.mrf.mxu0
    %v1597 = vadd.f32 0.0, %v1596
    %1598 = vmatmul.f32.gmra.mxu0 %v1355
    %v1599 = vpop.f32.mrf.mxu0
    %v1600 = vadd.f32 0.0, %v1599
    %1601 = vmatmul.f32.gmra.mxu0 %v1356
    %v1602 = vpop.f32.mrf.mxu0
    %v1603 = vadd.f32 0.0, %v1602
    %1604 = vmatmul.f32.gmra.mxu0 %v1357
    %v1605 = vpop.f32.mrf.mxu0
    %v1606 = vadd.f32 0.0, %v1605
    %1607 = vmatmul.f32.gmra.mxu0 %v1358
    %v1608 = vpop.f32.mrf.mxu0
    %v1609 = vadd.f32 0.0, %v1608
    %1610 = vmatmul.f32.gmra.mxu0 %v1359
    %v1611 = vpop.f32.mrf.mxu0
    %v1612 = vadd.f32 0.0, %v1611
    %1613 = vmatmul.f32.gmra.mxu0 %v1360
    %v1614 = vpop.f32.mrf.mxu0
    %v1615 = vadd.f32 0.0, %v1614
    %1616 = vmatmul.f32.gmra.mxu0 %v1361
    %v1617 = vpop.f32.mrf.mxu0
    %v1618 = vadd.f32 0.0, %v1617
    %1619 = vmatmul.f32.gmra.mxu0 %v1362
    %v1620 = vpop.f32.mrf.mxu0
    %v1621 = vadd.f32 0.0, %v1620
    %1622 = vdwg.mxu0
    %v1623 = vmul.f32 %v1511, 2.0
    %v1624 = vmul.f32 %v1514, 2.0
    %v1625 = vmul.f32 %v1517, 2.0
    %v1626 = vmul.f32 %v1520, 2.0
    %v1627 = vmul.f32 %v1523, 2.0
    %v1628 = vmul.f32 %v1526, 2.0
    %v1629 = vmul.f32 %v1529, 2.0
    %v1630 = vmul.f32 %v1532, 2.0
    %v1631 = vmul.f32 %v1535, 2.0
    %v1632 = vmul.f32 %v1538, 2.0
    %v1633 = vmul.f32 %v1541, 2.0
    %v1634 = vmul.f32 %v1544, 2.0
    %v1635 = vmul.f32 %v1547, 2.0
    %v1636 = vmul.f32 %v1550, 2.0
    %v1637 = vmul.f32 %v1553, 2.0
    %v1638 = vmul.f32 %v1556, 2.0
    %v1639 = vmul.f32 %v1576, 2.0
    %v1640 = vmul.f32 %v1579, 2.0
    %v1641 = vmul.f32 %v1582, 2.0
    %v1642 = vmul.f32 %v1585, 2.0
    %v1643 = vmul.f32 %v1588, 2.0
    %v1644 = vmul.f32 %v1591, 2.0
    %v1645 = vmul.f32 %v1594, 2.0
    %v1646 = vmul.f32 %v1597, 2.0
    %v1647 = vmul.f32 %v1600, 2.0
    %v1648 = vmul.f32 %v1603, 2.0
    %v1649 = vmul.f32 %v1606, 2.0
    %v1650 = vmul.f32 %v1609, 2.0
    %v1651 = vmul.f32 %v1612, 2.0
    %v1652 = vmul.f32 %v1615, 2.0
    %v1653 = vmul.f32 %v1618, 2.0
    %v1654 = vmul.f32 %v1621, 2.0
    %v1655 = vsub.f32 %v1623, %v1315
    %v1656 = vsub.f32 %v1624, %v1316
    %v1657 = vsub.f32 %v1625, %v1317
    %v1658 = vsub.f32 %v1626, %v1318
    %v1659 = vsub.f32 %v1627, %v1319
    %v1660 = vsub.f32 %v1628, %v1320
    %v1661 = vsub.f32 %v1629, %v1321
    %v1662 = vsub.f32 %v1630, %v1322
    %v1663 = vsub.f32 %v1631, %v1323
    %v1664 = vsub.f32 %v1632, %v1324
    %v1665 = vsub.f32 %v1633, %v1325
    %v1666 = vsub.f32 %v1634, %v1326
    %v1667 = vsub.f32 %v1635, %v1327
    %v1668 = vsub.f32 %v1636, %v1328
    %v1669 = vsub.f32 %v1637, %v1329
    %v1670 = vsub.f32 %v1638, %v1330
    %v1671 = vsub.f32 %v1639, %v1331
    %v1672 = vsub.f32 %v1640, %v1332
    %v1673 = vsub.f32 %v1641, %v1333
    %v1674 = vsub.f32 %v1642, %v1334
    %v1675 = vsub.f32 %v1643, %v1335
    %v1676 = vsub.f32 %v1644, %v1336
    %v1677 = vsub.f32 %v1645, %v1337
    %v1678 = vsub.f32 %v1646, %v1338
    %v1679 = vsub.f32 %v1647, %v1339
    %v1680 = vsub.f32 %v1648, %v1340
    %v1681 = vsub.f32 %v1649, %v1341
    %v1682 = vsub.f32 %v1650, %v1342
    %v1683 = vsub.f32 %v1651, %v1343
    %v1684 = vsub.f32 %v1652, %v1344
    %v1685 = vsub.f32 %v1653, %v1345
    %v1686 = vsub.f32 %v1654, %v1346
    %1719 = vrot.lane.b32.xlu0 %v1381, 32
    %v1720 = vpop.permute.xlu0 %1719
    %1721 = vrot.lane.b32.xlu0 %v1384, 32
    %v1722 = vpop.permute.xlu0 %1721
    %1723 = vrot.lane.b32.xlu0 %v1387, 32
    %v1724 = vpop.permute.xlu0 %1723
    %1725 = vrot.lane.b32.xlu0 %v1390, 32
    %v1726 = vpop.permute.xlu0 %1725
    %1727 = vrot.lane.b32.xlu0 %v1393, 32
    %v1728 = vpop.permute.xlu0 %1727
    %1729 = vrot.lane.b32.xlu0 %v1396, 32
    %v1730 = vpop.permute.xlu0 %1729
    %1731 = vrot.lane.b32.xlu0 %v1399, 32
    %v1732 = vpop.permute.xlu0 %1731
    %1733 = vrot.lane.b32.xlu0 %v1402, 32
    %v1734 = vpop.permute.xlu0 %1733
    %1735 = vrot.lane.b32.xlu0 %v1405, 32
    %v1736 = vpop.permute.xlu0 %1735
    %1737 = vrot.lane.b32.xlu0 %v1408, 32
    %v1738 = vpop.permute.xlu0 %1737
    %1739 = vrot.lane.b32.xlu0 %v1411, 32
    %v1740 = vpop.permute.xlu0 %1739
    %1741 = vrot.lane.b32.xlu0 %v1414, 32
    %v1742 = vpop.permute.xlu0 %1741
    %1743 = vrot.lane.b32.xlu0 %v1417, 32
    %v1744 = vpop.permute.xlu0 %1743
    %1745 = vrot.lane.b32.xlu0 %v1420, 32
    %v1746 = vpop.permute.xlu0 %1745
    %1747 = vrot.lane.b32.xlu0 %v1423, 32
    %v1748 = vpop.permute.xlu0 %1747
    %1749 = vrot.lane.b32.xlu0 %v1426, 32
    %v1750 = vpop.permute.xlu0 %1749
    %1751 = vrot.lane.b32.xlu0 %v1446, 32
    %v1752 = vpop.permute.xlu0 %1751
    %1753 = vrot.lane.b32.xlu0 %v1449, 32
    %v1754 = vpop.permute.xlu0 %1753
    %1755 = vrot.lane.b32.xlu0 %v1452, 32
    %v1756 = vpop.permute.xlu0 %1755
    %1757 = vrot.lane.b32.xlu0 %v1455, 32
    %v1758 = vpop.permute.xlu0 %1757
    %1759 = vrot.lane.b32.xlu0 %v1458, 32
    %v1760 = vpop.permute.xlu0 %1759
    %1761 = vrot.lane.b32.xlu0 %v1461, 32
    %v1762 = vpop.permute.xlu0 %1761
    %1763 = vrot.lane.b32.xlu0 %v1464, 32
    %v1764 = vpop.permute.xlu0 %1763
    %1765 = vrot.lane.b32.xlu0 %v1467, 32
    %v1766 = vpop.permute.xlu0 %1765
    %1767 = vrot.lane.b32.xlu0 %v1470, 32
    %v1768 = vpop.permute.xlu0 %1767
    %1769 = vrot.lane.b32.xlu0 %v1473, 32
    %v1770 = vpop.permute.xlu0 %1769
    %1771 = vrot.lane.b32.xlu0 %v1476, 32
    %v1772 = vpop.permute.xlu0 %1771
    %1773 = vrot.lane.b32.xlu0 %v1479, 32
    %v1774 = vpop.permute.xlu0 %1773
    %1775 = vrot.lane.b32.xlu0 %v1482, 32
    %v1776 = vpop.permute.xlu0 %1775
    %1777 = vrot.lane.b32.xlu0 %v1485, 32
    %v1778 = vpop.permute.xlu0 %1777
    %1779 = vrot.lane.b32.xlu0 %v1488, 32
    %v1780 = vpop.permute.xlu0 %1779
    %1781 = vrot.lane.b32.xlu0 %v1491, 32
    %v1782 = vpop.permute.xlu0 %1781
    %1847 = vrot.lane.b32.xlu0 %v1655, 64
    %v1848 = vpop.permute.xlu0 %1847
    %1849 = vrot.lane.b32.xlu0 %v1656, 64
    %v1850 = vpop.permute.xlu0 %1849
    %1851 = vrot.lane.b32.xlu0 %v1657, 64
    %v1852 = vpop.permute.xlu0 %1851
    %1853 = vrot.lane.b32.xlu0 %v1658, 64
    %v1854 = vpop.permute.xlu0 %1853
    %1855 = vrot.lane.b32.xlu0 %v1659, 64
    %v1856 = vpop.permute.xlu0 %1855
    %1857 = vrot.lane.b32.xlu0 %v1660, 64
    %v1858 = vpop.permute.xlu0 %1857
    %1859 = vrot.lane.b32.xlu0 %v1661, 64
    %v1860 = vpop.permute.xlu0 %1859
    %1861 = vrot.lane.b32.xlu0 %v1662, 64
    %v1862 = vpop.permute.xlu0 %1861
    %1863 = vrot.lane.b32.xlu0 %v1663, 64
    %v1864 = vpop.permute.xlu0 %1863
    %1865 = vrot.lane.b32.xlu0 %v1664, 64
    %v1866 = vpop.permute.xlu0 %1865
    %1867 = vrot.lane.b32.xlu0 %v1665, 64
    %v1868 = vpop.permute.xlu0 %1867
    %1869 = vrot.lane.b32.xlu0 %v1666, 64
    %v1870 = vpop.permute.xlu0 %1869
    %1871 = vrot.lane.b32.xlu0 %v1667, 64
    %v1872 = vpop.permute.xlu0 %1871
    %1873 = vrot.lane.b32.xlu0 %v1668, 64
    %v1874 = vpop.permute.xlu0 %1873
    %1875 = vrot.lane.b32.xlu0 %v1669, 64
    %v1876 = vpop.permute.xlu0 %1875
    %1877 = vrot.lane.b32.xlu0 %v1670, 64
    %v1878 = vpop.permute.xlu0 %1877
    %1879 = vrot.lane.b32.xlu0 %v1671, 64
    %v1880 = vpop.permute.xlu0 %1879
    %1881 = vrot.lane.b32.xlu0 %v1672, 64
    %v1882 = vpop.permute.xlu0 %1881
    %1883 = vrot.lane.b32.xlu0 %v1673, 64
    %v1884 = vpop.permute.xlu0 %1883
    %1885 = vrot.lane.b32.xlu0 %v1674, 64
    %v1886 = vpop.permute.xlu0 %1885
    %1887 = vrot.lane.b32.xlu0 %v1675, 64
    %v1888 = vpop.permute.xlu0 %1887
    %1889 = vrot.lane.b32.xlu0 %v1676, 64
    %v1890 = vpop.permute.xlu0 %1889
    %1891 = vrot.lane.b32.xlu0 %v1677, 64
    %v1892 = vpop.permute.xlu0 %1891
    %1893 = vrot.lane.b32.xlu0 %v1678, 64
    %v1894 = vpop.permute.xlu0 %1893
    %1895 = vrot.lane.b32.xlu0 %v1679, 64
    %v1896 = vpop.permute.xlu0 %1895
    %1897 = vrot.lane.b32.xlu0 %v1680, 64
    %v1898 = vpop.permute.xlu0 %1897
    %1899 = vrot.lane.b32.xlu0 %v1681, 64
    %v1900 = vpop.permute.xlu0 %1899
    %1901 = vrot.lane.b32.xlu0 %v1682, 64
    %v1902 = vpop.permute.xlu0 %1901
    %1903 = vrot.lane.b32.xlu0 %v1683, 64
    %v1904 = vpop.permute.xlu0 %1903
    %1905 = vrot.lane.b32.xlu0 %v1684, 64
    %v1906 = vpop.permute.xlu0 %1905
    %1907 = vrot.lane.b32.xlu0 %v1685, 64
    %v1908 = vpop.permute.xlu0 %1907
    %1909 = vrot.lane.b32.xlu0 %v1686, 64
    %v1910 = vpop.permute.xlu0 %1909
    %vm1943 = vcmask 261120
    %v1944 = vsel %vm1943, %v1315, %v1720
    %v1945 = vsel %vm1943, %v1316, %v1722
    %v1946 = vsel %vm1943, %v1317, %v1724
    %v1947 = vsel %vm1943, %v1318, %v1726
    %v1948 = vsel %vm1943, %v1319, %v1728
    %v1949 = vsel %vm1943, %v1320, %v1730
    %v1950 = vsel %vm1943, %v1321, %v1732
    %v1951 = vsel %vm1943, %v1322, %v1734
    %v1952 = vsel %vm1943, %v1323, %v1736
    %v1953 = vsel %vm1943, %v1324, %v1738
    %v1954 = vsel %vm1943, %v1325, %v1740
    %v1955 = vsel %vm1943, %v1326, %v1742
    %v1956 = vsel %vm1943, %v1327, %v1744
    %v1957 = vsel %vm1943, %v1328, %v1746
    %v1958 = vsel %vm1943, %v1329, %v1748
    %v1959 = vsel %vm1943, %v1330, %v1750
    %v1960 = vsel %vm1943, %v1331, %v1752
    %v1961 = vsel %vm1943, %v1332, %v1754
    %v1962 = vsel %vm1943, %v1333, %v1756
    %v1963 = vsel %vm1943, %v1334, %v1758
    %v1964 = vsel %vm1943, %v1335, %v1760
    %v1965 = vsel %vm1943, %v1336, %v1762
    %v1966 = vsel %vm1943, %v1337, %v1764
    %v1967 = vsel %vm1943, %v1338, %v1766
    %v1968 = vsel %vm1943, %v1339, %v1768
    %v1969 = vsel %vm1943, %v1340, %v1770
    %v1970 = vsel %vm1943, %v1341, %v1772
    %v1971 = vsel %vm1943, %v1342, %v1774
    %v1972 = vsel %vm1943, %v1343, %v1776
    %v1973 = vsel %vm1943, %v1344, %v1778
    %v1974 = vsel %vm1943, %v1345, %v1780
    %v1975 = vsel %vm1943, %v1346, %v1782
    %vm1976 = vcmask 523264
    %v1977 = vsel %vm1976, %v1944, %v1848
    %v1978 = vsel %vm1976, %v1945, %v1850
    %v1979 = vsel %vm1976, %v1946, %v1852
    %v1980 = vsel %vm1976, %v1947, %v1854
    %v1981 = vsel %vm1976, %v1948, %v1856
    %v1982 = vsel %vm1976, %v1949, %v1858
    %v1983 = vsel %vm1976, %v1950, %v1860
    %v1984 = vsel %vm1976, %v1951, %v1862
    %v1985 = vsel %vm1976, %v1952, %v1864
    %v1986 = vsel %vm1976, %v1953, %v1866
    %v1987 = vsel %vm1976, %v1954, %v1868
    %v1988 = vsel %vm1976, %v1955, %v1870
    %v1989 = vsel %vm1976, %v1956, %v1872
    %v1990 = vsel %vm1976, %v1957, %v1874
    %v1991 = vsel %vm1976, %v1958, %v1876
    %v1992 = vsel %vm1976, %v1959, %v1878
    %v1993 = vsel %vm1976, %v1960, %v1880
    %v1994 = vsel %vm1976, %v1961, %v1882
    %v1995 = vsel %vm1976, %v1962, %v1884
    %v1996 = vsel %vm1976, %v1963, %v1886
    %v1997 = vsel %vm1976, %v1964, %v1888
    %v1998 = vsel %vm1976, %v1965, %v1890
    %v1999 = vsel %vm1976, %v1966, %v1892
    %v2000 = vsel %vm1976, %v1967, %v1894
    %v2001 = vsel %vm1976, %v1968, %v1896
    %v2002 = vsel %vm1976, %v1969, %v1898
    %v2003 = vsel %vm1976, %v1970, %v1900
    %v2004 = vsel %vm1976, %v1971, %v1902
    %v2005 = vsel %vm1976, %v1972, %v1904
    %v2006 = vsel %vm1976, %v1973, %v1906
    %v2007 = vsel %vm1976, %v1974, %v1908
    %v2008 = vsel %vm1976, %v1975, %v1910
    %v2009 = vld [vmem:[%s4] sm:$0xff]
    %v2010 = vld [vmem:[%s4 + $0x8] sm:$0xff]
    %v2011 = vld [vmem:[%s4 + $0x10] sm:$0xff]
    %v2012 = vld [vmem:[%s4 + $0x18] sm:$0xff]
    %v2013 = vld [vmem:[%s4 + $0x20] sm:$0xff]
    %v2014 = vld [vmem:[%s4 + $0x28] sm:$0xff]
    %v2015 = vld [vmem:[%s4 + $0x30] sm:$0xff]
    %v2016 = vld [vmem:[%s4 + $0x38] sm:$0xff]
    %v2017 = vld [vmem:[%s4 + $0x40] sm:$0xff]
    %v2018 = vld [vmem:[%s4 + $0x48] sm:$0xff]
    %v2019 = vld [vmem:[%s4 + $0x50] sm:$0xff]
    %v2020 = vld [vmem:[%s4 + $0x58] sm:$0xff]
    %v2021 = vld [vmem:[%s5] sm:$0x1]
    %v2023 = vperm.slane %v2021, 0
    %vm2025 = vcmask 785408
    %v2027 = vsel %vm2025, %v1977, 0
    %v2030 = vsel %vm2025, %v1978, 0
    %v2033 = vsel %vm2025, %v1979, 0
    %v2036 = vsel %vm2025, %v1980, 0
    %v2039 = vsel %vm2025, %v1981, 0
    %v2042 = vsel %vm2025, %v1982, 0
    %v2045 = vsel %vm2025, %v1983, 0
    %v2048 = vsel %vm2025, %v1984, 0
    %v2051 = vsel %vm2025, %v1985, 0
    %v2054 = vsel %vm2025, %v1986, 0
    %v2057 = vsel %vm2025, %v1987, 0
    %v2060 = vsel %vm2025, %v1988, 0
    %v2063 = vsel %vm2025, %v1989, 0
    %v2066 = vsel %vm2025, %v1990, 0
    %v2069 = vsel %vm2025, %v1991, 0
    %v2072 = vsel %vm2025, %v1992, 0
    %v2075 = vsel %vm2025, %v1993, 0
    %v2078 = vsel %vm2025, %v1994, 0
    %v2081 = vsel %vm2025, %v1995, 0
    %v2084 = vsel %vm2025, %v1996, 0
    %v2087 = vsel %vm2025, %v1997, 0
    %v2090 = vsel %vm2025, %v1998, 0
    %v2093 = vsel %vm2025, %v1999, 0
    %v2096 = vsel %vm2025, %v2000, 0
    %v2099 = vsel %vm2025, %v2001, 0
    %v2102 = vsel %vm2025, %v2002, 0
    %v2105 = vsel %vm2025, %v2003, 0
    %v2108 = vsel %vm2025, %v2004, 0
    %v2111 = vsel %vm2025, %v2005, 0
    %v2114 = vsel %vm2025, %v2006, 0
    %v2117 = vsel %vm2025, %v2007, 0
    %v2120 = vsel %vm2025, %v2008, 0
    %2122 = vmatpush.msra.mxu0 0.0
    %2123 = vmatpush.msra.mxu0 0.0
    %2124 = vmatpush.msra.mxu0 0.0
    %2125 = vmatpush.msra.mxu0 0.0
    %2126 = vmatpush.msra.mxu0 %v2020
    %2127 = vmatpush.msra.mxu0 %v2019
    %2128 = vmatpush.msra.mxu0 %v2018
    %2129 = vmatpush.msra.mxu0 %v2017
    %2130 = vmatpush.msra.mxu0 %v2016
    %2131 = vmatpush.msra.mxu0 %v2015
    %2132 = vmatpush.msra.mxu0 %v2014
    %2133 = vmatpush.msra.mxu0 %v2013
    %2134 = vmatpush.msra.mxu0 %v2012
    %2135 = vmatpush.msra.mxu0 %v2011
    %2136 = vmatpush.msra.mxu0 %v2010
    %2137 = vmatpush.msra.mxu0 %v2009
    %2138 = vmatmul.f32.gmra.mxu0 %v2027
    %v2139 = vpop.f32.mrf.mxu0
    %v2140 = vadd.f32 %v2023, %v2139
    %2141 = vmatmul.f32.gmra.mxu0 %v2030
    %v2142 = vpop.f32.mrf.mxu0
    %v2143 = vadd.f32 %v2023, %v2142
    %2144 = vmatmul.f32.gmra.mxu0 %v2033
    %v2145 = vpop.f32.mrf.mxu0
    %v2146 = vadd.f32 %v2023, %v2145
    %2147 = vmatmul.f32.gmra.mxu0 %v2036
    %v2148 = vpop.f32.mrf.mxu0
    %v2149 = vadd.f32 %v2023, %v2148
    %2150 = vmatmul.f32.gmra.mxu0 %v2039
    %v2151 = vpop.f32.mrf.mxu0
    %v2152 = vadd.f32 %v2023, %v2151
    %2153 = vmatmul.f32.gmra.mxu0 %v2042
    %v2154 = vpop.f32.mrf.mxu0
    %v2155 = vadd.f32 %v2023, %v2154
    %2156 = vmatmul.f32.gmra.mxu0 %v2045
    %v2157 = vpop.f32.mrf.mxu0
    %v2158 = vadd.f32 %v2023, %v2157
    %2159 = vmatmul.f32.gmra.mxu0 %v2048
    %v2160 = vpop.f32.mrf.mxu0
    %v2161 = vadd.f32 %v2023, %v2160
    %2162 = vmatmul.f32.gmra.mxu0 %v2051
    %v2163 = vpop.f32.mrf.mxu0
    %v2164 = vadd.f32 %v2023, %v2163
    %2165 = vmatmul.f32.gmra.mxu0 %v2054
    %v2166 = vpop.f32.mrf.mxu0
    %v2167 = vadd.f32 %v2023, %v2166
    %2168 = vmatmul.f32.gmra.mxu0 %v2057
    %v2169 = vpop.f32.mrf.mxu0
    %v2170 = vadd.f32 %v2023, %v2169
    %2171 = vmatmul.f32.gmra.mxu0 %v2060
    %v2172 = vpop.f32.mrf.mxu0
    %v2173 = vadd.f32 %v2023, %v2172
    %2174 = vmatmul.f32.gmra.mxu0 %v2063
    %v2175 = vpop.f32.mrf.mxu0
    %v2176 = vadd.f32 %v2023, %v2175
    %2177 = vmatmul.f32.gmra.mxu0 %v2066
    %v2178 = vpop.f32.mrf.mxu0
    %v2179 = vadd.f32 %v2023, %v2178
    %2180 = vmatmul.f32.gmra.mxu0 %v2069
    %v2181 = vpop.f32.mrf.mxu0
    %v2182 = vadd.f32 %v2023, %v2181
    %2183 = vmatmul.f32.gmra.mxu0 %v2072
    %v2184 = vpop.f32.mrf.mxu0
    %v2185 = vadd.f32 %v2023, %v2184
    %2186 = vmatmul.f32.gmra.mxu0 %v2075
    %v2187 = vpop.f32.mrf.mxu0
    %v2188 = vadd.f32 %v2023, %v2187
    %2189 = vmatmul.f32.gmra.mxu0 %v2078
    %v2190 = vpop.f32.mrf.mxu0
    %v2191 = vadd.f32 %v2023, %v2190
    %2192 = vmatmul.f32.gmra.mxu0 %v2081
    %v2193 = vpop.f32.mrf.mxu0
    %v2194 = vadd.f32 %v2023, %v2193
    %2195 = vmatmul.f32.gmra.mxu0 %v2084
    %v2196 = vpop.f32.mrf.mxu0
    %v2197 = vadd.f32 %v2023, %v2196
    %2198 = vmatmul.f32.gmra.mxu0 %v2087
    %v2199 = vpop.f32.mrf.mxu0
    %v2200 = vadd.f32 %v2023, %v2199
    %2201 = vmatmul.f32.gmra.mxu0 %v2090
    %v2202 = vpop.f32.mrf.mxu0
    %v2203 = vadd.f32 %v2023, %v2202
    %2204 = vmatmul.f32.gmra.mxu0 %v2093
    %v2205 = vpop.f32.mrf.mxu0
    %v2206 = vadd.f32 %v2023, %v2205
    %2207 = vmatmul.f32.gmra.mxu0 %v2096
    %v2208 = vpop.f32.mrf.mxu0
    %v2209 = vadd.f32 %v2023, %v2208
    %2210 = vmatmul.f32.gmra.mxu0 %v2099
    %v2211 = vpop.f32.mrf.mxu0
    %v2212 = vadd.f32 %v2023, %v2211
    %2213 = vmatmul.f32.gmra.mxu0 %v2102
    %v2214 = vpop.f32.mrf.mxu0
    %v2215 = vadd.f32 %v2023, %v2214
    %2216 = vmatmul.f32.gmra.mxu0 %v2105
    %v2217 = vpop.f32.mrf.mxu0
    %v2218 = vadd.f32 %v2023, %v2217
    %2219 = vmatmul.f32.gmra.mxu0 %v2108
    %v2220 = vpop.f32.mrf.mxu0
    %v2221 = vadd.f32 %v2023, %v2220
    %2222 = vmatmul.f32.gmra.mxu0 %v2111
    %v2223 = vpop.f32.mrf.mxu0
    %v2224 = vadd.f32 %v2023, %v2223
    %2225 = vmatmul.f32.gmra.mxu0 %v2114
    %v2226 = vpop.f32.mrf.mxu0
    %v2227 = vadd.f32 %v2023, %v2226
    %2228 = vmatmul.f32.gmra.mxu0 %v2117
    %v2229 = vpop.f32.mrf.mxu0
    %v2230 = vadd.f32 %v2023, %v2229
    %2231 = vmatmul.f32.gmra.mxu0 %v2120
    %v2232 = vpop.f32.mrf.mxu0
    %v2233 = vadd.f32 %v2023, %v2232
    %2234 = vdwg.mxu0
    %v2235 = vadd.f32 %v2140, %v1315
    %v2236 = vadd.f32 %v2143, %v1316
    %v2237 = vadd.f32 %v2146, %v1317
    %v2238 = vadd.f32 %v2149, %v1318
    %v2239 = vadd.f32 %v2152, %v1319
    %v2240 = vadd.f32 %v2155, %v1320
    %v2241 = vadd.f32 %v2158, %v1321
    %v2242 = vadd.f32 %v2161, %v1322
    %v2243 = vadd.f32 %v2164, %v1323
    %v2244 = vadd.f32 %v2167, %v1324
    %v2245 = vadd.f32 %v2170, %v1325
    %v2246 = vadd.f32 %v2173, %v1326
    %v2247 = vadd.f32 %v2176, %v1327
    %v2248 = vadd.f32 %v2179, %v1328
    %v2249 = vadd.f32 %v2182, %v1329
    %v2250 = vadd.f32 %v2185, %v1330
    %v2251 = vadd.f32 %v2188, %v1331
    %v2252 = vadd.f32 %v2191, %v1332
    %v2253 = vadd.f32 %v2194, %v1333
    %v2254 = vadd.f32 %v2197, %v1334
    %v2255 = vadd.f32 %v2200, %v1335
    %v2256 = vadd.f32 %v2203, %v1336
    %v2257 = vadd.f32 %v2206, %v1337
    %v2258 = vadd.f32 %v2209, %v1338
    %v2259 = vadd.f32 %v2212, %v1339
    %v2260 = vadd.f32 %v2215, %v1340
    %v2261 = vadd.f32 %v2218, %v1341
    %v2262 = vadd.f32 %v2221, %v1342
    %v2263 = vadd.f32 %v2224, %v1343
    %v2264 = vadd.f32 %v2227, %v1344
    %v2265 = vadd.f32 %v2230, %v1345
    %v2266 = vadd.f32 %v2233, %v1346
    %vm2267 = vcmp.gt.f32.partialorder %v2235, 0.0
    %vm2268 = vcmp.gt.f32.partialorder %v2236, 0.0
    %vm2269 = vcmp.gt.f32.partialorder %v2237, 0.0
    %vm2270 = vcmp.gt.f32.partialorder %v2238, 0.0
    %vm2271 = vcmp.gt.f32.partialorder %v2239, 0.0
    %vm2272 = vcmp.gt.f32.partialorder %v2240, 0.0
    %vm2273 = vcmp.gt.f32.partialorder %v2241, 0.0
    %vm2274 = vcmp.gt.f32.partialorder %v2242, 0.0
    %vm2275 = vcmp.gt.f32.partialorder %v2243, 0.0
    %vm2276 = vcmp.gt.f32.partialorder %v2244, 0.0
    %vm2277 = vcmp.gt.f32.partialorder %v2245, 0.0
    %vm2278 = vcmp.gt.f32.partialorder %v2246, 0.0
    %vm2279 = vcmp.gt.f32.partialorder %v2247, 0.0
    %vm2280 = vcmp.gt.f32.partialorder %v2248, 0.0
    %vm2281 = vcmp.gt.f32.partialorder %v2249, 0.0
    %vm2282 = vcmp.gt.f32.partialorder %v2250, 0.0
    %vm2283 = vcmp.gt.f32.partialorder %v2251, 0.0
    %vm2284 = vcmp.gt.f32.partialorder %v2252, 0.0
    %vm2285 = vcmp.gt.f32.partialorder %v2253, 0.0
    %vm2286 = vcmp.gt.f32.partialorder %v2254, 0.0
    %vm2287 = vcmp.gt.f32.partialorder %v2255, 0.0
    %vm2288 = vcmp.gt.f32.partialorder %v2256, 0.0
    %vm2289 = vcmp.gt.f32.partialorder %v2257, 0.0
    %vm2290 = vcmp.gt.f32.partialorder %v2258, 0.0
    %vm2291 = vcmp.gt.f32.partialorder %v2259, 0.0
    %vm2292 = vcmp.gt.f32.partialorder %v2260, 0.0
    %vm2293 = vcmp.gt.f32.partialorder %v2261, 0.0
    %vm2294 = vcmp.gt.f32.partialorder %v2262, 0.0
    %vm2295 = vcmp.gt.f32.partialorder %v2263, 0.0
    %vm2296 = vcmp.gt.f32.partialorder %v2264, 0.0
    %vm2297 = vcmp.gt.f32.partialorder %v2265, 0.0
    %vm2298 = vcmp.gt.f32.partialorder %v2266, 0.0
    %v2299 = vmin.f32 %v2235, 0.0
    %v2300 = vmin.f32 %v2236, 0.0
    %v2301 = vmin.f32 %v2237, 0.0
    %v2302 = vmin.f32 %v2238, 0.0
    %v2303 = vmin.f32 %v2239, 0.0
    %v2304 = vmin.f32 %v2240, 0.0
    %v2305 = vmin.f32 %v2241, 0.0
    %v2306 = vmin.f32 %v2242, 0.0
    %v2307 = vmin.f32 %v2243, 0.0
    %v2308 = vmin.f32 %v2244, 0.0
    %v2309 = vmin.f32 %v2245, 0.0
    %v2310 = vmin.f32 %v2246, 0.0
    %v2311 = vmin.f32 %v2247, 0.0
    %v2312 = vmin.f32 %v2248, 0.0
    %v2313 = vmin.f32 %v2249, 0.0
    %v2314 = vmin.f32 %v2250, 0.0
    %v2315 = vmin.f32 %v2251, 0.0
    %v2316 = vmin.f32 %v2252, 0.0
    %v2317 = vmin.f32 %v2253, 0.0
    %v2318 = vmin.f32 %v2254, 0.0
    %v2319 = vmin.f32 %v2255, 0.0
    %v2320 = vmin.f32 %v2256, 0.0
    %v2321 = vmin.f32 %v2257, 0.0
    %v2322 = vmin.f32 %v2258, 0.0
    %v2323 = vmin.f32 %v2259, 0.0
    %v2324 = vmin.f32 %v2260, 0.0
    %v2325 = vmin.f32 %v2261, 0.0
    %v2326 = vmin.f32 %v2262, 0.0
    %v2327 = vmin.f32 %v2263, 0.0
    %v2328 = vmin.f32 %v2264, 0.0
    %v2329 = vmin.f32 %v2265, 0.0
    %v2330 = vmin.f32 %v2266, 0.0
    %v2331 = vmul.f32 %v2299, 1.442695
    %v2332 = vpow.pop %v2331
    %v2333 = vmul.f32 %v2300, 1.442695
    %v2334 = vpow.pop %v2333
    %v2335 = vmul.f32 %v2301, 1.442695
    %v2336 = vpow.pop %v2335
    %v2337 = vmul.f32 %v2302, 1.442695
    %v2338 = vpow.pop %v2337
    %v2339 = vmul.f32 %v2303, 1.442695
    %v2340 = vpow.pop %v2339
    %v2341 = vmul.f32 %v2304, 1.442695
    %v2342 = vpow.pop %v2341
    %v2343 = vmul.f32 %v2305, 1.442695
    %v2344 = vpow.pop %v2343
    %v2345 = vmul.f32 %v2306, 1.442695
    %v2346 = vpow.pop %v2345
    %v2347 = vmul.f32 %v2307, 1.442695
    %v2348 = vpow.pop %v2347
    %v2349 = vmul.f32 %v2308, 1.442695
    %v2350 = vpow.pop %v2349
    %v2351 = vmul.f32 %v2309, 1.442695
    %v2352 = vpow.pop %v2351
    %v2353 = vmul.f32 %v2310, 1.442695
    %v2354 = vpow.pop %v2353
    %v2355 = vmul.f32 %v2311, 1.442695
    %v2356 = vpow.pop %v2355
    %v2357 = vmul.f32 %v2312, 1.442695
    %v2358 = vpow.pop %v2357
    %v2359 = vmul.f32 %v2313, 1.442695
    %v2360 = vpow.pop %v2359
    %v2361 = vmul.f32 %v2314, 1.442695
    %v2362 = vpow.pop %v2361
    %v2363 = vmul.f32 %v2315, 1.442695
    %v2364 = vpow.pop %v2363
    %v2365 = vmul.f32 %v2316, 1.442695
    %v2366 = vpow.pop %v2365
    %v2367 = vmul.f32 %v2317, 1.442695
    %v2368 = vpow.pop %v2367
    %v2369 = vmul.f32 %v2318, 1.442695
    %v2370 = vpow.pop %v2369
    %v2371 = vmul.f32 %v2319, 1.442695
    %v2372 = vpow.pop %v2371
    %v2373 = vmul.f32 %v2320, 1.442695
    %v2374 = vpow.pop %v2373
    %v2375 = vmul.f32 %v2321, 1.442695
    %v2376 = vpow.pop %v2375
    %v2377 = vmul.f32 %v2322, 1.442695
    %v2378 = vpow.pop %v2377
    %v2379 = vmul.f32 %v2323, 1.442695
    %v2380 = vpow.pop %v2379
    %v2381 = vmul.f32 %v2324, 1.442695
    %v2382 = vpow.pop %v2381
    %v2383 = vmul.f32 %v2325, 1.442695
    %v2384 = vpow.pop %v2383
    %v2385 = vmul.f32 %v2326, 1.442695
    %v2386 = vpow.pop %v2385
    %v2387 = vmul.f32 %v2327, 1.442695
    %v2388 = vpow.pop %v2387
    %v2389 = vmul.f32 %v2328, 1.442695
    %v2390 = vpow.pop %v2389
    %v2391 = vmul.f32 %v2329, 1.442695
    %v2392 = vpow.pop %v2391
    %v2393 = vmul.f32 %v2330, 1.442695
    %v2394 = vpow.pop %v2393
    %v2395 = vsub.f32 %v2332, 1.0
    %v2396 = vsub.f32 %v2334, 1.0
    %v2397 = vsub.f32 %v2336, 1.0
    %v2398 = vsub.f32 %v2338, 1.0
    %v2399 = vsub.f32 %v2340, 1.0
    %v2400 = vsub.f32 %v2342, 1.0
    %v2401 = vsub.f32 %v2344, 1.0
    %v2402 = vsub.f32 %v2346, 1.0
    %v2403 = vsub.f32 %v2348, 1.0
    %v2404 = vsub.f32 %v2350, 1.0
    %v2405 = vsub.f32 %v2352, 1.0
    %v2406 = vsub.f32 %v2354, 1.0
    %v2407 = vsub.f32 %v2356, 1.0
    %v2408 = vsub.f32 %v2358, 1.0
    %v2409 = vsub.f32 %v2360, 1.0
    %v2410 = vsub.f32 %v2362, 1.0
    %v2411 = vsub.f32 %v2364, 1.0
    %v2412 = vsub.f32 %v2366, 1.0
    %v2413 = vsub.f32 %v2368, 1.0
    %v2414 = vsub.f32 %v2370, 1.0
    %v2415 = vsub.f32 %v2372, 1.0
    %v2416 = vsub.f32 %v2374, 1.0
    %v2417 = vsub.f32 %v2376, 1.0
    %v2418 = vsub.f32 %v2378, 1.0
    %v2419 = vsub.f32 %v2380, 1.0
    %v2420 = vsub.f32 %v2382, 1.0
    %v2421 = vsub.f32 %v2384, 1.0
    %v2422 = vsub.f32 %v2386, 1.0
    %v2423 = vsub.f32 %v2388, 1.0
    %v2424 = vsub.f32 %v2390, 1.0
    %v2425 = vsub.f32 %v2392, 1.0
    %v2426 = vsub.f32 %v2394, 1.0
    %v2427 = vsel %vm2267, %v2235, %v2395
    %v2428 = vsel %vm2268, %v2236, %v2396
    %v2429 = vsel %vm2269, %v2237, %v2397
    %v2430 = vsel %vm2270, %v2238, %v2398
    %v2431 = vsel %vm2271, %v2239, %v2399
    %v2432 = vsel %vm2272, %v2240, %v2400
    %v2433 = vsel %vm2273, %v2241, %v2401
    %v2434 = vsel %vm2274, %v2242, %v2402
    %v2435 = vsel %vm2275, %v2243, %v2403
    %v2436 = vsel %vm2276, %v2244, %v2404
    %v2437 = vsel %vm2277, %v2245, %v2405
    %v2438 = vsel %vm2278, %v2246, %v2406
    %v2439 = vsel %vm2279, %v2247, %v2407
    %v2440 = vsel %vm2280, %v2248, %v2408
    %v2441 = vsel %vm2281, %v2249, %v2409
    %v2442 = vsel %vm2282, %v2250, %v2410
    %v2443 = vsel %vm2283, %v2251, %v2411
    %v2444 = vsel %vm2284, %v2252, %v2412
    %v2445 = vsel %vm2285, %v2253, %v2413
    %v2446 = vsel %vm2286, %v2254, %v2414
    %v2447 = vsel %vm2287, %v2255, %v2415
    %v2448 = vsel %vm2288, %v2256, %v2416
    %v2449 = vsel %vm2289, %v2257, %v2417
    %v2450 = vsel %vm2290, %v2258, %v2418
    %v2451 = vsel %vm2291, %v2259, %v2419
    %v2452 = vsel %vm2292, %v2260, %v2420
    %v2453 = vsel %vm2293, %v2261, %v2421
    %v2454 = vsel %vm2294, %v2262, %v2422
    %v2455 = vsel %vm2295, %v2263, %v2423
    %v2456 = vsel %vm2296, %v2264, %v2424
    %v2457 = vsel %vm2297, %v2265, %v2425
    %v2458 = vsel %vm2298, %v2266, %v2426
    %v2459 = vld [vmem:[%s6] sm:$0xff]
    %v2460 = vld [vmem:[%s6 + $0x8] sm:$0xff]
    %v2461 = vld [vmem:[%s6 + $0x10] sm:$0xff]
    %v2462 = vld [vmem:[%s6 + $0x18] sm:$0xff]
    %v2463 = vld [vmem:[%s6 + $0x20] sm:$0xff]
    %v2464 = vld [vmem:[%s6 + $0x28] sm:$0xff]
    %v2465 = vld [vmem:[%s6 + $0x30] sm:$0xff]
    %v2466 = vld [vmem:[%s6 + $0x38] sm:$0xff]
    %v2467 = vld [vmem:[%s6 + $0x40] sm:$0xff]
    %v2468 = vld [vmem:[%s6 + $0x48] sm:$0xff]
    %v2469 = vld [vmem:[%s6 + $0x50] sm:$0xff]
    %v2470 = vld [vmem:[%s6 + $0x58] sm:$0xff]
    %v2471 = vld [vmem:[%s7] sm:$0x1]
    %2500 = vrot.lane.b32.xlu0 0.0, 32
    %v2501 = vpop.permute.xlu0 %2500
    %2502 = vrot.lane.b32.xlu0 %v2427, 32
    %v2503 = vpop.permute.xlu0 %2502
    %2504 = vrot.lane.b32.xlu0 %v2428, 32
    %v2505 = vpop.permute.xlu0 %2504
    %2506 = vrot.lane.b32.xlu0 %v2429, 32
    %v2507 = vpop.permute.xlu0 %2506
    %2508 = vrot.lane.b32.xlu0 %v2430, 32
    %v2509 = vpop.permute.xlu0 %2508
    %2510 = vrot.lane.b32.xlu0 %v2431, 32
    %v2511 = vpop.permute.xlu0 %2510
    %2512 = vrot.lane.b32.xlu0 %v2432, 32
    %v2513 = vpop.permute.xlu0 %2512
    %2514 = vrot.lane.b32.xlu0 %v2433, 32
    %v2515 = vpop.permute.xlu0 %2514
    %2516 = vrot.lane.b32.xlu0 %v2434, 32
    %v2517 = vpop.permute.xlu0 %2516
    %2518 = vrot.lane.b32.xlu0 %v2435, 32
    %v2519 = vpop.permute.xlu0 %2518
    %2520 = vrot.lane.b32.xlu0 %v2436, 32
    %v2521 = vpop.permute.xlu0 %2520
    %2522 = vrot.lane.b32.xlu0 %v2437, 32
    %v2523 = vpop.permute.xlu0 %2522
    %2524 = vrot.lane.b32.xlu0 %v2438, 32
    %v2525 = vpop.permute.xlu0 %2524
    %2526 = vrot.lane.b32.xlu0 %v2439, 32
    %v2527 = vpop.permute.xlu0 %2526
    %2528 = vrot.lane.b32.xlu0 %v2440, 32
    %v2529 = vpop.permute.xlu0 %2528
    %2530 = vrot.lane.b32.xlu0 %v2443, 32
    %v2531 = vpop.permute.xlu0 %2530
    %2532 = vrot.lane.b32.xlu0 %v2444, 32
    %v2533 = vpop.permute.xlu0 %2532
    %2534 = vrot.lane.b32.xlu0 %v2445, 32
    %v2535 = vpop.permute.xlu0 %2534
    %2536 = vrot.lane.b32.xlu0 %v2446, 32
    %v2537 = vpop.permute.xlu0 %2536
    %2538 = vrot.lane.b32.xlu0 %v2447, 32
    %v2539 = vpop.permute.xlu0 %2538
    %2540 = vrot.lane.b32.xlu0 %v2448, 32
    %v2541 = vpop.permute.xlu0 %2540
    %2542 = vrot.lane.b32.xlu0 %v2449, 32
    %v2543 = vpop.permute.xlu0 %2542
    %2544 = vrot.lane.b32.xlu0 %v2450, 32
    %v2545 = vpop.permute.xlu0 %2544
    %2546 = vrot.lane.b32.xlu0 %v2451, 32
    %v2547 = vpop.permute.xlu0 %2546
    %2548 = vrot.lane.b32.xlu0 %v2452, 32
    %v2549 = vpop.permute.xlu0 %2548
    %2550 = vrot.lane.b32.xlu0 %v2453, 32
    %v2551 = vpop.permute.xlu0 %2550
    %2552 = vrot.lane.b32.xlu0 %v2454, 32
    %v2553 = vpop.permute.xlu0 %2552
    %2554 = vrot.lane.b32.xlu0 %v2455, 32
    %v2555 = vpop.permute.xlu0 %2554
    %2556 = vrot.lane.b32.xlu0 %v2456, 32
    %v2557 = vpop.permute.xlu0 %2556
    %2591 = vrot.lane.b32.xlu0 %v2427, 64
    %v2592 = vpop.permute.xlu0 %2591
    %2593 = vrot.lane.b32.xlu0 %v2428, 64
    %v2594 = vpop.permute.xlu0 %2593
    %2595 = vrot.lane.b32.xlu0 %v2429, 64
    %v2596 = vpop.permute.xlu0 %2595
    %2597 = vrot.lane.b32.xlu0 %v2430, 64
    %v2598 = vpop.permute.xlu0 %2597
    %2599 = vrot.lane.b32.xlu0 %v2431, 64
    %v2600 = vpop.permute.xlu0 %2599
    %2601 = vrot.lane.b32.xlu0 %v2432, 64
    %v2602 = vpop.permute.xlu0 %2601
    %2603 = vrot.lane.b32.xlu0 %v2433, 64
    %v2604 = vpop.permute.xlu0 %2603
    %2605 = vrot.lane.b32.xlu0 %v2434, 64
    %v2606 = vpop.permute.xlu0 %2605
    %2607 = vrot.lane.b32.xlu0 %v2435, 64
    %v2608 = vpop.permute.xlu0 %2607
    %2609 = vrot.lane.b32.xlu0 %v2436, 64
    %v2610 = vpop.permute.xlu0 %2609
    %2611 = vrot.lane.b32.xlu0 %v2437, 64
    %v2612 = vpop.permute.xlu0 %2611
    %2613 = vrot.lane.b32.xlu0 %v2438, 64
    %v2614 = vpop.permute.xlu0 %2613
    %2615 = vrot.lane.b32.xlu0 %v2439, 64
    %v2616 = vpop.permute.xlu0 %2615
    %2617 = vrot.lane.b32.xlu0 %v2440, 64
    %v2618 = vpop.permute.xlu0 %2617
    %2619 = vrot.lane.b32.xlu0 %v2441, 64
    %v2620 = vpop.permute.xlu0 %2619
    %2621 = vrot.lane.b32.xlu0 %v2442, 64
    %v2622 = vpop.permute.xlu0 %2621
    %2623 = vrot.lane.b32.xlu0 %v2443, 64
    %v2624 = vpop.permute.xlu0 %2623
    %2625 = vrot.lane.b32.xlu0 %v2444, 64
    %v2626 = vpop.permute.xlu0 %2625
    %2627 = vrot.lane.b32.xlu0 %v2445, 64
    %v2628 = vpop.permute.xlu0 %2627
    %2629 = vrot.lane.b32.xlu0 %v2446, 64
    %v2630 = vpop.permute.xlu0 %2629
    %2631 = vrot.lane.b32.xlu0 %v2447, 64
    %v2632 = vpop.permute.xlu0 %2631
    %2633 = vrot.lane.b32.xlu0 %v2448, 64
    %v2634 = vpop.permute.xlu0 %2633
    %2635 = vrot.lane.b32.xlu0 %v2449, 64
    %v2636 = vpop.permute.xlu0 %2635
    %2637 = vrot.lane.b32.xlu0 %v2450, 64
    %v2638 = vpop.permute.xlu0 %2637
    %2639 = vrot.lane.b32.xlu0 %v2451, 64
    %v2640 = vpop.permute.xlu0 %2639
    %2641 = vrot.lane.b32.xlu0 %v2452, 64
    %v2642 = vpop.permute.xlu0 %2641
    %2643 = vrot.lane.b32.xlu0 %v2453, 64
    %v2644 = vpop.permute.xlu0 %2643
    %2645 = vrot.lane.b32.xlu0 %v2454, 64
    %v2646 = vpop.permute.xlu0 %2645
    %2647 = vrot.lane.b32.xlu0 %v2455, 64
    %v2648 = vpop.permute.xlu0 %2647
    %2649 = vrot.lane.b32.xlu0 %v2456, 64
    %v2650 = vpop.permute.xlu0 %2649
    %2651 = vrot.lane.b32.xlu0 %v2457, 64
    %v2652 = vpop.permute.xlu0 %2651
    %2653 = vrot.lane.b32.xlu0 %v2458, 64
    %v2654 = vpop.permute.xlu0 %2653
    %v2687 = vsel %vm1943, 0.0, %v2501
    %v2688 = vsel %vm1943, 0.0, %v2503
    %v2689 = vsel %vm1943, 0.0, %v2505
    %v2690 = vsel %vm1943, %v2427, %v2507
    %v2691 = vsel %vm1943, %v2428, %v2509
    %v2692 = vsel %vm1943, %v2429, %v2511
    %v2693 = vsel %vm1943, %v2430, %v2513
    %v2694 = vsel %vm1943, %v2431, %v2515
    %v2695 = vsel %vm1943, %v2432, %v2517
    %v2696 = vsel %vm1943, %v2433, %v2519
    %v2697 = vsel %vm1943, %v2434, %v2521
    %v2698 = vsel %vm1943, %v2435, %v2523
    %v2699 = vsel %vm1943, %v2436, %v2525
    %v2700 = vsel %vm1943, %v2437, %v2527
    %v2701 = vsel %vm1943, %v2438, %v2529
    %v2702 = vsel %vm1943, 0.0, %v2531
    %v2703 = vsel %vm1943, 0.0, %v2533
    %v2704 = vsel %vm1943, %v2443, %v2535
    %v2705 = vsel %vm1943, %v2444, %v2537
    %v2706 = vsel %vm1943, %v2445, %v2539
    %v2707 = vsel %vm1943, %v2446, %v2541
    %v2708 = vsel %vm1943, %v2447, %v2543
    %v2709 = vsel %vm1943, %v2448, %v2545
    %v2710 = vsel %vm1943, %v2449, %v2547
    %v2711 = vsel %vm1943, %v2450, %v2549
    %v2712 = vsel %vm1943, %v2451, %v2551
    %v2713 = vsel %vm1943, %v2452, %v2553
    %v2714 = vsel %vm1943, %v2453, %v2555
    %v2715 = vsel %vm1943, %v2454, %v2557
    %v2716 = vsel %vm1976, %v2687, %v2592
    %v2717 = vsel %vm1976, %v2687, %v2594
    %v2718 = vsel %vm1976, %v2688, %v2596
    %v2719 = vsel %vm1976, %v2689, %v2598
    %v2720 = vsel %vm1976, %v2690, %v2600
    %v2721 = vsel %vm1976, %v2691, %v2602
    %v2722 = vsel %vm1976, %v2692, %v2604
    %v2723 = vsel %vm1976, %v2693, %v2606
    %v2724 = vsel %vm1976, %v2694, %v2608
    %v2725 = vsel %vm1976, %v2695, %v2610
    %v2726 = vsel %vm1976, %v2696, %v2612
    %v2727 = vsel %vm1976, %v2697, %v2614
    %v2728 = vsel %vm1976, %v2698, %v2616
    %v2729 = vsel %vm1976, %v2699, %v2618
    %v2730 = vsel %vm1976, %v2700, %v2620
    %v2731 = vsel %vm1976, %v2701, %v2622
    %v2732 = vsel %vm1976, %v2687, %v2624
    %v2733 = vsel %vm1976, %v2687, %v2626
    %v2734 = vsel %vm1976, %v2702, %v2628
    %v2735 = vsel %vm1976, %v2703, %v2630
    %v2736 = vsel %vm1976, %v2704, %v2632
    %v2737 = vsel %vm1976, %v2705, %v2634
    %v2738 = vsel %vm1976, %v2706, %v2636
    %v2739 = vsel %vm1976, %v2707, %v2638
    %v2740 = vsel %vm1976, %v2708, %v2640
    %v2741 = vsel %vm1976, %v2709, %v2642
    %v2742 = vsel %vm1976, %v2710, %v2644
    %v2743 = vsel %vm1976, %v2711, %v2646
    %v2744 = vsel %vm1976, %v2712, %v2648
    %v2745 = vsel %vm1976, %v2713, %v2650
    %v2746 = vsel %vm1976, %v2714, %v2652
    %v2747 = vsel %vm1976, %v2715, %v2654
    %v2749 = vperm.slane %v2471, 0
    %v2752 = vsel %vm2025, %v2716, 0
    %v2755 = vsel %vm2025, %v2717, 0
    %v2758 = vsel %vm2025, %v2718, 0
    %v2761 = vsel %vm2025, %v2719, 0
    %v2764 = vsel %vm2025, %v2720, 0
    %v2767 = vsel %vm2025, %v2721, 0
    %v2770 = vsel %vm2025, %v2722, 0
    %v2773 = vsel %vm2025, %v2723, 0
    %v2776 = vsel %vm2025, %v2724, 0
    %v2779 = vsel %vm2025, %v2725, 0
    %v2782 = vsel %vm2025, %v2726, 0
    %v2785 = vsel %vm2025, %v2727, 0
    %v2788 = vsel %vm2025, %v2728, 0
    %v2791 = vsel %vm2025, %v2729, 0
    %v2794 = vsel %vm2025, %v2730, 0
    %v2797 = vsel %vm2025, %v2731, 0
    %v2800 = vsel %vm2025, %v2732, 0
    %v2803 = vsel %vm2025, %v2733, 0
    %v2806 = vsel %vm2025, %v2734, 0
    %v2809 = vsel %vm2025, %v2735, 0
    %v2812 = vsel %vm2025, %v2736, 0
    %v2815 = vsel %vm2025, %v2737, 0
    %v2818 = vsel %vm2025, %v2738, 0
    %v2821 = vsel %vm2025, %v2739, 0
    %v2824 = vsel %vm2025, %v2740, 0
    %v2827 = vsel %vm2025, %v2741, 0
    %v2830 = vsel %vm2025, %v2742, 0
    %v2833 = vsel %vm2025, %v2743, 0
    %v2836 = vsel %vm2025, %v2744, 0
    %v2839 = vsel %vm2025, %v2745, 0
    %v2842 = vsel %vm2025, %v2746, 0
    %v2845 = vsel %vm2025, %v2747, 0
    %2847 = vmatpush.msra.mxu0 0.0
    %2848 = vmatpush.msra.mxu0 0.0
    %2849 = vmatpush.msra.mxu0 0.0
    %2850 = vmatpush.msra.mxu0 0.0
    %2851 = vmatpush.msra.mxu0 %v2470
    %2852 = vmatpush.msra.mxu0 %v2469
    %2853 = vmatpush.msra.mxu0 %v2468
    %2854 = vmatpush.msra.mxu0 %v2467
    %2855 = vmatpush.msra.mxu0 %v2466
    %2856 = vmatpush.msra.mxu0 %v2465
    %2857 = vmatpush.msra.mxu0 %v2464
    %2858 = vmatpush.msra.mxu0 %v2463
    %2859 = vmatpush.msra.mxu0 %v2462
    %2860 = vmatpush.msra.mxu0 %v2461
    %2861 = vmatpush.msra.mxu0 %v2460
    %2862 = vmatpush.msra.mxu0 %v2459
    %2863 = vmatmul.f32.gmra.mxu0 %v2752
    %v2864 = vpop.f32.mrf.mxu0
    %v2865 = vadd.f32 %v2749, %v2864
    %2866 = vmatmul.f32.gmra.mxu0 %v2755
    %v2867 = vpop.f32.mrf.mxu0
    %v2868 = vadd.f32 %v2749, %v2867
    %2869 = vmatmul.f32.gmra.mxu0 %v2758
    %v2870 = vpop.f32.mrf.mxu0
    %v2871 = vadd.f32 %v2749, %v2870
    %2872 = vmatmul.f32.gmra.mxu0 %v2761
    %v2873 = vpop.f32.mrf.mxu0
    %v2874 = vadd.f32 %v2749, %v2873
    %2875 = vmatmul.f32.gmra.mxu0 %v2764
    %v2876 = vpop.f32.mrf.mxu0
    %v2877 = vadd.f32 %v2749, %v2876
    %2878 = vmatmul.f32.gmra.mxu0 %v2767
    %v2879 = vpop.f32.mrf.mxu0
    %v2880 = vadd.f32 %v2749, %v2879
    %2881 = vmatmul.f32.gmra.mxu0 %v2770
    %v2882 = vpop.f32.mrf.mxu0
    %v2883 = vadd.f32 %v2749, %v2882
    %2884 = vmatmul.f32.gmra.mxu0 %v2773
    %v2885 = vpop.f32.mrf.mxu0
    %v2886 = vadd.f32 %v2749, %v2885
    %2887 = vmatmul.f32.gmra.mxu0 %v2776
    %v2888 = vpop.f32.mrf.mxu0
    %v2889 = vadd.f32 %v2749, %v2888
    %2890 = vmatmul.f32.gmra.mxu0 %v2779
    %v2891 = vpop.f32.mrf.mxu0
    %v2892 = vadd.f32 %v2749, %v2891
    %2893 = vmatmul.f32.gmra.mxu0 %v2782
    %v2894 = vpop.f32.mrf.mxu0
    %v2895 = vadd.f32 %v2749, %v2894
    %2896 = vmatmul.f32.gmra.mxu0 %v2785
    %v2897 = vpop.f32.mrf.mxu0
    %v2898 = vadd.f32 %v2749, %v2897
    %2899 = vmatmul.f32.gmra.mxu0 %v2788
    %v2900 = vpop.f32.mrf.mxu0
    %v2901 = vadd.f32 %v2749, %v2900
    %2902 = vmatmul.f32.gmra.mxu0 %v2791
    %v2903 = vpop.f32.mrf.mxu0
    %v2904 = vadd.f32 %v2749, %v2903
    %2905 = vmatmul.f32.gmra.mxu0 %v2794
    %v2906 = vpop.f32.mrf.mxu0
    %v2907 = vadd.f32 %v2749, %v2906
    %2908 = vmatmul.f32.gmra.mxu0 %v2797
    %v2909 = vpop.f32.mrf.mxu0
    %v2910 = vadd.f32 %v2749, %v2909
    %2911 = vmatmul.f32.gmra.mxu0 %v2800
    %v2912 = vpop.f32.mrf.mxu0
    %v2913 = vadd.f32 %v2749, %v2912
    %2914 = vmatmul.f32.gmra.mxu0 %v2803
    %v2915 = vpop.f32.mrf.mxu0
    %v2916 = vadd.f32 %v2749, %v2915
    %2917 = vmatmul.f32.gmra.mxu0 %v2806
    %v2918 = vpop.f32.mrf.mxu0
    %v2919 = vadd.f32 %v2749, %v2918
    %2920 = vmatmul.f32.gmra.mxu0 %v2809
    %v2921 = vpop.f32.mrf.mxu0
    %v2922 = vadd.f32 %v2749, %v2921
    %2923 = vmatmul.f32.gmra.mxu0 %v2812
    %v2924 = vpop.f32.mrf.mxu0
    %v2925 = vadd.f32 %v2749, %v2924
    %2926 = vmatmul.f32.gmra.mxu0 %v2815
    %v2927 = vpop.f32.mrf.mxu0
    %v2928 = vadd.f32 %v2749, %v2927
    %2929 = vmatmul.f32.gmra.mxu0 %v2818
    %v2930 = vpop.f32.mrf.mxu0
    %v2931 = vadd.f32 %v2749, %v2930
    %2932 = vmatmul.f32.gmra.mxu0 %v2821
    %v2933 = vpop.f32.mrf.mxu0
    %v2934 = vadd.f32 %v2749, %v2933
    %2935 = vmatmul.f32.gmra.mxu0 %v2824
    %v2936 = vpop.f32.mrf.mxu0
    %v2937 = vadd.f32 %v2749, %v2936
    %2938 = vmatmul.f32.gmra.mxu0 %v2827
    %v2939 = vpop.f32.mrf.mxu0
    %v2940 = vadd.f32 %v2749, %v2939
    %2941 = vmatmul.f32.gmra.mxu0 %v2830
    %v2942 = vpop.f32.mrf.mxu0
    %v2943 = vadd.f32 %v2749, %v2942
    %2944 = vmatmul.f32.gmra.mxu0 %v2833
    %v2945 = vpop.f32.mrf.mxu0
    %v2946 = vadd.f32 %v2749, %v2945
    %2947 = vmatmul.f32.gmra.mxu0 %v2836
    %v2948 = vpop.f32.mrf.mxu0
    %v2949 = vadd.f32 %v2749, %v2948
    %2950 = vmatmul.f32.gmra.mxu0 %v2839
    %v2951 = vpop.f32.mrf.mxu0
    %v2952 = vadd.f32 %v2749, %v2951
    %2953 = vmatmul.f32.gmra.mxu0 %v2842
    %v2954 = vpop.f32.mrf.mxu0
    %v2955 = vadd.f32 %v2749, %v2954
    %2956 = vmatmul.f32.gmra.mxu0 %v2845
    %v2957 = vpop.f32.mrf.mxu0
    %v2958 = vadd.f32 %v2749, %v2957
    %2959 = vdwg.mxu0
    %v2960 = vxor.u32 %v2865, 2147483648
    %v2961 = vxor.u32 %v2868, 2147483648
    %v2962 = vxor.u32 %v2871, 2147483648
    %v2963 = vxor.u32 %v2874, 2147483648
    %v2964 = vxor.u32 %v2877, 2147483648
    %v2965 = vxor.u32 %v2880, 2147483648
    %v2966 = vxor.u32 %v2883, 2147483648
    %v2967 = vxor.u32 %v2886, 2147483648
    %v2968 = vxor.u32 %v2889, 2147483648
    %v2969 = vxor.u32 %v2892, 2147483648
    %v2970 = vxor.u32 %v2895, 2147483648
    %v2971 = vxor.u32 %v2898, 2147483648
    %v2972 = vxor.u32 %v2901, 2147483648
    %v2973 = vxor.u32 %v2904, 2147483648
    %v2974 = vxor.u32 %v2907, 2147483648
    %v2975 = vxor.u32 %v2910, 2147483648
    %v2976 = vxor.u32 %v2913, 2147483648
    %v2977 = vxor.u32 %v2916, 2147483648
    %v2978 = vxor.u32 %v2919, 2147483648
    %v2979 = vxor.u32 %v2922, 2147483648
    %v2980 = vxor.u32 %v2925, 2147483648
    %v2981 = vxor.u32 %v2928, 2147483648
    %v2982 = vxor.u32 %v2931, 2147483648
    %v2983 = vxor.u32 %v2934, 2147483648
    %v2984 = vxor.u32 %v2937, 2147483648
    %v2985 = vxor.u32 %v2940, 2147483648
    %v2986 = vxor.u32 %v2943, 2147483648
    %v2987 = vxor.u32 %v2946, 2147483648
    %v2988 = vxor.u32 %v2949, 2147483648
    %v2989 = vxor.u32 %v2952, 2147483648
    %v2990 = vxor.u32 %v2955, 2147483648
    %v2991 = vxor.u32 %v2958, 2147483648
    %v2992 = vmul.f32 %v2960, 1.442695
    %v2993 = vpow.pop %v2992
    %v2994 = vmul.f32 %v2961, 1.442695
    %v2995 = vpow.pop %v2994
    %v2996 = vmul.f32 %v2962, 1.442695
    %v2997 = vpow.pop %v2996
    %v2998 = vmul.f32 %v2963, 1.442695
    %v2999 = vpow.pop %v2998
    %v3000 = vmul.f32 %v2964, 1.442695
    %v3001 = vpow.pop %v3000
    %v3002 = vmul.f32 %v2965, 1.442695
    %v3003 = vpow.pop %v3002
    %v3004 = vmul.f32 %v2966, 1.442695
    %v3005 = vpow.pop %v3004
    %v3006 = vmul.f32 %v2967, 1.442695
    %v3007 = vpow.pop %v3006
    %v3008 = vmul.f32 %v2968, 1.442695
    %v3009 = vpow.pop %v3008
    %v3010 = vmul.f32 %v2969, 1.442695
    %v3011 = vpow.pop %v3010
    %v3012 = vmul.f32 %v2970, 1.442695
    %v3013 = vpow.pop %v3012
    %v3014 = vmul.f32 %v2971, 1.442695
    %v3015 = vpow.pop %v3014
    %v3016 = vmul.f32 %v2972, 1.442695
    %v3017 = vpow.pop %v3016
    %v3018 = vmul.f32 %v2973, 1.442695
    %v3019 = vpow.pop %v3018
    %v3020 = vmul.f32 %v2974, 1.442695
    %v3021 = vpow.pop %v3020
    %v3022 = vmul.f32 %v2975, 1.442695
    %v3023 = vpow.pop %v3022
    %v3024 = vmul.f32 %v2976, 1.442695
    %v3025 = vpow.pop %v3024
    %v3026 = vmul.f32 %v2977, 1.442695
    %v3027 = vpow.pop %v3026
    %v3028 = vmul.f32 %v2978, 1.442695
    %v3029 = vpow.pop %v3028
    %v3030 = vmul.f32 %v2979, 1.442695
    %v3031 = vpow.pop %v3030
    %v3032 = vmul.f32 %v2980, 1.442695
    %v3033 = vpow.pop %v3032
    %v3034 = vmul.f32 %v2981, 1.442695
    %v3035 = vpow.pop %v3034
    %v3036 = vmul.f32 %v2982, 1.442695
    %v3037 = vpow.pop %v3036
    %v3038 = vmul.f32 %v2983, 1.442695
    %v3039 = vpow.pop %v3038
    %v3040 = vmul.f32 %v2984, 1.442695
    %v3041 = vpow.pop %v3040
    %v3042 = vmul.f32 %v2985, 1.442695
    %v3043 = vpow.pop %v3042
    %v3044 = vmul.f32 %v2986, 1.442695
    %v3045 = vpow.pop %v3044
    %v3046 = vmul.f32 %v2987, 1.442695
    %v3047 = vpow.pop %v3046
    %v3048 = vmul.f32 %v2988, 1.442695
    %v3049 = vpow.pop %v3048
    %v3050 = vmul.f32 %v2989, 1.442695
    %v3051 = vpow.pop %v3050
    %v3052 = vmul.f32 %v2990, 1.442695
    %v3053 = vpow.pop %v3052
    %v3054 = vmul.f32 %v2991, 1.442695
    %v3055 = vpow.pop %v3054
    %v3056 = vadd.f32 %v2993, 1.0
    %v3057 = vadd.f32 %v2995, 1.0
    %v3058 = vadd.f32 %v2997, 1.0
    %v3059 = vadd.f32 %v2999, 1.0
    %v3060 = vadd.f32 %v3001, 1.0
    %v3061 = vadd.f32 %v3003, 1.0
    %v3062 = vadd.f32 %v3005, 1.0
    %v3063 = vadd.f32 %v3007, 1.0
    %v3064 = vadd.f32 %v3009, 1.0
    %v3065 = vadd.f32 %v3011, 1.0
    %v3066 = vadd.f32 %v3013, 1.0
    %v3067 = vadd.f32 %v3015, 1.0
    %v3068 = vadd.f32 %v3017, 1.0
    %v3069 = vadd.f32 %v3019, 1.0
    %v3070 = vadd.f32 %v3021, 1.0
    %v3071 = vadd.f32 %v3023, 1.0
    %v3072 = vadd.f32 %v3025, 1.0
    %v3073 = vadd.f32 %v3027, 1.0
    %v3074 = vadd.f32 %v3029, 1.0
    %v3075 = vadd.f32 %v3031, 1.0
    %v3076 = vadd.f32 %v3033, 1.0
    %v3077 = vadd.f32 %v3035, 1.0
    %v3078 = vadd.f32 %v3037, 1.0
    %v3079 = vadd.f32 %v3039, 1.0
    %v3080 = vadd.f32 %v3041, 1.0
    %v3081 = vadd.f32 %v3043, 1.0
    %v3082 = vadd.f32 %v3045, 1.0
    %v3083 = vadd.f32 %v3047, 1.0
    %v3084 = vadd.f32 %v3049, 1.0
    %v3085 = vadd.f32 %v3051, 1.0
    %v3086 = vadd.f32 %v3053, 1.0
    %v3087 = vadd.f32 %v3055, 1.0
    %v3088 = vrcp.pop %v3056
    %v3089 = vmul.f32 %v3056, %v3088
    %v3090 = vsub.f32 1.0, %v3089
    %v3091 = vmul.f32 %v3088, %v3090
    %v3092 = vadd.f32 %v3088, %v3091
    %vm3093 = vweird.f32 %v3056
    %vm3094 = vweird.f32 %v3088
    %vm3095 = vmor %vm3093, %vm3094
    %v3096 = vsel %vm3095, %v3088, %v3092
    %v3097 = vand.u32 2147483647, %v3056
    %vm3098 = vcmp.eq.f32.partialorder %v3097, 8.507059e+37
    %v3099 = vand.u32 %v3056, 2147483648
    %v3100 = vor.u32 1.1754944e-38, %v3099
    %v3101 = vsel %vm3098, %v3100, %v3096
    %v3102 = vmul.f32 1.0, %v3101
    %v3103 = vrcp.pop %v3057
    %v3104 = vmul.f32 %v3057, %v3103
    %v3105 = vsub.f32 1.0, %v3104
    %v3106 = vmul.f32 %v3103, %v3105
    %v3107 = vadd.f32 %v3103, %v3106
    %vm3108 = vweird.f32 %v3057
    %vm3109 = vweird.f32 %v3103
    %vm3110 = vmor %vm3108, %vm3109
    %v3111 = vsel %vm3110, %v3103, %v3107
    %v3112 = vand.u32 2147483647, %v3057
    %vm3113 = vcmp.eq.f32.partialorder %v3112, 8.507059e+37
    %v3114 = vand.u32 %v3057, 2147483648
    %v3115 = vor.u32 1.1754944e-38, %v3114
    %v3116 = vsel %vm3113, %v3115, %v3111
    %v3117 = vmul.f32 1.0, %v3116
    %v3118 = vrcp.pop %v3058
    %v3119 = vmul.f32 %v3058, %v3118
    %v3120 = vsub.f32 1.0, %v3119
    %v3121 = vmul.f32 %v3118, %v3120
    %v3122 = vadd.f32 %v3118, %v3121
    %vm3123 = vweird.f32 %v3058
    %vm3124 = vweird.f32 %v3118
    %vm3125 = vmor %vm3123, %vm3124
    %v3126 = vsel %vm3125, %v3118, %v3122
    %v3127 = vand.u32 2147483647, %v3058
    %vm3128 = vcmp.eq.f32.partialorder %v3127, 8.507059e+37
    %v3129 = vand.u32 %v3058, 2147483648
    %v3130 = vor.u32 1.1754944e-38, %v3129
    %v3131 = vsel %vm3128, %v3130, %v3126
    %v3132 = vmul.f32 1.0, %v3131
    %v3133 = vrcp.pop %v3059
    %v3134 = vmul.f32 %v3059, %v3133
    %v3135 = vsub.f32 1.0, %v3134
    %v3136 = vmul.f32 %v3133, %v3135
    %v3137 = vadd.f32 %v3133, %v3136
    %vm3138 = vweird.f32 %v3059
    %vm3139 = vweird.f32 %v3133
    %vm3140 = vmor %vm3138, %vm3139
    %v3141 = vsel %vm3140, %v3133, %v3137
    %v3142 = vand.u32 2147483647, %v3059
    %vm3143 = vcmp.eq.f32.partialorder %v3142, 8.507059e+37
    %v3144 = vand.u32 %v3059, 2147483648
    %v3145 = vor.u32 1.1754944e-38, %v3144
    %v3146 = vsel %vm3143, %v3145, %v3141
    %v3147 = vmul.f32 1.0, %v3146
    %v3148 = vrcp.pop %v3060
    %v3149 = vmul.f32 %v3060, %v3148
    %v3150 = vsub.f32 1.0, %v3149
    %v3151 = vmul.f32 %v3148, %v3150
    %v3152 = vadd.f32 %v3148, %v3151
    %vm3153 = vweird.f32 %v3060
    %vm3154 = vweird.f32 %v3148
    %vm3155 = vmor %vm3153, %vm3154
    %v3156 = vsel %vm3155, %v3148, %v3152
    %v3157 = vand.u32 2147483647, %v3060
    %vm3158 = vcmp.eq.f32.partialorder %v3157, 8.507059e+37
    %v3159 = vand.u32 %v3060, 2147483648
    %v3160 = vor.u32 1.1754944e-38, %v3159
    %v3161 = vsel %vm3158, %v3160, %v3156
    %v3162 = vmul.f32 1.0, %v3161
    %v3163 = vrcp.pop %v3061
    %v3164 = vmul.f32 %v3061, %v3163
    %v3165 = vsub.f32 1.0, %v3164
    %v3166 = vmul.f32 %v3163, %v3165
    %v3167 = vadd.f32 %v3163, %v3166
    %vm3168 = vweird.f32 %v3061
    %vm3169 = vweird.f32 %v3163
    %vm3170 = vmor %vm3168, %vm3169
    %v3171 = vsel %vm3170, %v3163, %v3167
    %v3172 = vand.u32 2147483647, %v3061
    %vm3173 = vcmp.eq.f32.partialorder %v3172, 8.507059e+37
    %v3174 = vand.u32 %v3061, 2147483648
    %v3175 = vor.u32 1.1754944e-38, %v3174
    %v3176 = vsel %vm3173, %v3175, %v3171
    %v3177 = vmul.f32 1.0, %v3176
    %v3178 = vrcp.pop %v3062
    %v3179 = vmul.f32 %v3062, %v3178
    %v3180 = vsub.f32 1.0, %v3179
    %v3181 = vmul.f32 %v3178, %v3180
    %v3182 = vadd.f32 %v3178, %v3181
    %vm3183 = vweird.f32 %v3062
    %vm3184 = vweird.f32 %v3178
    %vm3185 = vmor %vm3183, %vm3184
    %v3186 = vsel %vm3185, %v3178, %v3182
    %v3187 = vand.u32 2147483647, %v3062
    %vm3188 = vcmp.eq.f32.partialorder %v3187, 8.507059e+37
    %v3189 = vand.u32 %v3062, 2147483648
    %v3190 = vor.u32 1.1754944e-38, %v3189
    %v3191 = vsel %vm3188, %v3190, %v3186
    %v3192 = vmul.f32 1.0, %v3191
    %v3193 = vrcp.pop %v3063
    %v3194 = vmul.f32 %v3063, %v3193
    %v3195 = vsub.f32 1.0, %v3194
    %v3196 = vmul.f32 %v3193, %v3195
    %v3197 = vadd.f32 %v3193, %v3196
    %vm3198 = vweird.f32 %v3063
    %vm3199 = vweird.f32 %v3193
    %vm3200 = vmor %vm3198, %vm3199
    %v3201 = vsel %vm3200, %v3193, %v3197
    %v3202 = vand.u32 2147483647, %v3063
    %vm3203 = vcmp.eq.f32.partialorder %v3202, 8.507059e+37
    %v3204 = vand.u32 %v3063, 2147483648
    %v3205 = vor.u32 1.1754944e-38, %v3204
    %v3206 = vsel %vm3203, %v3205, %v3201
    %v3207 = vmul.f32 1.0, %v3206
    %v3208 = vrcp.pop %v3064
    %v3209 = vmul.f32 %v3064, %v3208
    %v3210 = vsub.f32 1.0, %v3209
    %v3211 = vmul.f32 %v3208, %v3210
    %v3212 = vadd.f32 %v3208, %v3211
    %vm3213 = vweird.f32 %v3064
    %vm3214 = vweird.f32 %v3208
    %vm3215 = vmor %vm3213, %vm3214
    %v3216 = vsel %vm3215, %v3208, %v3212
    %v3217 = vand.u32 2147483647, %v3064
    %vm3218 = vcmp.eq.f32.partialorder %v3217, 8.507059e+37
    %v3219 = vand.u32 %v3064, 2147483648
    %v3220 = vor.u32 1.1754944e-38, %v3219
    %v3221 = vsel %vm3218, %v3220, %v3216
    %v3222 = vmul.f32 1.0, %v3221
    %v3223 = vrcp.pop %v3065
    %v3224 = vmul.f32 %v3065, %v3223
    %v3225 = vsub.f32 1.0, %v3224
    %v3226 = vmul.f32 %v3223, %v3225
    %v3227 = vadd.f32 %v3223, %v3226
    %vm3228 = vweird.f32 %v3065
    %vm3229 = vweird.f32 %v3223
    %vm3230 = vmor %vm3228, %vm3229
    %v3231 = vsel %vm3230, %v3223, %v3227
    %v3232 = vand.u32 2147483647, %v3065
    %vm3233 = vcmp.eq.f32.partialorder %v3232, 8.507059e+37
    %v3234 = vand.u32 %v3065, 2147483648
    %v3235 = vor.u32 1.1754944e-38, %v3234
    %v3236 = vsel %vm3233, %v3235, %v3231
    %v3237 = vmul.f32 1.0, %v3236
    %v3238 = vrcp.pop %v3066
    %v3239 = vmul.f32 %v3066, %v3238
    %v3240 = vsub.f32 1.0, %v3239
    %v3241 = vmul.f32 %v3238, %v3240
    %v3242 = vadd.f32 %v3238, %v3241
    %vm3243 = vweird.f32 %v3066
    %vm3244 = vweird.f32 %v3238
    %vm3245 = vmor %vm3243, %vm3244
    %v3246 = vsel %vm3245, %v3238, %v3242
    %v3247 = vand.u32 2147483647, %v3066
    %vm3248 = vcmp.eq.f32.partialorder %v3247, 8.507059e+37
    %v3249 = vand.u32 %v3066, 2147483648
    %v3250 = vor.u32 1.1754944e-38, %v3249
    %v3251 = vsel %vm3248, %v3250, %v3246
    %v3252 = vmul.f32 1.0, %v3251
    %v3253 = vrcp.pop %v3067
    %v3254 = vmul.f32 %v3067, %v3253
    %v3255 = vsub.f32 1.0, %v3254
    %v3256 = vmul.f32 %v3253, %v3255
    %v3257 = vadd.f32 %v3253, %v3256
    %vm3258 = vweird.f32 %v3067
    %vm3259 = vweird.f32 %v3253
    %vm3260 = vmor %vm3258, %vm3259
    %v3261 = vsel %vm3260, %v3253, %v3257
    %v3262 = vand.u32 2147483647, %v3067
    %vm3263 = vcmp.eq.f32.partialorder %v3262, 8.507059e+37
    %v3264 = vand.u32 %v3067, 2147483648
    %v3265 = vor.u32 1.1754944e-38, %v3264
    %v3266 = vsel %vm3263, %v3265, %v3261
    %v3267 = vmul.f32 1.0, %v3266
    %v3268 = vrcp.pop %v3068
    %v3269 = vmul.f32 %v3068, %v3268
    %v3270 = vsub.f32 1.0, %v3269
    %v3271 = vmul.f32 %v3268, %v3270
    %v3272 = vadd.f32 %v3268, %v3271
    %vm3273 = vweird.f32 %v3068
    %vm3274 = vweird.f32 %v3268
    %vm3275 = vmor %vm3273, %vm3274
    %v3276 = vsel %vm3275, %v3268, %v3272
    %v3277 = vand.u32 2147483647, %v3068
    %vm3278 = vcmp.eq.f32.partialorder %v3277, 8.507059e+37
    %v3279 = vand.u32 %v3068, 2147483648
    %v3280 = vor.u32 1.1754944e-38, %v3279
    %v3281 = vsel %vm3278, %v3280, %v3276
    %v3282 = vmul.f32 1.0, %v3281
    %v3283 = vrcp.pop %v3069
    %v3284 = vmul.f32 %v3069, %v3283
    %v3285 = vsub.f32 1.0, %v3284
    %v3286 = vmul.f32 %v3283, %v3285
    %v3287 = vadd.f32 %v3283, %v3286
    %vm3288 = vweird.f32 %v3069
    %vm3289 = vweird.f32 %v3283
    %vm3290 = vmor %vm3288, %vm3289
    %v3291 = vsel %vm3290, %v3283, %v3287
    %v3292 = vand.u32 2147483647, %v3069
    %vm3293 = vcmp.eq.f32.partialorder %v3292, 8.507059e+37
    %v3294 = vand.u32 %v3069, 2147483648
    %v3295 = vor.u32 1.1754944e-38, %v3294
    %v3296 = vsel %vm3293, %v3295, %v3291
    %v3297 = vmul.f32 1.0, %v3296
    %v3298 = vrcp.pop %v3070
    %v3299 = vmul.f32 %v3070, %v3298
    %v3300 = vsub.f32 1.0, %v3299
    %v3301 = vmul.f32 %v3298, %v3300
    %v3302 = vadd.f32 %v3298, %v3301
    %vm3303 = vweird.f32 %v3070
    %vm3304 = vweird.f32 %v3298
    %vm3305 = vmor %vm3303, %vm3304
    %v3306 = vsel %vm3305, %v3298, %v3302
    %v3307 = vand.u32 2147483647, %v3070
    %vm3308 = vcmp.eq.f32.partialorder %v3307, 8.507059e+37
    %v3309 = vand.u32 %v3070, 2147483648
    %v3310 = vor.u32 1.1754944e-38, %v3309
    %v3311 = vsel %vm3308, %v3310, %v3306
    %v3312 = vmul.f32 1.0, %v3311
    %v3313 = vrcp.pop %v3071
    %v3314 = vmul.f32 %v3071, %v3313
    %v3315 = vsub.f32 1.0, %v3314
    %v3316 = vmul.f32 %v3313, %v3315
    %v3317 = vadd.f32 %v3313, %v3316
    %vm3318 = vweird.f32 %v3071
    %vm3319 = vweird.f32 %v3313
    %vm3320 = vmor %vm3318, %vm3319
    %v3321 = vsel %vm3320, %v3313, %v3317
    %v3322 = vand.u32 2147483647, %v3071
    %vm3323 = vcmp.eq.f32.partialorder %v3322, 8.507059e+37
    %v3324 = vand.u32 %v3071, 2147483648
    %v3325 = vor.u32 1.1754944e-38, %v3324
    %v3326 = vsel %vm3323, %v3325, %v3321
    %v3327 = vmul.f32 1.0, %v3326
    %v3328 = vrcp.pop %v3072
    %v3329 = vmul.f32 %v3072, %v3328
    %v3330 = vsub.f32 1.0, %v3329
    %v3331 = vmul.f32 %v3328, %v3330
    %v3332 = vadd.f32 %v3328, %v3331
    %vm3333 = vweird.f32 %v3072
    %vm3334 = vweird.f32 %v3328
    %vm3335 = vmor %vm3333, %vm3334
    %v3336 = vsel %vm3335, %v3328, %v3332
    %v3337 = vand.u32 2147483647, %v3072
    %vm3338 = vcmp.eq.f32.partialorder %v3337, 8.507059e+37
    %v3339 = vand.u32 %v3072, 2147483648
    %v3340 = vor.u32 1.1754944e-38, %v3339
    %v3341 = vsel %vm3338, %v3340, %v3336
    %v3342 = vmul.f32 1.0, %v3341
    %v3343 = vrcp.pop %v3073
    %v3344 = vmul.f32 %v3073, %v3343
    %v3345 = vsub.f32 1.0, %v3344
    %v3346 = vmul.f32 %v3343, %v3345
    %v3347 = vadd.f32 %v3343, %v3346
    %vm3348 = vweird.f32 %v3073
    %vm3349 = vweird.f32 %v3343
    %vm3350 = vmor %vm3348, %vm3349
    %v3351 = vsel %vm3350, %v3343, %v3347
    %v3352 = vand.u32 2147483647, %v3073
    %vm3353 = vcmp.eq.f32.partialorder %v3352, 8.507059e+37
    %v3354 = vand.u32 %v3073, 2147483648
    %v3355 = vor.u32 1.1754944e-38, %v3354
    %v3356 = vsel %vm3353, %v3355, %v3351
    %v3357 = vmul.f32 1.0, %v3356
    %v3358 = vrcp.pop %v3074
    %v3359 = vmul.f32 %v3074, %v3358
    %v3360 = vsub.f32 1.0, %v3359
    %v3361 = vmul.f32 %v3358, %v3360
    %v3362 = vadd.f32 %v3358, %v3361
    %vm3363 = vweird.f32 %v3074
    %vm3364 = vweird.f32 %v3358
    %vm3365 = vmor %vm3363, %vm3364
    %v3366 = vsel %vm3365, %v3358, %v3362
    %v3367 = vand.u32 2147483647, %v3074
    %vm3368 = vcmp.eq.f32.partialorder %v3367, 8.507059e+37
    %v3369 = vand.u32 %v3074, 2147483648
    %v3370 = vor.u32 1.1754944e-38, %v3369
    %v3371 = vsel %vm3368, %v3370, %v3366
    %v3372 = vmul.f32 1.0, %v3371
    %v3373 = vrcp.pop %v3075
    %v3374 = vmul.f32 %v3075, %v3373
    %v3375 = vsub.f32 1.0, %v3374
    %v3376 = vmul.f32 %v3373, %v3375
    %v3377 = vadd.f32 %v3373, %v3376
    %vm3378 = vweird.f32 %v3075
    %vm3379 = vweird.f32 %v3373
    %vm3380 = vmor %vm3378, %vm3379
    %v3381 = vsel %vm3380, %v3373, %v3377
    %v3382 = vand.u32 2147483647, %v3075
    %vm3383 = vcmp.eq.f32.partialorder %v3382, 8.507059e+37
    %v3384 = vand.u32 %v3075, 2147483648
    %v3385 = vor.u32 1.1754944e-38, %v3384
    %v3386 = vsel %vm3383, %v3385, %v3381
    %v3387 = vmul.f32 1.0, %v3386
    %v3388 = vrcp.pop %v3076
    %v3389 = vmul.f32 %v3076, %v3388
    %v3390 = vsub.f32 1.0, %v3389
    %v3391 = vmul.f32 %v3388, %v3390
    %v3392 = vadd.f32 %v3388, %v3391
    %vm3393 = vweird.f32 %v3076
    %vm3394 = vweird.f32 %v3388
    %vm3395 = vmor %vm3393, %vm3394
    %v3396 = vsel %vm3395, %v3388, %v3392
    %v3397 = vand.u32 2147483647, %v3076
    %vm3398 = vcmp.eq.f32.partialorder %v3397, 8.507059e+37
    %v3399 = vand.u32 %v3076, 2147483648
    %v3400 = vor.u32 1.1754944e-38, %v3399
    %v3401 = vsel %vm3398, %v3400, %v3396
    %v3402 = vmul.f32 1.0, %v3401
    %v3403 = vrcp.pop %v3077
    %v3404 = vmul.f32 %v3077, %v3403
    %v3405 = vsub.f32 1.0, %v3404
    %v3406 = vmul.f32 %v3403, %v3405
    %v3407 = vadd.f32 %v3403, %v3406
    %vm3408 = vweird.f32 %v3077
    %vm3409 = vweird.f32 %v3403
    %vm3410 = vmor %vm3408, %vm3409
    %v3411 = vsel %vm3410, %v3403, %v3407
    %v3412 = vand.u32 2147483647, %v3077
    %vm3413 = vcmp.eq.f32.partialorder %v3412, 8.507059e+37
    %v3414 = vand.u32 %v3077, 2147483648
    %v3415 = vor.u32 1.1754944e-38, %v3414
    %v3416 = vsel %vm3413, %v3415, %v3411
    %v3417 = vmul.f32 1.0, %v3416
    %v3418 = vrcp.pop %v3078
    %v3419 = vmul.f32 %v3078, %v3418
    %v3420 = vsub.f32 1.0, %v3419
    %v3421 = vmul.f32 %v3418, %v3420
    %v3422 = vadd.f32 %v3418, %v3421
    %vm3423 = vweird.f32 %v3078
    %vm3424 = vweird.f32 %v3418
    %vm3425 = vmor %vm3423, %vm3424
    %v3426 = vsel %vm3425, %v3418, %v3422
    %v3427 = vand.u32 2147483647, %v3078
    %vm3428 = vcmp.eq.f32.partialorder %v3427, 8.507059e+37
    %v3429 = vand.u32 %v3078, 2147483648
    %v3430 = vor.u32 1.1754944e-38, %v3429
    %v3431 = vsel %vm3428, %v3430, %v3426
    %v3432 = vmul.f32 1.0, %v3431
    %v3433 = vrcp.pop %v3079
    %v3434 = vmul.f32 %v3079, %v3433
    %v3435 = vsub.f32 1.0, %v3434
    %v3436 = vmul.f32 %v3433, %v3435
    %v3437 = vadd.f32 %v3433, %v3436
    %vm3438 = vweird.f32 %v3079
    %vm3439 = vweird.f32 %v3433
    %vm3440 = vmor %vm3438, %vm3439
    %v3441 = vsel %vm3440, %v3433, %v3437
    %v3442 = vand.u32 2147483647, %v3079
    %vm3443 = vcmp.eq.f32.partialorder %v3442, 8.507059e+37
    %v3444 = vand.u32 %v3079, 2147483648
    %v3445 = vor.u32 1.1754944e-38, %v3444
    %v3446 = vsel %vm3443, %v3445, %v3441
    %v3447 = vmul.f32 1.0, %v3446
    %v3448 = vrcp.pop %v3080
    %v3449 = vmul.f32 %v3080, %v3448
    %v3450 = vsub.f32 1.0, %v3449
    %v3451 = vmul.f32 %v3448, %v3450
    %v3452 = vadd.f32 %v3448, %v3451
    %vm3453 = vweird.f32 %v3080
    %vm3454 = vweird.f32 %v3448
    %vm3455 = vmor %vm3453, %vm3454
    %v3456 = vsel %vm3455, %v3448, %v3452
    %v3457 = vand.u32 2147483647, %v3080
    %vm3458 = vcmp.eq.f32.partialorder %v3457, 8.507059e+37
    %v3459 = vand.u32 %v3080, 2147483648
    %v3460 = vor.u32 1.1754944e-38, %v3459
    %v3461 = vsel %vm3458, %v3460, %v3456
    %v3462 = vmul.f32 1.0, %v3461
    %v3463 = vrcp.pop %v3081
    %v3464 = vmul.f32 %v3081, %v3463
    %v3465 = vsub.f32 1.0, %v3464
    %v3466 = vmul.f32 %v3463, %v3465
    %v3467 = vadd.f32 %v3463, %v3466
    %vm3468 = vweird.f32 %v3081
    %vm3469 = vweird.f32 %v3463
    %vm3470 = vmor %vm3468, %vm3469
    %v3471 = vsel %vm3470, %v3463, %v3467
    %v3472 = vand.u32 2147483647, %v3081
    %vm3473 = vcmp.eq.f32.partialorder %v3472, 8.507059e+37
    %v3474 = vand.u32 %v3081, 2147483648
    %v3475 = vor.u32 1.1754944e-38, %v3474
    %v3476 = vsel %vm3473, %v3475, %v3471
    %v3477 = vmul.f32 1.0, %v3476
    %v3478 = vrcp.pop %v3082
    %v3479 = vmul.f32 %v3082, %v3478
    %v3480 = vsub.f32 1.0, %v3479
    %v3481 = vmul.f32 %v3478, %v3480
    %v3482 = vadd.f32 %v3478, %v3481
    %vm3483 = vweird.f32 %v3082
    %vm3484 = vweird.f32 %v3478
    %vm3485 = vmor %vm3483, %vm3484
    %v3486 = vsel %vm3485, %v3478, %v3482
    %v3487 = vand.u32 2147483647, %v3082
    %vm3488 = vcmp.eq.f32.partialorder %v3487, 8.507059e+37
    %v3489 = vand.u32 %v3082, 2147483648
    %v3490 = vor.u32 1.1754944e-38, %v3489
    %v3491 = vsel %vm3488, %v3490, %v3486
    %v3492 = vmul.f32 1.0, %v3491
    %v3493 = vrcp.pop %v3083
    %v3494 = vmul.f32 %v3083, %v3493
    %v3495 = vsub.f32 1.0, %v3494
    %v3496 = vmul.f32 %v3493, %v3495
    %v3497 = vadd.f32 %v3493, %v3496
    %vm3498 = vweird.f32 %v3083
    %vm3499 = vweird.f32 %v3493
    %vm3500 = vmor %vm3498, %vm3499
    %v3501 = vsel %vm3500, %v3493, %v3497
    %v3502 = vand.u32 2147483647, %v3083
    %vm3503 = vcmp.eq.f32.partialorder %v3502, 8.507059e+37
    %v3504 = vand.u32 %v3083, 2147483648
    %v3505 = vor.u32 1.1754944e-38, %v3504
    %v3506 = vsel %vm3503, %v3505, %v3501
    %v3507 = vmul.f32 1.0, %v3506
    %v3508 = vrcp.pop %v3084
    %v3509 = vmul.f32 %v3084, %v3508
    %v3510 = vsub.f32 1.0, %v3509
    %v3511 = vmul.f32 %v3508, %v3510
    %v3512 = vadd.f32 %v3508, %v3511
    %vm3513 = vweird.f32 %v3084
    %vm3514 = vweird.f32 %v3508
    %vm3515 = vmor %vm3513, %vm3514
    %v3516 = vsel %vm3515, %v3508, %v3512
    %v3517 = vand.u32 2147483647, %v3084
    %vm3518 = vcmp.eq.f32.partialorder %v3517, 8.507059e+37
    %v3519 = vand.u32 %v3084, 2147483648
    %v3520 = vor.u32 1.1754944e-38, %v3519
    %v3521 = vsel %vm3518, %v3520, %v3516
    %v3522 = vmul.f32 1.0, %v3521
    %v3523 = vrcp.pop %v3085
    %v3524 = vmul.f32 %v3085, %v3523
    %v3525 = vsub.f32 1.0, %v3524
    %v3526 = vmul.f32 %v3523, %v3525
    %v3527 = vadd.f32 %v3523, %v3526
    %vm3528 = vweird.f32 %v3085
    %vm3529 = vweird.f32 %v3523
    %vm3530 = vmor %vm3528, %vm3529
    %v3531 = vsel %vm3530, %v3523, %v3527
    %v3532 = vand.u32 2147483647, %v3085
    %vm3533 = vcmp.eq.f32.partialorder %v3532, 8.507059e+37
    %v3534 = vand.u32 %v3085, 2147483648
    %v3535 = vor.u32 1.1754944e-38, %v3534
    %v3536 = vsel %vm3533, %v3535, %v3531
    %v3537 = vmul.f32 1.0, %v3536
    %v3538 = vrcp.pop %v3086
    %v3539 = vmul.f32 %v3086, %v3538
    %v3540 = vsub.f32 1.0, %v3539
    %v3541 = vmul.f32 %v3538, %v3540
    %v3542 = vadd.f32 %v3538, %v3541
    %vm3543 = vweird.f32 %v3086
    %vm3544 = vweird.f32 %v3538
    %vm3545 = vmor %vm3543, %vm3544
    %v3546 = vsel %vm3545, %v3538, %v3542
    %v3547 = vand.u32 2147483647, %v3086
    %vm3548 = vcmp.eq.f32.partialorder %v3547, 8.507059e+37
    %v3549 = vand.u32 %v3086, 2147483648
    %v3550 = vor.u32 1.1754944e-38, %v3549
    %v3551 = vsel %vm3548, %v3550, %v3546
    %v3552 = vmul.f32 1.0, %v3551
    %v3553 = vrcp.pop %v3087
    %v3554 = vmul.f32 %v3087, %v3553
    %v3555 = vsub.f32 1.0, %v3554
    %v3556 = vmul.f32 %v3553, %v3555
    %v3557 = vadd.f32 %v3553, %v3556
    %vm3558 = vweird.f32 %v3087
    %vm3559 = vweird.f32 %v3553
    %vm3560 = vmor %vm3558, %vm3559
    %v3561 = vsel %vm3560, %v3553, %v3557
    %v3562 = vand.u32 2147483647, %v3087
    %vm3563 = vcmp.eq.f32.partialorder %v3562, 8.507059e+37
    %v3564 = vand.u32 %v3087, 2147483648
    %v3565 = vor.u32 1.1754944e-38, %v3564
    %v3566 = vsel %vm3563, %v3565, %v3561
    %v3567 = vmul.f32 1.0, %v3566
    %3600 = vrot.lane.b32.xlu0 %v3102, 96
    %v3601 = vpop.permute.xlu0 %3600
    %3602 = vrot.lane.b32.xlu0 %v3117, 96
    %v3603 = vpop.permute.xlu0 %3602
    %3604 = vrot.lane.b32.xlu0 %v3132, 96
    %v3605 = vpop.permute.xlu0 %3604
    %3606 = vrot.lane.b32.xlu0 %v3147, 96
    %v3607 = vpop.permute.xlu0 %3606
    %3608 = vrot.lane.b32.xlu0 %v3162, 96
    %v3609 = vpop.permute.xlu0 %3608
    %3610 = vrot.lane.b32.xlu0 %v3177, 96
    %v3611 = vpop.permute.xlu0 %3610
    %3612 = vrot.lane.b32.xlu0 %v3192, 96
    %v3613 = vpop.permute.xlu0 %3612
    %3614 = vrot.lane.b32.xlu0 %v3207, 96
    %v3615 = vpop.permute.xlu0 %3614
    %3616 = vrot.lane.b32.xlu0 %v3222, 96
    %v3617 = vpop.permute.xlu0 %3616
    %3618 = vrot.lane.b32.xlu0 %v3237, 96
    %v3619 = vpop.permute.xlu0 %3618
    %3620 = vrot.lane.b32.xlu0 %v3252, 96
    %v3621 = vpop.permute.xlu0 %3620
    %3622 = vrot.lane.b32.xlu0 %v3267, 96
    %v3623 = vpop.permute.xlu0 %3622
    %3624 = vrot.lane.b32.xlu0 %v3282, 96
    %v3625 = vpop.permute.xlu0 %3624
    %3626 = vrot.lane.b32.xlu0 %v3297, 96
    %v3627 = vpop.permute.xlu0 %3626
    %3628 = vrot.lane.b32.xlu0 %v3312, 96
    %v3629 = vpop.permute.xlu0 %3628
    %3630 = vrot.lane.b32.xlu0 %v3327, 96
    %v3631 = vpop.permute.xlu0 %3630
    %3632 = vrot.lane.b32.xlu0 %v3342, 96
    %v3633 = vpop.permute.xlu0 %3632
    %3634 = vrot.lane.b32.xlu0 %v3357, 96
    %v3635 = vpop.permute.xlu0 %3634
    %3636 = vrot.lane.b32.xlu0 %v3372, 96
    %v3637 = vpop.permute.xlu0 %3636
    %3638 = vrot.lane.b32.xlu0 %v3387, 96
    %v3639 = vpop.permute.xlu0 %3638
    %3640 = vrot.lane.b32.xlu0 %v3402, 96
    %v3641 = vpop.permute.xlu0 %3640
    %3642 = vrot.lane.b32.xlu0 %v3417, 96
    %v3643 = vpop.permute.xlu0 %3642
    %3644 = vrot.lane.b32.xlu0 %v3432, 96
    %v3645 = vpop.permute.xlu0 %3644
    %3646 = vrot.lane.b32.xlu0 %v3447, 96
    %v3647 = vpop.permute.xlu0 %3646
    %3648 = vrot.lane.b32.xlu0 %v3462, 96
    %v3649 = vpop.permute.xlu0 %3648
    %3650 = vrot.lane.b32.xlu0 %v3477, 96
    %v3651 = vpop.permute.xlu0 %3650
    %3652 = vrot.lane.b32.xlu0 %v3492, 96
    %v3653 = vpop.permute.xlu0 %3652
    %3654 = vrot.lane.b32.xlu0 %v3507, 96
    %v3655 = vpop.permute.xlu0 %3654
    %3656 = vrot.lane.b32.xlu0 %v3522, 96
    %v3657 = vpop.permute.xlu0 %3656
    %3658 = vrot.lane.b32.xlu0 %v3537, 96
    %v3659 = vpop.permute.xlu0 %3658
    %3660 = vrot.lane.b32.xlu0 %v3552, 96
    %v3661 = vpop.permute.xlu0 %3660
    %3662 = vrot.lane.b32.xlu0 %v3567, 96
    %v3663 = vpop.permute.xlu0 %3662
    %v3696 = vmul.f32 %v2865, %v3601
    %v3697 = vmul.f32 %v2868, %v3603
    %v3698 = vmul.f32 %v2871, %v3605
    %v3699 = vmul.f32 %v2874, %v3607
    %v3700 = vmul.f32 %v2877, %v3609
    %v3701 = vmul.f32 %v2880, %v3611
    %v3702 = vmul.f32 %v2883, %v3613
    %v3703 = vmul.f32 %v2886, %v3615
    %v3704 = vmul.f32 %v2889, %v3617
    %v3705 = vmul.f32 %v2892, %v3619
    %v3706 = vmul.f32 %v2895, %v3621
    %v3707 = vmul.f32 %v2898, %v3623
    %v3708 = vmul.f32 %v2901, %v3625
    %v3709 = vmul.f32 %v2904, %v3627
    %v3710 = vmul.f32 %v2907, %v3629
    %v3711 = vmul.f32 %v2910, %v3631
    %v3712 = vmul.f32 %v2913, %v3633
    %v3713 = vmul.f32 %v2916, %v3635
    %v3714 = vmul.f32 %v2919, %v3637
    %v3715 = vmul.f32 %v2922, %v3639
    %v3716 = vmul.f32 %v2925, %v3641
    %v3717 = vmul.f32 %v2928, %v3643
    %v3718 = vmul.f32 %v2931, %v3645
    %v3719 = vmul.f32 %v2934, %v3647
    %v3720 = vmul.f32 %v2937, %v3649
    %v3721 = vmul.f32 %v2940, %v3651
    %v3722 = vmul.f32 %v2943, %v3653
    %v3723 = vmul.f32 %v2946, %v3655
    %v3724 = vmul.f32 %v2949, %v3657
    %v3725 = vmul.f32 %v2952, %v3659
    %v3726 = vmul.f32 %v2955, %v3661
    %v3727 = vmul.f32 %v2958, %v3663
    %v3728 = vld [vmem:[%s8] sm:$0xff]
    %v3729 = vld [vmem:[%s8 + $0x8] sm:$0xff]
    %v3730 = vld [vmem:[%s8 + $0x10] sm:$0xff]
    %v3731 = vld [vmem:[%s8 + $0x18] sm:$0xff]
    %v3732 = vld [vmem:[%s9] sm:$0x1]
    %v3734 = vperm.slane %v3732, 0
    %v3737 = vsel %vm1943, %v3696, 0
    %v3740 = vsel %vm1943, %v3697, 0
    %v3743 = vsel %vm1943, %v3698, 0
    %v3746 = vsel %vm1943, %v3699, 0
    %v3749 = vsel %vm1943, %v3700, 0
    %v3752 = vsel %vm1943, %v3701, 0
    %v3755 = vsel %vm1943, %v3702, 0
    %v3758 = vsel %vm1943, %v3703, 0
    %v3761 = vsel %vm1943, %v3704, 0
    %v3764 = vsel %vm1943, %v3705, 0
    %v3767 = vsel %vm1943, %v3706, 0
    %v3770 = vsel %vm1943, %v3707, 0
    %v3773 = vsel %vm1943, %v3708, 0
    %v3776 = vsel %vm1943, %v3709, 0
    %v3779 = vsel %vm1943, %v3710, 0
    %v3782 = vsel %vm1943, %v3711, 0
    %v3785 = vsel %vm1943, %v3712, 0
    %v3788 = vsel %vm1943, %v3713, 0
    %v3791 = vsel %vm1943, %v3714, 0
    %v3794 = vsel %vm1943, %v3715, 0
    %v3797 = vsel %vm1943, %v3716, 0
    %v3800 = vsel %vm1943, %v3717, 0
    %v3803 = vsel %vm1943, %v3718, 0
    %v3806 = vsel %vm1943, %v3719, 0
    %v3809 = vsel %vm1943, %v3720, 0
    %v3812 = vsel %vm1943, %v3721, 0
    %v3815 = vsel %vm1943, %v3722, 0
    %v3818 = vsel %vm1943, %v3723, 0
    %v3821 = vsel %vm1943, %v3724, 0
    %v3824 = vsel %vm1943, %v3725, 0
    %v3827 = vsel %vm1943, %v3726, 0
    %v3830 = vsel %vm1943, %v3727, 0
    %3832 = vmatpush.msra.mxu0 0.0
    %3833 = vmatpush.msra.mxu0 0.0
    %3834 = vmatpush.msra.mxu0 0.0
    %3835 = vmatpush.msra.mxu0 0.0
    %3836 = vmatpush.msra.mxu0 0.0
    %3837 = vmatpush.msra.mxu0 0.0
    %3838 = vmatpush.msra.mxu0 0.0
    %3839 = vmatpush.msra.mxu0 0.0
    %3840 = vmatpush.msra.mxu0 0.0
    %3841 = vmatpush.msra.mxu0 0.0
    %3842 = vmatpush.msra.mxu0 0.0
    %3843 = vmatpush.msra.mxu0 0.0
    %3844 = vmatpush.msra.mxu0 %v3731
    %3845 = vmatpush.msra.mxu0 %v3730
    %3846 = vmatpush.msra.mxu0 %v3729
    %3847 = vmatpush.msra.mxu0 %v3728
    %3848 = vmatmul.f32.gmra.mxu0 %v3737
    %v3849 = vpop.f32.mrf.mxu0
    %v3850 = vadd.f32 %v3734, %v3849
    %3851 = vmatmul.f32.gmra.mxu0 %v3740
    %v3852 = vpop.f32.mrf.mxu0
    %v3853 = vadd.f32 %v3734, %v3852
    %3854 = vmatmul.f32.gmra.mxu0 %v3743
    %v3855 = vpop.f32.mrf.mxu0
    %v3856 = vadd.f32 %v3734, %v3855
    %3857 = vmatmul.f32.gmra.mxu0 %v3746
    %v3858 = vpop.f32.mrf.mxu0
    %v3859 = vadd.f32 %v3734, %v3858
    %3860 = vmatmul.f32.gmra.mxu0 %v3749
    %v3861 = vpop.f32.mrf.mxu0
    %v3862 = vadd.f32 %v3734, %v3861
    %3863 = vmatmul.f32.gmra.mxu0 %v3752
    %v3864 = vpop.f32.mrf.mxu0
    %v3865 = vadd.f32 %v3734, %v3864
    %3866 = vmatmul.f32.gmra.mxu0 %v3755
    %v3867 = vpop.f32.mrf.mxu0
    %v3868 = vadd.f32 %v3734, %v3867
    %3869 = vmatmul.f32.gmra.mxu0 %v3758
    %v3870 = vpop.f32.mrf.mxu0
    %v3871 = vadd.f32 %v3734, %v3870
    %3872 = vmatmul.f32.gmra.mxu0 %v3761
    %v3873 = vpop.f32.mrf.mxu0
    %v3874 = vadd.f32 %v3734, %v3873
    %3875 = vmatmul.f32.gmra.mxu0 %v3764
    %v3876 = vpop.f32.mrf.mxu0
    %v3877 = vadd.f32 %v3734, %v3876
    %3878 = vmatmul.f32.gmra.mxu0 %v3767
    %v3879 = vpop.f32.mrf.mxu0
    %v3880 = vadd.f32 %v3734, %v3879
    %3881 = vmatmul.f32.gmra.mxu0 %v3770
    %v3882 = vpop.f32.mrf.mxu0
    %v3883 = vadd.f32 %v3734, %v3882
    %3884 = vmatmul.f32.gmra.mxu0 %v3773
    %v3885 = vpop.f32.mrf.mxu0
    %v3886 = vadd.f32 %v3734, %v3885
    %3887 = vmatmul.f32.gmra.mxu0 %v3776
    %v3888 = vpop.f32.mrf.mxu0
    %v3889 = vadd.f32 %v3734, %v3888
    %3890 = vmatmul.f32.gmra.mxu0 %v3779
    %v3891 = vpop.f32.mrf.mxu0
    %v3892 = vadd.f32 %v3734, %v3891
    %3893 = vmatmul.f32.gmra.mxu0 %v3782
    %v3894 = vpop.f32.mrf.mxu0
    %v3895 = vadd.f32 %v3734, %v3894
    %3896 = vmatmul.f32.gmra.mxu0 %v3785
    %v3897 = vpop.f32.mrf.mxu0
    %v3898 = vadd.f32 %v3734, %v3897
    %3899 = vmatmul.f32.gmra.mxu0 %v3788
    %v3900 = vpop.f32.mrf.mxu0
    %v3901 = vadd.f32 %v3734, %v3900
    %3902 = vmatmul.f32.gmra.mxu0 %v3791
    %v3903 = vpop.f32.mrf.mxu0
    %v3904 = vadd.f32 %v3734, %v3903
    %3905 = vmatmul.f32.gmra.mxu0 %v3794
    %v3906 = vpop.f32.mrf.mxu0
    %v3907 = vadd.f32 %v3734, %v3906
    %3908 = vmatmul.f32.gmra.mxu0 %v3797
    %v3909 = vpop.f32.mrf.mxu0
    %v3910 = vadd.f32 %v3734, %v3909
    %3911 = vmatmul.f32.gmra.mxu0 %v3800
    %v3912 = vpop.f32.mrf.mxu0
    %v3913 = vadd.f32 %v3734, %v3912
    %3914 = vmatmul.f32.gmra.mxu0 %v3803
    %v3915 = vpop.f32.mrf.mxu0
    %v3916 = vadd.f32 %v3734, %v3915
    %3917 = vmatmul.f32.gmra.mxu0 %v3806
    %v3918 = vpop.f32.mrf.mxu0
    %v3919 = vadd.f32 %v3734, %v3918
    %3920 = vmatmul.f32.gmra.mxu0 %v3809
    %v3921 = vpop.f32.mrf.mxu0
    %v3922 = vadd.f32 %v3734, %v3921
    %3923 = vmatmul.f32.gmra.mxu0 %v3812
    %v3924 = vpop.f32.mrf.mxu0
    %v3925 = vadd.f32 %v3734, %v3924
    %3926 = vmatmul.f32.gmra.mxu0 %v3815
    %v3927 = vpop.f32.mrf.mxu0
    %v3928 = vadd.f32 %v3734, %v3927
    %3929 = vmatmul.f32.gmra.mxu0 %v3818
    %v3930 = vpop.f32.mrf.mxu0
    %v3931 = vadd.f32 %v3734, %v3930
    %3932 = vmatmul.f32.gmra.mxu0 %v3821
    %v3933 = vpop.f32.mrf.mxu0
    %v3934 = vadd.f32 %v3734, %v3933
    %3935 = vmatmul.f32.gmra.mxu0 %v3824
    %v3936 = vpop.f32.mrf.mxu0
    %v3937 = vadd.f32 %v3734, %v3936
    %3938 = vmatmul.f32.gmra.mxu0 %v3827
    %v3939 = vpop.f32.mrf.mxu0
    %v3940 = vadd.f32 %v3734, %v3939
    %3941 = vmatmul.f32.gmra.mxu0 %v3830
    %v3942 = vpop.f32.mrf.mxu0
    %v3943 = vadd.f32 %v3734, %v3942
    %3944 = vdwg.mxu0
    %3945 = vst.msk [vmem:[#allocation2] sm:$0xff] %vm2025, %v3850
    %3946 = vst.msk [vmem:[#allocation2 + $0x8] sm:$0xff] %vm2025, %v3853
    %3947 = vst.msk [vmem:[#allocation2 + $0x10] sm:$0xff] %vm2025, %v3856
    %3948 = vst.msk [vmem:[#allocation2 + $0x18] sm:$0xff] %vm2025, %v3859
    %3949 = vst.msk [vmem:[#allocation2 + $0x20] sm:$0xff] %vm2025, %v3862
    %3950 = vst.msk [vmem:[#allocation2 + $0x28] sm:$0xff] %vm2025, %v3865
    %3951 = vst.msk [vmem:[#allocation2 + $0x30] sm:$0xff] %vm2025, %v3868
    %3952 = vst.msk [vmem:[#allocation2 + $0x38] sm:$0xff] %vm2025, %v3871
    %3953 = vst.msk [vmem:[#allocation2 + $0x40] sm:$0xff] %vm2025, %v3874
    %3954 = vst.msk [vmem:[#allocation2 + $0x48] sm:$0xff] %vm2025, %v3877
    %3955 = vst.msk [vmem:[#allocation2 + $0x50] sm:$0xff] %vm2025, %v3880
    %3956 = vst.msk [vmem:[#allocation2 + $0x58] sm:$0xff] %vm2025, %v3883
    %3957 = vst.msk [vmem:[#allocation2 + $0x60] sm:$0xff] %vm2025, %v3886
    %3958 = vst.msk [vmem:[#allocation2 + $0x68] sm:$0xff] %vm2025, %v3889
    %3959 = vst.msk [vmem:[#allocation2 + $0x70] sm:$0xff] %vm2025, %v3892
    %3960 = vst.msk [vmem:[#allocation2 + $0x78] sm:$0xff] %vm2025, %v3895
    %3961 = vst.msk [vmem:[#allocation2 + $0x80] sm:$0xff] %vm2025, %v3898
    %3962 = vst.msk [vmem:[#allocation2 + $0x88] sm:$0xff] %vm2025, %v3901
    %3963 = vst.msk [vmem:[#allocation2 + $0x90] sm:$0xff] %vm2025, %v3904
    %3964 = vst.msk [vmem:[#allocation2 + $0x98] sm:$0xff] %vm2025, %v3907
    %3965 = vst.msk [vmem:[#allocation2 + $0xa0] sm:$0xff] %vm2025, %v3910
    %3966 = vst.msk [vmem:[#allocation2 + $0xa8] sm:$0xff] %vm2025, %v3913
    %3967 = vst.msk [vmem:[#allocation2 + $0xb0] sm:$0xff] %vm2025, %v3916
    %3968 = vst.msk [vmem:[#allocation2 + $0xb8] sm:$0xff] %vm2025, %v3919
    %3969 = vst.msk [vmem:[#allocation2 + $0xc0] sm:$0xff] %vm2025, %v3922
    %3970 = vst.msk [vmem:[#allocation2 + $0xc8] sm:$0xff] %vm2025, %v3925
    %3971 = vst.msk [vmem:[#allocation2 + $0xd0] sm:$0xff] %vm2025, %v3928
    %3972 = vst.msk [vmem:[#allocation2 + $0xd8] sm:$0xff] %vm2025, %v3931
    %3973 = vst.msk [vmem:[#allocation2 + $0xe0] sm:$0xff] %vm2025, %v3934
    %3974 = vst.msk [vmem:[#allocation2 + $0xe8] sm:$0xff] %vm2025, %v3937
    %3975 = vst.msk [vmem:[#allocation2 + $0xf0] sm:$0xff] %vm2025, %v3940
    %3976 = vst.msk [vmem:[#allocation2 + $0xf8] sm:$0xff] %vm2025, %v3943
    %v3977 = vld [vmem:[%s10] sm:$0xff]
    %v3978 = vld [vmem:[%s10 + $0x8] sm:$0xff]
    %v3979 = vld [vmem:[%s10 + $0x10] sm:$0xff]
    %v3980 = vld [vmem:[%s10 + $0x18] sm:$0xff]
    %v3981 = vld [vmem:[%s10 + $0x20] sm:$0xff]
    %v3982 = vld [vmem:[%s10 + $0x28] sm:$0xff]
    %v3983 = vld [vmem:[%s10 + $0x30] sm:$0xff]
    %v3984 = vld [vmem:[%s10 + $0x38] sm:$0xff]
    %v3985 = vld [vmem:[%s10 + $0x40] sm:$0xff]
    %v3986 = vld [vmem:[%s10 + $0x48] sm:$0xff]
    %v3987 = vld [vmem:[%s10 + $0x50] sm:$0xff]
    %v3988 = vld [vmem:[%s10 + $0x58] sm:$0xff]
    %v3989 = vld [vmem:[%s10 + $0x60] sm:$0xff]
    %v3990 = vld [vmem:[%s10 + $0x68] sm:$0xff]
    %v3991 = vld [vmem:[%s10 + $0x70] sm:$0xff]
    %v3992 = vld [vmem:[%s10 + $0x78] sm:$0xff]
    %v3993 = vld [vmem:[%s10 + $0x80] sm:$0xff]
    %v3994 = vld [vmem:[%s10 + $0x88] sm:$0xff]
    %v3995 = vld [vmem:[%s10 + $0x90] sm:$0xff]
    %v3996 = vld [vmem:[%s10 + $0x98] sm:$0xff]
    %v3997 = vld [vmem:[%s10 + $0xa0] sm:$0xff]
    %v3998 = vld [vmem:[%s10 + $0xa8] sm:$0xff]
    %v3999 = vld [vmem:[%s10 + $0xb0] sm:$0xff]
    %v4000 = vld [vmem:[%s10 + $0xb8] sm:$0xff]
    %v4001 = vld [vmem:[%s11] sm:$0x7]
    %v4002 = vld [vmem:[%s12] sm:$0xff]
    %v4003 = vld [vmem:[%s12 + $0x8] sm:$0xff]
    %v4004 = vld [vmem:[%s13] sm:$0xff]
    %v4005 = vld [vmem:[%s13 + $0x8] sm:$0xff]
    %v4006 = vld [vmem:[#allocation2] ss:$8 sm:$0xf]
    %v4007 = vld [vmem:[#allocation2] ss:$8 sm:$0xf0]
    %v4008 = vor.u32 %v4006, %v4007
    %s4009 = scalar_lea.vmem [#allocation2], 64
    %v4010 = vld [vmem:[%s4009] ss:$8 sm:$0xf]
    %v4011 = vld [vmem:[%s4009] ss:$8 sm:$0xf0]
    %v4012 = vor.u32 %v4010, %v4011
    %s4013 = scalar_lea.vmem [#allocation2], 128
    %v4014 = vld [vmem:[%s4013] ss:$8 sm:$0xf]
    %v4015 = vld [vmem:[%s4013] ss:$8 sm:$0xf0]
    %v4016 = vor.u32 %v4014, %v4015
    %s4017 = scalar_lea.vmem [#allocation2], 192
    %v4018 = vld [vmem:[%s4017] ss:$8 sm:$0xf]
    %v4019 = vld [vmem:[%s4017] ss:$8 sm:$0xf0]
    %v4020 = vor.u32 %v4018, %v4019
    %v4022 = vperm.slane %v4001, 0
    %v4024 = vadd.f32 %v4008, %v4022
    %v4025 = vadd.f32 %v4012, %v4022
    %v4026 = vadd.f32 %v4016, %v4022
    %v4027 = vadd.f32 %v4020, %v4022
    %v4028 = vxor.u32 %v4024, 2147483648
    %v4029 = vxor.u32 %v4025, 2147483648
    %v4030 = vxor.u32 %v4026, 2147483648
    %v4031 = vxor.u32 %v4027, 2147483648
    %v4032 = vmul.f32 %v4028, 1.442695
    %v4033 = vpow.pop %v4032
    %v4034 = vmul.f32 %v4029, 1.442695
    %v4035 = vpow.pop %v4034
    %v4036 = vmul.f32 %v4030, 1.442695
    %v4037 = vpow.pop %v4036
    %v4038 = vmul.f32 %v4031, 1.442695
    %v4039 = vpow.pop %v4038
    %v4040 = vadd.f32 %v4033, 1.0
    %v4041 = vadd.f32 %v4035, 1.0
    %v4042 = vadd.f32 %v4037, 1.0
    %v4043 = vadd.f32 %v4039, 1.0
    %v4044 = vrcp.pop %v4040
    %v4045 = vmul.f32 %v4040, %v4044
    %v4046 = vsub.f32 1.0, %v4045
    %v4047 = vmul.f32 %v4044, %v4046
    %v4048 = vadd.f32 %v4044, %v4047
    %vm4049 = vweird.f32 %v4040
    %vm4050 = vweird.f32 %v4044
    %vm4051 = vmor %vm4049, %vm4050
    %v4052 = vsel %vm4051, %v4044, %v4048
    %v4053 = vand.u32 2147483647, %v4040
    %vm4054 = vcmp.eq.f32.partialorder %v4053, 8.507059e+37
    %v4055 = vand.u32 %v4040, 2147483648
    %v4056 = vor.u32 1.1754944e-38, %v4055
    %v4057 = vsel %vm4054, %v4056, %v4052
    %v4058 = vmul.f32 1.0, %v4057
    %v4059 = vrcp.pop %v4041
    %v4060 = vmul.f32 %v4041, %v4059
    %v4061 = vsub.f32 1.0, %v4060
    %v4062 = vmul.f32 %v4059, %v4061
    %v4063 = vadd.f32 %v4059, %v4062
    %vm4064 = vweird.f32 %v4041
    %vm4065 = vweird.f32 %v4059
    %vm4066 = vmor %vm4064, %vm4065
    %v4067 = vsel %vm4066, %v4059, %v4063
    %v4068 = vand.u32 2147483647, %v4041
    %vm4069 = vcmp.eq.f32.partialorder %v4068, 8.507059e+37
    %v4070 = vand.u32 %v4041, 2147483648
    %v4071 = vor.u32 1.1754944e-38, %v4070
    %v4072 = vsel %vm4069, %v4071, %v4067
    %v4073 = vmul.f32 1.0, %v4072
    %v4074 = vrcp.pop %v4042
    %v4075 = vmul.f32 %v4042, %v4074
    %v4076 = vsub.f32 1.0, %v4075
    %v4077 = vmul.f32 %v4074, %v4076
    %v4078 = vadd.f32 %v4074, %v4077
    %vm4079 = vweird.f32 %v4042
    %vm4080 = vweird.f32 %v4074
    %vm4081 = vmor %vm4079, %vm4080
    %v4082 = vsel %vm4081, %v4074, %v4078
    %v4083 = vand.u32 2147483647, %v4042
    %vm4084 = vcmp.eq.f32.partialorder %v4083, 8.507059e+37
    %v4085 = vand.u32 %v4042, 2147483648
    %v4086 = vor.u32 1.1754944e-38, %v4085
    %v4087 = vsel %vm4084, %v4086, %v4082
    %v4088 = vmul.f32 1.0, %v4087
    %v4089 = vrcp.pop %v4043
    %v4090 = vmul.f32 %v4043, %v4089
    %v4091 = vsub.f32 1.0, %v4090
    %v4092 = vmul.f32 %v4089, %v4091
    %v4093 = vadd.f32 %v4089, %v4092
    %vm4094 = vweird.f32 %v4043
    %vm4095 = vweird.f32 %v4089
    %vm4096 = vmor %vm4094, %vm4095
    %v4097 = vsel %vm4096, %v4089, %v4093
    %v4098 = vand.u32 2147483647, %v4043
    %vm4099 = vcmp.eq.f32.partialorder %v4098, 8.507059e+37
    %v4100 = vand.u32 %v4043, 2147483648
    %v4101 = vor.u32 1.1754944e-38, %v4100
    %v4102 = vsel %vm4099, %v4101, %v4097
    %v4103 = vmul.f32 1.0, %v4102
    %4104 = vrot.lane.b32.xlu0 %v4022, 64
    %v4105 = vpop.permute.xlu0 %4104
    %v4107 = vmul.f32 %v4058, %v4105
    %v4108 = vmul.f32 %v4073, %v4105
    %v4109 = vmul.f32 %v4088, %v4105
    %v4110 = vmul.f32 %v4103, %v4105
    %4115 = vrot.lane.b32.xlu0 %v4107, 64
    %v4116 = vpop.permute.xlu0 %4115
    %4117 = vrot.lane.b32.xlu0 %v4108, 64
    %v4118 = vpop.permute.xlu0 %4117
    %4119 = vrot.lane.b32.xlu0 %v4109, 64
    %v4120 = vpop.permute.xlu0 %4119
    %4121 = vrot.lane.b32.xlu0 %v4110, 64
    %v4122 = vpop.permute.xlu0 %4121
    %v4127 = vadd.f32 %v4008, %v4116
    %v4128 = vadd.f32 %v4012, %v4118
    %v4129 = vadd.f32 %v4016, %v4120
    %v4130 = vadd.f32 %v4020, %v4122
    %v4131 = vtanh.pop %v4127
    %v4132 = vtanh.pop %v4128
    %v4133 = vtanh.pop %v4129
    %v4134 = vtanh.pop %v4130
    %v4135 = vsub.f32 1.0, %v4058
    %v4136 = vsub.f32 1.0, %v4073
    %v4137 = vsub.f32 1.0, %v4088
    %v4138 = vsub.f32 1.0, %v4103
    %4143 = vrot.lane.b32.xlu0 %v4131, 96
    %v4144 = vpop.permute.xlu0 %4143
    %4145 = vrot.lane.b32.xlu0 %v4132, 96
    %v4146 = vpop.permute.xlu0 %4145
    %4147 = vrot.lane.b32.xlu0 %v4133, 96
    %v4148 = vpop.permute.xlu0 %4147
    %4149 = vrot.lane.b32.xlu0 %v4134, 96
    %v4150 = vpop.permute.xlu0 %4149
    %v4155 = vmul.f32 %v4135, %v4144
    %v4156 = vmul.f32 %v4136, %v4146
    %v4157 = vmul.f32 %v4137, %v4148
    %v4158 = vmul.f32 %v4138, %v4150
    %v4159 = vmul.f32 %v4058, 0.0
    %v4160 = vmul.f32 %v4073, 0.0
    %v4161 = vmul.f32 %v4088, 0.0
    %v4162 = vmul.f32 %v4103, 0.0
    %v4163 = vadd.f32 %v4155, %v4159
    %v4164 = vadd.f32 %v4156, %v4160
    %v4165 = vadd.f32 %v4157, %v4161
    %v4166 = vadd.f32 %v4158, %v4162
    %4171 = vrot.lane.b32.xlu0 %v4163, 96
    %v4172 = vpop.permute.xlu0 %4171
    %4173 = vrot.lane.b32.xlu0 %v4164, 96
    %v4174 = vpop.permute.xlu0 %4173
    %4175 = vrot.lane.b32.xlu0 %v4165, 96
    %v4176 = vpop.permute.xlu0 %4175
    %4177 = vrot.lane.b32.xlu0 %v4166, 96
    %v4178 = vpop.permute.xlu0 %4177
    %v4183 = vsel %vm1943, %v4172, 0.0
    %v4184 = vsel %vm1943, %v4174, 0.0
    %v4185 = vsel %vm1943, %v4176, 0.0
    %v4186 = vsel %vm1943, %v4178, 0.0
    %v4187 = vperm.slane %v4001, 1
    %v4188 = vperm.slane %v4001, 2
    %v4192 = vsel %vm1976, %v4183, 0
    %v4195 = vsel %vm1976, %v4184, 0
    %v4198 = vsel %vm1976, %v4185, 0
    %v4201 = vsel %vm1976, %v4186, 0
    %4203 = vmatpush.msra.mxu0 0.0
    %4204 = vmatpush.msra.mxu0 0.0
    %4205 = vmatpush.msra.mxu0 0.0
    %4206 = vmatpush.msra.mxu0 0.0
    %4207 = vmatpush.msra.mxu0 0.0
    %4208 = vmatpush.msra.mxu0 0.0
    %4209 = vmatpush.msra.mxu0 0.0
    %4210 = vmatpush.msra.mxu0 0.0
    %4211 = vmatpush.msra.mxu0 %v3998
    %4212 = vmatpush.msra.mxu0 %v3995
    %4213 = vmatpush.msra.mxu0 %v3992
    %4214 = vmatpush.msra.mxu0 %v3989
    %4215 = vmatpush.msra.mxu0 %v3986
    %4216 = vmatpush.msra.mxu0 %v3983
    %4217 = vmatpush.msra.mxu0 %v3980
    %4218 = vmatpush.msra.mxu0 %v3977
    %4219 = vmatmul.f32.gmra.mxu0 %v4192
    %v4220 = vpop.f32.mrf.mxu0
    %v4221 = vadd.f32 %v4022, %v4220
    %4222 = vmatmul.f32.gmra.mxu0 %v4195
    %v4223 = vpop.f32.mrf.mxu0
    %v4224 = vadd.f32 %v4022, %v4223
    %4225 = vmatmul.f32.gmra.mxu0 %v4198
    %v4226 = vpop.f32.mrf.mxu0
    %v4227 = vadd.f32 %v4022, %v4226
    %4228 = vmatmul.f32.gmra.mxu0 %v4201
    %v4229 = vpop.f32.mrf.mxu0
    %v4230 = vadd.f32 %v4022, %v4229
    %4231 = vdwg.mxu0
    %4232 = vmatpush.msra.mxu0 0.0
    %4233 = vmatpush.msra.mxu0 0.0
    %4234 = vmatpush.msra.mxu0 0.0
    %4235 = vmatpush.msra.mxu0 0.0
    %4236 = vmatpush.msra.mxu0 0.0
    %4237 = vmatpush.msra.mxu0 0.0
    %4238 = vmatpush.msra.mxu0 0.0
    %4239 = vmatpush.msra.mxu0 0.0
    %4240 = vmatpush.msra.mxu0 %v3999
    %4241 = vmatpush.msra.mxu0 %v3996
    %4242 = vmatpush.msra.mxu0 %v3993
    %4243 = vmatpush.msra.mxu0 %v3990
    %4244 = vmatpush.msra.mxu0 %v3987
    %4245 = vmatpush.msra.mxu0 %v3984
    %4246 = vmatpush.msra.mxu0 %v3981
    %4247 = vmatpush.msra.mxu0 %v3978
    %4248 = vmatmul.f32.gmra.mxu0 %v4192
    %v4249 = vpop.f32.mrf.mxu0
    %v4250 = vadd.f32 %v4187, %v4249
    %4251 = vmatmul.f32.gmra.mxu0 %v4195
    %v4252 = vpop.f32.mrf.mxu0
    %v4253 = vadd.f32 %v4187, %v4252
    %4254 = vmatmul.f32.gmra.mxu0 %v4198
    %v4255 = vpop.f32.mrf.mxu0
    %v4256 = vadd.f32 %v4187, %v4255
    %4257 = vmatmul.f32.gmra.mxu0 %v4201
    %v4258 = vpop.f32.mrf.mxu0
    %v4259 = vadd.f32 %v4187, %v4258
    %4260 = vdwg.mxu0
    %4261 = vmatpush.msra.mxu0 0.0
    %4262 = vmatpush.msra.mxu0 0.0
    %4263 = vmatpush.msra.mxu0 0.0
    %4264 = vmatpush.msra.mxu0 0.0
    %4265 = vmatpush.msra.mxu0 0.0
    %4266 = vmatpush.msra.mxu0 0.0
    %4267 = vmatpush.msra.mxu0 0.0
    %4268 = vmatpush.msra.mxu0 0.0
    %4269 = vmatpush.msra.mxu0 %v4000
    %4270 = vmatpush.msra.mxu0 %v3997
    %4271 = vmatpush.msra.mxu0 %v3994
    %4272 = vmatpush.msra.mxu0 %v3991
    %4273 = vmatpush.msra.mxu0 %v3988
    %4274 = vmatpush.msra.mxu0 %v3985
    %4275 = vmatpush.msra.mxu0 %v3982
    %4276 = vmatpush.msra.mxu0 %v3979
    %4277 = vmatmul.f32.gmra.mxu0 %v4192
    %v4278 = vpop.f32.mrf.mxu0
    %v4279 = vadd.f32 %v4188, %v4278
    %4280 = vmatmul.f32.gmra.mxu0 %v4195
    %v4281 = vpop.f32.mrf.mxu0
    %v4282 = vadd.f32 %v4188, %v4281
    %4283 = vmatmul.f32.gmra.mxu0 %v4198
    %v4284 = vpop.f32.mrf.mxu0
    %v4285 = vadd.f32 %v4188, %v4284
    %4286 = vmatmul.f32.gmra.mxu0 %v4201
    %v4287 = vpop.f32.mrf.mxu0
    %v4288 = vadd.f32 %v4188, %v4287
    %4289 = vdwg.mxu0
    %4294 = vrot.lane.b32.xlu0 %v4221, 96
    %v4295 = vpop.permute.xlu0 %4294
    %4296 = vrot.lane.b32.xlu0 %v4224, 96
    %v4297 = vpop.permute.xlu0 %4296
    %4298 = vrot.lane.b32.xlu0 %v4227, 96
    %v4299 = vpop.permute.xlu0 %4298
    %4300 = vrot.lane.b32.xlu0 %v4230, 96
    %v4301 = vpop.permute.xlu0 %4300
    %v4306 = vadd.f32 %v4250, %v4295
    %v4307 = vadd.f32 %v4253, %v4297
    %v4308 = vadd.f32 %v4256, %v4299
    %v4309 = vadd.f32 %v4259, %v4301
    %v4310 = vxor.u32 %v4306, 2147483648
    %v4311 = vxor.u32 %v4307, 2147483648
    %v4312 = vxor.u32 %v4308, 2147483648
    %v4313 = vxor.u32 %v4309, 2147483648
    %v4314 = vmul.f32 %v4310, 1.442695
    %v4315 = vpow.pop %v4314
    %v4316 = vmul.f32 %v4311, 1.442695
    %v4317 = vpow.pop %v4316
    %v4318 = vmul.f32 %v4312, 1.442695
    %v4319 = vpow.pop %v4318
    %v4320 = vmul.f32 %v4313, 1.442695
    %v4321 = vpow.pop %v4320
    %v4322 = vadd.f32 %v4315, 1.0
    %v4323 = vadd.f32 %v4317, 1.0
    %v4324 = vadd.f32 %v4319, 1.0
    %v4325 = vadd.f32 %v4321, 1.0
    %v4326 = vrcp.pop %v4322
    %v4327 = vmul.f32 %v4322, %v4326
    %v4328 = vsub.f32 1.0, %v4327
    %v4329 = vmul.f32 %v4326, %v4328
    %v4330 = vadd.f32 %v4326, %v4329
    %vm4331 = vweird.f32 %v4322
    %vm4332 = vweird.f32 %v4326
    %vm4333 = vmor %vm4331, %vm4332
    %v4334 = vsel %vm4333, %v4326, %v4330
    %v4335 = vand.u32 2147483647, %v4322
    %vm4336 = vcmp.eq.f32.partialorder %v4335, 8.507059e+37
    %v4337 = vand.u32 %v4322, 2147483648
    %v4338 = vor.u32 1.1754944e-38, %v4337
    %v4339 = vsel %vm4336, %v4338, %v4334
    %v4340 = vmul.f32 1.0, %v4339
    %v4341 = vrcp.pop %v4323
    %v4342 = vmul.f32 %v4323, %v4341
    %v4343 = vsub.f32 1.0, %v4342
    %v4344 = vmul.f32 %v4341, %v4343
    %v4345 = vadd.f32 %v4341, %v4344
    %vm4346 = vweird.f32 %v4323
    %vm4347 = vweird.f32 %v4341
    %vm4348 = vmor %vm4346, %vm4347
    %v4349 = vsel %vm4348, %v4341, %v4345
    %v4350 = vand.u32 2147483647, %v4323
    %vm4351 = vcmp.eq.f32.partialorder %v4350, 8.507059e+37
    %v4352 = vand.u32 %v4323, 2147483648
    %v4353 = vor.u32 1.1754944e-38, %v4352
    %v4354 = vsel %vm4351, %v4353, %v4349
    %v4355 = vmul.f32 1.0, %v4354
    %v4356 = vrcp.pop %v4324
    %v4357 = vmul.f32 %v4324, %v4356
    %v4358 = vsub.f32 1.0, %v4357
    %v4359 = vmul.f32 %v4356, %v4358
    %v4360 = vadd.f32 %v4356, %v4359
    %vm4361 = vweird.f32 %v4324
    %vm4362 = vweird.f32 %v4356
    %vm4363 = vmor %vm4361, %vm4362
    %v4364 = vsel %vm4363, %v4356, %v4360
    %v4365 = vand.u32 2147483647, %v4324
    %vm4366 = vcmp.eq.f32.partialorder %v4365, 8.507059e+37
    %v4367 = vand.u32 %v4324, 2147483648
    %v4368 = vor.u32 1.1754944e-38, %v4367
    %v4369 = vsel %vm4366, %v4368, %v4364
    %v4370 = vmul.f32 1.0, %v4369
    %v4371 = vrcp.pop %v4325
    %v4372 = vmul.f32 %v4325, %v4371
    %v4373 = vsub.f32 1.0, %v4372
    %v4374 = vmul.f32 %v4371, %v4373
    %v4375 = vadd.f32 %v4371, %v4374
    %vm4376 = vweird.f32 %v4325
    %vm4377 = vweird.f32 %v4371
    %vm4378 = vmor %vm4376, %vm4377
    %v4379 = vsel %vm4378, %v4371, %v4375
    %v4380 = vand.u32 2147483647, %v4325
    %vm4381 = vcmp.eq.f32.partialorder %v4380, 8.507059e+37
    %v4382 = vand.u32 %v4325, 2147483648
    %v4383 = vor.u32 1.1754944e-38, %v4382
    %v4384 = vsel %vm4381, %v4383, %v4379
    %v4385 = vmul.f32 1.0, %v4384
    %4390 = vrot.lane.b32.xlu0 %v4250, 96
    %v4391 = vpop.permute.xlu0 %4390
    %4392 = vrot.lane.b32.xlu0 %v4253, 96
    %v4393 = vpop.permute.xlu0 %4392
    %4394 = vrot.lane.b32.xlu0 %v4256, 96
    %v4395 = vpop.permute.xlu0 %4394
    %4396 = vrot.lane.b32.xlu0 %v4259, 96
    %v4397 = vpop.permute.xlu0 %4396
    %v4402 = vadd.f32 %v4250, %v4391
    %v4403 = vadd.f32 %v4253, %v4393
    %v4404 = vadd.f32 %v4256, %v4395
    %v4405 = vadd.f32 %v4259, %v4397
    %v4406 = vxor.u32 %v4402, 2147483648
    %v4407 = vxor.u32 %v4403, 2147483648
    %v4408 = vxor.u32 %v4404, 2147483648
    %v4409 = vxor.u32 %v4405, 2147483648
    %v4410 = vmul.f32 %v4406, 1.442695
    %v4411 = vpow.pop %v4410
    %v4412 = vmul.f32 %v4407, 1.442695
    %v4413 = vpow.pop %v4412
    %v4414 = vmul.f32 %v4408, 1.442695
    %v4415 = vpow.pop %v4414
    %v4416 = vmul.f32 %v4409, 1.442695
    %v4417 = vpow.pop %v4416
    %v4418 = vadd.f32 %v4411, 1.0
    %v4419 = vadd.f32 %v4413, 1.0
    %v4420 = vadd.f32 %v4415, 1.0
    %v4421 = vadd.f32 %v4417, 1.0
    %v4422 = vrcp.pop %v4418
    %v4423 = vmul.f32 %v4418, %v4422
    %v4424 = vsub.f32 1.0, %v4423
    %v4425 = vmul.f32 %v4422, %v4424
    %v4426 = vadd.f32 %v4422, %v4425
    %vm4427 = vweird.f32 %v4418
    %vm4428 = vweird.f32 %v4422
    %vm4429 = vmor %vm4427, %vm4428
    %v4430 = vsel %vm4429, %v4422, %v4426
    %v4431 = vand.u32 2147483647, %v4418
    %vm4432 = vcmp.eq.f32.partialorder %v4431, 8.507059e+37
    %v4433 = vand.u32 %v4418, 2147483648
    %v4434 = vor.u32 1.1754944e-38, %v4433
    %v4435 = vsel %vm4432, %v4434, %v4430
    %v4436 = vmul.f32 1.0, %v4435
    %v4437 = vrcp.pop %v4419
    %v4438 = vmul.f32 %v4419, %v4437
    %v4439 = vsub.f32 1.0, %v4438
    %v4440 = vmul.f32 %v4437, %v4439
    %v4441 = vadd.f32 %v4437, %v4440
    %vm4442 = vweird.f32 %v4419
    %vm4443 = vweird.f32 %v4437
    %vm4444 = vmor %vm4442, %vm4443
    %v4445 = vsel %vm4444, %v4437, %v4441
    %v4446 = vand.u32 2147483647, %v4419
    %vm4447 = vcmp.eq.f32.partialorder %v4446, 8.507059e+37
    %v4448 = vand.u32 %v4419, 2147483648
    %v4449 = vor.u32 1.1754944e-38, %v4448
    %v4450 = vsel %vm4447, %v4449, %v4445
    %v4451 = vmul.f32 1.0, %v4450
    %v4452 = vrcp.pop %v4420
    %v4453 = vmul.f32 %v4420, %v4452
    %v4454 = vsub.f32 1.0, %v4453
    %v4455 = vmul.f32 %v4452, %v4454
    %v4456 = vadd.f32 %v4452, %v4455
    %vm4457 = vweird.f32 %v4420
    %vm4458 = vweird.f32 %v4452
    %vm4459 = vmor %vm4457, %vm4458
    %v4460 = vsel %vm4459, %v4452, %v4456
    %v4461 = vand.u32 2147483647, %v4420
    %vm4462 = vcmp.eq.f32.partialorder %v4461, 8.507059e+37
    %v4463 = vand.u32 %v4420, 2147483648
    %v4464 = vor.u32 1.1754944e-38, %v4463
    %v4465 = vsel %vm4462, %v4464, %v4460
    %v4466 = vmul.f32 1.0, %v4465
    %v4467 = vrcp.pop %v4421
    %v4468 = vmul.f32 %v4421, %v4467
    %v4469 = vsub.f32 1.0, %v4468
    %v4470 = vmul.f32 %v4467, %v4469
    %v4471 = vadd.f32 %v4467, %v4470
    %vm4472 = vweird.f32 %v4421
    %vm4473 = vweird.f32 %v4467
    %vm4474 = vmor %vm4472, %vm4473
    %v4475 = vsel %vm4474, %v4467, %v4471
    %v4476 = vand.u32 2147483647, %v4421
    %vm4477 = vcmp.eq.f32.partialorder %v4476, 8.507059e+37
    %v4478 = vand.u32 %v4421, 2147483648
    %v4479 = vor.u32 1.1754944e-38, %v4478
    %v4480 = vsel %vm4477, %v4479, %v4475
    %v4481 = vmul.f32 1.0, %v4480
    %4482 = vrot.lane.b32.xlu0 %v4250, 32
    %v4483 = vpop.permute.xlu0 %4482
    %4484 = vrot.lane.b32.xlu0 %v4253, 32
    %v4485 = vpop.permute.xlu0 %4484
    %4486 = vrot.lane.b32.xlu0 %v4256, 32
    %v4487 = vpop.permute.xlu0 %4486
    %4488 = vrot.lane.b32.xlu0 %v4259, 32
    %v4489 = vpop.permute.xlu0 %4488
    %v4494 = vmul.f32 %v4340, %v4483
    %v4495 = vmul.f32 %v4355, %v4485
    %v4496 = vmul.f32 %v4370, %v4487
    %v4497 = vmul.f32 %v4385, %v4489
    %4502 = vrot.lane.b32.xlu0 %v4494, 64
    %v4503 = vpop.permute.xlu0 %4502
    %4504 = vrot.lane.b32.xlu0 %v4495, 64
    %v4505 = vpop.permute.xlu0 %4504
    %4506 = vrot.lane.b32.xlu0 %v4496, 64
    %v4507 = vpop.permute.xlu0 %4506
    %4508 = vrot.lane.b32.xlu0 %v4497, 64
    %v4509 = vpop.permute.xlu0 %4508
    %v4514 = vadd.f32 %v4279, %v4503
    %v4515 = vadd.f32 %v4282, %v4505
    %v4516 = vadd.f32 %v4285, %v4507
    %v4517 = vadd.f32 %v4288, %v4509
    %v4518 = vtanh.pop %v4514
    %v4519 = vtanh.pop %v4515
    %v4520 = vtanh.pop %v4516
    %v4521 = vtanh.pop %v4517
    %v4522 = vsub.f32 1.0, %v4436
    %v4523 = vsub.f32 1.0, %v4451
    %v4524 = vsub.f32 1.0, %v4466
    %v4525 = vsub.f32 1.0, %v4481
    %4530 = vrot.lane.b32.xlu0 %v4518, 96
    %v4531 = vpop.permute.xlu0 %4530
    %4532 = vrot.lane.b32.xlu0 %v4519, 96
    %v4533 = vpop.permute.xlu0 %4532
    %4534 = vrot.lane.b32.xlu0 %v4520, 96
    %v4535 = vpop.permute.xlu0 %4534
    %4536 = vrot.lane.b32.xlu0 %v4521, 96
    %v4537 = vpop.permute.xlu0 %4536
    %v4542 = vmul.f32 %v4522, %v4531
    %v4543 = vmul.f32 %v4523, %v4533
    %v4544 = vmul.f32 %v4524, %v4535
    %v4545 = vmul.f32 %v4525, %v4537
    %v4546 = vmul.f32 %v4436, 0.0
    %v4547 = vmul.f32 %v4451, 0.0
    %v4548 = vmul.f32 %v4466, 0.0
    %v4549 = vmul.f32 %v4481, 0.0
    %v4550 = vadd.f32 %v4542, %v4546
    %v4551 = vadd.f32 %v4543, %v4547
    %v4552 = vadd.f32 %v4544, %v4548
    %v4553 = vadd.f32 %v4545, %v4549
    %4556 = vrot.lane.b32.xlu0 %v4550, 32
    %v4557 = vpop.permute.xlu0 %4556
    %4558 = vrot.lane.b32.xlu0 %v4551, 32
    %v4559 = vpop.permute.xlu0 %4558
    %v4562 = vsel %vm1943, %v4557, 0.0
    %v4563 = vsel %vm1943, %v4559, 0.0
    %v4564 = vadd.f32 %v4562, %v4563
    %4565 = vadd.xlane.f32.xlu0 %v4564
    %v4566 = vpop.xlane.xlu0 %4565
    %v4567 = vrot.slane %v4566, 4
    %v4568 = vadd.f32 %v4566, %v4567
    %v4569 = vrot.slane %v4568, 2
    %v4570 = vadd.f32 %v4568, %v4569
    %v4571 = vrot.slane %v4570, 1
    %v4572 = vadd.f32 %v4570, %v4571
    %s4573 = vtos %v4572
    %v4574 = vrcp.pop 512.0
    %v4575 = vmul.f32 512.0, %v4574
    %v4576 = vsub.f32 1.0, %v4575
    %v4577 = vmul.f32 %v4574, %v4576
    %v4578 = vadd.f32 %v4574, %v4577
    %vm4579 = vweird.f32 %v4574
    %v4580 = vsel %vm4579, %v4574, %v4578
    %s4581 = vtos %v4580
    %s4582 = smul.f32 %s4573, %s4581
    %v4583 = vstv %s4582
    %v4584 = vsub.f32 %v4550, %v4583
    %v4585 = vsub.f32 %v4551, %v4583
    %v4586 = vmul.f32 %v4584, %v4584
    %v4587 = vmul.f32 %v4585, %v4585
    %4590 = vrot.lane.b32.xlu0 %v4586, 32
    %v4591 = vpop.permute.xlu0 %4590
    %4592 = vrot.lane.b32.xlu0 %v4587, 32
    %v4593 = vpop.permute.xlu0 %4592
    %v4596 = vsel %vm1943, %v4591, 0.0
    %v4597 = vsel %vm1943, %v4593, 0.0
    %v4598 = vadd.f32 %v4596, %v4597
    %4599 = vadd.xlane.f32.xlu0 %v4598
    %v4600 = vpop.xlane.xlu0 %4599
    %v4601 = vrot.slane %v4600, 4
    %v4602 = vadd.f32 %v4600, %v4601
    %v4603 = vrot.slane %v4602, 2
    %v4604 = vadd.f32 %v4602, %v4603
    %v4605 = vrot.slane %v4604, 1
    %v4606 = vadd.f32 %v4604, %v4605
    %s4607 = vtos %v4606
    %v4608 = vrcp.pop 512.0
    %v4609 = vmul.f32 512.0, %v4608
    %v4610 = vsub.f32 1.0, %v4609
    %v4611 = vmul.f32 %v4608, %v4610
    %v4612 = vadd.f32 %v4608, %v4611
    %vm4613 = vweird.f32 %v4608
    %v4614 = vsel %vm4613, %v4608, %v4612
    %s4615 = vtos %v4614
    %s4616 = smul.f32 %s4607, %s4615
    %s4617 = sadd.f32 %s4616, 1e-12
    %v4618 = vstv %s4617
    %v4619 = vrsqrt.pop %v4618
    %v4620 = vmul.f32 %v4619, %v4618
    %v4621 = vmul.f32 %v4620, %v4619
    %v4622 = vmul.f32 0.5, %v4621
    %v4623 = vsub.f32 1.5, %v4622
    %v4624 = vmul.f32 %v4619, %v4623
    %vm4625 = vweird.f32 %v4618
    %vm4626 = vweird.f32 %v4619
    %vm4627 = vmor %vm4625, %vm4626
    %v4628 = vsel %vm4627, %v4619, %v4624
    %s4629 = vtos %v4628
    %v4630 = vstv %s4629
    %v4631 = vmul.f32 %v4584, %v4630
    %v4632 = vmul.f32 %v4585, %v4630
    %4635 = vrot.lane.b32.xlu0 %v4002, 96
    %v4636 = vpop.permute.xlu0 %4635
    %4637 = vrot.lane.b32.xlu0 %v4003, 96
    %v4638 = vpop.permute.xlu0 %4637
    %v4641 = vmul.f32 %v4631, %v4636
    %v4642 = vmul.f32 %v4632, %v4638
    %4645 = vrot.lane.b32.xlu0 %v4004, 96
    %v4646 = vpop.permute.xlu0 %4645
    %4647 = vrot.lane.b32.xlu0 %v4005, 96
    %v4648 = vpop.permute.xlu0 %4647
    %v4651 = vadd.f32 %v4641, %v4646
    %v4652 = vadd.f32 %v4642, %v4648
    %4655 = vrot.lane.b32.xlu0 %v4651, 32
    %v4656 = vpop.permute.xlu0 %4655
    %4657 = vrot.lane.b32.xlu0 %v4652, 32
    %v4658 = vpop.permute.xlu0 %4657
    %4661 = vst.msk [vmem:[#allocation3] sm:$0xff] %vm1943, %v4656
    %4662 = vst.msk [vmem:[#allocation3 + $0x8] sm:$0xff] %vm1943, %v4658
    %4665 = vrot.lane.b32.xlu0 %v4552, 32
    %v4666 = vpop.permute.xlu0 %4665
    %4667 = vrot.lane.b32.xlu0 %v4553, 32
    %v4668 = vpop.permute.xlu0 %4667
    %v4671 = vsel %vm1943, %v4666, 0.0
    %v4672 = vsel %vm1943, %v4668, 0.0
    %v4673 = vadd.f32 %v4671, %v4672
    %4674 = vadd.xlane.f32.xlu0 %v4673
    %v4675 = vpop.xlane.xlu0 %4674
    %v4676 = vrot.slane %v4675, 4
    %v4677 = vadd.f32 %v4675, %v4676
    %v4678 = vrot.slane %v4677, 2
    %v4679 = vadd.f32 %v4677, %v4678
    %v4680 = vrot.slane %v4679, 1
    %v4681 = vadd.f32 %v4679, %v4680
    %s4682 = vtos %v4681
    %v4683 = vrcp.pop 512.0
    %v4684 = vmul.f32 512.0, %v4683
    %v4685 = vsub.f32 1.0, %v4684
    %v4686 = vmul.f32 %v4683, %v4685
    %v4687 = vadd.f32 %v4683, %v4686
    %vm4688 = vweird.f32 %v4683
    %v4689 = vsel %vm4688, %v4683, %v4687
    %s4690 = vtos %v4689
    %s4691 = smul.f32 %s4682, %s4690
    %v4692 = vstv %s4691
    %v4693 = vsub.f32 %v4552, %v4692
    %v4694 = vsub.f32 %v4553, %v4692
    %v4695 = vmul.f32 %v4693, %v4693
    %v4696 = vmul.f32 %v4694, %v4694
    %4699 = vrot.lane.b32.xlu0 %v4695, 32
    %v4700 = vpop.permute.xlu0 %4699
    %4701 = vrot.lane.b32.xlu0 %v4696, 32
    %v4702 = vpop.permute.xlu0 %4701
    %v4705 = vsel %vm1943, %v4700, 0.0
    %v4706 = vsel %vm1943, %v4702, 0.0
    %v4707 = vadd.f32 %v4705, %v4706
    %4708 = vadd.xlane.f32.xlu0 %v4707
    %v4709 = vpop.xlane.xlu0 %4708
    %v4710 = vrot.slane %v4709, 4
    %v4711 = vadd.f32 %v4709, %v4710
    %v4712 = vrot.slane %v4711, 2
    %v4713 = vadd.f32 %v4711, %v4712
    %v4714 = vrot.slane %v4713, 1
    %v4715 = vadd.f32 %v4713, %v4714
    %s4716 = vtos %v4715
    %v4717 = vrcp.pop 512.0
    %v4718 = vmul.f32 512.0, %v4717
    %v4719 = vsub.f32 1.0, %v4718
    %v4720 = vmul.f32 %v4717, %v4719
    %v4721 = vadd.f32 %v4717, %v4720
    %vm4722 = vweird.f32 %v4717
    %v4723 = vsel %vm4722, %v4717, %v4721
    %s4724 = vtos %v4723
    %s4725 = smul.f32 %s4716, %s4724
    %s4726 = sadd.f32 %s4725, 1e-12
    %v4727 = vstv %s4726
    %v4728 = vrsqrt.pop %v4727
    %v4729 = vmul.f32 %v4728, %v4727
    %v4730 = vmul.f32 %v4729, %v4728
    %v4731 = vmul.f32 0.5, %v4730
    %v4732 = vsub.f32 1.5, %v4731
    %v4733 = vmul.f32 %v4728, %v4732
    %vm4734 = vweird.f32 %v4727
    %vm4735 = vweird.f32 %v4728
    %vm4736 = vmor %vm4734, %vm4735
    %v4737 = vsel %vm4736, %v4728, %v4733
    %s4738 = vtos %v4737
    %v4739 = vstv %s4738
    %v4740 = vmul.f32 %v4693, %v4739
    %v4741 = vmul.f32 %v4694, %v4739
    %v4742 = vmul.f32 %v4740, %v4636
    %v4743 = vmul.f32 %v4741, %v4638
    %v4744 = vadd.f32 %v4742, %v4646
    %v4745 = vadd.f32 %v4743, %v4648
    %4748 = vrot.lane.b32.xlu0 %v4744, 32
    %v4749 = vpop.permute.xlu0 %4748
    %4750 = vrot.lane.b32.xlu0 %v4745, 32
    %v4751 = vpop.permute.xlu0 %4750
    %s4754 = scalar_lea.vmem [#allocation3], 128
    %4755 = vst.msk [vmem:[%s4754] sm:$0xff] %vm1943, %v4749
    %4756 = vst.msk [vmem:[%s4754 + $0x8] sm:$0xff] %vm1943, %v4751
    %s4757 = scalar_lea.vmem [#allocation2], 1
    %v4758 = vld [vmem:[%s4757] ss:$8 sm:$0xf]
    %v4759 = vld [vmem:[%s4757] ss:$8 sm:$0xf0]
    %v4760 = vor.u32 %v4758, %v4759
    %s4761 = scalar_lea.vmem [#allocation2], 65
    %v4762 = vld [vmem:[%s4761] ss:$8 sm:$0xf]
    %v4763 = vld [vmem:[%s4761] ss:$8 sm:$0xf0]
    %v4764 = vor.u32 %v4762, %v4763
    %s4765 = scalar_lea.vmem [#allocation2], 129
    %v4766 = vld [vmem:[%s4765] ss:$8 sm:$0xf]
    %v4767 = vld [vmem:[%s4765] ss:$8 sm:$0xf0]
    %v4768 = vor.u32 %v4766, %v4767
    %s4769 = scalar_lea.vmem [#allocation2], 193
    %v4770 = vld [vmem:[%s4769] ss:$8 sm:$0xf]
    %v4771 = vld [vmem:[%s4769] ss:$8 sm:$0xf0]
    %v4772 = vor.u32 %v4770, %v4771
    %v4773 = vadd.f32 %v4760, %v4221
    %v4774 = vadd.f32 %v4764, %v4224
    %v4775 = vadd.f32 %v4768, %v4227
    %v4776 = vadd.f32 %v4772, %v4230
    %v4777 = vxor.u32 %v4773, 2147483648
    %v4778 = vxor.u32 %v4774, 2147483648
    %v4779 = vxor.u32 %v4775, 2147483648
    %v4780 = vxor.u32 %v4776, 2147483648
    %v4781 = vmul.f32 %v4777, 1.442695
    %v4782 = vpow.pop %v4781
    %v4783 = vmul.f32 %v4778, 1.442695
    %v4784 = vpow.pop %v4783
    %v4785 = vmul.f32 %v4779, 1.442695
    %v4786 = vpow.pop %v4785
    %v4787 = vmul.f32 %v4780, 1.442695
    %v4788 = vpow.pop %v4787
    %v4789 = vadd.f32 %v4782, 1.0
    %v4790 = vadd.f32 %v4784, 1.0
    %v4791 = vadd.f32 %v4786, 1.0
    %v4792 = vadd.f32 %v4788, 1.0
    %v4793 = vrcp.pop %v4789
    %v4794 = vmul.f32 %v4789, %v4793
    %v4795 = vsub.f32 1.0, %v4794
    %v4796 = vmul.f32 %v4793, %v4795
    %v4797 = vadd.f32 %v4793, %v4796
    %vm4798 = vweird.f32 %v4789
    %vm4799 = vweird.f32 %v4793
    %vm4800 = vmor %vm4798, %vm4799
    %v4801 = vsel %vm4800, %v4793, %v4797
    %v4802 = vand.u32 2147483647, %v4789
    %vm4803 = vcmp.eq.f32.partialorder %v4802, 8.507059e+37
    %v4804 = vand.u32 %v4789, 2147483648
    %v4805 = vor.u32 1.1754944e-38, %v4804
    %v4806 = vsel %vm4803, %v4805, %v4801
    %v4807 = vmul.f32 1.0, %v4806
    %v4808 = vrcp.pop %v4790
    %v4809 = vmul.f32 %v4790, %v4808
    %v4810 = vsub.f32 1.0, %v4809
    %v4811 = vmul.f32 %v4808, %v4810
    %v4812 = vadd.f32 %v4808, %v4811
    %vm4813 = vweird.f32 %v4790
    %vm4814 = vweird.f32 %v4808
    %vm4815 = vmor %vm4813, %vm4814
    %v4816 = vsel %vm4815, %v4808, %v4812
    %v4817 = vand.u32 2147483647, %v4790
    %vm4818 = vcmp.eq.f32.partialorder %v4817, 8.507059e+37
    %v4819 = vand.u32 %v4790, 2147483648
    %v4820 = vor.u32 1.1754944e-38, %v4819
    %v4821 = vsel %vm4818, %v4820, %v4816
    %v4822 = vmul.f32 1.0, %v4821
    %v4823 = vrcp.pop %v4791
    %v4824 = vmul.f32 %v4791, %v4823
    %v4825 = vsub.f32 1.0, %v4824
    %v4826 = vmul.f32 %v4823, %v4825
    %v4827 = vadd.f32 %v4823, %v4826
    %vm4828 = vweird.f32 %v4791
    %vm4829 = vweird.f32 %v4823
    %vm4830 = vmor %vm4828, %vm4829
    %v4831 = vsel %vm4830, %v4823, %v4827
    %v4832 = vand.u32 2147483647, %v4791
    %vm4833 = vcmp.eq.f32.partialorder %v4832, 8.507059e+37
    %v4834 = vand.u32 %v4791, 2147483648
    %v4835 = vor.u32 1.1754944e-38, %v4834
    %v4836 = vsel %vm4833, %v4835, %v4831
    %v4837 = vmul.f32 1.0, %v4836
    %v4838 = vrcp.pop %v4792
    %v4839 = vmul.f32 %v4792, %v4838
    %v4840 = vsub.f32 1.0, %v4839
    %v4841 = vmul.f32 %v4838, %v4840
    %v4842 = vadd.f32 %v4838, %v4841
    %vm4843 = vweird.f32 %v4792
    %vm4844 = vweird.f32 %v4838
    %vm4845 = vmor %vm4843, %vm4844
    %v4846 = vsel %vm4845, %v4838, %v4842
    %v4847 = vand.u32 2147483647, %v4792
    %vm4848 = vcmp.eq.f32.partialorder %v4847, 8.507059e+37
    %v4849 = vand.u32 %v4792, 2147483648
    %v4850 = vor.u32 1.1754944e-38, %v4849
    %v4851 = vsel %vm4848, %v4850, %v4846
    %v4852 = vmul.f32 1.0, %v4851
    %4853 = vrot.lane.b32.xlu0 %v4221, 64
    %v4854 = vpop.permute.xlu0 %4853
    %4855 = vrot.lane.b32.xlu0 %v4224, 64
    %v4856 = vpop.permute.xlu0 %4855
    %4857 = vrot.lane.b32.xlu0 %v4227, 64
    %v4858 = vpop.permute.xlu0 %4857
    %4859 = vrot.lane.b32.xlu0 %v4230, 64
    %v4860 = vpop.permute.xlu0 %4859
    %v4865 = vmul.f32 %v4807, %v4854
    %v4866 = vmul.f32 %v4822, %v4856
    %v4867 = vmul.f32 %v4837, %v4858
    %v4868 = vmul.f32 %v4852, %v4860
    %4873 = vrot.lane.b32.xlu0 %v4865, 64
    %v4874 = vpop.permute.xlu0 %4873
    %4875 = vrot.lane.b32.xlu0 %v4866, 64
    %v4876 = vpop.permute.xlu0 %4875
    %4877 = vrot.lane.b32.xlu0 %v4867, 64
    %v4878 = vpop.permute.xlu0 %4877
    %4879 = vrot.lane.b32.xlu0 %v4868, 64
    %v4880 = vpop.permute.xlu0 %4879
    %v4885 = vadd.f32 %v4760, %v4874
    %v4886 = vadd.f32 %v4764, %v4876
    %v4887 = vadd.f32 %v4768, %v4878
    %v4888 = vadd.f32 %v4772, %v4880
    %v4889 = vtanh.pop %v4885
    %v4890 = vtanh.pop %v4886
    %v4891 = vtanh.pop %v4887
    %v4892 = vtanh.pop %v4888
    %v4893 = vsub.f32 1.0, %v4807
    %v4894 = vsub.f32 1.0, %v4822
    %v4895 = vsub.f32 1.0, %v4837
    %v4896 = vsub.f32 1.0, %v4852
    %4901 = vrot.lane.b32.xlu0 %v4889, 96
    %v4902 = vpop.permute.xlu0 %4901
    %4903 = vrot.lane.b32.xlu0 %v4890, 96
    %v4904 = vpop.permute.xlu0 %4903
    %4905 = vrot.lane.b32.xlu0 %v4891, 96
    %v4906 = vpop.permute.xlu0 %4905
    %4907 = vrot.lane.b32.xlu0 %v4892, 96
    %v4908 = vpop.permute.xlu0 %4907
    %v4913 = vmul.f32 %v4893, %v4902
    %v4914 = vmul.f32 %v4894, %v4904
    %v4915 = vmul.f32 %v4895, %v4906
    %v4916 = vmul.f32 %v4896, %v4908
    %v4917 = vmul.f32 %v4807, %v4163
    %v4918 = vmul.f32 %v4822, %v4164
    %v4919 = vmul.f32 %v4837, %v4165
    %v4920 = vmul.f32 %v4852, %v4166
    %v4921 = vadd.f32 %v4913, %v4917
    %v4922 = vadd.f32 %v4914, %v4918
    %v4923 = vadd.f32 %v4915, %v4919
    %v4924 = vadd.f32 %v4916, %v4920
    %4929 = vrot.lane.b32.xlu0 %v4921, 96
    %v4930 = vpop.permute.xlu0 %4929
    %4931 = vrot.lane.b32.xlu0 %v4922, 96
    %v4932 = vpop.permute.xlu0 %4931
    %4933 = vrot.lane.b32.xlu0 %v4923, 96
    %v4934 = vpop.permute.xlu0 %4933
    %4935 = vrot.lane.b32.xlu0 %v4924, 96
    %v4936 = vpop.permute.xlu0 %4935
    %4941 = vrot.lane.b32.xlu0 %v4550, 64
    %v4942 = vpop.permute.xlu0 %4941
    %4943 = vrot.lane.b32.xlu0 %v4551, 64
    %v4944 = vpop.permute.xlu0 %4943
    %4945 = vrot.lane.b32.xlu0 %v4552, 64
    %v4946 = vpop.permute.xlu0 %4945
    %4947 = vrot.lane.b32.xlu0 %v4553, 64
    %v4948 = vpop.permute.xlu0 %4947
    %v4953 = vsel %vm1943, %v4930, %v4942
    %v4954 = vsel %vm1943, %v4932, %v4944
    %v4955 = vsel %vm1943, %v4934, %v4946
    %v4956 = vsel %vm1943, %v4936, %v4948
    %v4958 = vsel %vm1976, %v4953, 0
    %v4961 = vsel %vm1976, %v4954, 0
    %v4964 = vsel %vm1976, %v4955, 0
    %v4967 = vsel %vm1976, %v4956, 0
    %4969 = vmatpush.msra.mxu0 0.0
    %4970 = vmatpush.msra.mxu0 0.0
    %4971 = vmatpush.msra.mxu0 0.0
    %4972 = vmatpush.msra.mxu0 0.0
    %4973 = vmatpush.msra.mxu0 0.0
    %4974 = vmatpush.msra.mxu0 0.0
    %4975 = vmatpush.msra.mxu0 0.0
    %4976 = vmatpush.msra.mxu0 0.0
    %4977 = vmatpush.msra.mxu0 %v3998
    %4978 = vmatpush.msra.mxu0 %v3995
    %4979 = vmatpush.msra.mxu0 %v3992
    %4980 = vmatpush.msra.mxu0 %v3989
    %4981 = vmatpush.msra.mxu0 %v3986
    %4982 = vmatpush.msra.mxu0 %v3983
    %4983 = vmatpush.msra.mxu0 %v3980
    %4984 = vmatpush.msra.mxu0 %v3977
    %4985 = vmatmul.f32.gmra.mxu0 %v4958
    %v4986 = vpop.f32.mrf.mxu0
    %v4987 = vadd.f32 %v4022, %v4986
    %4988 = vmatmul.f32.gmra.mxu0 %v4961
    %v4989 = vpop.f32.mrf.mxu0
    %v4990 = vadd.f32 %v4022, %v4989
    %4991 = vmatmul.f32.gmra.mxu0 %v4964
    %v4992 = vpop.f32.mrf.mxu0
    %v4993 = vadd.f32 %v4022, %v4992
    %4994 = vmatmul.f32.gmra.mxu0 %v4967
    %v4995 = vpop.f32.mrf.mxu0
    %v4996 = vadd.f32 %v4022, %v4995
    %4997 = vdwg.mxu0
    %4998 = vmatpush.msra.mxu0 0.0
    %4999 = vmatpush.msra.mxu0 0.0
    %5000 = vmatpush.msra.mxu0 0.0
    %5001 = vmatpush.msra.mxu0 0.0
    %5002 = vmatpush.msra.mxu0 0.0
    %5003 = vmatpush.msra.mxu0 0.0
    %5004 = vmatpush.msra.mxu0 0.0
    %5005 = vmatpush.msra.mxu0 0.0
    %5006 = vmatpush.msra.mxu0 %v3999
    %5007 = vmatpush.msra.mxu0 %v3996
    %5008 = vmatpush.msra.mxu0 %v3993
    %5009 = vmatpush.msra.mxu0 %v3990
    %5010 = vmatpush.msra.mxu0 %v3987
    %5011 = vmatpush.msra.mxu0 %v3984
    %5012 = vmatpush.msra.mxu0 %v3981
    %5013 = vmatpush.msra.mxu0 %v3978
    %5014 = vmatmul.f32.gmra.mxu0 %v4958
    %v5015 = vpop.f32.mrf.mxu0
    %v5016 = vadd.f32 %v4187, %v5015
    %5017 = vmatmul.f32.gmra.mxu0 %v4961
    %v5018 = vpop.f32.mrf.mxu0
    %v5019 = vadd.f32 %v4187, %v5018
    %5020 = vmatmul.f32.gmra.mxu0 %v4964
    %v5021 = vpop.f32.mrf.mxu0
    %v5022 = vadd.f32 %v4187, %v5021
    %5023 = vmatmul.f32.gmra.mxu0 %v4967
    %v5024 = vpop.f32.mrf.mxu0
    %v5025 = vadd.f32 %v4187, %v5024
    %5026 = vdwg.mxu0
    %5027 = vmatpush.msra.mxu0 0.0
    %5028 = vmatpush.msra.mxu0 0.0
    %5029 = vmatpush.msra.mxu0 0.0
    %5030 = vmatpush.msra.mxu0 0.0
    %5031 = vmatpush.msra.mxu0 0.0
    %5032 = vmatpush.msra.mxu0 0.0
    %5033 = vmatpush.msra.mxu0 0.0
    %5034 = vmatpush.msra.mxu0 0.0
    %5035 = vmatpush.msra.mxu0 %v4000
    %5036 = vmatpush.msra.mxu0 %v3997
    %5037 = vmatpush.msra.mxu0 %v3994
    %5038 = vmatpush.msra.mxu0 %v3991
    %5039 = vmatpush.msra.mxu0 %v3988
    %5040 = vmatpush.msra.mxu0 %v3985
    %5041 = vmatpush.msra.mxu0 %v3982
    %5042 = vmatpush.msra.mxu0 %v3979
    %5043 = vmatmul.f32.gmra.mxu0 %v4958
    %v5044 = vpop.f32.mrf.mxu0
    %v5045 = vadd.f32 %v4188, %v5044
    %5046 = vmatmul.f32.gmra.mxu0 %v4961
    %v5047 = vpop.f32.mrf.mxu0
    %v5048 = vadd.f32 %v4188, %v5047
    %5049 = vmatmul.f32.gmra.mxu0 %v4964
    %v5050 = vpop.f32.mrf.mxu0
    %v5051 = vadd.f32 %v4188, %v5050
    %5052 = vmatmul.f32.gmra.mxu0 %v4967
    %v5053 = vpop.f32.mrf.mxu0
    %v5054 = vadd.f32 %v4188, %v5053
    %5055 = vdwg.mxu0
    %5060 = vrot.lane.b32.xlu0 %v4987, 96
    %v5061 = vpop.permute.xlu0 %5060
    %5062 = vrot.lane.b32.xlu0 %v4990, 96
    %v5063 = vpop.permute.xlu0 %5062
    %5064 = vrot.lane.b32.xlu0 %v4993, 96
    %v5065 = vpop.permute.xlu0 %5064
    %5066 = vrot.lane.b32.xlu0 %v4996, 96
    %v5067 = vpop.permute.xlu0 %5066
    %v5072 = vadd.f32 %v5016, %v5061
    %v5073 = vadd.f32 %v5019, %v5063
    %v5074 = vadd.f32 %v5022, %v5065
    %v5075 = vadd.f32 %v5025, %v5067
    %v5076 = vxor.u32 %v5072, 2147483648
    %v5077 = vxor.u32 %v5073, 2147483648
    %v5078 = vxor.u32 %v5074, 2147483648
    %v5079 = vxor.u32 %v5075, 2147483648
    %v5080 = vmul.f32 %v5076, 1.442695
    %v5081 = vpow.pop %v5080
    %v5082 = vmul.f32 %v5077, 1.442695
    %v5083 = vpow.pop %v5082
    %v5084 = vmul.f32 %v5078, 1.442695
    %v5085 = vpow.pop %v5084
    %v5086 = vmul.f32 %v5079, 1.442695
    %v5087 = vpow.pop %v5086
    %v5088 = vadd.f32 %v5081, 1.0
    %v5089 = vadd.f32 %v5083, 1.0
    %v5090 = vadd.f32 %v5085, 1.0
    %v5091 = vadd.f32 %v5087, 1.0
    %v5092 = vrcp.pop %v5088
    %v5093 = vmul.f32 %v5088, %v5092
    %v5094 = vsub.f32 1.0, %v5093
    %v5095 = vmul.f32 %v5092, %v5094
    %v5096 = vadd.f32 %v5092, %v5095
    %vm5097 = vweird.f32 %v5088
    %vm5098 = vweird.f32 %v5092
    %vm5099 = vmor %vm5097, %vm5098
    %v5100 = vsel %vm5099, %v5092, %v5096
    %v5101 = vand.u32 2147483647, %v5088
    %vm5102 = vcmp.eq.f32.partialorder %v5101, 8.507059e+37
    %v5103 = vand.u32 %v5088, 2147483648
    %v5104 = vor.u32 1.1754944e-38, %v5103
    %v5105 = vsel %vm5102, %v5104, %v5100
    %v5106 = vmul.f32 1.0, %v5105
    %v5107 = vrcp.pop %v5089
    %v5108 = vmul.f32 %v5089, %v5107
    %v5109 = vsub.f32 1.0, %v5108
    %v5110 = vmul.f32 %v5107, %v5109
    %v5111 = vadd.f32 %v5107, %v5110
    %vm5112 = vweird.f32 %v5089
    %vm5113 = vweird.f32 %v5107
    %vm5114 = vmor %vm5112, %vm5113
    %v5115 = vsel %vm5114, %v5107, %v5111
    %v5116 = vand.u32 2147483647, %v5089
    %vm5117 = vcmp.eq.f32.partialorder %v5116, 8.507059e+37
    %v5118 = vand.u32 %v5089, 2147483648
    %v5119 = vor.u32 1.1754944e-38, %v5118
    %v5120 = vsel %vm5117, %v5119, %v5115
    %v5121 = vmul.f32 1.0, %v5120
    %v5122 = vrcp.pop %v5090
    %v5123 = vmul.f32 %v5090, %v5122
    %v5124 = vsub.f32 1.0, %v5123
    %v5125 = vmul.f32 %v5122, %v5124
    %v5126 = vadd.f32 %v5122, %v5125
    %vm5127 = vweird.f32 %v5090
    %vm5128 = vweird.f32 %v5122
    %vm5129 = vmor %vm5127, %vm5128
    %v5130 = vsel %vm5129, %v5122, %v5126
    %v5131 = vand.u32 2147483647, %v5090
    %vm5132 = vcmp.eq.f32.partialorder %v5131, 8.507059e+37
    %v5133 = vand.u32 %v5090, 2147483648
    %v5134 = vor.u32 1.1754944e-38, %v5133
    %v5135 = vsel %vm5132, %v5134, %v5130
    %v5136 = vmul.f32 1.0, %v5135
    %v5137 = vrcp.pop %v5091
    %v5138 = vmul.f32 %v5091, %v5137
    %v5139 = vsub.f32 1.0, %v5138
    %v5140 = vmul.f32 %v5137, %v5139
    %v5141 = vadd.f32 %v5137, %v5140
    %vm5142 = vweird.f32 %v5091
    %vm5143 = vweird.f32 %v5137
    %vm5144 = vmor %vm5142, %vm5143
    %v5145 = vsel %vm5144, %v5137, %v5141
    %v5146 = vand.u32 2147483647, %v5091
    %vm5147 = vcmp.eq.f32.partialorder %v5146, 8.507059e+37
    %v5148 = vand.u32 %v5091, 2147483648
    %v5149 = vor.u32 1.1754944e-38, %v5148
    %v5150 = vsel %vm5147, %v5149, %v5145
    %v5151 = vmul.f32 1.0, %v5150
    %5156 = vrot.lane.b32.xlu0 %v5016, 96
    %v5157 = vpop.permute.xlu0 %5156
    %5158 = vrot.lane.b32.xlu0 %v5019, 96
    %v5159 = vpop.permute.xlu0 %5158
    %5160 = vrot.lane.b32.xlu0 %v5022, 96
    %v5161 = vpop.permute.xlu0 %5160
    %5162 = vrot.lane.b32.xlu0 %v5025, 96
    %v5163 = vpop.permute.xlu0 %5162
    %v5168 = vadd.f32 %v5016, %v5157
    %v5169 = vadd.f32 %v5019, %v5159
    %v5170 = vadd.f32 %v5022, %v5161
    %v5171 = vadd.f32 %v5025, %v5163
    %v5172 = vxor.u32 %v5168, 2147483648
    %v5173 = vxor.u32 %v5169, 2147483648
    %v5174 = vxor.u32 %v5170, 2147483648
    %v5175 = vxor.u32 %v5171, 2147483648
    %v5176 = vmul.f32 %v5172, 1.442695
    %v5177 = vpow.pop %v5176
    %v5178 = vmul.f32 %v5173, 1.442695
    %v5179 = vpow.pop %v5178
    %v5180 = vmul.f32 %v5174, 1.442695
    %v5181 = vpow.pop %v5180
    %v5182 = vmul.f32 %v5175, 1.442695
    %v5183 = vpow.pop %v5182
    %v5184 = vadd.f32 %v5177, 1.0
    %v5185 = vadd.f32 %v5179, 1.0
    %v5186 = vadd.f32 %v5181, 1.0
    %v5187 = vadd.f32 %v5183, 1.0
    %v5188 = vrcp.pop %v5184
    %v5189 = vmul.f32 %v5184, %v5188
    %v5190 = vsub.f32 1.0, %v5189
    %v5191 = vmul.f32 %v5188, %v5190
    %v5192 = vadd.f32 %v5188, %v5191
    %vm5193 = vweird.f32 %v5184
    %vm5194 = vweird.f32 %v5188
    %vm5195 = vmor %vm5193, %vm5194
    %v5196 = vsel %vm5195, %v5188, %v5192
    %v5197 = vand.u32 2147483647, %v5184
    %vm5198 = vcmp.eq.f32.partialorder %v5197, 8.507059e+37
    %v5199 = vand.u32 %v5184, 2147483648
    %v5200 = vor.u32 1.1754944e-38, %v5199
    %v5201 = vsel %vm5198, %v5200, %v5196
    %v5202 = vmul.f32 1.0, %v5201
    %v5203 = vrcp.pop %v5185
    %v5204 = vmul.f32 %v5185, %v5203
    %v5205 = vsub.f32 1.0, %v5204
    %v5206 = vmul.f32 %v5203, %v5205
    %v5207 = vadd.f32 %v5203, %v5206
    %vm5208 = vweird.f32 %v5185
    %vm5209 = vweird.f32 %v5203
    %vm5210 = vmor %vm5208, %vm5209
    %v5211 = vsel %vm5210, %v5203, %v5207
    %v5212 = vand.u32 2147483647, %v5185
    %vm5213 = vcmp.eq.f32.partialorder %v5212, 8.507059e+37
    %v5214 = vand.u32 %v5185, 2147483648
    %v5215 = vor.u32 1.1754944e-38, %v5214
    %v5216 = vsel %vm5213, %v5215, %v5211
    %v5217 = vmul.f32 1.0, %v5216
    %v5218 = vrcp.pop %v5186
    %v5219 = vmul.f32 %v5186, %v5218
    %v5220 = vsub.f32 1.0, %v5219
    %v5221 = vmul.f32 %v5218, %v5220
    %v5222 = vadd.f32 %v5218, %v5221
    %vm5223 = vweird.f32 %v5186
    %vm5224 = vweird.f32 %v5218
    %vm5225 = vmor %vm5223, %vm5224
    %v5226 = vsel %vm5225, %v5218, %v5222
    %v5227 = vand.u32 2147483647, %v5186
    %vm5228 = vcmp.eq.f32.partialorder %v5227, 8.507059e+37
    %v5229 = vand.u32 %v5186, 2147483648
    %v5230 = vor.u32 1.1754944e-38, %v5229
    %v5231 = vsel %vm5228, %v5230, %v5226
    %v5232 = vmul.f32 1.0, %v5231
    %v5233 = vrcp.pop %v5187
    %v5234 = vmul.f32 %v5187, %v5233
    %v5235 = vsub.f32 1.0, %v5234
    %v5236 = vmul.f32 %v5233, %v5235
    %v5237 = vadd.f32 %v5233, %v5236
    %vm5238 = vweird.f32 %v5187
    %vm5239 = vweird.f32 %v5233
    %vm5240 = vmor %vm5238, %vm5239
    %v5241 = vsel %vm5240, %v5233, %v5237
    %v5242 = vand.u32 2147483647, %v5187
    %vm5243 = vcmp.eq.f32.partialorder %v5242, 8.507059e+37
    %v5244 = vand.u32 %v5187, 2147483648
    %v5245 = vor.u32 1.1754944e-38, %v5244
    %v5246 = vsel %vm5243, %v5245, %v5241
    %v5247 = vmul.f32 1.0, %v5246
    %5248 = vrot.lane.b32.xlu0 %v5016, 32
    %v5249 = vpop.permute.xlu0 %5248
    %5250 = vrot.lane.b32.xlu0 %v5019, 32
    %v5251 = vpop.permute.xlu0 %5250
    %5252 = vrot.lane.b32.xlu0 %v5022, 32
    %v5253 = vpop.permute.xlu0 %5252
    %5254 = vrot.lane.b32.xlu0 %v5025, 32
    %v5255 = vpop.permute.xlu0 %5254
    %v5260 = vmul.f32 %v5106, %v5249
    %v5261 = vmul.f32 %v5121, %v5251
    %v5262 = vmul.f32 %v5136, %v5253
    %v5263 = vmul.f32 %v5151, %v5255
    %5268 = vrot.lane.b32.xlu0 %v5260, 64
    %v5269 = vpop.permute.xlu0 %5268
    %5270 = vrot.lane.b32.xlu0 %v5261, 64
    %v5271 = vpop.permute.xlu0 %5270
    %5272 = vrot.lane.b32.xlu0 %v5262, 64
    %v5273 = vpop.permute.xlu0 %5272
    %5274 = vrot.lane.b32.xlu0 %v5263, 64
    %v5275 = vpop.permute.xlu0 %5274
    %v5280 = vadd.f32 %v5045, %v5269
    %v5281 = vadd.f32 %v5048, %v5271
    %v5282 = vadd.f32 %v5051, %v5273
    %v5283 = vadd.f32 %v5054, %v5275
    %v5284 = vtanh.pop %v5280
    %v5285 = vtanh.pop %v5281
    %v5286 = vtanh.pop %v5282
    %v5287 = vtanh.pop %v5283
    %v5288 = vsub.f32 1.0, %v5202
    %v5289 = vsub.f32 1.0, %v5217
    %v5290 = vsub.f32 1.0, %v5232
    %v5291 = vsub.f32 1.0, %v5247
    %5296 = vrot.lane.b32.xlu0 %v5284, 96
    %v5297 = vpop.permute.xlu0 %5296
    %5298 = vrot.lane.b32.xlu0 %v5285, 96
    %v5299 = vpop.permute.xlu0 %5298
    %5300 = vrot.lane.b32.xlu0 %v5286, 96
    %v5301 = vpop.permute.xlu0 %5300
    %5302 = vrot.lane.b32.xlu0 %v5287, 96
    %v5303 = vpop.permute.xlu0 %5302
    %v5308 = vmul.f32 %v5288, %v5297
    %v5309 = vmul.f32 %v5289, %v5299
    %v5310 = vmul.f32 %v5290, %v5301
    %v5311 = vmul.f32 %v5291, %v5303
    %v5312 = vmul.f32 %v5202, %v4550
    %v5313 = vmul.f32 %v5217, %v4551
    %v5314 = vmul.f32 %v5232, %v4552
    %v5315 = vmul.f32 %v5247, %v4553
    %v5316 = vadd.f32 %v5308, %v5312
    %v5317 = vadd.f32 %v5309, %v5313
    %v5318 = vadd.f32 %v5310, %v5314
    %v5319 = vadd.f32 %v5311, %v5315
    %5322 = vrot.lane.b32.xlu0 %v5316, 32
    %v5323 = vpop.permute.xlu0 %5322
    %5324 = vrot.lane.b32.xlu0 %v5317, 32
    %v5325 = vpop.permute.xlu0 %5324
    %v5328 = vsel %vm1943, %v5323, 0.0
    %v5329 = vsel %vm1943, %v5325, 0.0
    %v5330 = vadd.f32 %v5328, %v5329
    %5331 = vadd.xlane.f32.xlu0 %v5330
    %v5332 = vpop.xlane.xlu0 %5331
    %v5333 = vrot.slane %v5332, 4
    %v5334 = vadd.f32 %v5332, %v5333
    %v5335 = vrot.slane %v5334, 2
    %v5336 = vadd.f32 %v5334, %v5335
    %v5337 = vrot.slane %v5336, 1
    %v5338 = vadd.f32 %v5336, %v5337
    %s5339 = vtos %v5338
    %v5340 = vrcp.pop 512.0
    %v5341 = vmul.f32 512.0, %v5340
    %v5342 = vsub.f32 1.0, %v5341
    %v5343 = vmul.f32 %v5340, %v5342
    %v5344 = vadd.f32 %v5340, %v5343
    %vm5345 = vweird.f32 %v5340
    %v5346 = vsel %vm5345, %v5340, %v5344
    %s5347 = vtos %v5346
    %s5348 = smul.f32 %s5339, %s5347
    %v5349 = vstv %s5348
    %v5350 = vsub.f32 %v5316, %v5349
    %v5351 = vsub.f32 %v5317, %v5349
    %v5352 = vmul.f32 %v5350, %v5350
    %v5353 = vmul.f32 %v5351, %v5351
    %5356 = vrot.lane.b32.xlu0 %v5352, 32
    %v5357 = vpop.permute.xlu0 %5356
    %5358 = vrot.lane.b32.xlu0 %v5353, 32
    %v5359 = vpop.permute.xlu0 %5358
    %v5362 = vsel %vm1943, %v5357, 0.0
    %v5363 = vsel %vm1943, %v5359, 0.0
    %v5364 = vadd.f32 %v5362, %v5363
    %5365 = vadd.xlane.f32.xlu0 %v5364
    %v5366 = vpop.xlane.xlu0 %5365
    %v5367 = vrot.slane %v5366, 4
    %v5368 = vadd.f32 %v5366, %v5367
    %v5369 = vrot.slane %v5368, 2
    %v5370 = vadd.f32 %v5368, %v5369
    %v5371 = vrot.slane %v5370, 1
    %v5372 = vadd.f32 %v5370, %v5371
    %s5373 = vtos %v5372
    %v5374 = vrcp.pop 512.0
    %v5375 = vmul.f32 512.0, %v5374
    %v5376 = vsub.f32 1.0, %v5375
    %v5377 = vmul.f32 %v5374, %v5376
    %v5378 = vadd.f32 %v5374, %v5377
    %vm5379 = vweird.f32 %v5374
    %v5380 = vsel %vm5379, %v5374, %v5378
    %s5381 = vtos %v5380
    %s5382 = smul.f32 %s5373, %s5381
    %s5383 = sadd.f32 %s5382, 1e-12
    %v5384 = vstv %s5383
    %v5385 = vrsqrt.pop %v5384
    %v5386 = vmul.f32 %v5385, %v5384
    %v5387 = vmul.f32 %v5386, %v5385
    %v5388 = vmul.f32 0.5, %v5387
    %v5389 = vsub.f32 1.5, %v5388
    %v5390 = vmul.f32 %v5385, %v5389
    %vm5391 = vweird.f32 %v5384
    %vm5392 = vweird.f32 %v5385
    %vm5393 = vmor %vm5391, %vm5392
    %v5394 = vsel %vm5393, %v5385, %v5390
    %s5395 = vtos %v5394
    %v5396 = vstv %s5395
    %v5397 = vmul.f32 %v5350, %v5396
    %v5398 = vmul.f32 %v5351, %v5396
    %v5399 = vmul.f32 %v5397, %v4636
    %v5400 = vmul.f32 %v5398, %v4638
    %v5401 = vadd.f32 %v5399, %v4646
    %v5402 = vadd.f32 %v5400, %v4648
    %5405 = vrot.lane.b32.xlu0 %v5401, 32
    %v5406 = vpop.permute.xlu0 %5405
    %5407 = vrot.lane.b32.xlu0 %v5402, 32
    %v5408 = vpop.permute.xlu0 %5407
    %5411 = vst.msk [vmem:[#allocation3 + $0x10] sm:$0xff] %vm1943, %v5406
    %5412 = vst.msk [vmem:[#allocation3 + $0x18] sm:$0xff] %vm1943, %v5408
    %5415 = vrot.lane.b32.xlu0 %v5318, 32
    %v5416 = vpop.permute.xlu0 %5415
    %5417 = vrot.lane.b32.xlu0 %v5319, 32
    %v5418 = vpop.permute.xlu0 %5417
    %v5421 = vsel %vm1943, %v5416, 0.0
    %v5422 = vsel %vm1943, %v5418, 0.0
    %v5423 = vadd.f32 %v5421, %v5422
    %5424 = vadd.xlane.f32.xlu0 %v5423
    %v5425 = vpop.xlane.xlu0 %5424
    %v5426 = vrot.slane %v5425, 4
    %v5427 = vadd.f32 %v5425, %v5426
    %v5428 = vrot.slane %v5427, 2
    %v5429 = vadd.f32 %v5427, %v5428
    %v5430 = vrot.slane %v5429, 1
    %v5431 = vadd.f32 %v5429, %v5430
    %s5432 = vtos %v5431
    %v5433 = vrcp.pop 512.0
    %v5434 = vmul.f32 512.0, %v5433
    %v5435 = vsub.f32 1.0, %v5434
    %v5436 = vmul.f32 %v5433, %v5435
    %v5437 = vadd.f32 %v5433, %v5436
    %vm5438 = vweird.f32 %v5433
    %v5439 = vsel %vm5438, %v5433, %v5437
    %s5440 = vtos %v5439
    %s5441 = smul.f32 %s5432, %s5440
    %v5442 = vstv %s5441
    %v5443 = vsub.f32 %v5318, %v5442
    %v5444 = vsub.f32 %v5319, %v5442
    %v5445 = vmul.f32 %v5443, %v5443
    %v5446 = vmul.f32 %v5444, %v5444
    %5449 = vrot.lane.b32.xlu0 %v5445, 32
    %v5450 = vpop.permute.xlu0 %5449
    %5451 = vrot.lane.b32.xlu0 %v5446, 32
    %v5452 = vpop.permute.xlu0 %5451
    %v5455 = vsel %vm1943, %v5450, 0.0
    %v5456 = vsel %vm1943, %v5452, 0.0
    %v5457 = vadd.f32 %v5455, %v5456
    %5458 = vadd.xlane.f32.xlu0 %v5457
    %v5459 = vpop.xlane.xlu0 %5458
    %v5460 = vrot.slane %v5459, 4
    %v5461 = vadd.f32 %v5459, %v5460
    %v5462 = vrot.slane %v5461, 2
    %v5463 = vadd.f32 %v5461, %v5462
    %v5464 = vrot.slane %v5463, 1
    %v5465 = vadd.f32 %v5463, %v5464
    %s5466 = vtos %v5465
    %v5467 = vrcp.pop 512.0
    %v5468 = vmul.f32 512.0, %v5467
    %v5469 = vsub.f32 1.0, %v5468
    %v5470 = vmul.f32 %v5467, %v5469
    %v5471 = vadd.f32 %v5467, %v5470
    %vm5472 = vweird.f32 %v5467
    %v5473 = vsel %vm5472, %v5467, %v5471
    %s5474 = vtos %v5473
    %s5475 = smul.f32 %s5466, %s5474
    %s5476 = sadd.f32 %s5475, 1e-12
    %v5477 = vstv %s5476
    %v5478 = vrsqrt.pop %v5477
    %v5479 = vmul.f32 %v5478, %v5477
    %v5480 = vmul.f32 %v5479, %v5478
    %v5481 = vmul.f32 0.5, %v5480
    %v5482 = vsub.f32 1.5, %v5481
    %v5483 = vmul.f32 %v5478, %v5482
    %vm5484 = vweird.f32 %v5477
    %vm5485 = vweird.f32 %v5478
    %vm5486 = vmor %vm5484, %vm5485
    %v5487 = vsel %vm5486, %v5478, %v5483
    %s5488 = vtos %v5487
    %v5489 = vstv %s5488
    %v5490 = vmul.f32 %v5443, %v5489
    %v5491 = vmul.f32 %v5444, %v5489
    %v5492 = vmul.f32 %v5490, %v4636
    %v5493 = vmul.f32 %v5491, %v4638
    %v5494 = vadd.f32 %v5492, %v4646
    %v5495 = vadd.f32 %v5493, %v4648
    %5498 = vrot.lane.b32.xlu0 %v5494, 32
    %v5499 = vpop.permute.xlu0 %5498
    %5500 = vrot.lane.b32.xlu0 %v5495, 32
    %v5501 = vpop.permute.xlu0 %5500
    %5504 = vst.msk [vmem:[%s4754 + $0x10] sm:$0xff] %vm1943, %v5499
    %5505 = vst.msk [vmem:[%s4754 + $0x18] sm:$0xff] %vm1943, %v5501
    %s5506 = scalar_lea.vmem [#allocation2], 2
    %v5507 = vld [vmem:[%s5506] ss:$8 sm:$0xf]
    %v5508 = vld [vmem:[%s5506] ss:$8 sm:$0xf0]
    %v5509 = vor.u32 %v5507, %v5508
    %s5510 = scalar_lea.vmem [#allocation2], 66
    %v5511 = vld [vmem:[%s5510] ss:$8 sm:$0xf]
    %v5512 = vld [vmem:[%s5510] ss:$8 sm:$0xf0]
    %v5513 = vor.u32 %v5511, %v5512
    %s5514 = scalar_lea.vmem [#allocation2], 130
    %v5515 = vld [vmem:[%s5514] ss:$8 sm:$0xf]
    %v5516 = vld [vmem:[%s5514] ss:$8 sm:$0xf0]
    %v5517 = vor.u32 %v5515, %v5516
    %s5518 = scalar_lea.vmem [#allocation2], 194
    %v5519 = vld [vmem:[%s5518] ss:$8 sm:$0xf]
    %v5520 = vld [vmem:[%s5518] ss:$8 sm:$0xf0]
    %v5521 = vor.u32 %v5519, %v5520
    %v5522 = vadd.f32 %v5509, %v4987
    %v5523 = vadd.f32 %v5513, %v4990
    %v5524 = vadd.f32 %v5517, %v4993
    %v5525 = vadd.f32 %v5521, %v4996
    %v5526 = vxor.u32 %v5522, 2147483648
    %v5527 = vxor.u32 %v5523, 2147483648
    %v5528 = vxor.u32 %v5524, 2147483648
    %v5529 = vxor.u32 %v5525, 2147483648
    %v5530 = vmul.f32 %v5526, 1.442695
    %v5531 = vpow.pop %v5530
    %v5532 = vmul.f32 %v5527, 1.442695
    %v5533 = vpow.pop %v5532
    %v5534 = vmul.f32 %v5528, 1.442695
    %v5535 = vpow.pop %v5534
    %v5536 = vmul.f32 %v5529, 1.442695
    %v5537 = vpow.pop %v5536
    %v5538 = vadd.f32 %v5531, 1.0
    %v5539 = vadd.f32 %v5533, 1.0
    %v5540 = vadd.f32 %v5535, 1.0
    %v5541 = vadd.f32 %v5537, 1.0
    %v5542 = vrcp.pop %v5538
    %v5543 = vmul.f32 %v5538, %v5542
    %v5544 = vsub.f32 1.0, %v5543
    %v5545 = vmul.f32 %v5542, %v5544
    %v5546 = vadd.f32 %v5542, %v5545
    %vm5547 = vweird.f32 %v5538
    %vm5548 = vweird.f32 %v5542
    %vm5549 = vmor %vm5547, %vm5548
    %v5550 = vsel %vm5549, %v5542, %v5546
    %v5551 = vand.u32 2147483647, %v5538
    %vm5552 = vcmp.eq.f32.partialorder %v5551, 8.507059e+37
    %v5553 = vand.u32 %v5538, 2147483648
    %v5554 = vor.u32 1.1754944e-38, %v5553
    %v5555 = vsel %vm5552, %v5554, %v5550
    %v5556 = vmul.f32 1.0, %v5555
    %v5557 = vrcp.pop %v5539
    %v5558 = vmul.f32 %v5539, %v5557
    %v5559 = vsub.f32 1.0, %v5558
    %v5560 = vmul.f32 %v5557, %v5559
    %v5561 = vadd.f32 %v5557, %v5560
    %vm5562 = vweird.f32 %v5539
    %vm5563 = vweird.f32 %v5557
    %vm5564 = vmor %vm5562, %vm5563
    %v5565 = vsel %vm5564, %v5557, %v5561
    %v5566 = vand.u32 2147483647, %v5539
    %vm5567 = vcmp.eq.f32.partialorder %v5566, 8.507059e+37
    %v5568 = vand.u32 %v5539, 2147483648
    %v5569 = vor.u32 1.1754944e-38, %v5568
    %v5570 = vsel %vm5567, %v5569, %v5565
    %v5571 = vmul.f32 1.0, %v5570
    %v5572 = vrcp.pop %v5540
    %v5573 = vmul.f32 %v5540, %v5572
    %v5574 = vsub.f32 1.0, %v5573
    %v5575 = vmul.f32 %v5572, %v5574
    %v5576 = vadd.f32 %v5572, %v5575
    %vm5577 = vweird.f32 %v5540
    %vm5578 = vweird.f32 %v5572
    %vm5579 = vmor %vm5577, %vm5578
    %v5580 = vsel %vm5579, %v5572, %v5576
    %v5581 = vand.u32 2147483647, %v5540
    %vm5582 = vcmp.eq.f32.partialorder %v5581, 8.507059e+37
    %v5583 = vand.u32 %v5540, 2147483648
    %v5584 = vor.u32 1.1754944e-38, %v5583
    %v5585 = vsel %vm5582, %v5584, %v5580
    %v5586 = vmul.f32 1.0, %v5585
    %v5587 = vrcp.pop %v5541
    %v5588 = vmul.f32 %v5541, %v5587
    %v5589 = vsub.f32 1.0, %v5588
    %v5590 = vmul.f32 %v5587, %v5589
    %v5591 = vadd.f32 %v5587, %v5590
    %vm5592 = vweird.f32 %v5541
    %vm5593 = vweird.f32 %v5587
    %vm5594 = vmor %vm5592, %vm5593
    %v5595 = vsel %vm5594, %v5587, %v5591
    %v5596 = vand.u32 2147483647, %v5541
    %vm5597 = vcmp.eq.f32.partialorder %v5596, 8.507059e+37
    %v5598 = vand.u32 %v5541, 2147483648
    %v5599 = vor.u32 1.1754944e-38, %v5598
    %v5600 = vsel %vm5597, %v5599, %v5595
    %v5601 = vmul.f32 1.0, %v5600
    %5602 = vrot.lane.b32.xlu0 %v4987, 64
    %v5603 = vpop.permute.xlu0 %5602
    %5604 = vrot.lane.b32.xlu0 %v4990, 64
    %v5605 = vpop.permute.xlu0 %5604
    %5606 = vrot.lane.b32.xlu0 %v4993, 64
    %v5607 = vpop.permute.xlu0 %5606
    %5608 = vrot.lane.b32.xlu0 %v4996, 64
    %v5609 = vpop.permute.xlu0 %5608
    %v5614 = vmul.f32 %v5556, %v5603
    %v5615 = vmul.f32 %v5571, %v5605
    %v5616 = vmul.f32 %v5586, %v5607
    %v5617 = vmul.f32 %v5601, %v5609
    %5622 = vrot.lane.b32.xlu0 %v5614, 64
    %v5623 = vpop.permute.xlu0 %5622
    %5624 = vrot.lane.b32.xlu0 %v5615, 64
    %v5625 = vpop.permute.xlu0 %5624
    %5626 = vrot.lane.b32.xlu0 %v5616, 64
    %v5627 = vpop.permute.xlu0 %5626
    %5628 = vrot.lane.b32.xlu0 %v5617, 64
    %v5629 = vpop.permute.xlu0 %5628
    %v5634 = vadd.f32 %v5509, %v5623
    %v5635 = vadd.f32 %v5513, %v5625
    %v5636 = vadd.f32 %v5517, %v5627
    %v5637 = vadd.f32 %v5521, %v5629
    %v5638 = vtanh.pop %v5634
    %v5639 = vtanh.pop %v5635
    %v5640 = vtanh.pop %v5636
    %v5641 = vtanh.pop %v5637
    %v5642 = vsub.f32 1.0, %v5556
    %v5643 = vsub.f32 1.0, %v5571
    %v5644 = vsub.f32 1.0, %v5586
    %v5645 = vsub.f32 1.0, %v5601
    %5650 = vrot.lane.b32.xlu0 %v5638, 96
    %v5651 = vpop.permute.xlu0 %5650
    %5652 = vrot.lane.b32.xlu0 %v5639, 96
    %v5653 = vpop.permute.xlu0 %5652
    %5654 = vrot.lane.b32.xlu0 %v5640, 96
    %v5655 = vpop.permute.xlu0 %5654
    %5656 = vrot.lane.b32.xlu0 %v5641, 96
    %v5657 = vpop.permute.xlu0 %5656
    %v5662 = vmul.f32 %v5642, %v5651
    %v5663 = vmul.f32 %v5643, %v5653
    %v5664 = vmul.f32 %v5644, %v5655
    %v5665 = vmul.f32 %v5645, %v5657
    %v5666 = vmul.f32 %v5556, %v4921
    %v5667 = vmul.f32 %v5571, %v4922
    %v5668 = vmul.f32 %v5586, %v4923
    %v5669 = vmul.f32 %v5601, %v4924
    %v5670 = vadd.f32 %v5662, %v5666
    %v5671 = vadd.f32 %v5663, %v5667
    %v5672 = vadd.f32 %v5664, %v5668
    %v5673 = vadd.f32 %v5665, %v5669
    %5678 = vrot.lane.b32.xlu0 %v5670, 96
    %v5679 = vpop.permute.xlu0 %5678
    %5680 = vrot.lane.b32.xlu0 %v5671, 96
    %v5681 = vpop.permute.xlu0 %5680
    %5682 = vrot.lane.b32.xlu0 %v5672, 96
    %v5683 = vpop.permute.xlu0 %5682
    %5684 = vrot.lane.b32.xlu0 %v5673, 96
    %v5685 = vpop.permute.xlu0 %5684
    %5690 = vrot.lane.b32.xlu0 %v5316, 64
    %v5691 = vpop.permute.xlu0 %5690
    %5692 = vrot.lane.b32.xlu0 %v5317, 64
    %v5693 = vpop.permute.xlu0 %5692
    %5694 = vrot.lane.b32.xlu0 %v5318, 64
    %v5695 = vpop.permute.xlu0 %5694
    %5696 = vrot.lane.b32.xlu0 %v5319, 64
    %v5697 = vpop.permute.xlu0 %5696
    %v5702 = vsel %vm1943, %v5679, %v5691
    %v5703 = vsel %vm1943, %v5681, %v5693
    %v5704 = vsel %vm1943, %v5683, %v5695
    %v5705 = vsel %vm1943, %v5685, %v5697
    %v5707 = vsel %vm1976, %v5702, 0
    %v5710 = vsel %vm1976, %v5703, 0
    %v5713 = vsel %vm1976, %v5704, 0
    %v5716 = vsel %vm1976, %v5705, 0
    %5718 = vmatpush.msra.mxu0 0.0
    %5719 = vmatpush.msra.mxu0 0.0
    %5720 = vmatpush.msra.mxu0 0.0
    %5721 = vmatpush.msra.mxu0 0.0
    %5722 = vmatpush.msra.mxu0 0.0
    %5723 = vmatpush.msra.mxu0 0.0
    %5724 = vmatpush.msra.mxu0 0.0
    %5725 = vmatpush.msra.mxu0 0.0
    %5726 = vmatpush.msra.mxu0 %v3998
    %5727 = vmatpush.msra.mxu0 %v3995
    %5728 = vmatpush.msra.mxu0 %v3992
    %5729 = vmatpush.msra.mxu0 %v3989
    %5730 = vmatpush.msra.mxu0 %v3986
    %5731 = vmatpush.msra.mxu0 %v3983
    %5732 = vmatpush.msra.mxu0 %v3980
    %5733 = vmatpush.msra.mxu0 %v3977
    %5734 = vmatmul.f32.gmra.mxu0 %v5707
    %v5735 = vpop.f32.mrf.mxu0
    %v5736 = vadd.f32 %v4022, %v5735
    %5737 = vmatmul.f32.gmra.mxu0 %v5710
    %v5738 = vpop.f32.mrf.mxu0
    %v5739 = vadd.f32 %v4022, %v5738
    %5740 = vmatmul.f32.gmra.mxu0 %v5713
    %v5741 = vpop.f32.mrf.mxu0
    %v5742 = vadd.f32 %v4022, %v5741
    %5743 = vmatmul.f32.gmra.mxu0 %v5716
    %v5744 = vpop.f32.mrf.mxu0
    %v5745 = vadd.f32 %v4022, %v5744
    %5746 = vdwg.mxu0
    %5747 = vmatpush.msra.mxu0 0.0
    %5748 = vmatpush.msra.mxu0 0.0
    %5749 = vmatpush.msra.mxu0 0.0
    %5750 = vmatpush.msra.mxu0 0.0
    %5751 = vmatpush.msra.mxu0 0.0
    %5752 = vmatpush.msra.mxu0 0.0
    %5753 = vmatpush.msra.mxu0 0.0
    %5754 = vmatpush.msra.mxu0 0.0
    %5755 = vmatpush.msra.mxu0 %v3999
    %5756 = vmatpush.msra.mxu0 %v3996
    %5757 = vmatpush.msra.mxu0 %v3993
    %5758 = vmatpush.msra.mxu0 %v3990
    %5759 = vmatpush.msra.mxu0 %v3987
    %5760 = vmatpush.msra.mxu0 %v3984
    %5761 = vmatpush.msra.mxu0 %v3981
    %5762 = vmatpush.msra.mxu0 %v3978
    %5763 = vmatmul.f32.gmra.mxu0 %v5707
    %v5764 = vpop.f32.mrf.mxu0
    %v5765 = vadd.f32 %v4187, %v5764
    %5766 = vmatmul.f32.gmra.mxu0 %v5710
    %v5767 = vpop.f32.mrf.mxu0
    %v5768 = vadd.f32 %v4187, %v5767
    %5769 = vmatmul.f32.gmra.mxu0 %v5713
    %v5770 = vpop.f32.mrf.mxu0
    %v5771 = vadd.f32 %v4187, %v5770
    %5772 = vmatmul.f32.gmra.mxu0 %v5716
    %v5773 = vpop.f32.mrf.mxu0
    %v5774 = vadd.f32 %v4187, %v5773
    %5775 = vdwg.mxu0
    %5776 = vmatpush.msra.mxu0 0.0
    %5777 = vmatpush.msra.mxu0 0.0
    %5778 = vmatpush.msra.mxu0 0.0
    %5779 = vmatpush.msra.mxu0 0.0
    %5780 = vmatpush.msra.mxu0 0.0
    %5781 = vmatpush.msra.mxu0 0.0
    %5782 = vmatpush.msra.mxu0 0.0
    %5783 = vmatpush.msra.mxu0 0.0
    %5784 = vmatpush.msra.mxu0 %v4000
    %5785 = vmatpush.msra.mxu0 %v3997
    %5786 = vmatpush.msra.mxu0 %v3994
    %5787 = vmatpush.msra.mxu0 %v3991
    %5788 = vmatpush.msra.mxu0 %v3988
    %5789 = vmatpush.msra.mxu0 %v3985
    %5790 = vmatpush.msra.mxu0 %v3982
    %5791 = vmatpush.msra.mxu0 %v3979
    %5792 = vmatmul.f32.gmra.mxu0 %v5707
    %v5793 = vpop.f32.mrf.mxu0
    %v5794 = vadd.f32 %v4188, %v5793
    %5795 = vmatmul.f32.gmra.mxu0 %v5710
    %v5796 = vpop.f32.mrf.mxu0
    %v5797 = vadd.f32 %v4188, %v5796
    %5798 = vmatmul.f32.gmra.mxu0 %v5713
    %v5799 = vpop.f32.mrf.mxu0
    %v5800 = vadd.f32 %v4188, %v5799
    %5801 = vmatmul.f32.gmra.mxu0 %v5716
    %v5802 = vpop.f32.mrf.mxu0
    %v5803 = vadd.f32 %v4188, %v5802
    %5804 = vdwg.mxu0
    %5809 = vrot.lane.b32.xlu0 %v5736, 96
    %v5810 = vpop.permute.xlu0 %5809
    %5811 = vrot.lane.b32.xlu0 %v5739, 96
    %v5812 = vpop.permute.xlu0 %5811
    %5813 = vrot.lane.b32.xlu0 %v5742, 96
    %v5814 = vpop.permute.xlu0 %5813
    %5815 = vrot.lane.b32.xlu0 %v5745, 96
    %v5816 = vpop.permute.xlu0 %5815
    %v5821 = vadd.f32 %v5765, %v5810
    %v5822 = vadd.f32 %v5768, %v5812
    %v5823 = vadd.f32 %v5771, %v5814
    %v5824 = vadd.f32 %v5774, %v5816
    %v5825 = vxor.u32 %v5821, 2147483648
    %v5826 = vxor.u32 %v5822, 2147483648
    %v5827 = vxor.u32 %v5823, 2147483648
    %v5828 = vxor.u32 %v5824, 2147483648
    %v5829 = vmul.f32 %v5825, 1.442695
    %v5830 = vpow.pop %v5829
    %v5831 = vmul.f32 %v5826, 1.442695
    %v5832 = vpow.pop %v5831
    %v5833 = vmul.f32 %v5827, 1.442695
    %v5834 = vpow.pop %v5833
    %v5835 = vmul.f32 %v5828, 1.442695
    %v5836 = vpow.pop %v5835
    %v5837 = vadd.f32 %v5830, 1.0
    %v5838 = vadd.f32 %v5832, 1.0
    %v5839 = vadd.f32 %v5834, 1.0
    %v5840 = vadd.f32 %v5836, 1.0
    %v5841 = vrcp.pop %v5837
    %v5842 = vmul.f32 %v5837, %v5841
    %v5843 = vsub.f32 1.0, %v5842
    %v5844 = vmul.f32 %v5841, %v5843
    %v5845 = vadd.f32 %v5841, %v5844
    %vm5846 = vweird.f32 %v5837
    %vm5847 = vweird.f32 %v5841
    %vm5848 = vmor %vm5846, %vm5847
    %v5849 = vsel %vm5848, %v5841, %v5845
    %v5850 = vand.u32 2147483647, %v5837
    %vm5851 = vcmp.eq.f32.partialorder %v5850, 8.507059e+37
    %v5852 = vand.u32 %v5837, 2147483648
    %v5853 = vor.u32 1.1754944e-38, %v5852
    %v5854 = vsel %vm5851, %v5853, %v5849
    %v5855 = vmul.f32 1.0, %v5854
    %v5856 = vrcp.pop %v5838
    %v5857 = vmul.f32 %v5838, %v5856
    %v5858 = vsub.f32 1.0, %v5857
    %v5859 = vmul.f32 %v5856, %v5858
    %v5860 = vadd.f32 %v5856, %v5859
    %vm5861 = vweird.f32 %v5838
    %vm5862 = vweird.f32 %v5856
    %vm5863 = vmor %vm5861, %vm5862
    %v5864 = vsel %vm5863, %v5856, %v5860
    %v5865 = vand.u32 2147483647, %v5838
    %vm5866 = vcmp.eq.f32.partialorder %v5865, 8.507059e+37
    %v5867 = vand.u32 %v5838, 2147483648
    %v5868 = vor.u32 1.1754944e-38, %v5867
    %v5869 = vsel %vm5866, %v5868, %v5864
    %v5870 = vmul.f32 1.0, %v5869
    %v5871 = vrcp.pop %v5839
    %v5872 = vmul.f32 %v5839, %v5871
    %v5873 = vsub.f32 1.0, %v5872
    %v5874 = vmul.f32 %v5871, %v5873
    %v5875 = vadd.f32 %v5871, %v5874
    %vm5876 = vweird.f32 %v5839
    %vm5877 = vweird.f32 %v5871
    %vm5878 = vmor %vm5876, %vm5877
    %v5879 = vsel %vm5878, %v5871, %v5875
    %v5880 = vand.u32 2147483647, %v5839
    %vm5881 = vcmp.eq.f32.partialorder %v5880, 8.507059e+37
    %v5882 = vand.u32 %v5839, 2147483648
    %v5883 = vor.u32 1.1754944e-38, %v5882
    %v5884 = vsel %vm5881, %v5883, %v5879
    %v5885 = vmul.f32 1.0, %v5884
    %v5886 = vrcp.pop %v5840
    %v5887 = vmul.f32 %v5840, %v5886
    %v5888 = vsub.f32 1.0, %v5887
    %v5889 = vmul.f32 %v5886, %v5888
    %v5890 = vadd.f32 %v5886, %v5889
    %vm5891 = vweird.f32 %v5840
    %vm5892 = vweird.f32 %v5886
    %vm5893 = vmor %vm5891, %vm5892
    %v5894 = vsel %vm5893, %v5886, %v5890
    %v5895 = vand.u32 2147483647, %v5840
    %vm5896 = vcmp.eq.f32.partialorder %v5895, 8.507059e+37
    %v5897 = vand.u32 %v5840, 2147483648
    %v5898 = vor.u32 1.1754944e-38, %v5897
    %v5899 = vsel %vm5896, %v5898, %v5894
    %v5900 = vmul.f32 1.0, %v5899
    %5905 = vrot.lane.b32.xlu0 %v5765, 96
    %v5906 = vpop.permute.xlu0 %5905
    %5907 = vrot.lane.b32.xlu0 %v5768, 96
    %v5908 = vpop.permute.xlu0 %5907
    %5909 = vrot.lane.b32.xlu0 %v5771, 96
    %v5910 = vpop.permute.xlu0 %5909
    %5911 = vrot.lane.b32.xlu0 %v5774, 96
    %v5912 = vpop.permute.xlu0 %5911
    %v5917 = vadd.f32 %v5765, %v5906
    %v5918 = vadd.f32 %v5768, %v5908
    %v5919 = vadd.f32 %v5771, %v5910
    %v5920 = vadd.f32 %v5774, %v5912
    %v5921 = vxor.u32 %v5917, 2147483648
    %v5922 = vxor.u32 %v5918, 2147483648
    %v5923 = vxor.u32 %v5919, 2147483648
    %v5924 = vxor.u32 %v5920, 2147483648
    %v5925 = vmul.f32 %v5921, 1.442695
    %v5926 = vpow.pop %v5925
    %v5927 = vmul.f32 %v5922, 1.442695
    %v5928 = vpow.pop %v5927
    %v5929 = vmul.f32 %v5923, 1.442695
    %v5930 = vpow.pop %v5929
    %v5931 = vmul.f32 %v5924, 1.442695
    %v5932 = vpow.pop %v5931
    %v5933 = vadd.f32 %v5926, 1.0
    %v5934 = vadd.f32 %v5928, 1.0
    %v5935 = vadd.f32 %v5930, 1.0
    %v5936 = vadd.f32 %v5932, 1.0
    %v5937 = vrcp.pop %v5933
    %v5938 = vmul.f32 %v5933, %v5937
    %v5939 = vsub.f32 1.0, %v5938
    %v5940 = vmul.f32 %v5937, %v5939
    %v5941 = vadd.f32 %v5937, %v5940
    %vm5942 = vweird.f32 %v5933
    %vm5943 = vweird.f32 %v5937
    %vm5944 = vmor %vm5942, %vm5943
    %v5945 = vsel %vm5944, %v5937, %v5941
    %v5946 = vand.u32 2147483647, %v5933
    %vm5947 = vcmp.eq.f32.partialorder %v5946, 8.507059e+37
    %v5948 = vand.u32 %v5933, 2147483648
    %v5949 = vor.u32 1.1754944e-38, %v5948
    %v5950 = vsel %vm5947, %v5949, %v5945
    %v5951 = vmul.f32 1.0, %v5950
    %v5952 = vrcp.pop %v5934
    %v5953 = vmul.f32 %v5934, %v5952
    %v5954 = vsub.f32 1.0, %v5953
    %v5955 = vmul.f32 %v5952, %v5954
    %v5956 = vadd.f32 %v5952, %v5955
    %vm5957 = vweird.f32 %v5934
    %vm5958 = vweird.f32 %v5952
    %vm5959 = vmor %vm5957, %vm5958
    %v5960 = vsel %vm5959, %v5952, %v5956
    %v5961 = vand.u32 2147483647, %v5934
    %vm5962 = vcmp.eq.f32.partialorder %v5961, 8.507059e+37
    %v5963 = vand.u32 %v5934, 2147483648
    %v5964 = vor.u32 1.1754944e-38, %v5963
    %v5965 = vsel %vm5962, %v5964, %v5960
    %v5966 = vmul.f32 1.0, %v5965
    %v5967 = vrcp.pop %v5935
    %v5968 = vmul.f32 %v5935, %v5967
    %v5969 = vsub.f32 1.0, %v5968
    %v5970 = vmul.f32 %v5967, %v5969
    %v5971 = vadd.f32 %v5967, %v5970
    %vm5972 = vweird.f32 %v5935
    %vm5973 = vweird.f32 %v5967
    %vm5974 = vmor %vm5972, %vm5973
    %v5975 = vsel %vm5974, %v5967, %v5971
    %v5976 = vand.u32 2147483647, %v5935
    %vm5977 = vcmp.eq.f32.partialorder %v5976, 8.507059e+37
    %v5978 = vand.u32 %v5935, 2147483648
    %v5979 = vor.u32 1.1754944e-38, %v5978
    %v5980 = vsel %vm5977, %v5979, %v5975
    %v5981 = vmul.f32 1.0, %v5980
    %v5982 = vrcp.pop %v5936
    %v5983 = vmul.f32 %v5936, %v5982
    %v5984 = vsub.f32 1.0, %v5983
    %v5985 = vmul.f32 %v5982, %v5984
    %v5986 = vadd.f32 %v5982, %v5985
    %vm5987 = vweird.f32 %v5936
    %vm5988 = vweird.f32 %v5982
    %vm5989 = vmor %vm5987, %vm5988
    %v5990 = vsel %vm5989, %v5982, %v5986
    %v5991 = vand.u32 2147483647, %v5936
    %vm5992 = vcmp.eq.f32.partialorder %v5991, 8.507059e+37
    %v5993 = vand.u32 %v5936, 2147483648
    %v5994 = vor.u32 1.1754944e-38, %v5993
    %v5995 = vsel %vm5992, %v5994, %v5990
    %v5996 = vmul.f32 1.0, %v5995
    %5997 = vrot.lane.b32.xlu0 %v5765, 32
    %v5998 = vpop.permute.xlu0 %5997
    %5999 = vrot.lane.b32.xlu0 %v5768, 32
    %v6000 = vpop.permute.xlu0 %5999
    %6001 = vrot.lane.b32.xlu0 %v5771, 32
    %v6002 = vpop.permute.xlu0 %6001
    %6003 = vrot.lane.b32.xlu0 %v5774, 32
    %v6004 = vpop.permute.xlu0 %6003
    %v6009 = vmul.f32 %v5855, %v5998
    %v6010 = vmul.f32 %v5870, %v6000
    %v6011 = vmul.f32 %v5885, %v6002
    %v6012 = vmul.f32 %v5900, %v6004
    %6017 = vrot.lane.b32.xlu0 %v6009, 64
    %v6018 = vpop.permute.xlu0 %6017
    %6019 = vrot.lane.b32.xlu0 %v6010, 64
    %v6020 = vpop.permute.xlu0 %6019
    %6021 = vrot.lane.b32.xlu0 %v6011, 64
    %v6022 = vpop.permute.xlu0 %6021
    %6023 = vrot.lane.b32.xlu0 %v6012, 64
    %v6024 = vpop.permute.xlu0 %6023
    %v6029 = vadd.f32 %v5794, %v6018
    %v6030 = vadd.f32 %v5797, %v6020
    %v6031 = vadd.f32 %v5800, %v6022
    %v6032 = vadd.f32 %v5803, %v6024
    %v6033 = vtanh.pop %v6029
    %v6034 = vtanh.pop %v6030
    %v6035 = vtanh.pop %v6031
    %v6036 = vtanh.pop %v6032
    %v6037 = vsub.f32 1.0, %v5951
    %v6038 = vsub.f32 1.0, %v5966
    %v6039 = vsub.f32 1.0, %v5981
    %v6040 = vsub.f32 1.0, %v5996
    %6045 = vrot.lane.b32.xlu0 %v6033, 96
    %v6046 = vpop.permute.xlu0 %6045
    %6047 = vrot.lane.b32.xlu0 %v6034, 96
    %v6048 = vpop.permute.xlu0 %6047
    %6049 = vrot.lane.b32.xlu0 %v6035, 96
    %v6050 = vpop.permute.xlu0 %6049
    %6051 = vrot.lane.b32.xlu0 %v6036, 96
    %v6052 = vpop.permute.xlu0 %6051
    %v6057 = vmul.f32 %v6037, %v6046
    %v6058 = vmul.f32 %v6038, %v6048
    %v6059 = vmul.f32 %v6039, %v6050
    %v6060 = vmul.f32 %v6040, %v6052
    %v6061 = vmul.f32 %v5951, %v5316
    %v6062 = vmul.f32 %v5966, %v5317
    %v6063 = vmul.f32 %v5981, %v5318
    %v6064 = vmul.f32 %v5996, %v5319
    %v6065 = vadd.f32 %v6057, %v6061
    %v6066 = vadd.f32 %v6058, %v6062
    %v6067 = vadd.f32 %v6059, %v6063
    %v6068 = vadd.f32 %v6060, %v6064
    %6071 = vrot.lane.b32.xlu0 %v6065, 32
    %v6072 = vpop.permute.xlu0 %6071
    %6073 = vrot.lane.b32.xlu0 %v6066, 32
    %v6074 = vpop.permute.xlu0 %6073
    %v6077 = vsel %vm1943, %v6072, 0.0
    %v6078 = vsel %vm1943, %v6074, 0.0
    %v6079 = vadd.f32 %v6077, %v6078
    %6080 = vadd.xlane.f32.xlu0 %v6079
    %v6081 = vpop.xlane.xlu0 %6080
    %v6082 = vrot.slane %v6081, 4
    %v6083 = vadd.f32 %v6081, %v6082
    %v6084 = vrot.slane %v6083, 2
    %v6085 = vadd.f32 %v6083, %v6084
    %v6086 = vrot.slane %v6085, 1
    %v6087 = vadd.f32 %v6085, %v6086
    %s6088 = vtos %v6087
    %v6089 = vrcp.pop 512.0
    %v6090 = vmul.f32 512.0, %v6089
    %v6091 = vsub.f32 1.0, %v6090
    %v6092 = vmul.f32 %v6089, %v6091
    %v6093 = vadd.f32 %v6089, %v6092
    %vm6094 = vweird.f32 %v6089
    %v6095 = vsel %vm6094, %v6089, %v6093
    %s6096 = vtos %v6095
    %s6097 = smul.f32 %s6088, %s6096
    %v6098 = vstv %s6097
    %v6099 = vsub.f32 %v6065, %v6098
    %v6100 = vsub.f32 %v6066, %v6098
    %v6101 = vmul.f32 %v6099, %v6099
    %v6102 = vmul.f32 %v6100, %v6100
    %6105 = vrot.lane.b32.xlu0 %v6101, 32
    %v6106 = vpop.permute.xlu0 %6105
    %6107 = vrot.lane.b32.xlu0 %v6102, 32
    %v6108 = vpop.permute.xlu0 %6107
    %v6111 = vsel %vm1943, %v6106, 0.0
    %v6112 = vsel %vm1943, %v6108, 0.0
    %v6113 = vadd.f32 %v6111, %v6112
    %6114 = vadd.xlane.f32.xlu0 %v6113
    %v6115 = vpop.xlane.xlu0 %6114
    %v6116 = vrot.slane %v6115, 4
    %v6117 = vadd.f32 %v6115, %v6116
    %v6118 = vrot.slane %v6117, 2
    %v6119 = vadd.f32 %v6117, %v6118
    %v6120 = vrot.slane %v6119, 1
    %v6121 = vadd.f32 %v6119, %v6120
    %s6122 = vtos %v6121
    %v6123 = vrcp.pop 512.0
    %v6124 = vmul.f32 512.0, %v6123
    %v6125 = vsub.f32 1.0, %v6124
    %v6126 = vmul.f32 %v6123, %v6125
    %v6127 = vadd.f32 %v6123, %v6126
    %vm6128 = vweird.f32 %v6123
    %v6129 = vsel %vm6128, %v6123, %v6127
    %s6130 = vtos %v6129
    %s6131 = smul.f32 %s6122, %s6130
    %s6132 = sadd.f32 %s6131, 1e-12
    %v6133 = vstv %s6132
    %v6134 = vrsqrt.pop %v6133
    %v6135 = vmul.f32 %v6134, %v6133
    %v6136 = vmul.f32 %v6135, %v6134
    %v6137 = vmul.f32 0.5, %v6136
    %v6138 = vsub.f32 1.5, %v6137
    %v6139 = vmul.f32 %v6134, %v6138
    %vm6140 = vweird.f32 %v6133
    %vm6141 = vweird.f32 %v6134
    %vm6142 = vmor %vm6140, %vm6141
    %v6143 = vsel %vm6142, %v6134, %v6139
    %s6144 = vtos %v6143
    %v6145 = vstv %s6144
    %v6146 = vmul.f32 %v6099, %v6145
    %v6147 = vmul.f32 %v6100, %v6145
    %v6148 = vmul.f32 %v6146, %v4636
    %v6149 = vmul.f32 %v6147, %v4638
    %v6150 = vadd.f32 %v6148, %v4646
    %v6151 = vadd.f32 %v6149, %v4648
    %6154 = vrot.lane.b32.xlu0 %v6150, 32
    %v6155 = vpop.permute.xlu0 %6154
    %6156 = vrot.lane.b32.xlu0 %v6151, 32
    %v6157 = vpop.permute.xlu0 %6156
    %6160 = vst.msk [vmem:[#allocation3 + $0x20] sm:$0xff] %vm1943, %v6155
    %6161 = vst.msk [vmem:[#allocation3 + $0x28] sm:$0xff] %vm1943, %v6157
    %6164 = vrot.lane.b32.xlu0 %v6067, 32
    %v6165 = vpop.permute.xlu0 %6164
    %6166 = vrot.lane.b32.xlu0 %v6068, 32
    %v6167 = vpop.permute.xlu0 %6166
    %v6170 = vsel %vm1943, %v6165, 0.0
    %v6171 = vsel %vm1943, %v6167, 0.0
    %v6172 = vadd.f32 %v6170, %v6171
    %6173 = vadd.xlane.f32.xlu0 %v6172
    %v6174 = vpop.xlane.xlu0 %6173
    %v6175 = vrot.slane %v6174, 4
    %v6176 = vadd.f32 %v6174, %v6175
    %v6177 = vrot.slane %v6176, 2
    %v6178 = vadd.f32 %v6176, %v6177
    %v6179 = vrot.slane %v6178, 1
    %v6180 = vadd.f32 %v6178, %v6179
    %s6181 = vtos %v6180
    %v6182 = vrcp.pop 512.0
    %v6183 = vmul.f32 512.0, %v6182
    %v6184 = vsub.f32 1.0, %v6183
    %v6185 = vmul.f32 %v6182, %v6184
    %v6186 = vadd.f32 %v6182, %v6185
    %vm6187 = vweird.f32 %v6182
    %v6188 = vsel %vm6187, %v6182, %v6186
    %s6189 = vtos %v6188
    %s6190 = smul.f32 %s6181, %s6189
    %v6191 = vstv %s6190
    %v6192 = vsub.f32 %v6067, %v6191
    %v6193 = vsub.f32 %v6068, %v6191
    %v6194 = vmul.f32 %v6192, %v6192
    %v6195 = vmul.f32 %v6193, %v6193
    %6198 = vrot.lane.b32.xlu0 %v6194, 32
    %v6199 = vpop.permute.xlu0 %6198
    %6200 = vrot.lane.b32.xlu0 %v6195, 32
    %v6201 = vpop.permute.xlu0 %6200
    %v6204 = vsel %vm1943, %v6199, 0.0
    %v6205 = vsel %vm1943, %v6201, 0.0
    %v6206 = vadd.f32 %v6204, %v6205
    %6207 = vadd.xlane.f32.xlu0 %v6206
    %v6208 = vpop.xlane.xlu0 %6207
    %v6209 = vrot.slane %v6208, 4
    %v6210 = vadd.f32 %v6208, %v6209
    %v6211 = vrot.slane %v6210, 2
    %v6212 = vadd.f32 %v6210, %v6211
    %v6213 = vrot.slane %v6212, 1
    %v6214 = vadd.f32 %v6212, %v6213
    %s6215 = vtos %v6214
    %v6216 = vrcp.pop 512.0
    %v6217 = vmul.f32 512.0, %v6216
    %v6218 = vsub.f32 1.0, %v6217
    %v6219 = vmul.f32 %v6216, %v6218
    %v6220 = vadd.f32 %v6216, %v6219
    %vm6221 = vweird.f32 %v6216
    %v6222 = vsel %vm6221, %v6216, %v6220
    %s6223 = vtos %v6222
    %s6224 = smul.f32 %s6215, %s6223
    %s6225 = sadd.f32 %s6224, 1e-12
    %v6226 = vstv %s6225
    %v6227 = vrsqrt.pop %v6226
    %v6228 = vmul.f32 %v6227, %v6226
    %v6229 = vmul.f32 %v6228, %v6227
    %v6230 = vmul.f32 0.5, %v6229
    %v6231 = vsub.f32 1.5, %v6230
    %v6232 = vmul.f32 %v6227, %v6231
    %vm6233 = vweird.f32 %v6226
    %vm6234 = vweird.f32 %v6227
    %vm6235 = vmor %vm6233, %vm6234
    %v6236 = vsel %vm6235, %v6227, %v6232
    %s6237 = vtos %v6236
    %v6238 = vstv %s6237
    %v6239 = vmul.f32 %v6192, %v6238
    %v6240 = vmul.f32 %v6193, %v6238
    %v6241 = vmul.f32 %v6239, %v4636
    %v6242 = vmul.f32 %v6240, %v4638
    %v6243 = vadd.f32 %v6241, %v4646
    %v6244 = vadd.f32 %v6242, %v4648
    %6247 = vrot.lane.b32.xlu0 %v6243, 32
    %v6248 = vpop.permute.xlu0 %6247
    %6249 = vrot.lane.b32.xlu0 %v6244, 32
    %v6250 = vpop.permute.xlu0 %6249
    %6253 = vst.msk [vmem:[%s4754 + $0x20] sm:$0xff] %vm1943, %v6248
    %6254 = vst.msk [vmem:[%s4754 + $0x28] sm:$0xff] %vm1943, %v6250
    %s6255 = scalar_lea.vmem [#allocation2], 3
    %v6256 = vld [vmem:[%s6255] ss:$8 sm:$0xf]
    %v6257 = vld [vmem:[%s6255] ss:$8 sm:$0xf0]
    %v6258 = vor.u32 %v6256, %v6257
    %s6259 = scalar_lea.vmem [#allocation2], 67
    %v6260 = vld [vmem:[%s6259] ss:$8 sm:$0xf]
    %v6261 = vld [vmem:[%s6259] ss:$8 sm:$0xf0]
    %v6262 = vor.u32 %v6260, %v6261
    %s6263 = scalar_lea.vmem [#allocation2], 131
    %v6264 = vld [vmem:[%s6263] ss:$8 sm:$0xf]
    %v6265 = vld [vmem:[%s6263] ss:$8 sm:$0xf0]
    %v6266 = vor.u32 %v6264, %v6265
    %s6267 = scalar_lea.vmem [#allocation2], 195
    %v6268 = vld [vmem:[%s6267] ss:$8 sm:$0xf]
    %v6269 = vld [vmem:[%s6267] ss:$8 sm:$0xf0]
    %v6270 = vor.u32 %v6268, %v6269
    %v6271 = vadd.f32 %v6258, %v5736
    %v6272 = vadd.f32 %v6262, %v5739
    %v6273 = vadd.f32 %v6266, %v5742
    %v6274 = vadd.f32 %v6270, %v5745
    %v6275 = vxor.u32 %v6271, 2147483648
    %v6276 = vxor.u32 %v6272, 2147483648
    %v6277 = vxor.u32 %v6273, 2147483648
    %v6278 = vxor.u32 %v6274, 2147483648
    %v6279 = vmul.f32 %v6275, 1.442695
    %v6280 = vpow.pop %v6279
    %v6281 = vmul.f32 %v6276, 1.442695
    %v6282 = vpow.pop %v6281
    %v6283 = vmul.f32 %v6277, 1.442695
    %v6284 = vpow.pop %v6283
    %v6285 = vmul.f32 %v6278, 1.442695
    %v6286 = vpow.pop %v6285
    %v6287 = vadd.f32 %v6280, 1.0
    %v6288 = vadd.f32 %v6282, 1.0
    %v6289 = vadd.f32 %v6284, 1.0
    %v6290 = vadd.f32 %v6286, 1.0
    %v6291 = vrcp.pop %v6287
    %v6292 = vmul.f32 %v6287, %v6291
    %v6293 = vsub.f32 1.0, %v6292
    %v6294 = vmul.f32 %v6291, %v6293
    %v6295 = vadd.f32 %v6291, %v6294
    %vm6296 = vweird.f32 %v6287
    %vm6297 = vweird.f32 %v6291
    %vm6298 = vmor %vm6296, %vm6297
    %v6299 = vsel %vm6298, %v6291, %v6295
    %v6300 = vand.u32 2147483647, %v6287
    %vm6301 = vcmp.eq.f32.partialorder %v6300, 8.507059e+37
    %v6302 = vand.u32 %v6287, 2147483648
    %v6303 = vor.u32 1.1754944e-38, %v6302
    %v6304 = vsel %vm6301, %v6303, %v6299
    %v6305 = vmul.f32 1.0, %v6304
    %v6306 = vrcp.pop %v6288
    %v6307 = vmul.f32 %v6288, %v6306
    %v6308 = vsub.f32 1.0, %v6307
    %v6309 = vmul.f32 %v6306, %v6308
    %v6310 = vadd.f32 %v6306, %v6309
    %vm6311 = vweird.f32 %v6288
    %vm6312 = vweird.f32 %v6306
    %vm6313 = vmor %vm6311, %vm6312
    %v6314 = vsel %vm6313, %v6306, %v6310
    %v6315 = vand.u32 2147483647, %v6288
    %vm6316 = vcmp.eq.f32.partialorder %v6315, 8.507059e+37
    %v6317 = vand.u32 %v6288, 2147483648
    %v6318 = vor.u32 1.1754944e-38, %v6317
    %v6319 = vsel %vm6316, %v6318, %v6314
    %v6320 = vmul.f32 1.0, %v6319
    %v6321 = vrcp.pop %v6289
    %v6322 = vmul.f32 %v6289, %v6321
    %v6323 = vsub.f32 1.0, %v6322
    %v6324 = vmul.f32 %v6321, %v6323
    %v6325 = vadd.f32 %v6321, %v6324
    %vm6326 = vweird.f32 %v6289
    %vm6327 = vweird.f32 %v6321
    %vm6328 = vmor %vm6326, %vm6327
    %v6329 = vsel %vm6328, %v6321, %v6325
    %v6330 = vand.u32 2147483647, %v6289
    %vm6331 = vcmp.eq.f32.partialorder %v6330, 8.507059e+37
    %v6332 = vand.u32 %v6289, 2147483648
    %v6333 = vor.u32 1.1754944e-38, %v6332
    %v6334 = vsel %vm6331, %v6333, %v6329
    %v6335 = vmul.f32 1.0, %v6334
    %v6336 = vrcp.pop %v6290
    %v6337 = vmul.f32 %v6290, %v6336
    %v6338 = vsub.f32 1.0, %v6337
    %v6339 = vmul.f32 %v6336, %v6338
    %v6340 = vadd.f32 %v6336, %v6339
    %vm6341 = vweird.f32 %v6290
    %vm6342 = vweird.f32 %v6336
    %vm6343 = vmor %vm6341, %vm6342
    %v6344 = vsel %vm6343, %v6336, %v6340
    %v6345 = vand.u32 2147483647, %v6290
    %vm6346 = vcmp.eq.f32.partialorder %v6345, 8.507059e+37
    %v6347 = vand.u32 %v6290, 2147483648
    %v6348 = vor.u32 1.1754944e-38, %v6347
    %v6349 = vsel %vm6346, %v6348, %v6344
    %v6350 = vmul.f32 1.0, %v6349
    %6351 = vrot.lane.b32.xlu0 %v5736, 64
    %v6352 = vpop.permute.xlu0 %6351
    %6353 = vrot.lane.b32.xlu0 %v5739, 64
    %v6354 = vpop.permute.xlu0 %6353
    %6355 = vrot.lane.b32.xlu0 %v5742, 64
    %v6356 = vpop.permute.xlu0 %6355
    %6357 = vrot.lane.b32.xlu0 %v5745, 64
    %v6358 = vpop.permute.xlu0 %6357
    %v6363 = vmul.f32 %v6305, %v6352
    %v6364 = vmul.f32 %v6320, %v6354
    %v6365 = vmul.f32 %v6335, %v6356
    %v6366 = vmul.f32 %v6350, %v6358
    %6371 = vrot.lane.b32.xlu0 %v6363, 64
    %v6372 = vpop.permute.xlu0 %6371
    %6373 = vrot.lane.b32.xlu0 %v6364, 64
    %v6374 = vpop.permute.xlu0 %6373
    %6375 = vrot.lane.b32.xlu0 %v6365, 64
    %v6376 = vpop.permute.xlu0 %6375
    %6377 = vrot.lane.b32.xlu0 %v6366, 64
    %v6378 = vpop.permute.xlu0 %6377
    %v6383 = vadd.f32 %v6258, %v6372
    %v6384 = vadd.f32 %v6262, %v6374
    %v6385 = vadd.f32 %v6266, %v6376
    %v6386 = vadd.f32 %v6270, %v6378
    %v6387 = vtanh.pop %v6383
    %v6388 = vtanh.pop %v6384
    %v6389 = vtanh.pop %v6385
    %v6390 = vtanh.pop %v6386
    %v6391 = vsub.f32 1.0, %v6305
    %v6392 = vsub.f32 1.0, %v6320
    %v6393 = vsub.f32 1.0, %v6335
    %v6394 = vsub.f32 1.0, %v6350
    %6399 = vrot.lane.b32.xlu0 %v6387, 96
    %v6400 = vpop.permute.xlu0 %6399
    %6401 = vrot.lane.b32.xlu0 %v6388, 96
    %v6402 = vpop.permute.xlu0 %6401
    %6403 = vrot.lane.b32.xlu0 %v6389, 96
    %v6404 = vpop.permute.xlu0 %6403
    %6405 = vrot.lane.b32.xlu0 %v6390, 96
    %v6406 = vpop.permute.xlu0 %6405
    %v6411 = vmul.f32 %v6391, %v6400
    %v6412 = vmul.f32 %v6392, %v6402
    %v6413 = vmul.f32 %v6393, %v6404
    %v6414 = vmul.f32 %v6394, %v6406
    %v6415 = vmul.f32 %v6305, %v5670
    %v6416 = vmul.f32 %v6320, %v5671
    %v6417 = vmul.f32 %v6335, %v5672
    %v6418 = vmul.f32 %v6350, %v5673
    %v6419 = vadd.f32 %v6411, %v6415
    %v6420 = vadd.f32 %v6412, %v6416
    %v6421 = vadd.f32 %v6413, %v6417
    %v6422 = vadd.f32 %v6414, %v6418
    %6427 = vrot.lane.b32.xlu0 %v6419, 96
    %v6428 = vpop.permute.xlu0 %6427
    %6429 = vrot.lane.b32.xlu0 %v6420, 96
    %v6430 = vpop.permute.xlu0 %6429
    %6431 = vrot.lane.b32.xlu0 %v6421, 96
    %v6432 = vpop.permute.xlu0 %6431
    %6433 = vrot.lane.b32.xlu0 %v6422, 96
    %v6434 = vpop.permute.xlu0 %6433
    %6439 = vrot.lane.b32.xlu0 %v6065, 64
    %v6440 = vpop.permute.xlu0 %6439
    %6441 = vrot.lane.b32.xlu0 %v6066, 64
    %v6442 = vpop.permute.xlu0 %6441
    %6443 = vrot.lane.b32.xlu0 %v6067, 64
    %v6444 = vpop.permute.xlu0 %6443
    %6445 = vrot.lane.b32.xlu0 %v6068, 64
    %v6446 = vpop.permute.xlu0 %6445
    %v6451 = vsel %vm1943, %v6428, %v6440
    %v6452 = vsel %vm1943, %v6430, %v6442
    %v6453 = vsel %vm1943, %v6432, %v6444
    %v6454 = vsel %vm1943, %v6434, %v6446
    %v6456 = vsel %vm1976, %v6451, 0
    %v6459 = vsel %vm1976, %v6452, 0
    %v6462 = vsel %vm1976, %v6453, 0
    %v6465 = vsel %vm1976, %v6454, 0
    %6467 = vmatpush.msra.mxu0 0.0
    %6468 = vmatpush.msra.mxu0 0.0
    %6469 = vmatpush.msra.mxu0 0.0
    %6470 = vmatpush.msra.mxu0 0.0
    %6471 = vmatpush.msra.mxu0 0.0
    %6472 = vmatpush.msra.mxu0 0.0
    %6473 = vmatpush.msra.mxu0 0.0
    %6474 = vmatpush.msra.mxu0 0.0
    %6475 = vmatpush.msra.mxu0 %v3998
    %6476 = vmatpush.msra.mxu0 %v3995
    %6477 = vmatpush.msra.mxu0 %v3992
    %6478 = vmatpush.msra.mxu0 %v3989
    %6479 = vmatpush.msra.mxu0 %v3986
    %6480 = vmatpush.msra.mxu0 %v3983
    %6481 = vmatpush.msra.mxu0 %v3980
    %6482 = vmatpush.msra.mxu0 %v3977
    %6483 = vmatmul.f32.gmra.mxu0 %v6456
    %v6484 = vpop.f32.mrf.mxu0
    %v6485 = vadd.f32 %v4022, %v6484
    %6486 = vmatmul.f32.gmra.mxu0 %v6459
    %v6487 = vpop.f32.mrf.mxu0
    %v6488 = vadd.f32 %v4022, %v6487
    %6489 = vmatmul.f32.gmra.mxu0 %v6462
    %v6490 = vpop.f32.mrf.mxu0
    %v6491 = vadd.f32 %v4022, %v6490
    %6492 = vmatmul.f32.gmra.mxu0 %v6465
    %v6493 = vpop.f32.mrf.mxu0
    %v6494 = vadd.f32 %v4022, %v6493
    %6495 = vdwg.mxu0
    %6496 = vmatpush.msra.mxu0 0.0
    %6497 = vmatpush.msra.mxu0 0.0
    %6498 = vmatpush.msra.mxu0 0.0
    %6499 = vmatpush.msra.mxu0 0.0
    %6500 = vmatpush.msra.mxu0 0.0
    %6501 = vmatpush.msra.mxu0 0.0
    %6502 = vmatpush.msra.mxu0 0.0
    %6503 = vmatpush.msra.mxu0 0.0
    %6504 = vmatpush.msra.mxu0 %v3999
    %6505 = vmatpush.msra.mxu0 %v3996
    %6506 = vmatpush.msra.mxu0 %v3993
    %6507 = vmatpush.msra.mxu0 %v3990
    %6508 = vmatpush.msra.mxu0 %v3987
    %6509 = vmatpush.msra.mxu0 %v3984
    %6510 = vmatpush.msra.mxu0 %v3981
    %6511 = vmatpush.msra.mxu0 %v3978
    %6512 = vmatmul.f32.gmra.mxu0 %v6456
    %v6513 = vpop.f32.mrf.mxu0
    %v6514 = vadd.f32 %v4187, %v6513
    %6515 = vmatmul.f32.gmra.mxu0 %v6459
    %v6516 = vpop.f32.mrf.mxu0
    %v6517 = vadd.f32 %v4187, %v6516
    %6518 = vmatmul.f32.gmra.mxu0 %v6462
    %v6519 = vpop.f32.mrf.mxu0
    %v6520 = vadd.f32 %v4187, %v6519
    %6521 = vmatmul.f32.gmra.mxu0 %v6465
    %v6522 = vpop.f32.mrf.mxu0
    %v6523 = vadd.f32 %v4187, %v6522
    %6524 = vdwg.mxu0
    %6525 = vmatpush.msra.mxu0 0.0
    %6526 = vmatpush.msra.mxu0 0.0
    %6527 = vmatpush.msra.mxu0 0.0
    %6528 = vmatpush.msra.mxu0 0.0
    %6529 = vmatpush.msra.mxu0 0.0
    %6530 = vmatpush.msra.mxu0 0.0
    %6531 = vmatpush.msra.mxu0 0.0
    %6532 = vmatpush.msra.mxu0 0.0
    %6533 = vmatpush.msra.mxu0 %v4000
    %6534 = vmatpush.msra.mxu0 %v3997
    %6535 = vmatpush.msra.mxu0 %v3994
    %6536 = vmatpush.msra.mxu0 %v3991
    %6537 = vmatpush.msra.mxu0 %v3988
    %6538 = vmatpush.msra.mxu0 %v3985
    %6539 = vmatpush.msra.mxu0 %v3982
    %6540 = vmatpush.msra.mxu0 %v3979
    %6541 = vmatmul.f32.gmra.mxu0 %v6456
    %v6542 = vpop.f32.mrf.mxu0
    %v6543 = vadd.f32 %v4188, %v6542
    %6544 = vmatmul.f32.gmra.mxu0 %v6459
    %v6545 = vpop.f32.mrf.mxu0
    %v6546 = vadd.f32 %v4188, %v6545
    %6547 = vmatmul.f32.gmra.mxu0 %v6462
    %v6548 = vpop.f32.mrf.mxu0
    %v6549 = vadd.f32 %v4188, %v6548
    %6550 = vmatmul.f32.gmra.mxu0 %v6465
    %v6551 = vpop.f32.mrf.mxu0
    %v6552 = vadd.f32 %v4188, %v6551
    %6553 = vdwg.mxu0
    %6558 = vrot.lane.b32.xlu0 %v6485, 96
    %v6559 = vpop.permute.xlu0 %6558
    %6560 = vrot.lane.b32.xlu0 %v6488, 96
    %v6561 = vpop.permute.xlu0 %6560
    %6562 = vrot.lane.b32.xlu0 %v6491, 96
    %v6563 = vpop.permute.xlu0 %6562
    %6564 = vrot.lane.b32.xlu0 %v6494, 96
    %v6565 = vpop.permute.xlu0 %6564
    %v6570 = vadd.f32 %v6514, %v6559
    %v6571 = vadd.f32 %v6517, %v6561
    %v6572 = vadd.f32 %v6520, %v6563
    %v6573 = vadd.f32 %v6523, %v6565
    %v6574 = vxor.u32 %v6570, 2147483648
    %v6575 = vxor.u32 %v6571, 2147483648
    %v6576 = vxor.u32 %v6572, 2147483648
    %v6577 = vxor.u32 %v6573, 2147483648
    %v6578 = vmul.f32 %v6574, 1.442695
    %v6579 = vpow.pop %v6578
    %v6580 = vmul.f32 %v6575, 1.442695
    %v6581 = vpow.pop %v6580
    %v6582 = vmul.f32 %v6576, 1.442695
    %v6583 = vpow.pop %v6582
    %v6584 = vmul.f32 %v6577, 1.442695
    %v6585 = vpow.pop %v6584
    %v6586 = vadd.f32 %v6579, 1.0
    %v6587 = vadd.f32 %v6581, 1.0
    %v6588 = vadd.f32 %v6583, 1.0
    %v6589 = vadd.f32 %v6585, 1.0
    %v6590 = vrcp.pop %v6586
    %v6591 = vmul.f32 %v6586, %v6590
    %v6592 = vsub.f32 1.0, %v6591
    %v6593 = vmul.f32 %v6590, %v6592
    %v6594 = vadd.f32 %v6590, %v6593
    %vm6595 = vweird.f32 %v6586
    %vm6596 = vweird.f32 %v6590
    %vm6597 = vmor %vm6595, %vm6596
    %v6598 = vsel %vm6597, %v6590, %v6594
    %v6599 = vand.u32 2147483647, %v6586
    %vm6600 = vcmp.eq.f32.partialorder %v6599, 8.507059e+37
    %v6601 = vand.u32 %v6586, 2147483648
    %v6602 = vor.u32 1.1754944e-38, %v6601
    %v6603 = vsel %vm6600, %v6602, %v6598
    %v6604 = vmul.f32 1.0, %v6603
    %v6605 = vrcp.pop %v6587
    %v6606 = vmul.f32 %v6587, %v6605
    %v6607 = vsub.f32 1.0, %v6606
    %v6608 = vmul.f32 %v6605, %v6607
    %v6609 = vadd.f32 %v6605, %v6608
    %vm6610 = vweird.f32 %v6587
    %vm6611 = vweird.f32 %v6605
    %vm6612 = vmor %vm6610, %vm6611
    %v6613 = vsel %vm6612, %v6605, %v6609
    %v6614 = vand.u32 2147483647, %v6587
    %vm6615 = vcmp.eq.f32.partialorder %v6614, 8.507059e+37
    %v6616 = vand.u32 %v6587, 2147483648
    %v6617 = vor.u32 1.1754944e-38, %v6616
    %v6618 = vsel %vm6615, %v6617, %v6613
    %v6619 = vmul.f32 1.0, %v6618
    %v6620 = vrcp.pop %v6588
    %v6621 = vmul.f32 %v6588, %v6620
    %v6622 = vsub.f32 1.0, %v6621
    %v6623 = vmul.f32 %v6620, %v6622
    %v6624 = vadd.f32 %v6620, %v6623
    %vm6625 = vweird.f32 %v6588
    %vm6626 = vweird.f32 %v6620
    %vm6627 = vmor %vm6625, %vm6626
    %v6628 = vsel %vm6627, %v6620, %v6624
    %v6629 = vand.u32 2147483647, %v6588
    %vm6630 = vcmp.eq.f32.partialorder %v6629, 8.507059e+37
    %v6631 = vand.u32 %v6588, 2147483648
    %v6632 = vor.u32 1.1754944e-38, %v6631
    %v6633 = vsel %vm6630, %v6632, %v6628
    %v6634 = vmul.f32 1.0, %v6633
    %v6635 = vrcp.pop %v6589
    %v6636 = vmul.f32 %v6589, %v6635
    %v6637 = vsub.f32 1.0, %v6636
    %v6638 = vmul.f32 %v6635, %v6637
    %v6639 = vadd.f32 %v6635, %v6638
    %vm6640 = vweird.f32 %v6589
    %vm6641 = vweird.f32 %v6635
    %vm6642 = vmor %vm6640, %vm6641
    %v6643 = vsel %vm6642, %v6635, %v6639
    %v6644 = vand.u32 2147483647, %v6589
    %vm6645 = vcmp.eq.f32.partialorder %v6644, 8.507059e+37
    %v6646 = vand.u32 %v6589, 2147483648
    %v6647 = vor.u32 1.1754944e-38, %v6646
    %v6648 = vsel %vm6645, %v6647, %v6643
    %v6649 = vmul.f32 1.0, %v6648
    %6654 = vrot.lane.b32.xlu0 %v6514, 96
    %v6655 = vpop.permute.xlu0 %6654
    %6656 = vrot.lane.b32.xlu0 %v6517, 96
    %v6657 = vpop.permute.xlu0 %6656
    %6658 = vrot.lane.b32.xlu0 %v6520, 96
    %v6659 = vpop.permute.xlu0 %6658
    %6660 = vrot.lane.b32.xlu0 %v6523, 96
    %v6661 = vpop.permute.xlu0 %6660
    %v6666 = vadd.f32 %v6514, %v6655
    %v6667 = vadd.f32 %v6517, %v6657
    %v6668 = vadd.f32 %v6520, %v6659
    %v6669 = vadd.f32 %v6523, %v6661
    %v6670 = vxor.u32 %v6666, 2147483648
    %v6671 = vxor.u32 %v6667, 2147483648
    %v6672 = vxor.u32 %v6668, 2147483648
    %v6673 = vxor.u32 %v6669, 2147483648
    %v6674 = vmul.f32 %v6670, 1.442695
    %v6675 = vpow.pop %v6674
    %v6676 = vmul.f32 %v6671, 1.442695
    %v6677 = vpow.pop %v6676
    %v6678 = vmul.f32 %v6672, 1.442695
    %v6679 = vpow.pop %v6678
    %v6680 = vmul.f32 %v6673, 1.442695
    %v6681 = vpow.pop %v6680
    %v6682 = vadd.f32 %v6675, 1.0
    %v6683 = vadd.f32 %v6677, 1.0
    %v6684 = vadd.f32 %v6679, 1.0
    %v6685 = vadd.f32 %v6681, 1.0
    %v6686 = vrcp.pop %v6682
    %v6687 = vmul.f32 %v6682, %v6686
    %v6688 = vsub.f32 1.0, %v6687
    %v6689 = vmul.f32 %v6686, %v6688
    %v6690 = vadd.f32 %v6686, %v6689
    %vm6691 = vweird.f32 %v6682
    %vm6692 = vweird.f32 %v6686
    %vm6693 = vmor %vm6691, %vm6692
    %v6694 = vsel %vm6693, %v6686, %v6690
    %v6695 = vand.u32 2147483647, %v6682
    %vm6696 = vcmp.eq.f32.partialorder %v6695, 8.507059e+37
    %v6697 = vand.u32 %v6682, 2147483648
    %v6698 = vor.u32 1.1754944e-38, %v6697
    %v6699 = vsel %vm6696, %v6698, %v6694
    %v6700 = vmul.f32 1.0, %v6699
    %v6701 = vrcp.pop %v6683
    %v6702 = vmul.f32 %v6683, %v6701
    %v6703 = vsub.f32 1.0, %v6702
    %v6704 = vmul.f32 %v6701, %v6703
    %v6705 = vadd.f32 %v6701, %v6704
    %vm6706 = vweird.f32 %v6683
    %vm6707 = vweird.f32 %v6701
    %vm6708 = vmor %vm6706, %vm6707
    %v6709 = vsel %vm6708, %v6701, %v6705
    %v6710 = vand.u32 2147483647, %v6683
    %vm6711 = vcmp.eq.f32.partialorder %v6710, 8.507059e+37
    %v6712 = vand.u32 %v6683, 2147483648
    %v6713 = vor.u32 1.1754944e-38, %v6712
    %v6714 = vsel %vm6711, %v6713, %v6709
    %v6715 = vmul.f32 1.0, %v6714
    %v6716 = vrcp.pop %v6684
    %v6717 = vmul.f32 %v6684, %v6716
    %v6718 = vsub.f32 1.0, %v6717
    %v6719 = vmul.f32 %v6716, %v6718
    %v6720 = vadd.f32 %v6716, %v6719
    %vm6721 = vweird.f32 %v6684
    %vm6722 = vweird.f32 %v6716
    %vm6723 = vmor %vm6721, %vm6722
    %v6724 = vsel %vm6723, %v6716, %v6720
    %v6725 = vand.u32 2147483647, %v6684
    %vm6726 = vcmp.eq.f32.partialorder %v6725, 8.507059e+37
    %v6727 = vand.u32 %v6684, 2147483648
    %v6728 = vor.u32 1.1754944e-38, %v6727
    %v6729 = vsel %vm6726, %v6728, %v6724
    %v6730 = vmul.f32 1.0, %v6729
    %v6731 = vrcp.pop %v6685
    %v6732 = vmul.f32 %v6685, %v6731
    %v6733 = vsub.f32 1.0, %v6732
    %v6734 = vmul.f32 %v6731, %v6733
    %v6735 = vadd.f32 %v6731, %v6734
    %vm6736 = vweird.f32 %v6685
    %vm6737 = vweird.f32 %v6731
    %vm6738 = vmor %vm6736, %vm6737
    %v6739 = vsel %vm6738, %v6731, %v6735
    %v6740 = vand.u32 2147483647, %v6685
    %vm6741 = vcmp.eq.f32.partialorder %v6740, 8.507059e+37
    %v6742 = vand.u32 %v6685, 2147483648
    %v6743 = vor.u32 1.1754944e-38, %v6742
    %v6744 = vsel %vm6741, %v6743, %v6739
    %v6745 = vmul.f32 1.0, %v6744
    %6746 = vrot.lane.b32.xlu0 %v6514, 32
    %v6747 = vpop.permute.xlu0 %6746
    %6748 = vrot.lane.b32.xlu0 %v6517, 32
    %v6749 = vpop.permute.xlu0 %6748
    %6750 = vrot.lane.b32.xlu0 %v6520, 32
    %v6751 = vpop.permute.xlu0 %6750
    %6752 = vrot.lane.b32.xlu0 %v6523, 32
    %v6753 = vpop.permute.xlu0 %6752
    %v6758 = vmul.f32 %v6604, %v6747
    %v6759 = vmul.f32 %v6619, %v6749
    %v6760 = vmul.f32 %v6634, %v6751
    %v6761 = vmul.f32 %v6649, %v6753
    %6766 = vrot.lane.b32.xlu0 %v6758, 64
    %v6767 = vpop.permute.xlu0 %6766
    %6768 = vrot.lane.b32.xlu0 %v6759, 64
    %v6769 = vpop.permute.xlu0 %6768
    %6770 = vrot.lane.b32.xlu0 %v6760, 64
    %v6771 = vpop.permute.xlu0 %6770
    %6772 = vrot.lane.b32.xlu0 %v6761, 64
    %v6773 = vpop.permute.xlu0 %6772
    %v6778 = vadd.f32 %v6543, %v6767
    %v6779 = vadd.f32 %v6546, %v6769
    %v6780 = vadd.f32 %v6549, %v6771
    %v6781 = vadd.f32 %v6552, %v6773
    %v6782 = vtanh.pop %v6778
    %v6783 = vtanh.pop %v6779
    %v6784 = vtanh.pop %v6780
    %v6785 = vtanh.pop %v6781
    %v6786 = vsub.f32 1.0, %v6700
    %v6787 = vsub.f32 1.0, %v6715
    %v6788 = vsub.f32 1.0, %v6730
    %v6789 = vsub.f32 1.0, %v6745
    %6794 = vrot.lane.b32.xlu0 %v6782, 96
    %v6795 = vpop.permute.xlu0 %6794
    %6796 = vrot.lane.b32.xlu0 %v6783, 96
    %v6797 = vpop.permute.xlu0 %6796
    %6798 = vrot.lane.b32.xlu0 %v6784, 96
    %v6799 = vpop.permute.xlu0 %6798
    %6800 = vrot.lane.b32.xlu0 %v6785, 96
    %v6801 = vpop.permute.xlu0 %6800
    %v6806 = vmul.f32 %v6786, %v6795
    %v6807 = vmul.f32 %v6787, %v6797
    %v6808 = vmul.f32 %v6788, %v6799
    %v6809 = vmul.f32 %v6789, %v6801
    %v6810 = vmul.f32 %v6700, %v6065
    %v6811 = vmul.f32 %v6715, %v6066
    %v6812 = vmul.f32 %v6730, %v6067
    %v6813 = vmul.f32 %v6745, %v6068
    %v6814 = vadd.f32 %v6806, %v6810
    %v6815 = vadd.f32 %v6807, %v6811
    %v6816 = vadd.f32 %v6808, %v6812
    %v6817 = vadd.f32 %v6809, %v6813
    %6820 = vrot.lane.b32.xlu0 %v6814, 32
    %v6821 = vpop.permute.xlu0 %6820
    %6822 = vrot.lane.b32.xlu0 %v6815, 32
    %v6823 = vpop.permute.xlu0 %6822
    %v6826 = vsel %vm1943, %v6821, 0.0
    %v6827 = vsel %vm1943, %v6823, 0.0
    %v6828 = vadd.f32 %v6826, %v6827
    %6829 = vadd.xlane.f32.xlu0 %v6828
    %v6830 = vpop.xlane.xlu0 %6829
    %v6831 = vrot.slane %v6830, 4
    %v6832 = vadd.f32 %v6830, %v6831
    %v6833 = vrot.slane %v6832, 2
    %v6834 = vadd.f32 %v6832, %v6833
    %v6835 = vrot.slane %v6834, 1
    %v6836 = vadd.f32 %v6834, %v6835
    %s6837 = vtos %v6836
    %v6838 = vrcp.pop 512.0
    %v6839 = vmul.f32 512.0, %v6838
    %v6840 = vsub.f32 1.0, %v6839
    %v6841 = vmul.f32 %v6838, %v6840
    %v6842 = vadd.f32 %v6838, %v6841
    %vm6843 = vweird.f32 %v6838
    %v6844 = vsel %vm6843, %v6838, %v6842
    %s6845 = vtos %v6844
    %s6846 = smul.f32 %s6837, %s6845
    %v6847 = vstv %s6846
    %v6848 = vsub.f32 %v6814, %v6847
    %v6849 = vsub.f32 %v6815, %v6847
    %v6850 = vmul.f32 %v6848, %v6848
    %v6851 = vmul.f32 %v6849, %v6849
    %6854 = vrot.lane.b32.xlu0 %v6850, 32
    %v6855 = vpop.permute.xlu0 %6854
    %6856 = vrot.lane.b32.xlu0 %v6851, 32
    %v6857 = vpop.permute.xlu0 %6856
    %v6860 = vsel %vm1943, %v6855, 0.0
    %v6861 = vsel %vm1943, %v6857, 0.0
    %v6862 = vadd.f32 %v6860, %v6861
    %6863 = vadd.xlane.f32.xlu0 %v6862
    %v6864 = vpop.xlane.xlu0 %6863
    %v6865 = vrot.slane %v6864, 4
    %v6866 = vadd.f32 %v6864, %v6865
    %v6867 = vrot.slane %v6866, 2
    %v6868 = vadd.f32 %v6866, %v6867
    %v6869 = vrot.slane %v6868, 1
    %v6870 = vadd.f32 %v6868, %v6869
    %s6871 = vtos %v6870
    %v6872 = vrcp.pop 512.0
    %v6873 = vmul.f32 512.0, %v6872
    %v6874 = vsub.f32 1.0, %v6873
    %v6875 = vmul.f32 %v6872, %v6874
    %v6876 = vadd.f32 %v6872, %v6875
    %vm6877 = vweird.f32 %v6872
    %v6878 = vsel %vm6877, %v6872, %v6876
    %s6879 = vtos %v6878
    %s6880 = smul.f32 %s6871, %s6879
    %s6881 = sadd.f32 %s6880, 1e-12
    %v6882 = vstv %s6881
    %v6883 = vrsqrt.pop %v6882
    %v6884 = vmul.f32 %v6883, %v6882
    %v6885 = vmul.f32 %v6884, %v6883
    %v6886 = vmul.f32 0.5, %v6885
    %v6887 = vsub.f32 1.5, %v6886
    %v6888 = vmul.f32 %v6883, %v6887
    %vm6889 = vweird.f32 %v6882
    %vm6890 = vweird.f32 %v6883
    %vm6891 = vmor %vm6889, %vm6890
    %v6892 = vsel %vm6891, %v6883, %v6888
    %s6893 = vtos %v6892
    %v6894 = vstv %s6893
    %v6895 = vmul.f32 %v6848, %v6894
    %v6896 = vmul.f32 %v6849, %v6894
    %v6897 = vmul.f32 %v6895, %v4636
    %v6898 = vmul.f32 %v6896, %v4638
    %v6899 = vadd.f32 %v6897, %v4646
    %v6900 = vadd.f32 %v6898, %v4648
    %6903 = vrot.lane.b32.xlu0 %v6899, 32
    %v6904 = vpop.permute.xlu0 %6903
    %6905 = vrot.lane.b32.xlu0 %v6900, 32
    %v6906 = vpop.permute.xlu0 %6905
    %6909 = vst.msk [vmem:[#allocation3 + $0x30] sm:$0xff] %vm1943, %v6904
    %6910 = vst.msk [vmem:[#allocation3 + $0x38] sm:$0xff] %vm1943, %v6906
    %6913 = vrot.lane.b32.xlu0 %v6816, 32
    %v6914 = vpop.permute.xlu0 %6913
    %6915 = vrot.lane.b32.xlu0 %v6817, 32
    %v6916 = vpop.permute.xlu0 %6915
    %v6919 = vsel %vm1943, %v6914, 0.0
    %v6920 = vsel %vm1943, %v6916, 0.0
    %v6921 = vadd.f32 %v6919, %v6920
    %6922 = vadd.xlane.f32.xlu0 %v6921
    %v6923 = vpop.xlane.xlu0 %6922
    %v6924 = vrot.slane %v6923, 4
    %v6925 = vadd.f32 %v6923, %v6924
    %v6926 = vrot.slane %v6925, 2
    %v6927 = vadd.f32 %v6925, %v6926
    %v6928 = vrot.slane %v6927, 1
    %v6929 = vadd.f32 %v6927, %v6928
    %s6930 = vtos %v6929
    %v6931 = vrcp.pop 512.0
    %v6932 = vmul.f32 512.0, %v6931
    %v6933 = vsub.f32 1.0, %v6932
    %v6934 = vmul.f32 %v6931, %v6933
    %v6935 = vadd.f32 %v6931, %v6934
    %vm6936 = vweird.f32 %v6931
    %v6937 = vsel %vm6936, %v6931, %v6935
    %s6938 = vtos %v6937
    %s6939 = smul.f32 %s6930, %s6938
    %v6940 = vstv %s6939
    %v6941 = vsub.f32 %v6816, %v6940
    %v6942 = vsub.f32 %v6817, %v6940
    %v6943 = vmul.f32 %v6941, %v6941
    %v6944 = vmul.f32 %v6942, %v6942
    %6947 = vrot.lane.b32.xlu0 %v6943, 32
    %v6948 = vpop.permute.xlu0 %6947
    %6949 = vrot.lane.b32.xlu0 %v6944, 32
    %v6950 = vpop.permute.xlu0 %6949
    %v6953 = vsel %vm1943, %v6948, 0.0
    %v6954 = vsel %vm1943, %v6950, 0.0
    %v6955 = vadd.f32 %v6953, %v6954
    %6956 = vadd.xlane.f32.xlu0 %v6955
    %v6957 = vpop.xlane.xlu0 %6956
    %v6958 = vrot.slane %v6957, 4
    %v6959 = vadd.f32 %v6957, %v6958
    %v6960 = vrot.slane %v6959, 2
    %v6961 = vadd.f32 %v6959, %v6960
    %v6962 = vrot.slane %v6961, 1
    %v6963 = vadd.f32 %v6961, %v6962
    %s6964 = vtos %v6963
    %v6965 = vrcp.pop 512.0
    %v6966 = vmul.f32 512.0, %v6965
    %v6967 = vsub.f32 1.0, %v6966
    %v6968 = vmul.f32 %v6965, %v6967
    %v6969 = vadd.f32 %v6965, %v6968
    %vm6970 = vweird.f32 %v6965
    %v6971 = vsel %vm6970, %v6965, %v6969
    %s6972 = vtos %v6971
    %s6973 = smul.f32 %s6964, %s6972
    %s6974 = sadd.f32 %s6973, 1e-12
    %v6975 = vstv %s6974
    %v6976 = vrsqrt.pop %v6975
    %v6977 = vmul.f32 %v6976, %v6975
    %v6978 = vmul.f32 %v6977, %v6976
    %v6979 = vmul.f32 0.5, %v6978
    %v6980 = vsub.f32 1.5, %v6979
    %v6981 = vmul.f32 %v6976, %v6980
    %vm6982 = vweird.f32 %v6975
    %vm6983 = vweird.f32 %v6976
    %vm6984 = vmor %vm6982, %vm6983
    %v6985 = vsel %vm6984, %v6976, %v6981
    %s6986 = vtos %v6985
    %v6987 = vstv %s6986
    %v6988 = vmul.f32 %v6941, %v6987
    %v6989 = vmul.f32 %v6942, %v6987
    %v6990 = vmul.f32 %v6988, %v4636
    %v6991 = vmul.f32 %v6989, %v4638
    %v6992 = vadd.f32 %v6990, %v4646
    %v6993 = vadd.f32 %v6991, %v4648
    %6996 = vrot.lane.b32.xlu0 %v6992, 32
    %v6997 = vpop.permute.xlu0 %6996
    %6998 = vrot.lane.b32.xlu0 %v6993, 32
    %v6999 = vpop.permute.xlu0 %6998
    %7002 = vst.msk [vmem:[%s4754 + $0x30] sm:$0xff] %vm1943, %v6997
    %7003 = vst.msk [vmem:[%s4754 + $0x38] sm:$0xff] %vm1943, %v6999
    %s7004 = scalar_lea.vmem [#allocation2], 4
    %v7005 = vld [vmem:[%s7004] ss:$8 sm:$0xf]
    %v7006 = vld [vmem:[%s7004] ss:$8 sm:$0xf0]
    %v7007 = vor.u32 %v7005, %v7006
    %s7008 = scalar_lea.vmem [#allocation2], 68
    %v7009 = vld [vmem:[%s7008] ss:$8 sm:$0xf]
    %v7010 = vld [vmem:[%s7008] ss:$8 sm:$0xf0]
    %v7011 = vor.u32 %v7009, %v7010
    %s7012 = scalar_lea.vmem [#allocation2], 132
    %v7013 = vld [vmem:[%s7012] ss:$8 sm:$0xf]
    %v7014 = vld [vmem:[%s7012] ss:$8 sm:$0xf0]
    %v7015 = vor.u32 %v7013, %v7014
    %s7016 = scalar_lea.vmem [#allocation2], 196
    %v7017 = vld [vmem:[%s7016] ss:$8 sm:$0xf]
    %v7018 = vld [vmem:[%s7016] ss:$8 sm:$0xf0]
    %v7019 = vor.u32 %v7017, %v7018
    %v7020 = vadd.f32 %v7007, %v6485
    %v7021 = vadd.f32 %v7011, %v6488
    %v7022 = vadd.f32 %v7015, %v6491
    %v7023 = vadd.f32 %v7019, %v6494
    %v7024 = vxor.u32 %v7020, 2147483648
    %v7025 = vxor.u32 %v7021, 2147483648
    %v7026 = vxor.u32 %v7022, 2147483648
    %v7027 = vxor.u32 %v7023, 2147483648
    %v7028 = vmul.f32 %v7024, 1.442695
    %v7029 = vpow.pop %v7028
    %v7030 = vmul.f32 %v7025, 1.442695
    %v7031 = vpow.pop %v7030
    %v7032 = vmul.f32 %v7026, 1.442695
    %v7033 = vpow.pop %v7032
    %v7034 = vmul.f32 %v7027, 1.442695
    %v7035 = vpow.pop %v7034
    %v7036 = vadd.f32 %v7029, 1.0
    %v7037 = vadd.f32 %v7031, 1.0
    %v7038 = vadd.f32 %v7033, 1.0
    %v7039 = vadd.f32 %v7035, 1.0
    %v7040 = vrcp.pop %v7036
    %v7041 = vmul.f32 %v7036, %v7040
    %v7042 = vsub.f32 1.0, %v7041
    %v7043 = vmul.f32 %v7040, %v7042
    %v7044 = vadd.f32 %v7040, %v7043
    %vm7045 = vweird.f32 %v7036
    %vm7046 = vweird.f32 %v7040
    %vm7047 = vmor %vm7045, %vm7046
    %v7048 = vsel %vm7047, %v7040, %v7044
    %v7049 = vand.u32 2147483647, %v7036
    %vm7050 = vcmp.eq.f32.partialorder %v7049, 8.507059e+37
    %v7051 = vand.u32 %v7036, 2147483648
    %v7052 = vor.u32 1.1754944e-38, %v7051
    %v7053 = vsel %vm7050, %v7052, %v7048
    %v7054 = vmul.f32 1.0, %v7053
    %v7055 = vrcp.pop %v7037
    %v7056 = vmul.f32 %v7037, %v7055
    %v7057 = vsub.f32 1.0, %v7056
    %v7058 = vmul.f32 %v7055, %v7057
    %v7059 = vadd.f32 %v7055, %v7058
    %vm7060 = vweird.f32 %v7037
    %vm7061 = vweird.f32 %v7055
    %vm7062 = vmor %vm7060, %vm7061
    %v7063 = vsel %vm7062, %v7055, %v7059
    %v7064 = vand.u32 2147483647, %v7037
    %vm7065 = vcmp.eq.f32.partialorder %v7064, 8.507059e+37
    %v7066 = vand.u32 %v7037, 2147483648
    %v7067 = vor.u32 1.1754944e-38, %v7066
    %v7068 = vsel %vm7065, %v7067, %v7063
    %v7069 = vmul.f32 1.0, %v7068
    %v7070 = vrcp.pop %v7038
    %v7071 = vmul.f32 %v7038, %v7070
    %v7072 = vsub.f32 1.0, %v7071
    %v7073 = vmul.f32 %v7070, %v7072
    %v7074 = vadd.f32 %v7070, %v7073
    %vm7075 = vweird.f32 %v7038
    %vm7076 = vweird.f32 %v7070
    %vm7077 = vmor %vm7075, %vm7076
    %v7078 = vsel %vm7077, %v7070, %v7074
    %v7079 = vand.u32 2147483647, %v7038
    %vm7080 = vcmp.eq.f32.partialorder %v7079, 8.507059e+37
    %v7081 = vand.u32 %v7038, 2147483648
    %v7082 = vor.u32 1.1754944e-38, %v7081
    %v7083 = vsel %vm7080, %v7082, %v7078
    %v7084 = vmul.f32 1.0, %v7083
    %v7085 = vrcp.pop %v7039
    %v7086 = vmul.f32 %v7039, %v7085
    %v7087 = vsub.f32 1.0, %v7086
    %v7088 = vmul.f32 %v7085, %v7087
    %v7089 = vadd.f32 %v7085, %v7088
    %vm7090 = vweird.f32 %v7039
    %vm7091 = vweird.f32 %v7085
    %vm7092 = vmor %vm7090, %vm7091
    %v7093 = vsel %vm7092, %v7085, %v7089
    %v7094 = vand.u32 2147483647, %v7039
    %vm7095 = vcmp.eq.f32.partialorder %v7094, 8.507059e+37
    %v7096 = vand.u32 %v7039, 2147483648
    %v7097 = vor.u32 1.1754944e-38, %v7096
    %v7098 = vsel %vm7095, %v7097, %v7093
    %v7099 = vmul.f32 1.0, %v7098
    %7100 = vrot.lane.b32.xlu0 %v6485, 64
    %v7101 = vpop.permute.xlu0 %7100
    %7102 = vrot.lane.b32.xlu0 %v6488, 64
    %v7103 = vpop.permute.xlu0 %7102
    %7104 = vrot.lane.b32.xlu0 %v6491, 64
    %v7105 = vpop.permute.xlu0 %7104
    %7106 = vrot.lane.b32.xlu0 %v6494, 64
    %v7107 = vpop.permute.xlu0 %7106
    %v7112 = vmul.f32 %v7054, %v7101
    %v7113 = vmul.f32 %v7069, %v7103
    %v7114 = vmul.f32 %v7084, %v7105
    %v7115 = vmul.f32 %v7099, %v7107
    %7120 = vrot.lane.b32.xlu0 %v7112, 64
    %v7121 = vpop.permute.xlu0 %7120
    %7122 = vrot.lane.b32.xlu0 %v7113, 64
    %v7123 = vpop.permute.xlu0 %7122
    %7124 = vrot.lane.b32.xlu0 %v7114, 64
    %v7125 = vpop.permute.xlu0 %7124
    %7126 = vrot.lane.b32.xlu0 %v7115, 64
    %v7127 = vpop.permute.xlu0 %7126
    %v7132 = vadd.f32 %v7007, %v7121
    %v7133 = vadd.f32 %v7011, %v7123
    %v7134 = vadd.f32 %v7015, %v7125
    %v7135 = vadd.f32 %v7019, %v7127
    %v7136 = vtanh.pop %v7132
    %v7137 = vtanh.pop %v7133
    %v7138 = vtanh.pop %v7134
    %v7139 = vtanh.pop %v7135
    %v7140 = vsub.f32 1.0, %v7054
    %v7141 = vsub.f32 1.0, %v7069
    %v7142 = vsub.f32 1.0, %v7084
    %v7143 = vsub.f32 1.0, %v7099
    %7148 = vrot.lane.b32.xlu0 %v7136, 96
    %v7149 = vpop.permute.xlu0 %7148
    %7150 = vrot.lane.b32.xlu0 %v7137, 96
    %v7151 = vpop.permute.xlu0 %7150
    %7152 = vrot.lane.b32.xlu0 %v7138, 96
    %v7153 = vpop.permute.xlu0 %7152
    %7154 = vrot.lane.b32.xlu0 %v7139, 96
    %v7155 = vpop.permute.xlu0 %7154
    %v7160 = vmul.f32 %v7140, %v7149
    %v7161 = vmul.f32 %v7141, %v7151
    %v7162 = vmul.f32 %v7142, %v7153
    %v7163 = vmul.f32 %v7143, %v7155
    %v7164 = vmul.f32 %v7054, %v6419
    %v7165 = vmul.f32 %v7069, %v6420
    %v7166 = vmul.f32 %v7084, %v6421
    %v7167 = vmul.f32 %v7099, %v6422
    %v7168 = vadd.f32 %v7160, %v7164
    %v7169 = vadd.f32 %v7161, %v7165
    %v7170 = vadd.f32 %v7162, %v7166
    %v7171 = vadd.f32 %v7163, %v7167
    %7176 = vrot.lane.b32.xlu0 %v7168, 96
    %v7177 = vpop.permute.xlu0 %7176
    %7178 = vrot.lane.b32.xlu0 %v7169, 96
    %v7179 = vpop.permute.xlu0 %7178
    %7180 = vrot.lane.b32.xlu0 %v7170, 96
    %v7181 = vpop.permute.xlu0 %7180
    %7182 = vrot.lane.b32.xlu0 %v7171, 96
    %v7183 = vpop.permute.xlu0 %7182
    %7188 = vrot.lane.b32.xlu0 %v6814, 64
    %v7189 = vpop.permute.xlu0 %7188
    %7190 = vrot.lane.b32.xlu0 %v6815, 64
    %v7191 = vpop.permute.xlu0 %7190
    %7192 = vrot.lane.b32.xlu0 %v6816, 64
    %v7193 = vpop.permute.xlu0 %7192
    %7194 = vrot.lane.b32.xlu0 %v6817, 64
    %v7195 = vpop.permute.xlu0 %7194
    %v7200 = vsel %vm1943, %v7177, %v7189
    %v7201 = vsel %vm1943, %v7179, %v7191
    %v7202 = vsel %vm1943, %v7181, %v7193
    %v7203 = vsel %vm1943, %v7183, %v7195
    %v7205 = vsel %vm1976, %v7200, 0
    %v7208 = vsel %vm1976, %v7201, 0
    %v7211 = vsel %vm1976, %v7202, 0
    %v7214 = vsel %vm1976, %v7203, 0
    %7216 = vmatpush.msra.mxu0 0.0
    %7217 = vmatpush.msra.mxu0 0.0
    %7218 = vmatpush.msra.mxu0 0.0
    %7219 = vmatpush.msra.mxu0 0.0
    %7220 = vmatpush.msra.mxu0 0.0
    %7221 = vmatpush.msra.mxu0 0.0
    %7222 = vmatpush.msra.mxu0 0.0
    %7223 = vmatpush.msra.mxu0 0.0
    %7224 = vmatpush.msra.mxu0 %v3998
    %7225 = vmatpush.msra.mxu0 %v3995
    %7226 = vmatpush.msra.mxu0 %v3992
    %7227 = vmatpush.msra.mxu0 %v3989
    %7228 = vmatpush.msra.mxu0 %v3986
    %7229 = vmatpush.msra.mxu0 %v3983
    %7230 = vmatpush.msra.mxu0 %v3980
    %7231 = vmatpush.msra.mxu0 %v3977
    %7232 = vmatmul.f32.gmra.mxu0 %v7205
    %v7233 = vpop.f32.mrf.mxu0
    %v7234 = vadd.f32 %v4022, %v7233
    %7235 = vmatmul.f32.gmra.mxu0 %v7208
    %v7236 = vpop.f32.mrf.mxu0
    %v7237 = vadd.f32 %v4022, %v7236
    %7238 = vmatmul.f32.gmra.mxu0 %v7211
    %v7239 = vpop.f32.mrf.mxu0
    %v7240 = vadd.f32 %v4022, %v7239
    %7241 = vmatmul.f32.gmra.mxu0 %v7214
    %v7242 = vpop.f32.mrf.mxu0
    %v7243 = vadd.f32 %v4022, %v7242
    %7244 = vdwg.mxu0
    %7245 = vmatpush.msra.mxu0 0.0
    %7246 = vmatpush.msra.mxu0 0.0
    %7247 = vmatpush.msra.mxu0 0.0
    %7248 = vmatpush.msra.mxu0 0.0
    %7249 = vmatpush.msra.mxu0 0.0
    %7250 = vmatpush.msra.mxu0 0.0
    %7251 = vmatpush.msra.mxu0 0.0
    %7252 = vmatpush.msra.mxu0 0.0
    %7253 = vmatpush.msra.mxu0 %v3999
    %7254 = vmatpush.msra.mxu0 %v3996
    %7255 = vmatpush.msra.mxu0 %v3993
    %7256 = vmatpush.msra.mxu0 %v3990
    %7257 = vmatpush.msra.mxu0 %v3987
    %7258 = vmatpush.msra.mxu0 %v3984
    %7259 = vmatpush.msra.mxu0 %v3981
    %7260 = vmatpush.msra.mxu0 %v3978
    %7261 = vmatmul.f32.gmra.mxu0 %v7205
    %v7262 = vpop.f32.mrf.mxu0
    %v7263 = vadd.f32 %v4187, %v7262
    %7264 = vmatmul.f32.gmra.mxu0 %v7208
    %v7265 = vpop.f32.mrf.mxu0
    %v7266 = vadd.f32 %v4187, %v7265
    %7267 = vmatmul.f32.gmra.mxu0 %v7211
    %v7268 = vpop.f32.mrf.mxu0
    %v7269 = vadd.f32 %v4187, %v7268
    %7270 = vmatmul.f32.gmra.mxu0 %v7214
    %v7271 = vpop.f32.mrf.mxu0
    %v7272 = vadd.f32 %v4187, %v7271
    %7273 = vdwg.mxu0
    %7274 = vmatpush.msra.mxu0 0.0
    %7275 = vmatpush.msra.mxu0 0.0
    %7276 = vmatpush.msra.mxu0 0.0
    %7277 = vmatpush.msra.mxu0 0.0
    %7278 = vmatpush.msra.mxu0 0.0
    %7279 = vmatpush.msra.mxu0 0.0
    %7280 = vmatpush.msra.mxu0 0.0
    %7281 = vmatpush.msra.mxu0 0.0
    %7282 = vmatpush.msra.mxu0 %v4000
    %7283 = vmatpush.msra.mxu0 %v3997
    %7284 = vmatpush.msra.mxu0 %v3994
    %7285 = vmatpush.msra.mxu0 %v3991
    %7286 = vmatpush.msra.mxu0 %v3988
    %7287 = vmatpush.msra.mxu0 %v3985
    %7288 = vmatpush.msra.mxu0 %v3982
    %7289 = vmatpush.msra.mxu0 %v3979
    %7290 = vmatmul.f32.gmra.mxu0 %v7205
    %v7291 = vpop.f32.mrf.mxu0
    %v7292 = vadd.f32 %v4188, %v7291
    %7293 = vmatmul.f32.gmra.mxu0 %v7208
    %v7294 = vpop.f32.mrf.mxu0
    %v7295 = vadd.f32 %v4188, %v7294
    %7296 = vmatmul.f32.gmra.mxu0 %v7211
    %v7297 = vpop.f32.mrf.mxu0
    %v7298 = vadd.f32 %v4188, %v7297
    %7299 = vmatmul.f32.gmra.mxu0 %v7214
    %v7300 = vpop.f32.mrf.mxu0
    %v7301 = vadd.f32 %v4188, %v7300
    %7302 = vdwg.mxu0
    %7307 = vrot.lane.b32.xlu0 %v7234, 96
    %v7308 = vpop.permute.xlu0 %7307
    %7309 = vrot.lane.b32.xlu0 %v7237, 96
    %v7310 = vpop.permute.xlu0 %7309
    %7311 = vrot.lane.b32.xlu0 %v7240, 96
    %v7312 = vpop.permute.xlu0 %7311
    %7313 = vrot.lane.b32.xlu0 %v7243, 96
    %v7314 = vpop.permute.xlu0 %7313
    %v7319 = vadd.f32 %v7263, %v7308
    %v7320 = vadd.f32 %v7266, %v7310
    %v7321 = vadd.f32 %v7269, %v7312
    %v7322 = vadd.f32 %v7272, %v7314
    %v7323 = vxor.u32 %v7319, 2147483648
    %v7324 = vxor.u32 %v7320, 2147483648
    %v7325 = vxor.u32 %v7321, 2147483648
    %v7326 = vxor.u32 %v7322, 2147483648
    %v7327 = vmul.f32 %v7323, 1.442695
    %v7328 = vpow.pop %v7327
    %v7329 = vmul.f32 %v7324, 1.442695
    %v7330 = vpow.pop %v7329
    %v7331 = vmul.f32 %v7325, 1.442695
    %v7332 = vpow.pop %v7331
    %v7333 = vmul.f32 %v7326, 1.442695
    %v7334 = vpow.pop %v7333
    %v7335 = vadd.f32 %v7328, 1.0
    %v7336 = vadd.f32 %v7330, 1.0
    %v7337 = vadd.f32 %v7332, 1.0
    %v7338 = vadd.f32 %v7334, 1.0
    %v7339 = vrcp.pop %v7335
    %v7340 = vmul.f32 %v7335, %v7339
    %v7341 = vsub.f32 1.0, %v7340
    %v7342 = vmul.f32 %v7339, %v7341
    %v7343 = vadd.f32 %v7339, %v7342
    %vm7344 = vweird.f32 %v7335
    %vm7345 = vweird.f32 %v7339
    %vm7346 = vmor %vm7344, %vm7345
    %v7347 = vsel %vm7346, %v7339, %v7343
    %v7348 = vand.u32 2147483647, %v7335
    %vm7349 = vcmp.eq.f32.partialorder %v7348, 8.507059e+37
    %v7350 = vand.u32 %v7335, 2147483648
    %v7351 = vor.u32 1.1754944e-38, %v7350
    %v7352 = vsel %vm7349, %v7351, %v7347
    %v7353 = vmul.f32 1.0, %v7352
    %v7354 = vrcp.pop %v7336
    %v7355 = vmul.f32 %v7336, %v7354
    %v7356 = vsub.f32 1.0, %v7355
    %v7357 = vmul.f32 %v7354, %v7356
    %v7358 = vadd.f32 %v7354, %v7357
    %vm7359 = vweird.f32 %v7336
    %vm7360 = vweird.f32 %v7354
    %vm7361 = vmor %vm7359, %vm7360
    %v7362 = vsel %vm7361, %v7354, %v7358
    %v7363 = vand.u32 2147483647, %v7336
    %vm7364 = vcmp.eq.f32.partialorder %v7363, 8.507059e+37
    %v7365 = vand.u32 %v7336, 2147483648
    %v7366 = vor.u32 1.1754944e-38, %v7365
    %v7367 = vsel %vm7364, %v7366, %v7362
    %v7368 = vmul.f32 1.0, %v7367
    %v7369 = vrcp.pop %v7337
    %v7370 = vmul.f32 %v7337, %v7369
    %v7371 = vsub.f32 1.0, %v7370
    %v7372 = vmul.f32 %v7369, %v7371
    %v7373 = vadd.f32 %v7369, %v7372
    %vm7374 = vweird.f32 %v7337
    %vm7375 = vweird.f32 %v7369
    %vm7376 = vmor %vm7374, %vm7375
    %v7377 = vsel %vm7376, %v7369, %v7373
    %v7378 = vand.u32 2147483647, %v7337
    %vm7379 = vcmp.eq.f32.partialorder %v7378, 8.507059e+37
    %v7380 = vand.u32 %v7337, 2147483648
    %v7381 = vor.u32 1.1754944e-38, %v7380
    %v7382 = vsel %vm7379, %v7381, %v7377
    %v7383 = vmul.f32 1.0, %v7382
    %v7384 = vrcp.pop %v7338
    %v7385 = vmul.f32 %v7338, %v7384
    %v7386 = vsub.f32 1.0, %v7385
    %v7387 = vmul.f32 %v7384, %v7386
    %v7388 = vadd.f32 %v7384, %v7387
    %vm7389 = vweird.f32 %v7338
    %vm7390 = vweird.f32 %v7384
    %vm7391 = vmor %vm7389, %vm7390
    %v7392 = vsel %vm7391, %v7384, %v7388
    %v7393 = vand.u32 2147483647, %v7338
    %vm7394 = vcmp.eq.f32.partialorder %v7393, 8.507059e+37
    %v7395 = vand.u32 %v7338, 2147483648
    %v7396 = vor.u32 1.1754944e-38, %v7395
    %v7397 = vsel %vm7394, %v7396, %v7392
    %v7398 = vmul.f32 1.0, %v7397
    %7403 = vrot.lane.b32.xlu0 %v7263, 96
    %v7404 = vpop.permute.xlu0 %7403
    %7405 = vrot.lane.b32.xlu0 %v7266, 96
    %v7406 = vpop.permute.xlu0 %7405
    %7407 = vrot.lane.b32.xlu0 %v7269, 96
    %v7408 = vpop.permute.xlu0 %7407
    %7409 = vrot.lane.b32.xlu0 %v7272, 96
    %v7410 = vpop.permute.xlu0 %7409
    %v7415 = vadd.f32 %v7263, %v7404
    %v7416 = vadd.f32 %v7266, %v7406
    %v7417 = vadd.f32 %v7269, %v7408
    %v7418 = vadd.f32 %v7272, %v7410
    %v7419 = vxor.u32 %v7415, 2147483648
    %v7420 = vxor.u32 %v7416, 2147483648
    %v7421 = vxor.u32 %v7417, 2147483648
    %v7422 = vxor.u32 %v7418, 2147483648
    %v7423 = vmul.f32 %v7419, 1.442695
    %v7424 = vpow.pop %v7423
    %v7425 = vmul.f32 %v7420, 1.442695
    %v7426 = vpow.pop %v7425
    %v7427 = vmul.f32 %v7421, 1.442695
    %v7428 = vpow.pop %v7427
    %v7429 = vmul.f32 %v7422, 1.442695
    %v7430 = vpow.pop %v7429
    %v7431 = vadd.f32 %v7424, 1.0
    %v7432 = vadd.f32 %v7426, 1.0
    %v7433 = vadd.f32 %v7428, 1.0
    %v7434 = vadd.f32 %v7430, 1.0
    %v7435 = vrcp.pop %v7431
    %v7436 = vmul.f32 %v7431, %v7435
    %v7437 = vsub.f32 1.0, %v7436
    %v7438 = vmul.f32 %v7435, %v7437
    %v7439 = vadd.f32 %v7435, %v7438
    %vm7440 = vweird.f32 %v7431
    %vm7441 = vweird.f32 %v7435
    %vm7442 = vmor %vm7440, %vm7441
    %v7443 = vsel %vm7442, %v7435, %v7439
    %v7444 = vand.u32 2147483647, %v7431
    %vm7445 = vcmp.eq.f32.partialorder %v7444, 8.507059e+37
    %v7446 = vand.u32 %v7431, 2147483648
    %v7447 = vor.u32 1.1754944e-38, %v7446
    %v7448 = vsel %vm7445, %v7447, %v7443
    %v7449 = vmul.f32 1.0, %v7448
    %v7450 = vrcp.pop %v7432
    %v7451 = vmul.f32 %v7432, %v7450
    %v7452 = vsub.f32 1.0, %v7451
    %v7453 = vmul.f32 %v7450, %v7452
    %v7454 = vadd.f32 %v7450, %v7453
    %vm7455 = vweird.f32 %v7432
    %vm7456 = vweird.f32 %v7450
    %vm7457 = vmor %vm7455, %vm7456
    %v7458 = vsel %vm7457, %v7450, %v7454
    %v7459 = vand.u32 2147483647, %v7432
    %vm7460 = vcmp.eq.f32.partialorder %v7459, 8.507059e+37
    %v7461 = vand.u32 %v7432, 2147483648
    %v7462 = vor.u32 1.1754944e-38, %v7461
    %v7463 = vsel %vm7460, %v7462, %v7458
    %v7464 = vmul.f32 1.0, %v7463
    %v7465 = vrcp.pop %v7433
    %v7466 = vmul.f32 %v7433, %v7465
    %v7467 = vsub.f32 1.0, %v7466
    %v7468 = vmul.f32 %v7465, %v7467
    %v7469 = vadd.f32 %v7465, %v7468
    %vm7470 = vweird.f32 %v7433
    %vm7471 = vweird.f32 %v7465
    %vm7472 = vmor %vm7470, %vm7471
    %v7473 = vsel %vm7472, %v7465, %v7469
    %v7474 = vand.u32 2147483647, %v7433
    %vm7475 = vcmp.eq.f32.partialorder %v7474, 8.507059e+37
    %v7476 = vand.u32 %v7433, 2147483648
    %v7477 = vor.u32 1.1754944e-38, %v7476
    %v7478 = vsel %vm7475, %v7477, %v7473
    %v7479 = vmul.f32 1.0, %v7478
    %v7480 = vrcp.pop %v7434
    %v7481 = vmul.f32 %v7434, %v7480
    %v7482 = vsub.f32 1.0, %v7481
    %v7483 = vmul.f32 %v7480, %v7482
    %v7484 = vadd.f32 %v7480, %v7483
    %vm7485 = vweird.f32 %v7434
    %vm7486 = vweird.f32 %v7480
    %vm7487 = vmor %vm7485, %vm7486
    %v7488 = vsel %vm7487, %v7480, %v7484
    %v7489 = vand.u32 2147483647, %v7434
    %vm7490 = vcmp.eq.f32.partialorder %v7489, 8.507059e+37
    %v7491 = vand.u32 %v7434, 2147483648
    %v7492 = vor.u32 1.1754944e-38, %v7491
    %v7493 = vsel %vm7490, %v7492, %v7488
    %v7494 = vmul.f32 1.0, %v7493
    %7495 = vrot.lane.b32.xlu0 %v7263, 32
    %v7496 = vpop.permute.xlu0 %7495
    %7497 = vrot.lane.b32.xlu0 %v7266, 32
    %v7498 = vpop.permute.xlu0 %7497
    %7499 = vrot.lane.b32.xlu0 %v7269, 32
    %v7500 = vpop.permute.xlu0 %7499
    %7501 = vrot.lane.b32.xlu0 %v7272, 32
    %v7502 = vpop.permute.xlu0 %7501
    %v7507 = vmul.f32 %v7353, %v7496
    %v7508 = vmul.f32 %v7368, %v7498
    %v7509 = vmul.f32 %v7383, %v7500
    %v7510 = vmul.f32 %v7398, %v7502
    %7515 = vrot.lane.b32.xlu0 %v7507, 64
    %v7516 = vpop.permute.xlu0 %7515
    %7517 = vrot.lane.b32.xlu0 %v7508, 64
    %v7518 = vpop.permute.xlu0 %7517
    %7519 = vrot.lane.b32.xlu0 %v7509, 64
    %v7520 = vpop.permute.xlu0 %7519
    %7521 = vrot.lane.b32.xlu0 %v7510, 64
    %v7522 = vpop.permute.xlu0 %7521
    %v7527 = vadd.f32 %v7292, %v7516
    %v7528 = vadd.f32 %v7295, %v7518
    %v7529 = vadd.f32 %v7298, %v7520
    %v7530 = vadd.f32 %v7301, %v7522
    %v7531 = vtanh.pop %v7527
    %v7532 = vtanh.pop %v7528
    %v7533 = vtanh.pop %v7529
    %v7534 = vtanh.pop %v7530
    %v7535 = vsub.f32 1.0, %v7449
    %v7536 = vsub.f32 1.0, %v7464
    %v7537 = vsub.f32 1.0, %v7479
    %v7538 = vsub.f32 1.0, %v7494
    %7543 = vrot.lane.b32.xlu0 %v7531, 96
    %v7544 = vpop.permute.xlu0 %7543
    %7545 = vrot.lane.b32.xlu0 %v7532, 96
    %v7546 = vpop.permute.xlu0 %7545
    %7547 = vrot.lane.b32.xlu0 %v7533, 96
    %v7548 = vpop.permute.xlu0 %7547
    %7549 = vrot.lane.b32.xlu0 %v7534, 96
    %v7550 = vpop.permute.xlu0 %7549
    %v7555 = vmul.f32 %v7535, %v7544
    %v7556 = vmul.f32 %v7536, %v7546
    %v7557 = vmul.f32 %v7537, %v7548
    %v7558 = vmul.f32 %v7538, %v7550
    %v7559 = vmul.f32 %v7449, %v6814
    %v7560 = vmul.f32 %v7464, %v6815
    %v7561 = vmul.f32 %v7479, %v6816
    %v7562 = vmul.f32 %v7494, %v6817
    %v7563 = vadd.f32 %v7555, %v7559
    %v7564 = vadd.f32 %v7556, %v7560
    %v7565 = vadd.f32 %v7557, %v7561
    %v7566 = vadd.f32 %v7558, %v7562
    %7569 = vrot.lane.b32.xlu0 %v7563, 32
    %v7570 = vpop.permute.xlu0 %7569
    %7571 = vrot.lane.b32.xlu0 %v7564, 32
    %v7572 = vpop.permute.xlu0 %7571
    %v7575 = vsel %vm1943, %v7570, 0.0
    %v7576 = vsel %vm1943, %v7572, 0.0
    %v7577 = vadd.f32 %v7575, %v7576
    %7578 = vadd.xlane.f32.xlu0 %v7577
    %v7579 = vpop.xlane.xlu0 %7578
    %v7580 = vrot.slane %v7579, 4
    %v7581 = vadd.f32 %v7579, %v7580
    %v7582 = vrot.slane %v7581, 2
    %v7583 = vadd.f32 %v7581, %v7582
    %v7584 = vrot.slane %v7583, 1
    %v7585 = vadd.f32 %v7583, %v7584
    %s7586 = vtos %v7585
    %v7587 = vrcp.pop 512.0
    %v7588 = vmul.f32 512.0, %v7587
    %v7589 = vsub.f32 1.0, %v7588
    %v7590 = vmul.f32 %v7587, %v7589
    %v7591 = vadd.f32 %v7587, %v7590
    %vm7592 = vweird.f32 %v7587
    %v7593 = vsel %vm7592, %v7587, %v7591
    %s7594 = vtos %v7593
    %s7595 = smul.f32 %s7586, %s7594
    %v7596 = vstv %s7595
    %v7597 = vsub.f32 %v7563, %v7596
    %v7598 = vsub.f32 %v7564, %v7596
    %v7599 = vmul.f32 %v7597, %v7597
    %v7600 = vmul.f32 %v7598, %v7598
    %7603 = vrot.lane.b32.xlu0 %v7599, 32
    %v7604 = vpop.permute.xlu0 %7603
    %7605 = vrot.lane.b32.xlu0 %v7600, 32
    %v7606 = vpop.permute.xlu0 %7605
    %v7609 = vsel %vm1943, %v7604, 0.0
    %v7610 = vsel %vm1943, %v7606, 0.0
    %v7611 = vadd.f32 %v7609, %v7610
    %7612 = vadd.xlane.f32.xlu0 %v7611
    %v7613 = vpop.xlane.xlu0 %7612
    %v7614 = vrot.slane %v7613, 4
    %v7615 = vadd.f32 %v7613, %v7614
    %v7616 = vrot.slane %v7615, 2
    %v7617 = vadd.f32 %v7615, %v7616
    %v7618 = vrot.slane %v7617, 1
    %v7619 = vadd.f32 %v7617, %v7618
    %s7620 = vtos %v7619
    %v7621 = vrcp.pop 512.0
    %v7622 = vmul.f32 512.0, %v7621
    %v7623 = vsub.f32 1.0, %v7622
    %v7624 = vmul.f32 %v7621, %v7623
    %v7625 = vadd.f32 %v7621, %v7624
    %vm7626 = vweird.f32 %v7621
    %v7627 = vsel %vm7626, %v7621, %v7625
    %s7628 = vtos %v7627
    %s7629 = smul.f32 %s7620, %s7628
    %s7630 = sadd.f32 %s7629, 1e-12
    %v7631 = vstv %s7630
    %v7632 = vrsqrt.pop %v7631
    %v7633 = vmul.f32 %v7632, %v7631
    %v7634 = vmul.f32 %v7633, %v7632
    %v7635 = vmul.f32 0.5, %v7634
    %v7636 = vsub.f32 1.5, %v7635
    %v7637 = vmul.f32 %v7632, %v7636
    %vm7638 = vweird.f32 %v7631
    %vm7639 = vweird.f32 %v7632
    %vm7640 = vmor %vm7638, %vm7639
    %v7641 = vsel %vm7640, %v7632, %v7637
    %s7642 = vtos %v7641
    %v7643 = vstv %s7642
    %v7644 = vmul.f32 %v7597, %v7643
    %v7645 = vmul.f32 %v7598, %v7643
    %v7646 = vmul.f32 %v7644, %v4636
    %v7647 = vmul.f32 %v7645, %v4638
    %v7648 = vadd.f32 %v7646, %v4646
    %v7649 = vadd.f32 %v7647, %v4648
    %7652 = vrot.lane.b32.xlu0 %v7648, 32
    %v7653 = vpop.permute.xlu0 %7652
    %7654 = vrot.lane.b32.xlu0 %v7649, 32
    %v7655 = vpop.permute.xlu0 %7654
    %7658 = vst.msk [vmem:[#allocation3 + $0x40] sm:$0xff] %vm1943, %v7653
    %7659 = vst.msk [vmem:[#allocation3 + $0x48] sm:$0xff] %vm1943, %v7655
    %7662 = vrot.lane.b32.xlu0 %v7565, 32
    %v7663 = vpop.permute.xlu0 %7662
    %7664 = vrot.lane.b32.xlu0 %v7566, 32
    %v7665 = vpop.permute.xlu0 %7664
    %v7668 = vsel %vm1943, %v7663, 0.0
    %v7669 = vsel %vm1943, %v7665, 0.0
    %v7670 = vadd.f32 %v7668, %v7669
    %7671 = vadd.xlane.f32.xlu0 %v7670
    %v7672 = vpop.xlane.xlu0 %7671
    %v7673 = vrot.slane %v7672, 4
    %v7674 = vadd.f32 %v7672, %v7673
    %v7675 = vrot.slane %v7674, 2
    %v7676 = vadd.f32 %v7674, %v7675
    %v7677 = vrot.slane %v7676, 1
    %v7678 = vadd.f32 %v7676, %v7677
    %s7679 = vtos %v7678
    %v7680 = vrcp.pop 512.0
    %v7681 = vmul.f32 512.0, %v7680
    %v7682 = vsub.f32 1.0, %v7681
    %v7683 = vmul.f32 %v7680, %v7682
    %v7684 = vadd.f32 %v7680, %v7683
    %vm7685 = vweird.f32 %v7680
    %v7686 = vsel %vm7685, %v7680, %v7684
    %s7687 = vtos %v7686
    %s7688 = smul.f32 %s7679, %s7687
    %v7689 = vstv %s7688
    %v7690 = vsub.f32 %v7565, %v7689
    %v7691 = vsub.f32 %v7566, %v7689
    %v7692 = vmul.f32 %v7690, %v7690
    %v7693 = vmul.f32 %v7691, %v7691
    %7696 = vrot.lane.b32.xlu0 %v7692, 32
    %v7697 = vpop.permute.xlu0 %7696
    %7698 = vrot.lane.b32.xlu0 %v7693, 32
    %v7699 = vpop.permute.xlu0 %7698
    %v7702 = vsel %vm1943, %v7697, 0.0
    %v7703 = vsel %vm1943, %v7699, 0.0
    %v7704 = vadd.f32 %v7702, %v7703
    %7705 = vadd.xlane.f32.xlu0 %v7704
    %v7706 = vpop.xlane.xlu0 %7705
    %v7707 = vrot.slane %v7706, 4
    %v7708 = vadd.f32 %v7706, %v7707
    %v7709 = vrot.slane %v7708, 2
    %v7710 = vadd.f32 %v7708, %v7709
    %v7711 = vrot.slane %v7710, 1
    %v7712 = vadd.f32 %v7710, %v7711
    %s7713 = vtos %v7712
    %v7714 = vrcp.pop 512.0
    %v7715 = vmul.f32 512.0, %v7714
    %v7716 = vsub.f32 1.0, %v7715
    %v7717 = vmul.f32 %v7714, %v7716
    %v7718 = vadd.f32 %v7714, %v7717
    %vm7719 = vweird.f32 %v7714
    %v7720 = vsel %vm7719, %v7714, %v7718
    %s7721 = vtos %v7720
    %s7722 = smul.f32 %s7713, %s7721
    %s7723 = sadd.f32 %s7722, 1e-12
    %v7724 = vstv %s7723
    %v7725 = vrsqrt.pop %v7724
    %v7726 = vmul.f32 %v7725, %v7724
    %v7727 = vmul.f32 %v7726, %v7725
    %v7728 = vmul.f32 0.5, %v7727
    %v7729 = vsub.f32 1.5, %v7728
    %v7730 = vmul.f32 %v7725, %v7729
    %vm7731 = vweird.f32 %v7724
    %vm7732 = vweird.f32 %v7725
    %vm7733 = vmor %vm7731, %vm7732
    %v7734 = vsel %vm7733, %v7725, %v7730
    %s7735 = vtos %v7734
    %v7736 = vstv %s7735
    %v7737 = vmul.f32 %v7690, %v7736
    %v7738 = vmul.f32 %v7691, %v7736
    %v7739 = vmul.f32 %v7737, %v4636
    %v7740 = vmul.f32 %v7738, %v4638
    %v7741 = vadd.f32 %v7739, %v4646
    %v7742 = vadd.f32 %v7740, %v4648
    %7745 = vrot.lane.b32.xlu0 %v7741, 32
    %v7746 = vpop.permute.xlu0 %7745
    %7747 = vrot.lane.b32.xlu0 %v7742, 32
    %v7748 = vpop.permute.xlu0 %7747
    %7751 = vst.msk [vmem:[%s4754 + $0x40] sm:$0xff] %vm1943, %v7746
    %7752 = vst.msk [vmem:[%s4754 + $0x48] sm:$0xff] %vm1943, %v7748
    %s7753 = scalar_lea.vmem [#allocation2], 5
    %v7754 = vld [vmem:[%s7753] ss:$8 sm:$0xf]
    %v7755 = vld [vmem:[%s7753] ss:$8 sm:$0xf0]
    %v7756 = vor.u32 %v7754, %v7755
    %s7757 = scalar_lea.vmem [#allocation2], 69
    %v7758 = vld [vmem:[%s7757] ss:$8 sm:$0xf]
    %v7759 = vld [vmem:[%s7757] ss:$8 sm:$0xf0]
    %v7760 = vor.u32 %v7758, %v7759
    %s7761 = scalar_lea.vmem [#allocation2], 133
    %v7762 = vld [vmem:[%s7761] ss:$8 sm:$0xf]
    %v7763 = vld [vmem:[%s7761] ss:$8 sm:$0xf0]
    %v7764 = vor.u32 %v7762, %v7763
    %s7765 = scalar_lea.vmem [#allocation2], 197
    %v7766 = vld [vmem:[%s7765] ss:$8 sm:$0xf]
    %v7767 = vld [vmem:[%s7765] ss:$8 sm:$0xf0]
    %v7768 = vor.u32 %v7766, %v7767
    %v7769 = vadd.f32 %v7756, %v7234
    %v7770 = vadd.f32 %v7760, %v7237
    %v7771 = vadd.f32 %v7764, %v7240
    %v7772 = vadd.f32 %v7768, %v7243
    %v7773 = vxor.u32 %v7769, 2147483648
    %v7774 = vxor.u32 %v7770, 2147483648
    %v7775 = vxor.u32 %v7771, 2147483648
    %v7776 = vxor.u32 %v7772, 2147483648
    %v7777 = vmul.f32 %v7773, 1.442695
    %v7778 = vpow.pop %v7777
    %v7779 = vmul.f32 %v7774, 1.442695
    %v7780 = vpow.pop %v7779
    %v7781 = vmul.f32 %v7775, 1.442695
    %v7782 = vpow.pop %v7781
    %v7783 = vmul.f32 %v7776, 1.442695
    %v7784 = vpow.pop %v7783
    %v7785 = vadd.f32 %v7778, 1.0
    %v7786 = vadd.f32 %v7780, 1.0
    %v7787 = vadd.f32 %v7782, 1.0
    %v7788 = vadd.f32 %v7784, 1.0
    %v7789 = vrcp.pop %v7785
    %v7790 = vmul.f32 %v7785, %v7789
    %v7791 = vsub.f32 1.0, %v7790
    %v7792 = vmul.f32 %v7789, %v7791
    %v7793 = vadd.f32 %v7789, %v7792
    %vm7794 = vweird.f32 %v7785
    %vm7795 = vweird.f32 %v7789
    %vm7796 = vmor %vm7794, %vm7795
    %v7797 = vsel %vm7796, %v7789, %v7793
    %v7798 = vand.u32 2147483647, %v7785
    %vm7799 = vcmp.eq.f32.partialorder %v7798, 8.507059e+37
    %v7800 = vand.u32 %v7785, 2147483648
    %v7801 = vor.u32 1.1754944e-38, %v7800
    %v7802 = vsel %vm7799, %v7801, %v7797
    %v7803 = vmul.f32 1.0, %v7802
    %v7804 = vrcp.pop %v7786
    %v7805 = vmul.f32 %v7786, %v7804
    %v7806 = vsub.f32 1.0, %v7805
    %v7807 = vmul.f32 %v7804, %v7806
    %v7808 = vadd.f32 %v7804, %v7807
    %vm7809 = vweird.f32 %v7786
    %vm7810 = vweird.f32 %v7804
    %vm7811 = vmor %vm7809, %vm7810
    %v7812 = vsel %vm7811, %v7804, %v7808
    %v7813 = vand.u32 2147483647, %v7786
    %vm7814 = vcmp.eq.f32.partialorder %v7813, 8.507059e+37
    %v7815 = vand.u32 %v7786, 2147483648
    %v7816 = vor.u32 1.1754944e-38, %v7815
    %v7817 = vsel %vm7814, %v7816, %v7812
    %v7818 = vmul.f32 1.0, %v7817
    %v7819 = vrcp.pop %v7787
    %v7820 = vmul.f32 %v7787, %v7819
    %v7821 = vsub.f32 1.0, %v7820
    %v7822 = vmul.f32 %v7819, %v7821
    %v7823 = vadd.f32 %v7819, %v7822
    %vm7824 = vweird.f32 %v7787
    %vm7825 = vweird.f32 %v7819
    %vm7826 = vmor %vm7824, %vm7825
    %v7827 = vsel %vm7826, %v7819, %v7823
    %v7828 = vand.u32 2147483647, %v7787
    %vm7829 = vcmp.eq.f32.partialorder %v7828, 8.507059e+37
    %v7830 = vand.u32 %v7787, 2147483648
    %v7831 = vor.u32 1.1754944e-38, %v7830
    %v7832 = vsel %vm7829, %v7831, %v7827
    %v7833 = vmul.f32 1.0, %v7832
    %v7834 = vrcp.pop %v7788
    %v7835 = vmul.f32 %v7788, %v7834
    %v7836 = vsub.f32 1.0, %v7835
    %v7837 = vmul.f32 %v7834, %v7836
    %v7838 = vadd.f32 %v7834, %v7837
    %vm7839 = vweird.f32 %v7788
    %vm7840 = vweird.f32 %v7834
    %vm7841 = vmor %vm7839, %vm7840
    %v7842 = vsel %vm7841, %v7834, %v7838
    %v7843 = vand.u32 2147483647, %v7788
    %vm7844 = vcmp.eq.f32.partialorder %v7843, 8.507059e+37
    %v7845 = vand.u32 %v7788, 2147483648
    %v7846 = vor.u32 1.1754944e-38, %v7845
    %v7847 = vsel %vm7844, %v7846, %v7842
    %v7848 = vmul.f32 1.0, %v7847
    %7849 = vrot.lane.b32.xlu0 %v7234, 64
    %v7850 = vpop.permute.xlu0 %7849
    %7851 = vrot.lane.b32.xlu0 %v7237, 64
    %v7852 = vpop.permute.xlu0 %7851
    %7853 = vrot.lane.b32.xlu0 %v7240, 64
    %v7854 = vpop.permute.xlu0 %7853
    %7855 = vrot.lane.b32.xlu0 %v7243, 64
    %v7856 = vpop.permute.xlu0 %7855
    %v7861 = vmul.f32 %v7803, %v7850
    %v7862 = vmul.f32 %v7818, %v7852
    %v7863 = vmul.f32 %v7833, %v7854
    %v7864 = vmul.f32 %v7848, %v7856
    %7869 = vrot.lane.b32.xlu0 %v7861, 64
    %v7870 = vpop.permute.xlu0 %7869
    %7871 = vrot.lane.b32.xlu0 %v7862, 64
    %v7872 = vpop.permute.xlu0 %7871
    %7873 = vrot.lane.b32.xlu0 %v7863, 64
    %v7874 = vpop.permute.xlu0 %7873
    %7875 = vrot.lane.b32.xlu0 %v7864, 64
    %v7876 = vpop.permute.xlu0 %7875
    %v7881 = vadd.f32 %v7756, %v7870
    %v7882 = vadd.f32 %v7760, %v7872
    %v7883 = vadd.f32 %v7764, %v7874
    %v7884 = vadd.f32 %v7768, %v7876
    %v7885 = vtanh.pop %v7881
    %v7886 = vtanh.pop %v7882
    %v7887 = vtanh.pop %v7883
    %v7888 = vtanh.pop %v7884
    %v7889 = vsub.f32 1.0, %v7803
    %v7890 = vsub.f32 1.0, %v7818
    %v7891 = vsub.f32 1.0, %v7833
    %v7892 = vsub.f32 1.0, %v7848
    %7897 = vrot.lane.b32.xlu0 %v7885, 96
    %v7898 = vpop.permute.xlu0 %7897
    %7899 = vrot.lane.b32.xlu0 %v7886, 96
    %v7900 = vpop.permute.xlu0 %7899
    %7901 = vrot.lane.b32.xlu0 %v7887, 96
    %v7902 = vpop.permute.xlu0 %7901
    %7903 = vrot.lane.b32.xlu0 %v7888, 96
    %v7904 = vpop.permute.xlu0 %7903
    %v7909 = vmul.f32 %v7889, %v7898
    %v7910 = vmul.f32 %v7890, %v7900
    %v7911 = vmul.f32 %v7891, %v7902
    %v7912 = vmul.f32 %v7892, %v7904
    %v7913 = vmul.f32 %v7803, %v7168
    %v7914 = vmul.f32 %v7818, %v7169
    %v7915 = vmul.f32 %v7833, %v7170
    %v7916 = vmul.f32 %v7848, %v7171
    %v7917 = vadd.f32 %v7909, %v7913
    %v7918 = vadd.f32 %v7910, %v7914
    %v7919 = vadd.f32 %v7911, %v7915
    %v7920 = vadd.f32 %v7912, %v7916
    %7925 = vrot.lane.b32.xlu0 %v7917, 96
    %v7926 = vpop.permute.xlu0 %7925
    %7927 = vrot.lane.b32.xlu0 %v7918, 96
    %v7928 = vpop.permute.xlu0 %7927
    %7929 = vrot.lane.b32.xlu0 %v7919, 96
    %v7930 = vpop.permute.xlu0 %7929
    %7931 = vrot.lane.b32.xlu0 %v7920, 96
    %v7932 = vpop.permute.xlu0 %7931
    %7937 = vrot.lane.b32.xlu0 %v7563, 64
    %v7938 = vpop.permute.xlu0 %7937
    %7939 = vrot.lane.b32.xlu0 %v7564, 64
    %v7940 = vpop.permute.xlu0 %7939
    %7941 = vrot.lane.b32.xlu0 %v7565, 64
    %v7942 = vpop.permute.xlu0 %7941
    %7943 = vrot.lane.b32.xlu0 %v7566, 64
    %v7944 = vpop.permute.xlu0 %7943
    %v7949 = vsel %vm1943, %v7926, %v7938
    %v7950 = vsel %vm1943, %v7928, %v7940
    %v7951 = vsel %vm1943, %v7930, %v7942
    %v7952 = vsel %vm1943, %v7932, %v7944
    %v7954 = vsel %vm1976, %v7949, 0
    %v7957 = vsel %vm1976, %v7950, 0
    %v7960 = vsel %vm1976, %v7951, 0
    %v7963 = vsel %vm1976, %v7952, 0
    %7965 = vmatpush.msra.mxu0 0.0
    %7966 = vmatpush.msra.mxu0 0.0
    %7967 = vmatpush.msra.mxu0 0.0
    %7968 = vmatpush.msra.mxu0 0.0
    %7969 = vmatpush.msra.mxu0 0.0
    %7970 = vmatpush.msra.mxu0 0.0
    %7971 = vmatpush.msra.mxu0 0.0
    %7972 = vmatpush.msra.mxu0 0.0
    %7973 = vmatpush.msra.mxu0 %v3998
    %7974 = vmatpush.msra.mxu0 %v3995
    %7975 = vmatpush.msra.mxu0 %v3992
    %7976 = vmatpush.msra.mxu0 %v3989
    %7977 = vmatpush.msra.mxu0 %v3986
    %7978 = vmatpush.msra.mxu0 %v3983
    %7979 = vmatpush.msra.mxu0 %v3980
    %7980 = vmatpush.msra.mxu0 %v3977
    %7981 = vmatmul.f32.gmra.mxu0 %v7954
    %v7982 = vpop.f32.mrf.mxu0
    %v7983 = vadd.f32 %v4022, %v7982
    %7984 = vmatmul.f32.gmra.mxu0 %v7957
    %v7985 = vpop.f32.mrf.mxu0
    %v7986 = vadd.f32 %v4022, %v7985
    %7987 = vmatmul.f32.gmra.mxu0 %v7960
    %v7988 = vpop.f32.mrf.mxu0
    %v7989 = vadd.f32 %v4022, %v7988
    %7990 = vmatmul.f32.gmra.mxu0 %v7963
    %v7991 = vpop.f32.mrf.mxu0
    %v7992 = vadd.f32 %v4022, %v7991
    %7993 = vdwg.mxu0
    %7994 = vmatpush.msra.mxu0 0.0
    %7995 = vmatpush.msra.mxu0 0.0
    %7996 = vmatpush.msra.mxu0 0.0
    %7997 = vmatpush.msra.mxu0 0.0
    %7998 = vmatpush.msra.mxu0 0.0
    %7999 = vmatpush.msra.mxu0 0.0
    %8000 = vmatpush.msra.mxu0 0.0
    %8001 = vmatpush.msra.mxu0 0.0
    %8002 = vmatpush.msra.mxu0 %v3999
    %8003 = vmatpush.msra.mxu0 %v3996
    %8004 = vmatpush.msra.mxu0 %v3993
    %8005 = vmatpush.msra.mxu0 %v3990
    %8006 = vmatpush.msra.mxu0 %v3987
    %8007 = vmatpush.msra.mxu0 %v3984
    %8008 = vmatpush.msra.mxu0 %v3981
    %8009 = vmatpush.msra.mxu0 %v3978
    %8010 = vmatmul.f32.gmra.mxu0 %v7954
    %v8011 = vpop.f32.mrf.mxu0
    %v8012 = vadd.f32 %v4187, %v8011
    %8013 = vmatmul.f32.gmra.mxu0 %v7957
    %v8014 = vpop.f32.mrf.mxu0
    %v8015 = vadd.f32 %v4187, %v8014
    %8016 = vmatmul.f32.gmra.mxu0 %v7960
    %v8017 = vpop.f32.mrf.mxu0
    %v8018 = vadd.f32 %v4187, %v8017
    %8019 = vmatmul.f32.gmra.mxu0 %v7963
    %v8020 = vpop.f32.mrf.mxu0
    %v8021 = vadd.f32 %v4187, %v8020
    %8022 = vdwg.mxu0
    %8023 = vmatpush.msra.mxu0 0.0
    %8024 = vmatpush.msra.mxu0 0.0
    %8025 = vmatpush.msra.mxu0 0.0
    %8026 = vmatpush.msra.mxu0 0.0
    %8027 = vmatpush.msra.mxu0 0.0
    %8028 = vmatpush.msra.mxu0 0.0
    %8029 = vmatpush.msra.mxu0 0.0
    %8030 = vmatpush.msra.mxu0 0.0
    %8031 = vmatpush.msra.mxu0 %v4000
    %8032 = vmatpush.msra.mxu0 %v3997
    %8033 = vmatpush.msra.mxu0 %v3994
    %8034 = vmatpush.msra.mxu0 %v3991
    %8035 = vmatpush.msra.mxu0 %v3988
    %8036 = vmatpush.msra.mxu0 %v3985
    %8037 = vmatpush.msra.mxu0 %v3982
    %8038 = vmatpush.msra.mxu0 %v3979
    %8039 = vmatmul.f32.gmra.mxu0 %v7954
    %v8040 = vpop.f32.mrf.mxu0
    %v8041 = vadd.f32 %v4188, %v8040
    %8042 = vmatmul.f32.gmra.mxu0 %v7957
    %v8043 = vpop.f32.mrf.mxu0
    %v8044 = vadd.f32 %v4188, %v8043
    %8045 = vmatmul.f32.gmra.mxu0 %v7960
    %v8046 = vpop.f32.mrf.mxu0
    %v8047 = vadd.f32 %v4188, %v8046
    %8048 = vmatmul.f32.gmra.mxu0 %v7963
    %v8049 = vpop.f32.mrf.mxu0
    %v8050 = vadd.f32 %v4188, %v8049
    %8051 = vdwg.mxu0
    %8056 = vrot.lane.b32.xlu0 %v7983, 96
    %v8057 = vpop.permute.xlu0 %8056
    %8058 = vrot.lane.b32.xlu0 %v7986, 96
    %v8059 = vpop.permute.xlu0 %8058
    %8060 = vrot.lane.b32.xlu0 %v7989, 96
    %v8061 = vpop.permute.xlu0 %8060
    %8062 = vrot.lane.b32.xlu0 %v7992, 96
    %v8063 = vpop.permute.xlu0 %8062
    %v8068 = vadd.f32 %v8012, %v8057
    %v8069 = vadd.f32 %v8015, %v8059
    %v8070 = vadd.f32 %v8018, %v8061
    %v8071 = vadd.f32 %v8021, %v8063
    %v8072 = vxor.u32 %v8068, 2147483648
    %v8073 = vxor.u32 %v8069, 2147483648
    %v8074 = vxor.u32 %v8070, 2147483648
    %v8075 = vxor.u32 %v8071, 2147483648
    %v8076 = vmul.f32 %v8072, 1.442695
    %v8077 = vpow.pop %v8076
    %v8078 = vmul.f32 %v8073, 1.442695
    %v8079 = vpow.pop %v8078
    %v8080 = vmul.f32 %v8074, 1.442695
    %v8081 = vpow.pop %v8080
    %v8082 = vmul.f32 %v8075, 1.442695
    %v8083 = vpow.pop %v8082
    %v8084 = vadd.f32 %v8077, 1.0
    %v8085 = vadd.f32 %v8079, 1.0
    %v8086 = vadd.f32 %v8081, 1.0
    %v8087 = vadd.f32 %v8083, 1.0
    %v8088 = vrcp.pop %v8084
    %v8089 = vmul.f32 %v8084, %v8088
    %v8090 = vsub.f32 1.0, %v8089
    %v8091 = vmul.f32 %v8088, %v8090
    %v8092 = vadd.f32 %v8088, %v8091
    %vm8093 = vweird.f32 %v8084
    %vm8094 = vweird.f32 %v8088
    %vm8095 = vmor %vm8093, %vm8094
    %v8096 = vsel %vm8095, %v8088, %v8092
    %v8097 = vand.u32 2147483647, %v8084
    %vm8098 = vcmp.eq.f32.partialorder %v8097, 8.507059e+37
    %v8099 = vand.u32 %v8084, 2147483648
    %v8100 = vor.u32 1.1754944e-38, %v8099
    %v8101 = vsel %vm8098, %v8100, %v8096
    %v8102 = vmul.f32 1.0, %v8101
    %v8103 = vrcp.pop %v8085
    %v8104 = vmul.f32 %v8085, %v8103
    %v8105 = vsub.f32 1.0, %v8104
    %v8106 = vmul.f32 %v8103, %v8105
    %v8107 = vadd.f32 %v8103, %v8106
    %vm8108 = vweird.f32 %v8085
    %vm8109 = vweird.f32 %v8103
    %vm8110 = vmor %vm8108, %vm8109
    %v8111 = vsel %vm8110, %v8103, %v8107
    %v8112 = vand.u32 2147483647, %v8085
    %vm8113 = vcmp.eq.f32.partialorder %v8112, 8.507059e+37
    %v8114 = vand.u32 %v8085, 2147483648
    %v8115 = vor.u32 1.1754944e-38, %v8114
    %v8116 = vsel %vm8113, %v8115, %v8111
    %v8117 = vmul.f32 1.0, %v8116
    %v8118 = vrcp.pop %v8086
    %v8119 = vmul.f32 %v8086, %v8118
    %v8120 = vsub.f32 1.0, %v8119
    %v8121 = vmul.f32 %v8118, %v8120
    %v8122 = vadd.f32 %v8118, %v8121
    %vm8123 = vweird.f32 %v8086
    %vm8124 = vweird.f32 %v8118
    %vm8125 = vmor %vm8123, %vm8124
    %v8126 = vsel %vm8125, %v8118, %v8122
    %v8127 = vand.u32 2147483647, %v8086
    %vm8128 = vcmp.eq.f32.partialorder %v8127, 8.507059e+37
    %v8129 = vand.u32 %v8086, 2147483648
    %v8130 = vor.u32 1.1754944e-38, %v8129
    %v8131 = vsel %vm8128, %v8130, %v8126
    %v8132 = vmul.f32 1.0, %v8131
    %v8133 = vrcp.pop %v8087
    %v8134 = vmul.f32 %v8087, %v8133
    %v8135 = vsub.f32 1.0, %v8134
    %v8136 = vmul.f32 %v8133, %v8135
    %v8137 = vadd.f32 %v8133, %v8136
    %vm8138 = vweird.f32 %v8087
    %vm8139 = vweird.f32 %v8133
    %vm8140 = vmor %vm8138, %vm8139
    %v8141 = vsel %vm8140, %v8133, %v8137
    %v8142 = vand.u32 2147483647, %v8087
    %vm8143 = vcmp.eq.f32.partialorder %v8142, 8.507059e+37
    %v8144 = vand.u32 %v8087, 2147483648
    %v8145 = vor.u32 1.1754944e-38, %v8144
    %v8146 = vsel %vm8143, %v8145, %v8141
    %v8147 = vmul.f32 1.0, %v8146
    %8152 = vrot.lane.b32.xlu0 %v8012, 96
    %v8153 = vpop.permute.xlu0 %8152
    %8154 = vrot.lane.b32.xlu0 %v8015, 96
    %v8155 = vpop.permute.xlu0 %8154
    %8156 = vrot.lane.b32.xlu0 %v8018, 96
    %v8157 = vpop.permute.xlu0 %8156
    %8158 = vrot.lane.b32.xlu0 %v8021, 96
    %v8159 = vpop.permute.xlu0 %8158
    %v8164 = vadd.f32 %v8012, %v8153
    %v8165 = vadd.f32 %v8015, %v8155
    %v8166 = vadd.f32 %v8018, %v8157
    %v8167 = vadd.f32 %v8021, %v8159
    %v8168 = vxor.u32 %v8164, 2147483648
    %v8169 = vxor.u32 %v8165, 2147483648
    %v8170 = vxor.u32 %v8166, 2147483648
    %v8171 = vxor.u32 %v8167, 2147483648
    %v8172 = vmul.f32 %v8168, 1.442695
    %v8173 = vpow.pop %v8172
    %v8174 = vmul.f32 %v8169, 1.442695
    %v8175 = vpow.pop %v8174
    %v8176 = vmul.f32 %v8170, 1.442695
    %v8177 = vpow.pop %v8176
    %v8178 = vmul.f32 %v8171, 1.442695
    %v8179 = vpow.pop %v8178
    %v8180 = vadd.f32 %v8173, 1.0
    %v8181 = vadd.f32 %v8175, 1.0
    %v8182 = vadd.f32 %v8177, 1.0
    %v8183 = vadd.f32 %v8179, 1.0
    %v8184 = vrcp.pop %v8180
    %v8185 = vmul.f32 %v8180, %v8184
    %v8186 = vsub.f32 1.0, %v8185
    %v8187 = vmul.f32 %v8184, %v8186
    %v8188 = vadd.f32 %v8184, %v8187
    %vm8189 = vweird.f32 %v8180
    %vm8190 = vweird.f32 %v8184
    %vm8191 = vmor %vm8189, %vm8190
    %v8192 = vsel %vm8191, %v8184, %v8188
    %v8193 = vand.u32 2147483647, %v8180
    %vm8194 = vcmp.eq.f32.partialorder %v8193, 8.507059e+37
    %v8195 = vand.u32 %v8180, 2147483648
    %v8196 = vor.u32 1.1754944e-38, %v8195
    %v8197 = vsel %vm8194, %v8196, %v8192
    %v8198 = vmul.f32 1.0, %v8197
    %v8199 = vrcp.pop %v8181
    %v8200 = vmul.f32 %v8181, %v8199
    %v8201 = vsub.f32 1.0, %v8200
    %v8202 = vmul.f32 %v8199, %v8201
    %v8203 = vadd.f32 %v8199, %v8202
    %vm8204 = vweird.f32 %v8181
    %vm8205 = vweird.f32 %v8199
    %vm8206 = vmor %vm8204, %vm8205
    %v8207 = vsel %vm8206, %v8199, %v8203
    %v8208 = vand.u32 2147483647, %v8181
    %vm8209 = vcmp.eq.f32.partialorder %v8208, 8.507059e+37
    %v8210 = vand.u32 %v8181, 2147483648
    %v8211 = vor.u32 1.1754944e-38, %v8210
    %v8212 = vsel %vm8209, %v8211, %v8207
    %v8213 = vmul.f32 1.0, %v8212
    %v8214 = vrcp.pop %v8182
    %v8215 = vmul.f32 %v8182, %v8214
    %v8216 = vsub.f32 1.0, %v8215
    %v8217 = vmul.f32 %v8214, %v8216
    %v8218 = vadd.f32 %v8214, %v8217
    %vm8219 = vweird.f32 %v8182
    %vm8220 = vweird.f32 %v8214
    %vm8221 = vmor %vm8219, %vm8220
    %v8222 = vsel %vm8221, %v8214, %v8218
    %v8223 = vand.u32 2147483647, %v8182
    %vm8224 = vcmp.eq.f32.partialorder %v8223, 8.507059e+37
    %v8225 = vand.u32 %v8182, 2147483648
    %v8226 = vor.u32 1.1754944e-38, %v8225
    %v8227 = vsel %vm8224, %v8226, %v8222
    %v8228 = vmul.f32 1.0, %v8227
    %v8229 = vrcp.pop %v8183
    %v8230 = vmul.f32 %v8183, %v8229
    %v8231 = vsub.f32 1.0, %v8230
    %v8232 = vmul.f32 %v8229, %v8231
    %v8233 = vadd.f32 %v8229, %v8232
    %vm8234 = vweird.f32 %v8183
    %vm8235 = vweird.f32 %v8229
    %vm8236 = vmor %vm8234, %vm8235
    %v8237 = vsel %vm8236, %v8229, %v8233
    %v8238 = vand.u32 2147483647, %v8183
    %vm8239 = vcmp.eq.f32.partialorder %v8238, 8.507059e+37
    %v8240 = vand.u32 %v8183, 2147483648
    %v8241 = vor.u32 1.1754944e-38, %v8240
    %v8242 = vsel %vm8239, %v8241, %v8237
    %v8243 = vmul.f32 1.0, %v8242
    %8244 = vrot.lane.b32.xlu0 %v8012, 32
    %v8245 = vpop.permute.xlu0 %8244
    %8246 = vrot.lane.b32.xlu0 %v8015, 32
    %v8247 = vpop.permute.xlu0 %8246
    %8248 = vrot.lane.b32.xlu0 %v8018, 32
    %v8249 = vpop.permute.xlu0 %8248
    %8250 = vrot.lane.b32.xlu0 %v8021, 32
    %v8251 = vpop.permute.xlu0 %8250
    %v8256 = vmul.f32 %v8102, %v8245
    %v8257 = vmul.f32 %v8117, %v8247
    %v8258 = vmul.f32 %v8132, %v8249
    %v8259 = vmul.f32 %v8147, %v8251
    %8264 = vrot.lane.b32.xlu0 %v8256, 64
    %v8265 = vpop.permute.xlu0 %8264
    %8266 = vrot.lane.b32.xlu0 %v8257, 64
    %v8267 = vpop.permute.xlu0 %8266
    %8268 = vrot.lane.b32.xlu0 %v8258, 64
    %v8269 = vpop.permute.xlu0 %8268
    %8270 = vrot.lane.b32.xlu0 %v8259, 64
    %v8271 = vpop.permute.xlu0 %8270
    %v8276 = vadd.f32 %v8041, %v8265
    %v8277 = vadd.f32 %v8044, %v8267
    %v8278 = vadd.f32 %v8047, %v8269
    %v8279 = vadd.f32 %v8050, %v8271
    %v8280 = vtanh.pop %v8276
    %v8281 = vtanh.pop %v8277
    %v8282 = vtanh.pop %v8278
    %v8283 = vtanh.pop %v8279
    %v8284 = vsub.f32 1.0, %v8198
    %v8285 = vsub.f32 1.0, %v8213
    %v8286 = vsub.f32 1.0, %v8228
    %v8287 = vsub.f32 1.0, %v8243
    %8292 = vrot.lane.b32.xlu0 %v8280, 96
    %v8293 = vpop.permute.xlu0 %8292
    %8294 = vrot.lane.b32.xlu0 %v8281, 96
    %v8295 = vpop.permute.xlu0 %8294
    %8296 = vrot.lane.b32.xlu0 %v8282, 96
    %v8297 = vpop.permute.xlu0 %8296
    %8298 = vrot.lane.b32.xlu0 %v8283, 96
    %v8299 = vpop.permute.xlu0 %8298
    %v8304 = vmul.f32 %v8284, %v8293
    %v8305 = vmul.f32 %v8285, %v8295
    %v8306 = vmul.f32 %v8286, %v8297
    %v8307 = vmul.f32 %v8287, %v8299
    %v8308 = vmul.f32 %v8198, %v7563
    %v8309 = vmul.f32 %v8213, %v7564
    %v8310 = vmul.f32 %v8228, %v7565
    %v8311 = vmul.f32 %v8243, %v7566
    %v8312 = vadd.f32 %v8304, %v8308
    %v8313 = vadd.f32 %v8305, %v8309
    %v8314 = vadd.f32 %v8306, %v8310
    %v8315 = vadd.f32 %v8307, %v8311
    %8318 = vrot.lane.b32.xlu0 %v8312, 32
    %v8319 = vpop.permute.xlu0 %8318
    %8320 = vrot.lane.b32.xlu0 %v8313, 32
    %v8321 = vpop.permute.xlu0 %8320
    %v8324 = vsel %vm1943, %v8319, 0.0
    %v8325 = vsel %vm1943, %v8321, 0.0
    %v8326 = vadd.f32 %v8324, %v8325
    %8327 = vadd.xlane.f32.xlu0 %v8326
    %v8328 = vpop.xlane.xlu0 %8327
    %v8329 = vrot.slane %v8328, 4
    %v8330 = vadd.f32 %v8328, %v8329
    %v8331 = vrot.slane %v8330, 2
    %v8332 = vadd.f32 %v8330, %v8331
    %v8333 = vrot.slane %v8332, 1
    %v8334 = vadd.f32 %v8332, %v8333
    %s8335 = vtos %v8334
    %v8336 = vrcp.pop 512.0
    %v8337 = vmul.f32 512.0, %v8336
    %v8338 = vsub.f32 1.0, %v8337
    %v8339 = vmul.f32 %v8336, %v8338
    %v8340 = vadd.f32 %v8336, %v8339
    %vm8341 = vweird.f32 %v8336
    %v8342 = vsel %vm8341, %v8336, %v8340
    %s8343 = vtos %v8342
    %s8344 = smul.f32 %s8335, %s8343
    %v8345 = vstv %s8344
    %v8346 = vsub.f32 %v8312, %v8345
    %v8347 = vsub.f32 %v8313, %v8345
    %v8348 = vmul.f32 %v8346, %v8346
    %v8349 = vmul.f32 %v8347, %v8347
    %8352 = vrot.lane.b32.xlu0 %v8348, 32
    %v8353 = vpop.permute.xlu0 %8352
    %8354 = vrot.lane.b32.xlu0 %v8349, 32
    %v8355 = vpop.permute.xlu0 %8354
    %v8358 = vsel %vm1943, %v8353, 0.0
    %v8359 = vsel %vm1943, %v8355, 0.0
    %v8360 = vadd.f32 %v8358, %v8359
    %8361 = vadd.xlane.f32.xlu0 %v8360
    %v8362 = vpop.xlane.xlu0 %8361
    %v8363 = vrot.slane %v8362, 4
    %v8364 = vadd.f32 %v8362, %v8363
    %v8365 = vrot.slane %v8364, 2
    %v8366 = vadd.f32 %v8364, %v8365
    %v8367 = vrot.slane %v8366, 1
    %v8368 = vadd.f32 %v8366, %v8367
    %s8369 = vtos %v8368
    %v8370 = vrcp.pop 512.0
    %v8371 = vmul.f32 512.0, %v8370
    %v8372 = vsub.f32 1.0, %v8371
    %v8373 = vmul.f32 %v8370, %v8372
    %v8374 = vadd.f32 %v8370, %v8373
    %vm8375 = vweird.f32 %v8370
    %v8376 = vsel %vm8375, %v8370, %v8374
    %s8377 = vtos %v8376
    %s8378 = smul.f32 %s8369, %s8377
    %s8379 = sadd.f32 %s8378, 1e-12
    %v8380 = vstv %s8379
    %v8381 = vrsqrt.pop %v8380
    %v8382 = vmul.f32 %v8381, %v8380
    %v8383 = vmul.f32 %v8382, %v8381
    %v8384 = vmul.f32 0.5, %v8383
    %v8385 = vsub.f32 1.5, %v8384
    %v8386 = vmul.f32 %v8381, %v8385
    %vm8387 = vweird.f32 %v8380
    %vm8388 = vweird.f32 %v8381
    %vm8389 = vmor %vm8387, %vm8388
    %v8390 = vsel %vm8389, %v8381, %v8386
    %s8391 = vtos %v8390
    %v8392 = vstv %s8391
    %v8393 = vmul.f32 %v8346, %v8392
    %v8394 = vmul.f32 %v8347, %v8392
    %v8395 = vmul.f32 %v8393, %v4636
    %v8396 = vmul.f32 %v8394, %v4638
    %v8397 = vadd.f32 %v8395, %v4646
    %v8398 = vadd.f32 %v8396, %v4648
    %8401 = vrot.lane.b32.xlu0 %v8397, 32
    %v8402 = vpop.permute.xlu0 %8401
    %8403 = vrot.lane.b32.xlu0 %v8398, 32
    %v8404 = vpop.permute.xlu0 %8403
    %8407 = vst.msk [vmem:[#allocation3 + $0x50] sm:$0xff] %vm1943, %v8402
    %8408 = vst.msk [vmem:[#allocation3 + $0x58] sm:$0xff] %vm1943, %v8404
    %8411 = vrot.lane.b32.xlu0 %v8314, 32
    %v8412 = vpop.permute.xlu0 %8411
    %8413 = vrot.lane.b32.xlu0 %v8315, 32
    %v8414 = vpop.permute.xlu0 %8413
    %v8417 = vsel %vm1943, %v8412, 0.0
    %v8418 = vsel %vm1943, %v8414, 0.0
    %v8419 = vadd.f32 %v8417, %v8418
    %8420 = vadd.xlane.f32.xlu0 %v8419
    %v8421 = vpop.xlane.xlu0 %8420
    %v8422 = vrot.slane %v8421, 4
    %v8423 = vadd.f32 %v8421, %v8422
    %v8424 = vrot.slane %v8423, 2
    %v8425 = vadd.f32 %v8423, %v8424
    %v8426 = vrot.slane %v8425, 1
    %v8427 = vadd.f32 %v8425, %v8426
    %s8428 = vtos %v8427
    %v8429 = vrcp.pop 512.0
    %v8430 = vmul.f32 512.0, %v8429
    %v8431 = vsub.f32 1.0, %v8430
    %v8432 = vmul.f32 %v8429, %v8431
    %v8433 = vadd.f32 %v8429, %v8432
    %vm8434 = vweird.f32 %v8429
    %v8435 = vsel %vm8434, %v8429, %v8433
    %s8436 = vtos %v8435
    %s8437 = smul.f32 %s8428, %s8436
    %v8438 = vstv %s8437
    %v8439 = vsub.f32 %v8314, %v8438
    %v8440 = vsub.f32 %v8315, %v8438
    %v8441 = vmul.f32 %v8439, %v8439
    %v8442 = vmul.f32 %v8440, %v8440
    %8445 = vrot.lane.b32.xlu0 %v8441, 32
    %v8446 = vpop.permute.xlu0 %8445
    %8447 = vrot.lane.b32.xlu0 %v8442, 32
    %v8448 = vpop.permute.xlu0 %8447
    %v8451 = vsel %vm1943, %v8446, 0.0
    %v8452 = vsel %vm1943, %v8448, 0.0
    %v8453 = vadd.f32 %v8451, %v8452
    %8454 = vadd.xlane.f32.xlu0 %v8453
    %v8455 = vpop.xlane.xlu0 %8454
    %v8456 = vrot.slane %v8455, 4
    %v8457 = vadd.f32 %v8455, %v8456
    %v8458 = vrot.slane %v8457, 2
    %v8459 = vadd.f32 %v8457, %v8458
    %v8460 = vrot.slane %v8459, 1
    %v8461 = vadd.f32 %v8459, %v8460
    %s8462 = vtos %v8461
    %v8463 = vrcp.pop 512.0
    %v8464 = vmul.f32 512.0, %v8463
    %v8465 = vsub.f32 1.0, %v8464
    %v8466 = vmul.f32 %v8463, %v8465
    %v8467 = vadd.f32 %v8463, %v8466
    %vm8468 = vweird.f32 %v8463
    %v8469 = vsel %vm8468, %v8463, %v8467
    %s8470 = vtos %v8469
    %s8471 = smul.f32 %s8462, %s8470
    %s8472 = sadd.f32 %s8471, 1e-12
    %v8473 = vstv %s8472
    %v8474 = vrsqrt.pop %v8473
    %v8475 = vmul.f32 %v8474, %v8473
    %v8476 = vmul.f32 %v8475, %v8474
    %v8477 = vmul.f32 0.5, %v8476
    %v8478 = vsub.f32 1.5, %v8477
    %v8479 = vmul.f32 %v8474, %v8478
    %vm8480 = vweird.f32 %v8473
    %vm8481 = vweird.f32 %v8474
    %vm8482 = vmor %vm8480, %vm8481
    %v8483 = vsel %vm8482, %v8474, %v8479
    %s8484 = vtos %v8483
    %v8485 = vstv %s8484
    %v8486 = vmul.f32 %v8439, %v8485
    %v8487 = vmul.f32 %v8440, %v8485
    %v8488 = vmul.f32 %v8486, %v4636
    %v8489 = vmul.f32 %v8487, %v4638
    %v8490 = vadd.f32 %v8488, %v4646
    %v8491 = vadd.f32 %v8489, %v4648
    %8494 = vrot.lane.b32.xlu0 %v8490, 32
    %v8495 = vpop.permute.xlu0 %8494
    %8496 = vrot.lane.b32.xlu0 %v8491, 32
    %v8497 = vpop.permute.xlu0 %8496
    %8500 = vst.msk [vmem:[%s4754 + $0x50] sm:$0xff] %vm1943, %v8495
    %8501 = vst.msk [vmem:[%s4754 + $0x58] sm:$0xff] %vm1943, %v8497
    %s8502 = scalar_lea.vmem [#allocation2], 6
    %v8503 = vld [vmem:[%s8502] ss:$8 sm:$0xf]
    %v8504 = vld [vmem:[%s8502] ss:$8 sm:$0xf0]
    %v8505 = vor.u32 %v8503, %v8504
    %s8506 = scalar_lea.vmem [#allocation2], 70
    %v8507 = vld [vmem:[%s8506] ss:$8 sm:$0xf]
    %v8508 = vld [vmem:[%s8506] ss:$8 sm:$0xf0]
    %v8509 = vor.u32 %v8507, %v8508
    %s8510 = scalar_lea.vmem [#allocation2], 134
    %v8511 = vld [vmem:[%s8510] ss:$8 sm:$0xf]
    %v8512 = vld [vmem:[%s8510] ss:$8 sm:$0xf0]
    %v8513 = vor.u32 %v8511, %v8512
    %s8514 = scalar_lea.vmem [#allocation2], 198
    %v8515 = vld [vmem:[%s8514] ss:$8 sm:$0xf]
    %v8516 = vld [vmem:[%s8514] ss:$8 sm:$0xf0]
    %v8517 = vor.u32 %v8515, %v8516
    %v8518 = vadd.f32 %v8505, %v7983
    %v8519 = vadd.f32 %v8509, %v7986
    %v8520 = vadd.f32 %v8513, %v7989
    %v8521 = vadd.f32 %v8517, %v7992
    %v8522 = vxor.u32 %v8518, 2147483648
    %v8523 = vxor.u32 %v8519, 2147483648
    %v8524 = vxor.u32 %v8520, 2147483648
    %v8525 = vxor.u32 %v8521, 2147483648
    %v8526 = vmul.f32 %v8522, 1.442695
    %v8527 = vpow.pop %v8526
    %v8528 = vmul.f32 %v8523, 1.442695
    %v8529 = vpow.pop %v8528
    %v8530 = vmul.f32 %v8524, 1.442695
    %v8531 = vpow.pop %v8530
    %v8532 = vmul.f32 %v8525, 1.442695
    %v8533 = vpow.pop %v8532
    %v8534 = vadd.f32 %v8527, 1.0
    %v8535 = vadd.f32 %v8529, 1.0
    %v8536 = vadd.f32 %v8531, 1.0
    %v8537 = vadd.f32 %v8533, 1.0
    %v8538 = vrcp.pop %v8534
    %v8539 = vmul.f32 %v8534, %v8538
    %v8540 = vsub.f32 1.0, %v8539
    %v8541 = vmul.f32 %v8538, %v8540
    %v8542 = vadd.f32 %v8538, %v8541
    %vm8543 = vweird.f32 %v8534
    %vm8544 = vweird.f32 %v8538
    %vm8545 = vmor %vm8543, %vm8544
    %v8546 = vsel %vm8545, %v8538, %v8542
    %v8547 = vand.u32 2147483647, %v8534
    %vm8548 = vcmp.eq.f32.partialorder %v8547, 8.507059e+37
    %v8549 = vand.u32 %v8534, 2147483648
    %v8550 = vor.u32 1.1754944e-38, %v8549
    %v8551 = vsel %vm8548, %v8550, %v8546
    %v8552 = vmul.f32 1.0, %v8551
    %v8553 = vrcp.pop %v8535
    %v8554 = vmul.f32 %v8535, %v8553
    %v8555 = vsub.f32 1.0, %v8554
    %v8556 = vmul.f32 %v8553, %v8555
    %v8557 = vadd.f32 %v8553, %v8556
    %vm8558 = vweird.f32 %v8535
    %vm8559 = vweird.f32 %v8553
    %vm8560 = vmor %vm8558, %vm8559
    %v8561 = vsel %vm8560, %v8553, %v8557
    %v8562 = vand.u32 2147483647, %v8535
    %vm8563 = vcmp.eq.f32.partialorder %v8562, 8.507059e+37
    %v8564 = vand.u32 %v8535, 2147483648
    %v8565 = vor.u32 1.1754944e-38, %v8564
    %v8566 = vsel %vm8563, %v8565, %v8561
    %v8567 = vmul.f32 1.0, %v8566
    %v8568 = vrcp.pop %v8536
    %v8569 = vmul.f32 %v8536, %v8568
    %v8570 = vsub.f32 1.0, %v8569
    %v8571 = vmul.f32 %v8568, %v8570
    %v8572 = vadd.f32 %v8568, %v8571
    %vm8573 = vweird.f32 %v8536
    %vm8574 = vweird.f32 %v8568
    %vm8575 = vmor %vm8573, %vm8574
    %v8576 = vsel %vm8575, %v8568, %v8572
    %v8577 = vand.u32 2147483647, %v8536
    %vm8578 = vcmp.eq.f32.partialorder %v8577, 8.507059e+37
    %v8579 = vand.u32 %v8536, 2147483648
    %v8580 = vor.u32 1.1754944e-38, %v8579
    %v8581 = vsel %vm8578, %v8580, %v8576
    %v8582 = vmul.f32 1.0, %v8581
    %v8583 = vrcp.pop %v8537
    %v8584 = vmul.f32 %v8537, %v8583
    %v8585 = vsub.f32 1.0, %v8584
    %v8586 = vmul.f32 %v8583, %v8585
    %v8587 = vadd.f32 %v8583, %v8586
    %vm8588 = vweird.f32 %v8537
    %vm8589 = vweird.f32 %v8583
    %vm8590 = vmor %vm8588, %vm8589
    %v8591 = vsel %vm8590, %v8583, %v8587
    %v8592 = vand.u32 2147483647, %v8537
    %vm8593 = vcmp.eq.f32.partialorder %v8592, 8.507059e+37
    %v8594 = vand.u32 %v8537, 2147483648
    %v8595 = vor.u32 1.1754944e-38, %v8594
    %v8596 = vsel %vm8593, %v8595, %v8591
    %v8597 = vmul.f32 1.0, %v8596
    %8598 = vrot.lane.b32.xlu0 %v7983, 64
    %v8599 = vpop.permute.xlu0 %8598
    %8600 = vrot.lane.b32.xlu0 %v7986, 64
    %v8601 = vpop.permute.xlu0 %8600
    %8602 = vrot.lane.b32.xlu0 %v7989, 64
    %v8603 = vpop.permute.xlu0 %8602
    %8604 = vrot.lane.b32.xlu0 %v7992, 64
    %v8605 = vpop.permute.xlu0 %8604
    %v8610 = vmul.f32 %v8552, %v8599
    %v8611 = vmul.f32 %v8567, %v8601
    %v8612 = vmul.f32 %v8582, %v8603
    %v8613 = vmul.f32 %v8597, %v8605
    %8618 = vrot.lane.b32.xlu0 %v8610, 64
    %v8619 = vpop.permute.xlu0 %8618
    %8620 = vrot.lane.b32.xlu0 %v8611, 64
    %v8621 = vpop.permute.xlu0 %8620
    %8622 = vrot.lane.b32.xlu0 %v8612, 64
    %v8623 = vpop.permute.xlu0 %8622
    %8624 = vrot.lane.b32.xlu0 %v8613, 64
    %v8625 = vpop.permute.xlu0 %8624
    %v8630 = vadd.f32 %v8505, %v8619
    %v8631 = vadd.f32 %v8509, %v8621
    %v8632 = vadd.f32 %v8513, %v8623
    %v8633 = vadd.f32 %v8517, %v8625
    %v8634 = vtanh.pop %v8630
    %v8635 = vtanh.pop %v8631
    %v8636 = vtanh.pop %v8632
    %v8637 = vtanh.pop %v8633
    %v8638 = vsub.f32 1.0, %v8552
    %v8639 = vsub.f32 1.0, %v8567
    %v8640 = vsub.f32 1.0, %v8582
    %v8641 = vsub.f32 1.0, %v8597
    %8646 = vrot.lane.b32.xlu0 %v8634, 96
    %v8647 = vpop.permute.xlu0 %8646
    %8648 = vrot.lane.b32.xlu0 %v8635, 96
    %v8649 = vpop.permute.xlu0 %8648
    %8650 = vrot.lane.b32.xlu0 %v8636, 96
    %v8651 = vpop.permute.xlu0 %8650
    %8652 = vrot.lane.b32.xlu0 %v8637, 96
    %v8653 = vpop.permute.xlu0 %8652
    %v8658 = vmul.f32 %v8638, %v8647
    %v8659 = vmul.f32 %v8639, %v8649
    %v8660 = vmul.f32 %v8640, %v8651
    %v8661 = vmul.f32 %v8641, %v8653
    %v8662 = vmul.f32 %v8552, %v7917
    %v8663 = vmul.f32 %v8567, %v7918
    %v8664 = vmul.f32 %v8582, %v7919
    %v8665 = vmul.f32 %v8597, %v7920
    %v8666 = vadd.f32 %v8658, %v8662
    %v8667 = vadd.f32 %v8659, %v8663
    %v8668 = vadd.f32 %v8660, %v8664
    %v8669 = vadd.f32 %v8661, %v8665
    %8674 = vrot.lane.b32.xlu0 %v8666, 96
    %v8675 = vpop.permute.xlu0 %8674
    %8676 = vrot.lane.b32.xlu0 %v8667, 96
    %v8677 = vpop.permute.xlu0 %8676
    %8678 = vrot.lane.b32.xlu0 %v8668, 96
    %v8679 = vpop.permute.xlu0 %8678
    %8680 = vrot.lane.b32.xlu0 %v8669, 96
    %v8681 = vpop.permute.xlu0 %8680
    %8686 = vrot.lane.b32.xlu0 %v8312, 64
    %v8687 = vpop.permute.xlu0 %8686
    %8688 = vrot.lane.b32.xlu0 %v8313, 64
    %v8689 = vpop.permute.xlu0 %8688
    %8690 = vrot.lane.b32.xlu0 %v8314, 64
    %v8691 = vpop.permute.xlu0 %8690
    %8692 = vrot.lane.b32.xlu0 %v8315, 64
    %v8693 = vpop.permute.xlu0 %8692
    %v8698 = vsel %vm1943, %v8675, %v8687
    %v8699 = vsel %vm1943, %v8677, %v8689
    %v8700 = vsel %vm1943, %v8679, %v8691
    %v8701 = vsel %vm1943, %v8681, %v8693
    %v8703 = vsel %vm1976, %v8698, 0
    %v8706 = vsel %vm1976, %v8699, 0
    %v8709 = vsel %vm1976, %v8700, 0
    %v8712 = vsel %vm1976, %v8701, 0
    %8714 = vmatpush.msra.mxu0 0.0
    %8715 = vmatpush.msra.mxu0 0.0
    %8716 = vmatpush.msra.mxu0 0.0
    %8717 = vmatpush.msra.mxu0 0.0
    %8718 = vmatpush.msra.mxu0 0.0
    %8719 = vmatpush.msra.mxu0 0.0
    %8720 = vmatpush.msra.mxu0 0.0
    %8721 = vmatpush.msra.mxu0 0.0
    %8722 = vmatpush.msra.mxu0 %v3998
    %8723 = vmatpush.msra.mxu0 %v3995
    %8724 = vmatpush.msra.mxu0 %v3992
    %8725 = vmatpush.msra.mxu0 %v3989
    %8726 = vmatpush.msra.mxu0 %v3986
    %8727 = vmatpush.msra.mxu0 %v3983
    %8728 = vmatpush.msra.mxu0 %v3980
    %8729 = vmatpush.msra.mxu0 %v3977
    %8730 = vmatmul.f32.gmra.mxu0 %v8703
    %v8731 = vpop.f32.mrf.mxu0
    %v8732 = vadd.f32 %v4022, %v8731
    %8733 = vmatmul.f32.gmra.mxu0 %v8706
    %v8734 = vpop.f32.mrf.mxu0
    %v8735 = vadd.f32 %v4022, %v8734
    %8736 = vmatmul.f32.gmra.mxu0 %v8709
    %v8737 = vpop.f32.mrf.mxu0
    %v8738 = vadd.f32 %v4022, %v8737
    %8739 = vmatmul.f32.gmra.mxu0 %v8712
    %v8740 = vpop.f32.mrf.mxu0
    %v8741 = vadd.f32 %v4022, %v8740
    %8742 = vdwg.mxu0
    %8743 = vmatpush.msra.mxu0 0.0
    %8744 = vmatpush.msra.mxu0 0.0
    %8745 = vmatpush.msra.mxu0 0.0
    %8746 = vmatpush.msra.mxu0 0.0
    %8747 = vmatpush.msra.mxu0 0.0
    %8748 = vmatpush.msra.mxu0 0.0
    %8749 = vmatpush.msra.mxu0 0.0
    %8750 = vmatpush.msra.mxu0 0.0
    %8751 = vmatpush.msra.mxu0 %v3999
    %8752 = vmatpush.msra.mxu0 %v3996
    %8753 = vmatpush.msra.mxu0 %v3993
    %8754 = vmatpush.msra.mxu0 %v3990
    %8755 = vmatpush.msra.mxu0 %v3987
    %8756 = vmatpush.msra.mxu0 %v3984
    %8757 = vmatpush.msra.mxu0 %v3981
    %8758 = vmatpush.msra.mxu0 %v3978
    %8759 = vmatmul.f32.gmra.mxu0 %v8703
    %v8760 = vpop.f32.mrf.mxu0
    %v8761 = vadd.f32 %v4187, %v8760
    %8762 = vmatmul.f32.gmra.mxu0 %v8706
    %v8763 = vpop.f32.mrf.mxu0
    %v8764 = vadd.f32 %v4187, %v8763
    %8765 = vmatmul.f32.gmra.mxu0 %v8709
    %v8766 = vpop.f32.mrf.mxu0
    %v8767 = vadd.f32 %v4187, %v8766
    %8768 = vmatmul.f32.gmra.mxu0 %v8712
    %v8769 = vpop.f32.mrf.mxu0
    %v8770 = vadd.f32 %v4187, %v8769
    %8771 = vdwg.mxu0
    %8772 = vmatpush.msra.mxu0 0.0
    %8773 = vmatpush.msra.mxu0 0.0
    %8774 = vmatpush.msra.mxu0 0.0
    %8775 = vmatpush.msra.mxu0 0.0
    %8776 = vmatpush.msra.mxu0 0.0
    %8777 = vmatpush.msra.mxu0 0.0
    %8778 = vmatpush.msra.mxu0 0.0
    %8779 = vmatpush.msra.mxu0 0.0
    %8780 = vmatpush.msra.mxu0 %v4000
    %8781 = vmatpush.msra.mxu0 %v3997
    %8782 = vmatpush.msra.mxu0 %v3994
    %8783 = vmatpush.msra.mxu0 %v3991
    %8784 = vmatpush.msra.mxu0 %v3988
    %8785 = vmatpush.msra.mxu0 %v3985
    %8786 = vmatpush.msra.mxu0 %v3982
    %8787 = vmatpush.msra.mxu0 %v3979
    %8788 = vmatmul.f32.gmra.mxu0 %v8703
    %v8789 = vpop.f32.mrf.mxu0
    %v8790 = vadd.f32 %v4188, %v8789
    %8791 = vmatmul.f32.gmra.mxu0 %v8706
    %v8792 = vpop.f32.mrf.mxu0
    %v8793 = vadd.f32 %v4188, %v8792
    %8794 = vmatmul.f32.gmra.mxu0 %v8709
    %v8795 = vpop.f32.mrf.mxu0
    %v8796 = vadd.f32 %v4188, %v8795
    %8797 = vmatmul.f32.gmra.mxu0 %v8712
    %v8798 = vpop.f32.mrf.mxu0
    %v8799 = vadd.f32 %v4188, %v8798
    %8800 = vdwg.mxu0
    %8805 = vrot.lane.b32.xlu0 %v8732, 96
    %v8806 = vpop.permute.xlu0 %8805
    %8807 = vrot.lane.b32.xlu0 %v8735, 96
    %v8808 = vpop.permute.xlu0 %8807
    %8809 = vrot.lane.b32.xlu0 %v8738, 96
    %v8810 = vpop.permute.xlu0 %8809
    %8811 = vrot.lane.b32.xlu0 %v8741, 96
    %v8812 = vpop.permute.xlu0 %8811
    %v8817 = vadd.f32 %v8761, %v8806
    %v8818 = vadd.f32 %v8764, %v8808
    %v8819 = vadd.f32 %v8767, %v8810
    %v8820 = vadd.f32 %v8770, %v8812
    %v8821 = vxor.u32 %v8817, 2147483648
    %v8822 = vxor.u32 %v8818, 2147483648
    %v8823 = vxor.u32 %v8819, 2147483648
    %v8824 = vxor.u32 %v8820, 2147483648
    %v8825 = vmul.f32 %v8821, 1.442695
    %v8826 = vpow.pop %v8825
    %v8827 = vmul.f32 %v8822, 1.442695
    %v8828 = vpow.pop %v8827
    %v8829 = vmul.f32 %v8823, 1.442695
    %v8830 = vpow.pop %v8829
    %v8831 = vmul.f32 %v8824, 1.442695
    %v8832 = vpow.pop %v8831
    %v8833 = vadd.f32 %v8826, 1.0
    %v8834 = vadd.f32 %v8828, 1.0
    %v8835 = vadd.f32 %v8830, 1.0
    %v8836 = vadd.f32 %v8832, 1.0
    %v8837 = vrcp.pop %v8833
    %v8838 = vmul.f32 %v8833, %v8837
    %v8839 = vsub.f32 1.0, %v8838
    %v8840 = vmul.f32 %v8837, %v8839
    %v8841 = vadd.f32 %v8837, %v8840
    %vm8842 = vweird.f32 %v8833
    %vm8843 = vweird.f32 %v8837
    %vm8844 = vmor %vm8842, %vm8843
    %v8845 = vsel %vm8844, %v8837, %v8841
    %v8846 = vand.u32 2147483647, %v8833
    %vm8847 = vcmp.eq.f32.partialorder %v8846, 8.507059e+37
    %v8848 = vand.u32 %v8833, 2147483648
    %v8849 = vor.u32 1.1754944e-38, %v8848
    %v8850 = vsel %vm8847, %v8849, %v8845
    %v8851 = vmul.f32 1.0, %v8850
    %v8852 = vrcp.pop %v8834
    %v8853 = vmul.f32 %v8834, %v8852
    %v8854 = vsub.f32 1.0, %v8853
    %v8855 = vmul.f32 %v8852, %v8854
    %v8856 = vadd.f32 %v8852, %v8855
    %vm8857 = vweird.f32 %v8834
    %vm8858 = vweird.f32 %v8852
    %vm8859 = vmor %vm8857, %vm8858
    %v8860 = vsel %vm8859, %v8852, %v8856
    %v8861 = vand.u32 2147483647, %v8834
    %vm8862 = vcmp.eq.f32.partialorder %v8861, 8.507059e+37
    %v8863 = vand.u32 %v8834, 2147483648
    %v8864 = vor.u32 1.1754944e-38, %v8863
    %v8865 = vsel %vm8862, %v8864, %v8860
    %v8866 = vmul.f32 1.0, %v8865
    %v8867 = vrcp.pop %v8835
    %v8868 = vmul.f32 %v8835, %v8867
    %v8869 = vsub.f32 1.0, %v8868
    %v8870 = vmul.f32 %v8867, %v8869
    %v8871 = vadd.f32 %v8867, %v8870
    %vm8872 = vweird.f32 %v8835
    %vm8873 = vweird.f32 %v8867
    %vm8874 = vmor %vm8872, %vm8873
    %v8875 = vsel %vm8874, %v8867, %v8871
    %v8876 = vand.u32 2147483647, %v8835
    %vm8877 = vcmp.eq.f32.partialorder %v8876, 8.507059e+37
    %v8878 = vand.u32 %v8835, 2147483648
    %v8879 = vor.u32 1.1754944e-38, %v8878
    %v8880 = vsel %vm8877, %v8879, %v8875
    %v8881 = vmul.f32 1.0, %v8880
    %v8882 = vrcp.pop %v8836
    %v8883 = vmul.f32 %v8836, %v8882
    %v8884 = vsub.f32 1.0, %v8883
    %v8885 = vmul.f32 %v8882, %v8884
    %v8886 = vadd.f32 %v8882, %v8885
    %vm8887 = vweird.f32 %v8836
    %vm8888 = vweird.f32 %v8882
    %vm8889 = vmor %vm8887, %vm8888
    %v8890 = vsel %vm8889, %v8882, %v8886
    %v8891 = vand.u32 2147483647, %v8836
    %vm8892 = vcmp.eq.f32.partialorder %v8891, 8.507059e+37
    %v8893 = vand.u32 %v8836, 2147483648
    %v8894 = vor.u32 1.1754944e-38, %v8893
    %v8895 = vsel %vm8892, %v8894, %v8890
    %v8896 = vmul.f32 1.0, %v8895
    %8901 = vrot.lane.b32.xlu0 %v8761, 96
    %v8902 = vpop.permute.xlu0 %8901
    %8903 = vrot.lane.b32.xlu0 %v8764, 96
    %v8904 = vpop.permute.xlu0 %8903
    %8905 = vrot.lane.b32.xlu0 %v8767, 96
    %v8906 = vpop.permute.xlu0 %8905
    %8907 = vrot.lane.b32.xlu0 %v8770, 96
    %v8908 = vpop.permute.xlu0 %8907
    %v8913 = vadd.f32 %v8761, %v8902
    %v8914 = vadd.f32 %v8764, %v8904
    %v8915 = vadd.f32 %v8767, %v8906
    %v8916 = vadd.f32 %v8770, %v8908
    %v8917 = vxor.u32 %v8913, 2147483648
    %v8918 = vxor.u32 %v8914, 2147483648
    %v8919 = vxor.u32 %v8915, 2147483648
    %v8920 = vxor.u32 %v8916, 2147483648
    %v8921 = vmul.f32 %v8917, 1.442695
    %v8922 = vpow.pop %v8921
    %v8923 = vmul.f32 %v8918, 1.442695
    %v8924 = vpow.pop %v8923
    %v8925 = vmul.f32 %v8919, 1.442695
    %v8926 = vpow.pop %v8925
    %v8927 = vmul.f32 %v8920, 1.442695
    %v8928 = vpow.pop %v8927
    %v8929 = vadd.f32 %v8922, 1.0
    %v8930 = vadd.f32 %v8924, 1.0
    %v8931 = vadd.f32 %v8926, 1.0
    %v8932 = vadd.f32 %v8928, 1.0
    %v8933 = vrcp.pop %v8929
    %v8934 = vmul.f32 %v8929, %v8933
    %v8935 = vsub.f32 1.0, %v8934
    %v8936 = vmul.f32 %v8933, %v8935
    %v8937 = vadd.f32 %v8933, %v8936
    %vm8938 = vweird.f32 %v8929
    %vm8939 = vweird.f32 %v8933
    %vm8940 = vmor %vm8938, %vm8939
    %v8941 = vsel %vm8940, %v8933, %v8937
    %v8942 = vand.u32 2147483647, %v8929
    %vm8943 = vcmp.eq.f32.partialorder %v8942, 8.507059e+37
    %v8944 = vand.u32 %v8929, 2147483648
    %v8945 = vor.u32 1.1754944e-38, %v8944
    %v8946 = vsel %vm8943, %v8945, %v8941
    %v8947 = vmul.f32 1.0, %v8946
    %v8948 = vrcp.pop %v8930
    %v8949 = vmul.f32 %v8930, %v8948
    %v8950 = vsub.f32 1.0, %v8949
    %v8951 = vmul.f32 %v8948, %v8950
    %v8952 = vadd.f32 %v8948, %v8951
    %vm8953 = vweird.f32 %v8930
    %vm8954 = vweird.f32 %v8948
    %vm8955 = vmor %vm8953, %vm8954
    %v8956 = vsel %vm8955, %v8948, %v8952
    %v8957 = vand.u32 2147483647, %v8930
    %vm8958 = vcmp.eq.f32.partialorder %v8957, 8.507059e+37
    %v8959 = vand.u32 %v8930, 2147483648
    %v8960 = vor.u32 1.1754944e-38, %v8959
    %v8961 = vsel %vm8958, %v8960, %v8956
    %v8962 = vmul.f32 1.0, %v8961
    %v8963 = vrcp.pop %v8931
    %v8964 = vmul.f32 %v8931, %v8963
    %v8965 = vsub.f32 1.0, %v8964
    %v8966 = vmul.f32 %v8963, %v8965
    %v8967 = vadd.f32 %v8963, %v8966
    %vm8968 = vweird.f32 %v8931
    %vm8969 = vweird.f32 %v8963
    %vm8970 = vmor %vm8968, %vm8969
    %v8971 = vsel %vm8970, %v8963, %v8967
    %v8972 = vand.u32 2147483647, %v8931
    %vm8973 = vcmp.eq.f32.partialorder %v8972, 8.507059e+37
    %v8974 = vand.u32 %v8931, 2147483648
    %v8975 = vor.u32 1.1754944e-38, %v8974
    %v8976 = vsel %vm8973, %v8975, %v8971
    %v8977 = vmul.f32 1.0, %v8976
    %v8978 = vrcp.pop %v8932
    %v8979 = vmul.f32 %v8932, %v8978
    %v8980 = vsub.f32 1.0, %v8979
    %v8981 = vmul.f32 %v8978, %v8980
    %v8982 = vadd.f32 %v8978, %v8981
    %vm8983 = vweird.f32 %v8932
    %vm8984 = vweird.f32 %v8978
    %vm8985 = vmor %vm8983, %vm8984
    %v8986 = vsel %vm8985, %v8978, %v8982
    %v8987 = vand.u32 2147483647, %v8932
    %vm8988 = vcmp.eq.f32.partialorder %v8987, 8.507059e+37
    %v8989 = vand.u32 %v8932, 2147483648
    %v8990 = vor.u32 1.1754944e-38, %v8989
    %v8991 = vsel %vm8988, %v8990, %v8986
    %v8992 = vmul.f32 1.0, %v8991
    %8993 = vrot.lane.b32.xlu0 %v8761, 32
    %v8994 = vpop.permute.xlu0 %8993
    %8995 = vrot.lane.b32.xlu0 %v8764, 32
    %v8996 = vpop.permute.xlu0 %8995
    %8997 = vrot.lane.b32.xlu0 %v8767, 32
    %v8998 = vpop.permute.xlu0 %8997
    %8999 = vrot.lane.b32.xlu0 %v8770, 32
    %v9000 = vpop.permute.xlu0 %8999
    %v9005 = vmul.f32 %v8851, %v8994
    %v9006 = vmul.f32 %v8866, %v8996
    %v9007 = vmul.f32 %v8881, %v8998
    %v9008 = vmul.f32 %v8896, %v9000
    %9013 = vrot.lane.b32.xlu0 %v9005, 64
    %v9014 = vpop.permute.xlu0 %9013
    %9015 = vrot.lane.b32.xlu0 %v9006, 64
    %v9016 = vpop.permute.xlu0 %9015
    %9017 = vrot.lane.b32.xlu0 %v9007, 64
    %v9018 = vpop.permute.xlu0 %9017
    %9019 = vrot.lane.b32.xlu0 %v9008, 64
    %v9020 = vpop.permute.xlu0 %9019
    %v9025 = vadd.f32 %v8790, %v9014
    %v9026 = vadd.f32 %v8793, %v9016
    %v9027 = vadd.f32 %v8796, %v9018
    %v9028 = vadd.f32 %v8799, %v9020
    %v9029 = vtanh.pop %v9025
    %v9030 = vtanh.pop %v9026
    %v9031 = vtanh.pop %v9027
    %v9032 = vtanh.pop %v9028
    %v9033 = vsub.f32 1.0, %v8947
    %v9034 = vsub.f32 1.0, %v8962
    %v9035 = vsub.f32 1.0, %v8977
    %v9036 = vsub.f32 1.0, %v8992
    %9041 = vrot.lane.b32.xlu0 %v9029, 96
    %v9042 = vpop.permute.xlu0 %9041
    %9043 = vrot.lane.b32.xlu0 %v9030, 96
    %v9044 = vpop.permute.xlu0 %9043
    %9045 = vrot.lane.b32.xlu0 %v9031, 96
    %v9046 = vpop.permute.xlu0 %9045
    %9047 = vrot.lane.b32.xlu0 %v9032, 96
    %v9048 = vpop.permute.xlu0 %9047
    %v9053 = vmul.f32 %v9033, %v9042
    %v9054 = vmul.f32 %v9034, %v9044
    %v9055 = vmul.f32 %v9035, %v9046
    %v9056 = vmul.f32 %v9036, %v9048
    %v9057 = vmul.f32 %v8947, %v8312
    %v9058 = vmul.f32 %v8962, %v8313
    %v9059 = vmul.f32 %v8977, %v8314
    %v9060 = vmul.f32 %v8992, %v8315
    %v9061 = vadd.f32 %v9053, %v9057
    %v9062 = vadd.f32 %v9054, %v9058
    %v9063 = vadd.f32 %v9055, %v9059
    %v9064 = vadd.f32 %v9056, %v9060
    %9067 = vrot.lane.b32.xlu0 %v9061, 32
    %v9068 = vpop.permute.xlu0 %9067
    %9069 = vrot.lane.b32.xlu0 %v9062, 32
    %v9070 = vpop.permute.xlu0 %9069
    %v9073 = vsel %vm1943, %v9068, 0.0
    %v9074 = vsel %vm1943, %v9070, 0.0
    %v9075 = vadd.f32 %v9073, %v9074
    %9076 = vadd.xlane.f32.xlu0 %v9075
    %v9077 = vpop.xlane.xlu0 %9076
    %v9078 = vrot.slane %v9077, 4
    %v9079 = vadd.f32 %v9077, %v9078
    %v9080 = vrot.slane %v9079, 2
    %v9081 = vadd.f32 %v9079, %v9080
    %v9082 = vrot.slane %v9081, 1
    %v9083 = vadd.f32 %v9081, %v9082
    %s9084 = vtos %v9083
    %v9085 = vrcp.pop 512.0
    %v9086 = vmul.f32 512.0, %v9085
    %v9087 = vsub.f32 1.0, %v9086
    %v9088 = vmul.f32 %v9085, %v9087
    %v9089 = vadd.f32 %v9085, %v9088
    %vm9090 = vweird.f32 %v9085
    %v9091 = vsel %vm9090, %v9085, %v9089
    %s9092 = vtos %v9091
    %s9093 = smul.f32 %s9084, %s9092
    %v9094 = vstv %s9093
    %v9095 = vsub.f32 %v9061, %v9094
    %v9096 = vsub.f32 %v9062, %v9094
    %v9097 = vmul.f32 %v9095, %v9095
    %v9098 = vmul.f32 %v9096, %v9096
    %9101 = vrot.lane.b32.xlu0 %v9097, 32
    %v9102 = vpop.permute.xlu0 %9101
    %9103 = vrot.lane.b32.xlu0 %v9098, 32
    %v9104 = vpop.permute.xlu0 %9103
    %v9107 = vsel %vm1943, %v9102, 0.0
    %v9108 = vsel %vm1943, %v9104, 0.0
    %v9109 = vadd.f32 %v9107, %v9108
    %9110 = vadd.xlane.f32.xlu0 %v9109
    %v9111 = vpop.xlane.xlu0 %9110
    %v9112 = vrot.slane %v9111, 4
    %v9113 = vadd.f32 %v9111, %v9112
    %v9114 = vrot.slane %v9113, 2
    %v9115 = vadd.f32 %v9113, %v9114
    %v9116 = vrot.slane %v9115, 1
    %v9117 = vadd.f32 %v9115, %v9116
    %s9118 = vtos %v9117
    %v9119 = vrcp.pop 512.0
    %v9120 = vmul.f32 512.0, %v9119
    %v9121 = vsub.f32 1.0, %v9120
    %v9122 = vmul.f32 %v9119, %v9121
    %v9123 = vadd.f32 %v9119, %v9122
    %vm9124 = vweird.f32 %v9119
    %v9125 = vsel %vm9124, %v9119, %v9123
    %s9126 = vtos %v9125
    %s9127 = smul.f32 %s9118, %s9126
    %s9128 = sadd.f32 %s9127, 1e-12
    %v9129 = vstv %s9128
    %v9130 = vrsqrt.pop %v9129
    %v9131 = vmul.f32 %v9130, %v9129
    %v9132 = vmul.f32 %v9131, %v9130
    %v9133 = vmul.f32 0.5, %v9132
    %v9134 = vsub.f32 1.5, %v9133
    %v9135 = vmul.f32 %v9130, %v9134
    %vm9136 = vweird.f32 %v9129
    %vm9137 = vweird.f32 %v9130
    %vm9138 = vmor %vm9136, %vm9137
    %v9139 = vsel %vm9138, %v9130, %v9135
    %s9140 = vtos %v9139
    %v9141 = vstv %s9140
    %v9142 = vmul.f32 %v9095, %v9141
    %v9143 = vmul.f32 %v9096, %v9141
    %v9144 = vmul.f32 %v9142, %v4636
    %v9145 = vmul.f32 %v9143, %v4638
    %v9146 = vadd.f32 %v9144, %v4646
    %v9147 = vadd.f32 %v9145, %v4648
    %9150 = vrot.lane.b32.xlu0 %v9146, 32
    %v9151 = vpop.permute.xlu0 %9150
    %9152 = vrot.lane.b32.xlu0 %v9147, 32
    %v9153 = vpop.permute.xlu0 %9152
    %9156 = vst.msk [vmem:[#allocation3 + $0x60] sm:$0xff] %vm1943, %v9151
    %9157 = vst.msk [vmem:[#allocation3 + $0x68] sm:$0xff] %vm1943, %v9153
    %9160 = vrot.lane.b32.xlu0 %v9063, 32
    %v9161 = vpop.permute.xlu0 %9160
    %9162 = vrot.lane.b32.xlu0 %v9064, 32
    %v9163 = vpop.permute.xlu0 %9162
    %v9166 = vsel %vm1943, %v9161, 0.0
    %v9167 = vsel %vm1943, %v9163, 0.0
    %v9168 = vadd.f32 %v9166, %v9167
    %9169 = vadd.xlane.f32.xlu0 %v9168
    %v9170 = vpop.xlane.xlu0 %9169
    %v9171 = vrot.slane %v9170, 4
    %v9172 = vadd.f32 %v9170, %v9171
    %v9173 = vrot.slane %v9172, 2
    %v9174 = vadd.f32 %v9172, %v9173
    %v9175 = vrot.slane %v9174, 1
    %v9176 = vadd.f32 %v9174, %v9175
    %s9177 = vtos %v9176
    %v9178 = vrcp.pop 512.0
    %v9179 = vmul.f32 512.0, %v9178
    %v9180 = vsub.f32 1.0, %v9179
    %v9181 = vmul.f32 %v9178, %v9180
    %v9182 = vadd.f32 %v9178, %v9181
    %vm9183 = vweird.f32 %v9178
    %v9184 = vsel %vm9183, %v9178, %v9182
    %s9185 = vtos %v9184
    %s9186 = smul.f32 %s9177, %s9185
    %v9187 = vstv %s9186
    %v9188 = vsub.f32 %v9063, %v9187
    %v9189 = vsub.f32 %v9064, %v9187
    %v9190 = vmul.f32 %v9188, %v9188
    %v9191 = vmul.f32 %v9189, %v9189
    %9194 = vrot.lane.b32.xlu0 %v9190, 32
    %v9195 = vpop.permute.xlu0 %9194
    %9196 = vrot.lane.b32.xlu0 %v9191, 32
    %v9197 = vpop.permute.xlu0 %9196
    %v9200 = vsel %vm1943, %v9195, 0.0
    %v9201 = vsel %vm1943, %v9197, 0.0
    %v9202 = vadd.f32 %v9200, %v9201
    %9203 = vadd.xlane.f32.xlu0 %v9202
    %v9204 = vpop.xlane.xlu0 %9203
    %v9205 = vrot.slane %v9204, 4
    %v9206 = vadd.f32 %v9204, %v9205
    %v9207 = vrot.slane %v9206, 2
    %v9208 = vadd.f32 %v9206, %v9207
    %v9209 = vrot.slane %v9208, 1
    %v9210 = vadd.f32 %v9208, %v9209
    %s9211 = vtos %v9210
    %v9212 = vrcp.pop 512.0
    %v9213 = vmul.f32 512.0, %v9212
    %v9214 = vsub.f32 1.0, %v9213
    %v9215 = vmul.f32 %v9212, %v9214
    %v9216 = vadd.f32 %v9212, %v9215
    %vm9217 = vweird.f32 %v9212
    %v9218 = vsel %vm9217, %v9212, %v9216
    %s9219 = vtos %v9218
    %s9220 = smul.f32 %s9211, %s9219
    %s9221 = sadd.f32 %s9220, 1e-12
    %v9222 = vstv %s9221
    %v9223 = vrsqrt.pop %v9222
    %v9224 = vmul.f32 %v9223, %v9222
    %v9225 = vmul.f32 %v9224, %v9223
    %v9226 = vmul.f32 0.5, %v9225
    %v9227 = vsub.f32 1.5, %v9226
    %v9228 = vmul.f32 %v9223, %v9227
    %vm9229 = vweird.f32 %v9222
    %vm9230 = vweird.f32 %v9223
    %vm9231 = vmor %vm9229, %vm9230
    %v9232 = vsel %vm9231, %v9223, %v9228
    %s9233 = vtos %v9232
    %v9234 = vstv %s9233
    %v9235 = vmul.f32 %v9188, %v9234
    %v9236 = vmul.f32 %v9189, %v9234
    %v9237 = vmul.f32 %v9235, %v4636
    %v9238 = vmul.f32 %v9236, %v4638
    %v9239 = vadd.f32 %v9237, %v4646
    %v9240 = vadd.f32 %v9238, %v4648
    %9243 = vrot.lane.b32.xlu0 %v9239, 32
    %v9244 = vpop.permute.xlu0 %9243
    %9245 = vrot.lane.b32.xlu0 %v9240, 32
    %v9246 = vpop.permute.xlu0 %9245
    %9249 = vst.msk [vmem:[%s4754 + $0x60] sm:$0xff] %vm1943, %v9244
    %9250 = vst.msk [vmem:[%s4754 + $0x68] sm:$0xff] %vm1943, %v9246
    %s9251 = scalar_lea.vmem [#allocation2], 7
    %v9252 = vld [vmem:[%s9251] ss:$8 sm:$0xf]
    %v9253 = vld [vmem:[%s9251] ss:$8 sm:$0xf0]
    %v9254 = vor.u32 %v9252, %v9253
    %s9255 = scalar_lea.vmem [#allocation2], 71
    %v9256 = vld [vmem:[%s9255] ss:$8 sm:$0xf]
    %v9257 = vld [vmem:[%s9255] ss:$8 sm:$0xf0]
    %v9258 = vor.u32 %v9256, %v9257
    %s9259 = scalar_lea.vmem [#allocation2], 135
    %v9260 = vld [vmem:[%s9259] ss:$8 sm:$0xf]
    %v9261 = vld [vmem:[%s9259] ss:$8 sm:$0xf0]
    %v9262 = vor.u32 %v9260, %v9261
    %s9263 = scalar_lea.vmem [#allocation2], 199
    %v9264 = vld [vmem:[%s9263] ss:$8 sm:$0xf]
    %v9265 = vld [vmem:[%s9263] ss:$8 sm:$0xf0]
    %v9266 = vor.u32 %v9264, %v9265
    %v9267 = vadd.f32 %v9254, %v8732
    %v9268 = vadd.f32 %v9258, %v8735
    %v9269 = vadd.f32 %v9262, %v8738
    %v9270 = vadd.f32 %v9266, %v8741
    %v9271 = vxor.u32 %v9267, 2147483648
    %v9272 = vxor.u32 %v9268, 2147483648
    %v9273 = vxor.u32 %v9269, 2147483648
    %v9274 = vxor.u32 %v9270, 2147483648
    %v9275 = vmul.f32 %v9271, 1.442695
    %v9276 = vpow.pop %v9275
    %v9277 = vmul.f32 %v9272, 1.442695
    %v9278 = vpow.pop %v9277
    %v9279 = vmul.f32 %v9273, 1.442695
    %v9280 = vpow.pop %v9279
    %v9281 = vmul.f32 %v9274, 1.442695
    %v9282 = vpow.pop %v9281
    %v9283 = vadd.f32 %v9276, 1.0
    %v9284 = vadd.f32 %v9278, 1.0
    %v9285 = vadd.f32 %v9280, 1.0
    %v9286 = vadd.f32 %v9282, 1.0
    %v9287 = vrcp.pop %v9283
    %v9288 = vmul.f32 %v9283, %v9287
    %v9289 = vsub.f32 1.0, %v9288
    %v9290 = vmul.f32 %v9287, %v9289
    %v9291 = vadd.f32 %v9287, %v9290
    %vm9292 = vweird.f32 %v9283
    %vm9293 = vweird.f32 %v9287
    %vm9294 = vmor %vm9292, %vm9293
    %v9295 = vsel %vm9294, %v9287, %v9291
    %v9296 = vand.u32 2147483647, %v9283
    %vm9297 = vcmp.eq.f32.partialorder %v9296, 8.507059e+37
    %v9298 = vand.u32 %v9283, 2147483648
    %v9299 = vor.u32 1.1754944e-38, %v9298
    %v9300 = vsel %vm9297, %v9299, %v9295
    %v9301 = vmul.f32 1.0, %v9300
    %v9302 = vrcp.pop %v9284
    %v9303 = vmul.f32 %v9284, %v9302
    %v9304 = vsub.f32 1.0, %v9303
    %v9305 = vmul.f32 %v9302, %v9304
    %v9306 = vadd.f32 %v9302, %v9305
    %vm9307 = vweird.f32 %v9284
    %vm9308 = vweird.f32 %v9302
    %vm9309 = vmor %vm9307, %vm9308
    %v9310 = vsel %vm9309, %v9302, %v9306
    %v9311 = vand.u32 2147483647, %v9284
    %vm9312 = vcmp.eq.f32.partialorder %v9311, 8.507059e+37
    %v9313 = vand.u32 %v9284, 2147483648
    %v9314 = vor.u32 1.1754944e-38, %v9313
    %v9315 = vsel %vm9312, %v9314, %v9310
    %v9316 = vmul.f32 1.0, %v9315
    %v9317 = vrcp.pop %v9285
    %v9318 = vmul.f32 %v9285, %v9317
    %v9319 = vsub.f32 1.0, %v9318
    %v9320 = vmul.f32 %v9317, %v9319
    %v9321 = vadd.f32 %v9317, %v9320
    %vm9322 = vweird.f32 %v9285
    %vm9323 = vweird.f32 %v9317
    %vm9324 = vmor %vm9322, %vm9323
    %v9325 = vsel %vm9324, %v9317, %v9321
    %v9326 = vand.u32 2147483647, %v9285
    %vm9327 = vcmp.eq.f32.partialorder %v9326, 8.507059e+37
    %v9328 = vand.u32 %v9285, 2147483648
    %v9329 = vor.u32 1.1754944e-38, %v9328
    %v9330 = vsel %vm9327, %v9329, %v9325
    %v9331 = vmul.f32 1.0, %v9330
    %v9332 = vrcp.pop %v9286
    %v9333 = vmul.f32 %v9286, %v9332
    %v9334 = vsub.f32 1.0, %v9333
    %v9335 = vmul.f32 %v9332, %v9334
    %v9336 = vadd.f32 %v9332, %v9335
    %vm9337 = vweird.f32 %v9286
    %vm9338 = vweird.f32 %v9332
    %vm9339 = vmor %vm9337, %vm9338
    %v9340 = vsel %vm9339, %v9332, %v9336
    %v9341 = vand.u32 2147483647, %v9286
    %vm9342 = vcmp.eq.f32.partialorder %v9341, 8.507059e+37
    %v9343 = vand.u32 %v9286, 2147483648
    %v9344 = vor.u32 1.1754944e-38, %v9343
    %v9345 = vsel %vm9342, %v9344, %v9340
    %v9346 = vmul.f32 1.0, %v9345
    %9347 = vrot.lane.b32.xlu0 %v8732, 64
    %v9348 = vpop.permute.xlu0 %9347
    %9349 = vrot.lane.b32.xlu0 %v8735, 64
    %v9350 = vpop.permute.xlu0 %9349
    %9351 = vrot.lane.b32.xlu0 %v8738, 64
    %v9352 = vpop.permute.xlu0 %9351
    %9353 = vrot.lane.b32.xlu0 %v8741, 64
    %v9354 = vpop.permute.xlu0 %9353
    %v9359 = vmul.f32 %v9301, %v9348
    %v9360 = vmul.f32 %v9316, %v9350
    %v9361 = vmul.f32 %v9331, %v9352
    %v9362 = vmul.f32 %v9346, %v9354
    %9367 = vrot.lane.b32.xlu0 %v9359, 64
    %v9368 = vpop.permute.xlu0 %9367
    %9369 = vrot.lane.b32.xlu0 %v9360, 64
    %v9370 = vpop.permute.xlu0 %9369
    %9371 = vrot.lane.b32.xlu0 %v9361, 64
    %v9372 = vpop.permute.xlu0 %9371
    %9373 = vrot.lane.b32.xlu0 %v9362, 64
    %v9374 = vpop.permute.xlu0 %9373
    %v9379 = vadd.f32 %v9254, %v9368
    %v9380 = vadd.f32 %v9258, %v9370
    %v9381 = vadd.f32 %v9262, %v9372
    %v9382 = vadd.f32 %v9266, %v9374
    %v9383 = vtanh.pop %v9379
    %v9384 = vtanh.pop %v9380
    %v9385 = vtanh.pop %v9381
    %v9386 = vtanh.pop %v9382
    %v9387 = vsub.f32 1.0, %v9301
    %v9388 = vsub.f32 1.0, %v9316
    %v9389 = vsub.f32 1.0, %v9331
    %v9390 = vsub.f32 1.0, %v9346
    %9395 = vrot.lane.b32.xlu0 %v9383, 96
    %v9396 = vpop.permute.xlu0 %9395
    %9397 = vrot.lane.b32.xlu0 %v9384, 96
    %v9398 = vpop.permute.xlu0 %9397
    %9399 = vrot.lane.b32.xlu0 %v9385, 96
    %v9400 = vpop.permute.xlu0 %9399
    %9401 = vrot.lane.b32.xlu0 %v9386, 96
    %v9402 = vpop.permute.xlu0 %9401
    %v9407 = vmul.f32 %v9387, %v9396
    %v9408 = vmul.f32 %v9388, %v9398
    %v9409 = vmul.f32 %v9389, %v9400
    %v9410 = vmul.f32 %v9390, %v9402
    %v9411 = vmul.f32 %v9301, %v8666
    %v9412 = vmul.f32 %v9316, %v8667
    %v9413 = vmul.f32 %v9331, %v8668
    %v9414 = vmul.f32 %v9346, %v8669
    %v9415 = vadd.f32 %v9407, %v9411
    %v9416 = vadd.f32 %v9408, %v9412
    %v9417 = vadd.f32 %v9409, %v9413
    %v9418 = vadd.f32 %v9410, %v9414
    %9423 = vrot.lane.b32.xlu0 %v9415, 96
    %v9424 = vpop.permute.xlu0 %9423
    %9425 = vrot.lane.b32.xlu0 %v9416, 96
    %v9426 = vpop.permute.xlu0 %9425
    %9427 = vrot.lane.b32.xlu0 %v9417, 96
    %v9428 = vpop.permute.xlu0 %9427
    %9429 = vrot.lane.b32.xlu0 %v9418, 96
    %v9430 = vpop.permute.xlu0 %9429
    %9435 = vrot.lane.b32.xlu0 %v9061, 64
    %v9436 = vpop.permute.xlu0 %9435
    %9437 = vrot.lane.b32.xlu0 %v9062, 64
    %v9438 = vpop.permute.xlu0 %9437
    %9439 = vrot.lane.b32.xlu0 %v9063, 64
    %v9440 = vpop.permute.xlu0 %9439
    %9441 = vrot.lane.b32.xlu0 %v9064, 64
    %v9442 = vpop.permute.xlu0 %9441
    %v9447 = vsel %vm1943, %v9424, %v9436
    %v9448 = vsel %vm1943, %v9426, %v9438
    %v9449 = vsel %vm1943, %v9428, %v9440
    %v9450 = vsel %vm1943, %v9430, %v9442
    %v9452 = vsel %vm1976, %v9447, 0
    %v9455 = vsel %vm1976, %v9448, 0
    %v9458 = vsel %vm1976, %v9449, 0
    %v9461 = vsel %vm1976, %v9450, 0
    %9463 = vmatpush.msra.mxu0 0.0
    %9464 = vmatpush.msra.mxu0 0.0
    %9465 = vmatpush.msra.mxu0 0.0
    %9466 = vmatpush.msra.mxu0 0.0
    %9467 = vmatpush.msra.mxu0 0.0
    %9468 = vmatpush.msra.mxu0 0.0
    %9469 = vmatpush.msra.mxu0 0.0
    %9470 = vmatpush.msra.mxu0 0.0
    %9471 = vmatpush.msra.mxu0 %v3998
    %9472 = vmatpush.msra.mxu0 %v3995
    %9473 = vmatpush.msra.mxu0 %v3992
    %9474 = vmatpush.msra.mxu0 %v3989
    %9475 = vmatpush.msra.mxu0 %v3986
    %9476 = vmatpush.msra.mxu0 %v3983
    %9477 = vmatpush.msra.mxu0 %v3980
    %9478 = vmatpush.msra.mxu0 %v3977
    %9479 = vmatmul.f32.gmra.mxu0 %v9452
    %v9480 = vpop.f32.mrf.mxu0
    %v9481 = vadd.f32 %v4022, %v9480
    %9482 = vmatmul.f32.gmra.mxu0 %v9455
    %v9483 = vpop.f32.mrf.mxu0
    %v9484 = vadd.f32 %v4022, %v9483
    %9485 = vmatmul.f32.gmra.mxu0 %v9458
    %v9486 = vpop.f32.mrf.mxu0
    %v9487 = vadd.f32 %v4022, %v9486
    %9488 = vmatmul.f32.gmra.mxu0 %v9461
    %v9489 = vpop.f32.mrf.mxu0
    %v9490 = vadd.f32 %v4022, %v9489
    %9491 = vdwg.mxu0
    %9492 = vmatpush.msra.mxu0 0.0
    %9493 = vmatpush.msra.mxu0 0.0
    %9494 = vmatpush.msra.mxu0 0.0
    %9495 = vmatpush.msra.mxu0 0.0
    %9496 = vmatpush.msra.mxu0 0.0
    %9497 = vmatpush.msra.mxu0 0.0
    %9498 = vmatpush.msra.mxu0 0.0
    %9499 = vmatpush.msra.mxu0 0.0
    %9500 = vmatpush.msra.mxu0 %v3999
    %9501 = vmatpush.msra.mxu0 %v3996
    %9502 = vmatpush.msra.mxu0 %v3993
    %9503 = vmatpush.msra.mxu0 %v3990
    %9504 = vmatpush.msra.mxu0 %v3987
    %9505 = vmatpush.msra.mxu0 %v3984
    %9506 = vmatpush.msra.mxu0 %v3981
    %9507 = vmatpush.msra.mxu0 %v3978
    %9508 = vmatmul.f32.gmra.mxu0 %v9452
    %v9509 = vpop.f32.mrf.mxu0
    %v9510 = vadd.f32 %v4187, %v9509
    %9511 = vmatmul.f32.gmra.mxu0 %v9455
    %v9512 = vpop.f32.mrf.mxu0
    %v9513 = vadd.f32 %v4187, %v9512
    %9514 = vmatmul.f32.gmra.mxu0 %v9458
    %v9515 = vpop.f32.mrf.mxu0
    %v9516 = vadd.f32 %v4187, %v9515
    %9517 = vmatmul.f32.gmra.mxu0 %v9461
    %v9518 = vpop.f32.mrf.mxu0
    %v9519 = vadd.f32 %v4187, %v9518
    %9520 = vdwg.mxu0
    %9521 = vmatpush.msra.mxu0 0.0
    %9522 = vmatpush.msra.mxu0 0.0
    %9523 = vmatpush.msra.mxu0 0.0
    %9524 = vmatpush.msra.mxu0 0.0
    %9525 = vmatpush.msra.mxu0 0.0
    %9526 = vmatpush.msra.mxu0 0.0
    %9527 = vmatpush.msra.mxu0 0.0
    %9528 = vmatpush.msra.mxu0 0.0
    %9529 = vmatpush.msra.mxu0 %v4000
    %9530 = vmatpush.msra.mxu0 %v3997
    %9531 = vmatpush.msra.mxu0 %v3994
    %9532 = vmatpush.msra.mxu0 %v3991
    %9533 = vmatpush.msra.mxu0 %v3988
    %9534 = vmatpush.msra.mxu0 %v3985
    %9535 = vmatpush.msra.mxu0 %v3982
    %9536 = vmatpush.msra.mxu0 %v3979
    %9537 = vmatmul.f32.gmra.mxu0 %v9452
    %v9538 = vpop.f32.mrf.mxu0
    %v9539 = vadd.f32 %v4188, %v9538
    %9540 = vmatmul.f32.gmra.mxu0 %v9455
    %v9541 = vpop.f32.mrf.mxu0
    %v9542 = vadd.f32 %v4188, %v9541
    %9543 = vmatmul.f32.gmra.mxu0 %v9458
    %v9544 = vpop.f32.mrf.mxu0
    %v9545 = vadd.f32 %v4188, %v9544
    %9546 = vmatmul.f32.gmra.mxu0 %v9461
    %v9547 = vpop.f32.mrf.mxu0
    %v9548 = vadd.f32 %v4188, %v9547
    %9549 = vdwg.mxu0
    %9554 = vrot.lane.b32.xlu0 %v9481, 96
    %v9555 = vpop.permute.xlu0 %9554
    %9556 = vrot.lane.b32.xlu0 %v9484, 96
    %v9557 = vpop.permute.xlu0 %9556
    %9558 = vrot.lane.b32.xlu0 %v9487, 96
    %v9559 = vpop.permute.xlu0 %9558
    %9560 = vrot.lane.b32.xlu0 %v9490, 96
    %v9561 = vpop.permute.xlu0 %9560
    %v9566 = vadd.f32 %v9510, %v9555
    %v9567 = vadd.f32 %v9513, %v9557
    %v9568 = vadd.f32 %v9516, %v9559
    %v9569 = vadd.f32 %v9519, %v9561
    %v9570 = vxor.u32 %v9566, 2147483648
    %v9571 = vxor.u32 %v9567, 2147483648
    %v9572 = vxor.u32 %v9568, 2147483648
    %v9573 = vxor.u32 %v9569, 2147483648
    %v9574 = vmul.f32 %v9570, 1.442695
    %v9575 = vpow.pop %v9574
    %v9576 = vmul.f32 %v9571, 1.442695
    %v9577 = vpow.pop %v9576
    %v9578 = vmul.f32 %v9572, 1.442695
    %v9579 = vpow.pop %v9578
    %v9580 = vmul.f32 %v9573, 1.442695
    %v9581 = vpow.pop %v9580
    %v9582 = vadd.f32 %v9575, 1.0
    %v9583 = vadd.f32 %v9577, 1.0
    %v9584 = vadd.f32 %v9579, 1.0
    %v9585 = vadd.f32 %v9581, 1.0
    %v9586 = vrcp.pop %v9582
    %v9587 = vmul.f32 %v9582, %v9586
    %v9588 = vsub.f32 1.0, %v9587
    %v9589 = vmul.f32 %v9586, %v9588
    %v9590 = vadd.f32 %v9586, %v9589
    %vm9591 = vweird.f32 %v9582
    %vm9592 = vweird.f32 %v9586
    %vm9593 = vmor %vm9591, %vm9592
    %v9594 = vsel %vm9593, %v9586, %v9590
    %v9595 = vand.u32 2147483647, %v9582
    %vm9596 = vcmp.eq.f32.partialorder %v9595, 8.507059e+37
    %v9597 = vand.u32 %v9582, 2147483648
    %v9598 = vor.u32 1.1754944e-38, %v9597
    %v9599 = vsel %vm9596, %v9598, %v9594
    %v9600 = vmul.f32 1.0, %v9599
    %v9601 = vrcp.pop %v9583
    %v9602 = vmul.f32 %v9583, %v9601
    %v9603 = vsub.f32 1.0, %v9602
    %v9604 = vmul.f32 %v9601, %v9603
    %v9605 = vadd.f32 %v9601, %v9604
    %vm9606 = vweird.f32 %v9583
    %vm9607 = vweird.f32 %v9601
    %vm9608 = vmor %vm9606, %vm9607
    %v9609 = vsel %vm9608, %v9601, %v9605
    %v9610 = vand.u32 2147483647, %v9583
    %vm9611 = vcmp.eq.f32.partialorder %v9610, 8.507059e+37
    %v9612 = vand.u32 %v9583, 2147483648
    %v9613 = vor.u32 1.1754944e-38, %v9612
    %v9614 = vsel %vm9611, %v9613, %v9609
    %v9615 = vmul.f32 1.0, %v9614
    %v9616 = vrcp.pop %v9584
    %v9617 = vmul.f32 %v9584, %v9616
    %v9618 = vsub.f32 1.0, %v9617
    %v9619 = vmul.f32 %v9616, %v9618
    %v9620 = vadd.f32 %v9616, %v9619
    %vm9621 = vweird.f32 %v9584
    %vm9622 = vweird.f32 %v9616
    %vm9623 = vmor %vm9621, %vm9622
    %v9624 = vsel %vm9623, %v9616, %v9620
    %v9625 = vand.u32 2147483647, %v9584
    %vm9626 = vcmp.eq.f32.partialorder %v9625, 8.507059e+37
    %v9627 = vand.u32 %v9584, 2147483648
    %v9628 = vor.u32 1.1754944e-38, %v9627
    %v9629 = vsel %vm9626, %v9628, %v9624
    %v9630 = vmul.f32 1.0, %v9629
    %v9631 = vrcp.pop %v9585
    %v9632 = vmul.f32 %v9585, %v9631
    %v9633 = vsub.f32 1.0, %v9632
    %v9634 = vmul.f32 %v9631, %v9633
    %v9635 = vadd.f32 %v9631, %v9634
    %vm9636 = vweird.f32 %v9585
    %vm9637 = vweird.f32 %v9631
    %vm9638 = vmor %vm9636, %vm9637
    %v9639 = vsel %vm9638, %v9631, %v9635
    %v9640 = vand.u32 2147483647, %v9585
    %vm9641 = vcmp.eq.f32.partialorder %v9640, 8.507059e+37
    %v9642 = vand.u32 %v9585, 2147483648
    %v9643 = vor.u32 1.1754944e-38, %v9642
    %v9644 = vsel %vm9641, %v9643, %v9639
    %v9645 = vmul.f32 1.0, %v9644
    %9650 = vrot.lane.b32.xlu0 %v9510, 96
    %v9651 = vpop.permute.xlu0 %9650
    %9652 = vrot.lane.b32.xlu0 %v9513, 96
    %v9653 = vpop.permute.xlu0 %9652
    %9654 = vrot.lane.b32.xlu0 %v9516, 96
    %v9655 = vpop.permute.xlu0 %9654
    %9656 = vrot.lane.b32.xlu0 %v9519, 96
    %v9657 = vpop.permute.xlu0 %9656
    %v9662 = vadd.f32 %v9510, %v9651
    %v9663 = vadd.f32 %v9513, %v9653
    %v9664 = vadd.f32 %v9516, %v9655
    %v9665 = vadd.f32 %v9519, %v9657
    %v9666 = vxor.u32 %v9662, 2147483648
    %v9667 = vxor.u32 %v9663, 2147483648
    %v9668 = vxor.u32 %v9664, 2147483648
    %v9669 = vxor.u32 %v9665, 2147483648
    %v9670 = vmul.f32 %v9666, 1.442695
    %v9671 = vpow.pop %v9670
    %v9672 = vmul.f32 %v9667, 1.442695
    %v9673 = vpow.pop %v9672
    %v9674 = vmul.f32 %v9668, 1.442695
    %v9675 = vpow.pop %v9674
    %v9676 = vmul.f32 %v9669, 1.442695
    %v9677 = vpow.pop %v9676
    %v9678 = vadd.f32 %v9671, 1.0
    %v9679 = vadd.f32 %v9673, 1.0
    %v9680 = vadd.f32 %v9675, 1.0
    %v9681 = vadd.f32 %v9677, 1.0
    %v9682 = vrcp.pop %v9678
    %v9683 = vmul.f32 %v9678, %v9682
    %v9684 = vsub.f32 1.0, %v9683
    %v9685 = vmul.f32 %v9682, %v9684
    %v9686 = vadd.f32 %v9682, %v9685
    %vm9687 = vweird.f32 %v9678
    %vm9688 = vweird.f32 %v9682
    %vm9689 = vmor %vm9687, %vm9688
    %v9690 = vsel %vm9689, %v9682, %v9686
    %v9691 = vand.u32 2147483647, %v9678
    %vm9692 = vcmp.eq.f32.partialorder %v9691, 8.507059e+37
    %v9693 = vand.u32 %v9678, 2147483648
    %v9694 = vor.u32 1.1754944e-38, %v9693
    %v9695 = vsel %vm9692, %v9694, %v9690
    %v9696 = vmul.f32 1.0, %v9695
    %v9697 = vrcp.pop %v9679
    %v9698 = vmul.f32 %v9679, %v9697
    %v9699 = vsub.f32 1.0, %v9698
    %v9700 = vmul.f32 %v9697, %v9699
    %v9701 = vadd.f32 %v9697, %v9700
    %vm9702 = vweird.f32 %v9679
    %vm9703 = vweird.f32 %v9697
    %vm9704 = vmor %vm9702, %vm9703
    %v9705 = vsel %vm9704, %v9697, %v9701
    %v9706 = vand.u32 2147483647, %v9679
    %vm9707 = vcmp.eq.f32.partialorder %v9706, 8.507059e+37
    %v9708 = vand.u32 %v9679, 2147483648
    %v9709 = vor.u32 1.1754944e-38, %v9708
    %v9710 = vsel %vm9707, %v9709, %v9705
    %v9711 = vmul.f32 1.0, %v9710
    %v9712 = vrcp.pop %v9680
    %v9713 = vmul.f32 %v9680, %v9712
    %v9714 = vsub.f32 1.0, %v9713
    %v9715 = vmul.f32 %v9712, %v9714
    %v9716 = vadd.f32 %v9712, %v9715
    %vm9717 = vweird.f32 %v9680
    %vm9718 = vweird.f32 %v9712
    %vm9719 = vmor %vm9717, %vm9718
    %v9720 = vsel %vm9719, %v9712, %v9716
    %v9721 = vand.u32 2147483647, %v9680
    %vm9722 = vcmp.eq.f32.partialorder %v9721, 8.507059e+37
    %v9723 = vand.u32 %v9680, 2147483648
    %v9724 = vor.u32 1.1754944e-38, %v9723
    %v9725 = vsel %vm9722, %v9724, %v9720
    %v9726 = vmul.f32 1.0, %v9725
    %v9727 = vrcp.pop %v9681
    %v9728 = vmul.f32 %v9681, %v9727
    %v9729 = vsub.f32 1.0, %v9728
    %v9730 = vmul.f32 %v9727, %v9729
    %v9731 = vadd.f32 %v9727, %v9730
    %vm9732 = vweird.f32 %v9681
    %vm9733 = vweird.f32 %v9727
    %vm9734 = vmor %vm9732, %vm9733
    %v9735 = vsel %vm9734, %v9727, %v9731
    %v9736 = vand.u32 2147483647, %v9681
    %vm9737 = vcmp.eq.f32.partialorder %v9736, 8.507059e+37
    %v9738 = vand.u32 %v9681, 2147483648
    %v9739 = vor.u32 1.1754944e-38, %v9738
    %v9740 = vsel %vm9737, %v9739, %v9735
    %v9741 = vmul.f32 1.0, %v9740
    %9742 = vrot.lane.b32.xlu0 %v9510, 32
    %v9743 = vpop.permute.xlu0 %9742
    %9744 = vrot.lane.b32.xlu0 %v9513, 32
    %v9745 = vpop.permute.xlu0 %9744
    %9746 = vrot.lane.b32.xlu0 %v9516, 32
    %v9747 = vpop.permute.xlu0 %9746
    %9748 = vrot.lane.b32.xlu0 %v9519, 32
    %v9749 = vpop.permute.xlu0 %9748
    %v9754 = vmul.f32 %v9600, %v9743
    %v9755 = vmul.f32 %v9615, %v9745
    %v9756 = vmul.f32 %v9630, %v9747
    %v9757 = vmul.f32 %v9645, %v9749
    %9762 = vrot.lane.b32.xlu0 %v9754, 64
    %v9763 = vpop.permute.xlu0 %9762
    %9764 = vrot.lane.b32.xlu0 %v9755, 64
    %v9765 = vpop.permute.xlu0 %9764
    %9766 = vrot.lane.b32.xlu0 %v9756, 64
    %v9767 = vpop.permute.xlu0 %9766
    %9768 = vrot.lane.b32.xlu0 %v9757, 64
    %v9769 = vpop.permute.xlu0 %9768
    %v9774 = vadd.f32 %v9539, %v9763
    %v9775 = vadd.f32 %v9542, %v9765
    %v9776 = vadd.f32 %v9545, %v9767
    %v9777 = vadd.f32 %v9548, %v9769
    %v9778 = vtanh.pop %v9774
    %v9779 = vtanh.pop %v9775
    %v9780 = vtanh.pop %v9776
    %v9781 = vtanh.pop %v9777
    %v9782 = vsub.f32 1.0, %v9696
    %v9783 = vsub.f32 1.0, %v9711
    %v9784 = vsub.f32 1.0, %v9726
    %v9785 = vsub.f32 1.0, %v9741
    %9790 = vrot.lane.b32.xlu0 %v9778, 96
    %v9791 = vpop.permute.xlu0 %9790
    %9792 = vrot.lane.b32.xlu0 %v9779, 96
    %v9793 = vpop.permute.xlu0 %9792
    %9794 = vrot.lane.b32.xlu0 %v9780, 96
    %v9795 = vpop.permute.xlu0 %9794
    %9796 = vrot.lane.b32.xlu0 %v9781, 96
    %v9797 = vpop.permute.xlu0 %9796
    %v9802 = vmul.f32 %v9782, %v9791
    %v9803 = vmul.f32 %v9783, %v9793
    %v9804 = vmul.f32 %v9784, %v9795
    %v9805 = vmul.f32 %v9785, %v9797
    %v9806 = vmul.f32 %v9696, %v9061
    %v9807 = vmul.f32 %v9711, %v9062
    %v9808 = vmul.f32 %v9726, %v9063
    %v9809 = vmul.f32 %v9741, %v9064
    %v9810 = vadd.f32 %v9802, %v9806
    %v9811 = vadd.f32 %v9803, %v9807
    %v9812 = vadd.f32 %v9804, %v9808
    %v9813 = vadd.f32 %v9805, %v9809
    %9816 = vrot.lane.b32.xlu0 %v9810, 32
    %v9817 = vpop.permute.xlu0 %9816
    %9818 = vrot.lane.b32.xlu0 %v9811, 32
    %v9819 = vpop.permute.xlu0 %9818
    %v9822 = vsel %vm1943, %v9817, 0.0
    %v9823 = vsel %vm1943, %v9819, 0.0
    %v9824 = vadd.f32 %v9822, %v9823
    %9825 = vadd.xlane.f32.xlu0 %v9824
    %v9826 = vpop.xlane.xlu0 %9825
    %v9827 = vrot.slane %v9826, 4
    %v9828 = vadd.f32 %v9826, %v9827
    %v9829 = vrot.slane %v9828, 2
    %v9830 = vadd.f32 %v9828, %v9829
    %v9831 = vrot.slane %v9830, 1
    %v9832 = vadd.f32 %v9830, %v9831
    %s9833 = vtos %v9832
    %v9834 = vrcp.pop 512.0
    %v9835 = vmul.f32 512.0, %v9834
    %v9836 = vsub.f32 1.0, %v9835
    %v9837 = vmul.f32 %v9834, %v9836
    %v9838 = vadd.f32 %v9834, %v9837
    %vm9839 = vweird.f32 %v9834
    %v9840 = vsel %vm9839, %v9834, %v9838
    %s9841 = vtos %v9840
    %s9842 = smul.f32 %s9833, %s9841
    %v9843 = vstv %s9842
    %v9844 = vsub.f32 %v9810, %v9843
    %v9845 = vsub.f32 %v9811, %v9843
    %v9846 = vmul.f32 %v9844, %v9844
    %v9847 = vmul.f32 %v9845, %v9845
    %9850 = vrot.lane.b32.xlu0 %v9846, 32
    %v9851 = vpop.permute.xlu0 %9850
    %9852 = vrot.lane.b32.xlu0 %v9847, 32
    %v9853 = vpop.permute.xlu0 %9852
    %v9856 = vsel %vm1943, %v9851, 0.0
    %v9857 = vsel %vm1943, %v9853, 0.0
    %v9858 = vadd.f32 %v9856, %v9857
    %9859 = vadd.xlane.f32.xlu0 %v9858
    %v9860 = vpop.xlane.xlu0 %9859
    %v9861 = vrot.slane %v9860, 4
    %v9862 = vadd.f32 %v9860, %v9861
    %v9863 = vrot.slane %v9862, 2
    %v9864 = vadd.f32 %v9862, %v9863
    %v9865 = vrot.slane %v9864, 1
    %v9866 = vadd.f32 %v9864, %v9865
    %s9867 = vtos %v9866
    %v9868 = vrcp.pop 512.0
    %v9869 = vmul.f32 512.0, %v9868
    %v9870 = vsub.f32 1.0, %v9869
    %v9871 = vmul.f32 %v9868, %v9870
    %v9872 = vadd.f32 %v9868, %v9871
    %vm9873 = vweird.f32 %v9868
    %v9874 = vsel %vm9873, %v9868, %v9872
    %s9875 = vtos %v9874
    %s9876 = smul.f32 %s9867, %s9875
    %s9877 = sadd.f32 %s9876, 1e-12
    %v9878 = vstv %s9877
    %v9879 = vrsqrt.pop %v9878
    %v9880 = vmul.f32 %v9879, %v9878
    %v9881 = vmul.f32 %v9880, %v9879
    %v9882 = vmul.f32 0.5, %v9881
    %v9883 = vsub.f32 1.5, %v9882
    %v9884 = vmul.f32 %v9879, %v9883
    %vm9885 = vweird.f32 %v9878
    %vm9886 = vweird.f32 %v9879
    %vm9887 = vmor %vm9885, %vm9886
    %v9888 = vsel %vm9887, %v9879, %v9884
    %s9889 = vtos %v9888
    %v9890 = vstv %s9889
    %v9891 = vmul.f32 %v9844, %v9890
    %v9892 = vmul.f32 %v9845, %v9890
    %v9893 = vmul.f32 %v9891, %v4636
    %v9894 = vmul.f32 %v9892, %v4638
    %v9895 = vadd.f32 %v9893, %v4646
    %v9896 = vadd.f32 %v9894, %v4648
    %9899 = vrot.lane.b32.xlu0 %v9895, 32
    %v9900 = vpop.permute.xlu0 %9899
    %9901 = vrot.lane.b32.xlu0 %v9896, 32
    %v9902 = vpop.permute.xlu0 %9901
    %9905 = vst.msk [vmem:[#allocation3 + $0x70] sm:$0xff] %vm1943, %v9900
    %9906 = vst.msk [vmem:[#allocation3 + $0x78] sm:$0xff] %vm1943, %v9902
    %9909 = vrot.lane.b32.xlu0 %v9812, 32
    %v9910 = vpop.permute.xlu0 %9909
    %9911 = vrot.lane.b32.xlu0 %v9813, 32
    %v9912 = vpop.permute.xlu0 %9911
    %v9915 = vsel %vm1943, %v9910, 0.0
    %v9916 = vsel %vm1943, %v9912, 0.0
    %v9917 = vadd.f32 %v9915, %v9916
    %9918 = vadd.xlane.f32.xlu0 %v9917
    %v9919 = vpop.xlane.xlu0 %9918
    %v9920 = vrot.slane %v9919, 4
    %v9921 = vadd.f32 %v9919, %v9920
    %v9922 = vrot.slane %v9921, 2
    %v9923 = vadd.f32 %v9921, %v9922
    %v9924 = vrot.slane %v9923, 1
    %v9925 = vadd.f32 %v9923, %v9924
    %s9926 = vtos %v9925
    %v9927 = vrcp.pop 512.0
    %v9928 = vmul.f32 512.0, %v9927
    %v9929 = vsub.f32 1.0, %v9928
    %v9930 = vmul.f32 %v9927, %v9929
    %v9931 = vadd.f32 %v9927, %v9930
    %vm9932 = vweird.f32 %v9927
    %v9933 = vsel %vm9932, %v9927, %v9931
    %s9934 = vtos %v9933
    %s9935 = smul.f32 %s9926, %s9934
    %v9936 = vstv %s9935
    %v9937 = vsub.f32 %v9812, %v9936
    %v9938 = vsub.f32 %v9813, %v9936
    %v9939 = vmul.f32 %v9937, %v9937
    %v9940 = vmul.f32 %v9938, %v9938
    %9943 = vrot.lane.b32.xlu0 %v9939, 32
    %v9944 = vpop.permute.xlu0 %9943
    %9945 = vrot.lane.b32.xlu0 %v9940, 32
    %v9946 = vpop.permute.xlu0 %9945
    %v9949 = vsel %vm1943, %v9944, 0.0
    %v9950 = vsel %vm1943, %v9946, 0.0
    %v9951 = vadd.f32 %v9949, %v9950
    %9952 = vadd.xlane.f32.xlu0 %v9951
    %v9953 = vpop.xlane.xlu0 %9952
    %v9954 = vrot.slane %v9953, 4
    %v9955 = vadd.f32 %v9953, %v9954
    %v9956 = vrot.slane %v9955, 2
    %v9957 = vadd.f32 %v9955, %v9956
    %v9958 = vrot.slane %v9957, 1
    %v9959 = vadd.f32 %v9957, %v9958
    %s9960 = vtos %v9959
    %v9961 = vrcp.pop 512.0
    %v9962 = vmul.f32 512.0, %v9961
    %v9963 = vsub.f32 1.0, %v9962
    %v9964 = vmul.f32 %v9961, %v9963
    %v9965 = vadd.f32 %v9961, %v9964
    %vm9966 = vweird.f32 %v9961
    %v9967 = vsel %vm9966, %v9961, %v9965
    %s9968 = vtos %v9967
    %s9969 = smul.f32 %s9960, %s9968
    %s9970 = sadd.f32 %s9969, 1e-12
    %v9971 = vstv %s9970
    %v9972 = vrsqrt.pop %v9971
    %v9973 = vmul.f32 %v9972, %v9971
    %v9974 = vmul.f32 %v9973, %v9972
    %v9975 = vmul.f32 0.5, %v9974
    %v9976 = vsub.f32 1.5, %v9975
    %v9977 = vmul.f32 %v9972, %v9976
    %vm9978 = vweird.f32 %v9971
    %vm9979 = vweird.f32 %v9972
    %vm9980 = vmor %vm9978, %vm9979
    %v9981 = vsel %vm9980, %v9972, %v9977
    %s9982 = vtos %v9981
    %v9983 = vstv %s9982
    %v9984 = vmul.f32 %v9937, %v9983
    %v9985 = vmul.f32 %v9938, %v9983
    %v9986 = vmul.f32 %v9984, %v4636
    %v9987 = vmul.f32 %v9985, %v4638
    %v9988 = vadd.f32 %v9986, %v4646
    %v9989 = vadd.f32 %v9987, %v4648
    %9992 = vrot.lane.b32.xlu0 %v9988, 32
    %v9993 = vpop.permute.xlu0 %9992
    %9994 = vrot.lane.b32.xlu0 %v9989, 32
    %v9995 = vpop.permute.xlu0 %9994
    %9998 = vst.msk [vmem:[%s4754 + $0x70] sm:$0xff] %vm1943, %v9993
    %9999 = vst.msk [vmem:[%s4754 + $0x78] sm:$0xff] %vm1943, %v9995
    // Predicated region
    $region58: #{st_conv_block_gru.1} parent=1 // pred_check
      _
    $region59: #{st_conv_block_gru.1} parent=1 // pred_check_branch
      %10001 = sbr.rel (0) target = $region61
    $region60: #{st_conv_block_gru.1} parent=1 // pred_region
      %10003 = vsyncadd [#allocation4], 0
      %s10004 = sshll.u32 [#allocation3], 4
      %s10005 = int_to_ptr.vmem [resolvable:$true] %s10004
      %s10006 = sshll.u32 %s14, 4
      %s10007 = int_to_ptr.hbm [resolvable:$true] %s10006
      %10012 = dma.vmem_to_hbm [thread:$0]  %s10005, 4096, %s10007, [#allocation4], 128, 128, 8
    $region61: #{st_conv_block_gru.1} parent=1 // pred_fallthru
      _
    // Predicated region
    $region62: #{st_conv_block_gru.1} parent=1 // pred_check
      _
    $region63: #{st_conv_block_gru.1} parent=1 // pred_check_branch
      %10014 = sbr.rel (0) target = $region65
    $region64: #{st_conv_block_gru.1} parent=1 // pred_region
      %10016 = dma.done [#allocation4], 4096
    $region65: #{st_conv_block_gru.1} parent=1 // pred_fallthru
      _
    %10017 = vsyncpa [#allocation4], 1

</llo_original>
